<compile_context>
chip_gen: v7x
topology: tpu7x:2x2x1
jax: 0.10.0
libtpu: 0.0.40
codegen_flags: <defaults>
</compile_context>

<pallas_src>
import functools

import numpy as np
import jax
import jax.numpy as jnp
from jax import lax
from jax.experimental import pallas as pl
from jax.experimental.pallas import tpu as pltpu

BN_EPS = 1e-5
K = 5   # conv kernel size
S = 2   # conv stride


def _conv_out(n):
    return (n - (K - 1) - 1) // S + 1


def _ceil_div(a, b):
    return -(-a // b)


def _round_up(a, m):
    return _ceil_div(a, m) * m


def _vmem_spec(shape):
    """Whole-array block (block_shape == full dims, so no (8,128) constraint)."""
    shape = tuple(int(d) for d in shape)
    zeros = (0,) * len(shape)
    return pl.BlockSpec(shape, lambda i, _z=zeros: _z)


# ----------------------------------------------------------------------------
# Fused kernel
# ----------------------------------------------------------------------------
def _make_dqn_kernel(*, B, M1P, M2P, Hh1, Wh1, Hh2, Wh2,
                     wide2, wide2p, wide3, wide3p,
                     C1, C2, C3, H2, W2, H3, W3, n1, n2, n3):
    f32 = jnp.float32

    def bn_scale_shift(y, mask, inv_n, gamma, beta):
        """Masked two-pass training-mode BatchNorm stats -> (scale, shift)."""
        valid = mask > 0.5                                   # (M, 1) bool
        ym = jnp.where(valid, y, 0.0)
        mean = jnp.sum(ym, axis=0, keepdims=True) * inv_n    # (1, C)
        d = jnp.where(valid, y - mean, 0.0)
        var = jnp.sum(d * d, axis=0, keepdims=True) * inv_n  # biased, like PyTorch
        scale = gamma * lax.rsqrt(var + BN_EPS)
        shift = beta - mean * scale
        return scale, shift

    def kernel(p1_ref, w1_ref, g1_ref, be1_ref, m1_ref,
               w2_ref, g2_ref, be2_ref, m2_ref,
               w3_ref, g3_ref, be3_ref, m3_ref,
               whw_ref, bh_ref,
               o_ref,
               act1_ref, col2_ref, a2_ref, act2_ref, col3_ref, hcol_ref):
        # ---------------- layer 1: one big matmul over (batch*rows) ----------------
        act1_ref[...] = jnp.dot(p1_ref[...], w1_ref[...],
                                preferred_element_type=f32)
        sc, sh = bn_scale_shift(act1_ref[...], m1_ref[...], 1.0 / n1,
                                g1_ref[...], be1_ref[...])
        act1_ref[...] = jnp.maximum(act1_ref[...] * sc + sh, 0.0)

        # -------- layer 2: VMEM im2col gather (ld/st slots) + ONE matmul --------
        col2_ref[...] = jnp.zeros_like(col2_ref)
        for b in range(B):
            dst = b * wide2p
            for kh in range(K):
                for kw in range(K):
                    t = kh * K + kw
                    blk = (kh % 2) * 2 + (kw % 2)
                    s = b * M1P + blk * (Hh1 * Wh1) + (kh // 2) * Wh1 + (kw // 2)
                    col2_ref[dst:dst + wide2, t * C1:(t + 1) * C1] = \
                        act1_ref[s:s + wide2, :]
        a2_ref[...] = jnp.dot(col2_ref[...], w2_ref[...],
                              preferred_element_type=f32)
        sc, sh = bn_scale_shift(a2_ref[...], m2_ref[...], 1.0 / n2,
                                g2_ref[...], be2_ref[...])
        a2_ref[...] = jnp.maximum(a2_ref[...] * sc + sh, 0.0)

        # repack layer-2 activations into the polyphase layout layer 3 reads
        # (stride-2 row reads + contiguous stores; replaces the sel2 matmul).
        act2_ref[...] = jnp.zeros_like(act2_ref)
        for b in range(B):
            for oh2 in range(H2):
                ph, ii = oh2 % 2, oh2 // 2
                for pw in range(2):
                    ncol = (W2 - pw + 1) // 2
                    if ncol <= 0:
                        continue
                    src = b * wide2p + oh2 * Wh1 + pw
                    dst = b * M2P + (ph * 2 + pw) * (Hh2 * Wh2) + ii * Wh2
                    act2_ref[dst:dst + ncol, :] = \
                        a2_ref[pl.ds(src, ncol, stride=2), :]

        # -------- layer 3: VMEM im2col gather + ONE matmul --------
        col3_ref[...] = jnp.zeros_like(col3_ref)
        for b in range(B):
            dst = b * wide3p
            for kh in range(K):
                for kw in range(K):
                    t = kh * K + kw
                    blk = (kh % 2) * 2 + (kw % 2)
                    s = b * M2P + blk * (Hh2 * Wh2) + (kh // 2) * Wh2 + (kw // 2)
                    col3_ref[dst:dst + wide3, t * C2:(t + 1) * C2] = \
                        act2_ref[s:s + wide3, :]
        y3 = jnp.dot(col3_ref[...], w3_ref[...], preferred_element_type=f32)
        sc, sh = bn_scale_shift(y3, m3_ref[...], 1.0 / n3,
                                g3_ref[...], be3_ref[...])
        a3 = jnp.maximum(y3 * sc + sh, 0.0)

        # -------- linear head: gather valid features, ONE matmul --------
        hcol_ref[...] = jnp.zeros_like(hcol_ref)
        for b in range(B):
            for oh3 in range(H3):
                for ow3 in range(W3):
                    r = b * wide3p + oh3 * Wh2 + ow3
                    f0 = (oh3 * W3 + ow3) * C3
                    hcol_ref[b:b + 1, f0:f0 + C3] = a3[r:r + 1, :]
        q = jnp.dot(hcol_ref[...], whw_ref[...],
                    preferred_element_type=f32) + bh_ref[...]
        o_ref[...] = q[:B, :]

    return kernel


# ----------------------------------------------------------------------------
# Wrapper (cheap XLA glue: layer-1 im2col, weight repacking, constants)
# ----------------------------------------------------------------------------
def dqn_forward(x_nchw, params):
    """Forward pass matching DQN.forward (PyTorch training-mode BatchNorm)."""
    B = int(x_nchw.shape[0])
    x = jnp.transpose(x_nchw, (0, 2, 3, 1)).astype(jnp.float32)     # NHWC
    H, W, Cin = int(x.shape[1]), int(x.shape[2]), int(x.shape[3])
    C1, C2, C3 = 16, 32, 32
    OUT = int(params["head_w"].shape[0])

    H1, W1 = _conv_out(H), _conv_out(W)
    H2, W2 = _conv_out(H1), _conv_out(W1)
    H3, W3 = _conv_out(H2), _conv_out(W2)
    Hh1, Wh1 = _ceil_div(H1, 2), _ceil_div(W1, 2)    # polyphase cell grid of act1
    Hh2, Wh2 = _ceil_div(H2, 2), _ceil_div(W2, 2)    # polyphase cell grid of act2
    wide2, wide3 = H2 * Wh1, H3 * Wh2                # "wide" output rows per image
    wide2p, wide3p = _round_up(wide2, 8), _round_up(wide3, 8)
    Bp = _round_up(B, 8)
    F = H3 * W3 * C3                                 # linear_input_size
    K1 = _round_up(K * K * Cin, 8)                   # 75 -> 80 (no 128 HBM pad)
    M1P = _round_up(max(4 * Hh1 * Wh1,
                        3 * Hh1 * Wh1 + 2 * Wh1 + 2 + wide2), 8)
    M2P = _round_up(max(4 * Hh2 * Wh2,
                        3 * Hh2 * Wh2 + 2 * Wh2 + 2 + wide3), 8)

    # ---- layer-1 im2col (features ordered (kh, kw, cin)); rows re-ordered so
    # row = block*Hh1*Wh1 + (oh//2)*Wh1 + (ow//2) with block = (oh%2)*2 + (ow%2);
    # batch folded into the row dimension.
    taps = [x[:, i:i + S * (H1 - 1) + 1:S, j:j + S * (W1 - 1) + 1:S, :]
            for i in range(K) for j in range(K)]
    patches = jnp.stack(taps, axis=3).reshape(B, H1, W1, K * K * Cin)
    patches = jnp.pad(patches,
                      ((0, 0), (0, 2 * Hh1 - H1), (0, 2 * Wh1 - W1), (0, 0)))
    patches = patches.reshape(B, Hh1, 2, Wh1, 2, K * K * Cin)
    patches = jnp.transpose(patches, (0, 2, 4, 1, 3, 5)).reshape(
        B, 4 * Hh1 * Wh1, K * K * Cin)
    p1 = jnp.pad(patches, ((0, 0), (0, M1P - 4 * Hh1 * Wh1),
                           (0, K1 - K * K * Cin)))
    p1 = p1.reshape(B * M1P, K1)

    # ---- weights: PyTorch (Cout, Cin, kh, kw) -> ((kh, kw, cin), Cout)
    def conv_w_mat(w_oihw):
        co, ci, kh, kw = (int(d) for d in w_oihw.shape)
        return jnp.transpose(w_oihw, (2, 3, 1, 0)).reshape(
            kh * kw * ci, co).astype(jnp.float32)

    w1 = jnp.pad(conv_w_mat(params["conv1_w"]), ((0, K1 - K * K * Cin), (0, 0)))
    w2 = conv_w_mat(params["conv2_w"])               # (25*C1, C2)
    w3 = conv_w_mat(params["conv3_w"])               # (25*C2, C3)

    g1 = params["bn1_g"].reshape(1, C1).astype(jnp.float32)
    be1 = params["bn1_b"].reshape(1, C1).astype(jnp.float32)
    g2 = params["bn2_g"].reshape(1, C2).astype(jnp.float32)
    be2 = params["bn2_b"].reshape(1, C2).astype(jnp.float32)
    g3 = params["bn3_g"].reshape(1, C3).astype(jnp.float32)
    be3 = params["bn3_b"].reshape(1, C3).astype(jnp.float32)
    # NOTE: conv biases are intentionally not applied — training-mode BatchNorm
    # subtracts the per-channel batch mean, cancelling them exactly.

    # ---- 0/1 masks marking rows that correspond to real conv outputs
    m1 = np.zeros((B * M1P, 1), np.float32)
    for b in range(B):
        for oh in range(H1):
            for ow in range(W1):
                blk = (oh % 2) * 2 + (ow % 2)
                r = blk * (Hh1 * Wh1) + (oh // 2) * Wh1 + (ow // 2)
                m1[b * M1P + r, 0] = 1.0
    m2 = np.zeros((B * wide2p, 1), np.float32)
    for b in range(B):
        for oh2 in range(H2):
            r0 = b * wide2p + oh2 * Wh1
            m2[r0:r0 + W2, 0] = 1.0
    m3 = np.zeros((B * wide3p, 1), np.float32)
    for b in range(B):
        for oh3 in range(H3):
            r0 = b * wide3p + oh3 * Wh2
            m3[r0:r0 + W3, 0] = 1.0

    # ---- head weight flattened to (F, OUT) in (h, w, c) order, folding in
    # PyTorch's (c, h, w) flatten order; head bias as (1, OUT).
    w_head = params["head_w"].astype(jnp.float32)            # (OUT, C3*H3*W3)
    whw = jnp.transpose(w_head.reshape(OUT, C3, H3, W3),
                        (2, 3, 1, 0)).reshape(F, OUT)
    bh = params["head_b"].reshape(1, OUT).astype(jnp.float32)

    kernel = _make_dqn_kernel(
        B=B, M1P=M1P, M2P=M2P, Hh1=Hh1, Wh1=Wh1, Hh2=Hh2, Wh2=Wh2,
        wide2=wide2, wide2p=wide2p, wide3=wide3, wide3p=wide3p,
        C1=C1, C2=C2, C3=C3, H2=H2, W2=W2, H3=H3, W3=W3,
        n1=B * H1 * W1, n2=B * H2 * W2, n3=B * H3 * W3)

    inputs = (p1, w1, g1, be1, jnp.asarray(m1),
              w2, g2, be2, jnp.asarray(m2),
              w3, g3, be3, jnp.asarray(m3),
              whw, bh)

    flops = 2 * (B * M1P * K1 * C1 + B * wide2p * 25 * C1 * C2
                 + B * wide3p * 25 * C2 * C3 + Bp * F * OUT) \
        + 10 * (B * M1P * C1 + B * wide2p * C2 + B * wide3p * C3)
    bytes_accessed = 4 * (sum(int(np.prod(a.shape)) for a in inputs) + B * OUT)
    cost = pl.CostEstimate(flops=int(flops),
                           transcendentals=int(C1 + C2 + C3),
                           bytes_accessed=int(bytes_accessed))

    # TODO(synk): a batch-parallel grid (to use v7x's 2nd TensorCore / pipeline the
    # p1 DMA) needs a cross-core reduction of the BatchNorm batch statistics, since
    # training-mode BN couples every batch element; kept on a single grid point.
    return pl.pallas_call(
        kernel,
        out_shape=jax.ShapeDtypeStruct((B, OUT), jnp.float32),
        grid=(1,),
        in_specs=[_vmem_spec(a.shape) for a in inputs],
        out_specs=_vmem_spec((B, OUT)),
        scratch_shapes=[
            pltpu.VMEM((B * M1P, C1), jnp.float32),          # act1 (polyphase rows)
            pltpu.VMEM((B * wide2p, 25 * C1), jnp.float32),  # layer-2 im2col
            pltpu.VMEM((B * wide2p, C2), jnp.float32),       # layer-2 pre/post act
            pltpu.VMEM((B * M2P, C2), jnp.float32),          # act2 (polyphase rows)
            pltpu.VMEM((B * wide3p, 25 * C2), jnp.float32),  # layer-3 im2col
            pltpu.VMEM((Bp, F), jnp.float32),                # head feature rows
        ],
        compiler_params=pltpu.CompilerParams(
            dimension_semantics=("arbitrary",)),
        cost_estimate=cost,
    )(*inputs)


# ----------------------------------------------------------------------------
# Pure-JAX reference (for the numerical self-check)
# ----------------------------------------------------------------------------
def _reference_forward(x_nchw, params):
    x = x_nchw.astype(jnp.float32)
    hi = lax.Precision.HIGHEST

    def conv(h, w, b):
        y = lax.conv_general_dilated(h, w.astype(jnp.float32), (S, S), "VALID",
                                     dimension_numbers=("NCHW", "OIHW", "NCHW"),
                                     precision=hi)
        return y + b.reshape(1, -1, 1, 1).astype(jnp.float32)

    def bn_relu(y, g, b):
        mean = jnp.mean(y, axis=(0, 2, 3), keepdims=True)
        var = jnp.mean((y - mean) ** 2, axis=(0, 2, 3), keepdims=True)
        yh = (y - mean) * lax.rsqrt(var + BN_EPS)
        return jnp.maximum(yh * g.reshape(1, -1, 1, 1) + b.reshape(1, -1, 1, 1), 0.0)

    y = bn_relu(conv(x, params["conv1_w"], params["conv1_b"]),
                params["bn1_g"], params["bn1_b"])
    y = bn_relu(conv(y, params["conv2_w"], params["conv2_b"]),
                params["bn2_g"], params["bn2_b"])
    y = bn_relu(conv(y, params["conv3_w"], params["conv3_b"]),
                params["bn3_g"], params["bn3_b"])
    flat = y.reshape(y.shape[0], -1)
    return jnp.dot(flat, params["head_w"].T.astype(jnp.float32), precision=hi) + \
        params["head_b"].astype(jnp.float32)


# ----------------------------------------------------------------------------
# Deterministic parameter construction (shapes from DQN.__init__)
# ----------------------------------------------------------------------------
def init_params(key, h, w, outputs):
    convw = _conv_out(_conv_out(_conv_out(w)))
    convh = _conv_out(_conv_out(_conv_out(h)))
    lin_in = convw * convh * 32

    keys = jax.random.split(key, 14)
    return {
        "conv1_w": 0.05 * jax.random.normal(keys[0], (16, 3, 5, 5), jnp.float32),
        "conv1_b": 0.05 * jax.random.normal(keys[1], (16,), jnp.float32),
        "bn1_g": 1.0 + 0.1 * jax.random.normal(keys[2], (16,), jnp.float32),
        "bn1_b": 0.01 * jax.random.normal(keys[3], (16,), jnp.float32),
        "conv2_w": 0.05 * jax.random.normal(keys[4], (32, 16, 5, 5), jnp.float32),
        "conv2_b": 0.05 * jax.random.normal(keys[5], (32,), jnp.float32),
        "bn2_g": 1.0 + 0.1 * jax.random.normal(keys[6], (32,), jnp.float32),
        "bn2_b": 0.01 * jax.random.normal(keys[7], (32,), jnp.float32),
        "conv3_w": 0.05 * jax.random.normal(keys[8], (32, 32, 5, 5), jnp.float32),
        "conv3_b": 0.05 * jax.random.normal(keys[9], (32,), jnp.float32),
        "bn3_g": 1.0 + 0.1 * jax.random.normal(keys[10], (32,), jnp.float32),
        "bn3_b": 0.01 * jax.random.normal(keys[11], (32,), jnp.float32),
        "head_w": 0.05 * jax.random.normal(keys[12], (outputs, lin_in), jnp.float32),
        "head_b": 0.05 * jax.random.normal(keys[13], (outputs,), jnp.float32),
    }


if __name__ == "__main__":
    # batch=2, C=3 (fixed by the module), h=w=32, outputs=4.
    # Spatial chain: 32 -> 14 -> 5 -> 1, so linear_input_size = 1*1*32 = 32.
    B, H, W, OUT = 2, 32, 32, 4
    key = jax.random.PRNGKey(0)
    pkey, xkey = jax.random.split(key)
    params = init_params(pkey, H, W, OUT)
    x = jax.random.normal(xkey, (B, 3, H, W), jnp.float32)   # NCHW, like PyTorch

    fwd = jax.jit(functools.partial(dqn_forward, params=params))
    q_values = fwd(x)
    jax.block_until_ready(q_values)
    assert q_values.shape == (B, OUT), q_values.shape
    assert q_values.dtype == jnp.float32

    # numerical self-check against a pure-JAX reference (tightened tolerance)
    q_ref = _reference_forward(x, params)
    err = float(jnp.max(jnp.abs(q_values - q_ref)))
    assert err < 2e-3, f"mismatch vs reference: max abs err = {err}"
    print("KERNEL_OK")
</pallas_src>

<mosaic_0001>
module attributes {stable_mosaic.version = 11 : i64} {
  func.func @kernel(%arg0: i32, %arg1: memref<400x80xf32, #tpu.memory_space<vmem>>, %arg2: memref<80x16xf32, #tpu.memory_space<vmem>>, %arg3: memref<1x16xf32, #tpu.memory_space<vmem>>, %arg4: memref<1x16xf32, #tpu.memory_space<vmem>>, %arg5: memref<400x1xf32, #tpu.memory_space<vmem>>, %arg6: memref<400x32xf32, #tpu.memory_space<vmem>>, %arg7: memref<1x32xf32, #tpu.memory_space<vmem>>, %arg8: memref<1x32xf32, #tpu.memory_space<vmem>>, %arg9: memref<80x1xf32, #tpu.memory_space<vmem>>, %arg10: memref<800x32xf32, #tpu.memory_space<vmem>>, %arg11: memref<1x32xf32, #tpu.memory_space<vmem>>, %arg12: memref<1x32xf32, #tpu.memory_space<vmem>>, %arg13: memref<16x1xf32, #tpu.memory_space<vmem>>, %arg14: memref<32x4xf32, #tpu.memory_space<vmem>>, %arg15: memref<1x4xf32, #tpu.memory_space<vmem>>, %arg16: memref<2x4xf32, #tpu.memory_space<vmem>>, %arg17: memref<400x16xf32, #tpu.memory_space<vmem>>, %arg18: memref<80x400xf32, #tpu.memory_space<vmem>>, %arg19: memref<80x32xf32, #tpu.memory_space<vmem>>, %arg20: memref<80x32xf32, #tpu.memory_space<vmem>>, %arg21: memref<16x800xf32, #tpu.memory_space<vmem>>, %arg22: memref<8x32xf32, #tpu.memory_space<vmem>>) attributes {dimension_semantics = [#tpu.dimension_semantics<arbitrary>], iteration_bounds = array<i64: 1>, scalar_prefetch = 0 : i64, scratch_operands = 6 : i64, tpu.core_type = #tpu.core_type<tc>, window_params = [{pipeline_mode = #tpu.pipeline_mode<synchronous>, transform_indices = @transform_0, window_bounds = array<i64: 400, 80>}, {pipeline_mode = #tpu.pipeline_mode<synchronous>, transform_indices = @transform_1, window_bounds = array<i64: 80, 16>}, {pipeline_mode = #tpu.pipeline_mode<synchronous>, transform_indices = @transform_2, window_bounds = array<i64: 1, 16>}, {pipeline_mode = #tpu.pipeline_mode<synchronous>, transform_indices = @transform_3, window_bounds = array<i64: 1, 16>}, {pipeline_mode = #tpu.pipeline_mode<synchronous>, transform_indices = @transform_4, window_bounds = array<i64: 400, 1>}, {pipeline_mode = #tpu.pipeline_mode<synchronous>, transform_indices = @transform_5, window_bounds = array<i64: 400, 32>}, {pipeline_mode = #tpu.pipeline_mode<synchronous>, transform_indices = @transform_6, window_bounds = array<i64: 1, 32>}, {pipeline_mode = #tpu.pipeline_mode<synchronous>, transform_indices = @transform_7, window_bounds = array<i64: 1, 32>}, {pipeline_mode = #tpu.pipeline_mode<synchronous>, transform_indices = @transform_8, window_bounds = array<i64: 80, 1>}, {pipeline_mode = #tpu.pipeline_mode<synchronous>, transform_indices = @transform_9, window_bounds = array<i64: 800, 32>}, {pipeline_mode = #tpu.pipeline_mode<synchronous>, transform_indices = @transform_10, window_bounds = array<i64: 1, 32>}, {pipeline_mode = #tpu.pipeline_mode<synchronous>, transform_indices = @transform_11, window_bounds = array<i64: 1, 32>}, {pipeline_mode = #tpu.pipeline_mode<synchronous>, transform_indices = @transform_12, window_bounds = array<i64: 16, 1>}, {pipeline_mode = #tpu.pipeline_mode<synchronous>, transform_indices = @transform_13, window_bounds = array<i64: 32, 4>}, {pipeline_mode = #tpu.pipeline_mode<synchronous>, transform_indices = @transform_14, window_bounds = array<i64: 1, 4>}, {pipeline_mode = #tpu.pipeline_mode<synchronous>, transform_indices = @transform_15, window_bounds = array<i64: 2, 4>}]} {
    %c0 = arith.constant 0 : index
    %c0_0 = arith.constant 0 : index
    %0 = vector.load %arg1[%c0, %c0_0] : memref<400x80xf32, #tpu.memory_space<vmem>>, vector<400x80xf32>
    %c0_1 = arith.constant 0 : index
    %c0_2 = arith.constant 0 : index
    %1 = vector.load %arg2[%c0_1, %c0_2] : memref<80x16xf32, #tpu.memory_space<vmem>>, vector<80x16xf32>
    %cst = arith.constant dense<0.000000e+00> : vector<400x16xf32>
    %2 = tpu.matmul %0, %1, %cst {dimension_numbers = #tpu.dot_dimension_numbers<[1], [0], [0], [1], [0, 0, 1, 1], [], []>} : vector<400x80xf32>, vector<80x16xf32>, vector<400x16xf32> -> vector<400x16xf32>
    %c0_3 = arith.constant 0 : index
    %c0_4 = arith.constant 0 : index
    %3 = vector.load %arg17[%c0_3, %c0_4] : memref<400x16xf32, #tpu.memory_space<vmem>>, vector<400x16xf32>
    tpu.vector_store %arg17[%c0_3, %c0_4], %2 {strides = array<i32>} : memref<400x16xf32, #tpu.memory_space<vmem>>, vector<400x16xf32>,
    %c0_5 = arith.constant 0 : index
    %c0_6 = arith.constant 0 : index
    %4 = vector.load %arg17[%c0_5, %c0_6] : memref<400x16xf32, #tpu.memory_space<vmem>>, vector<400x16xf32>
    %c0_7 = arith.constant 0 : index
    %c0_8 = arith.constant 0 : index
    %5 = vector.load %arg5[%c0_7, %c0_8] : memref<400x1xf32, #tpu.memory_space<vmem>>, vector<400x1xf32>
    %c0_9 = arith.constant 0 : index
    %c0_10 = arith.constant 0 : index
    %6 = vector.load %arg3[%c0_9, %c0_10] : memref<1x16xf32, #tpu.memory_space<vmem>>, vector<1x16xf32>
    %c0_11 = arith.constant 0 : index
    %c0_12 = arith.constant 0 : index
    %7 = vector.load %arg4[%c0_11, %c0_12] : memref<1x16xf32, #tpu.memory_space<vmem>>, vector<1x16xf32>
    %cst_13 = arith.constant 5.000000e-01 : f32
    %8 = vector.broadcast %cst_13 : f32 to vector<400x1xf32>
    %9 = arith.cmpf ogt, %5, %8 : vector<400x1xf32>
    %cst_14 = arith.constant 0.000000e+00 : f32
    %10 = vector.shape_cast %9 : vector<400x1xi1> to vector<400x1xi1>
    %11 = vector.broadcast %10 : vector<400x1xi1> to vector<400x16xi1>
    %12 = vector.broadcast %cst_14 : f32 to vector<400x16xf32>
    %13 = arith.select %11, %4, %12 : vector<400x16xi1>, vector<400x16xf32>
    %cst_15 = arith.constant dense<0.000000e+00> : vector<16xf32>
    %14 = vector.multi_reduction <add>, %13, %cst_15 [0] : vector<400x16xf32> to vector<16xf32>
    %15 = vector.shape_cast %14 : vector<16xf32> to vector<1x16xf32>
    %cst_16 = arith.constant 0.00255102036 : f32
    %16 = vector.broadcast %cst_16 : f32 to vector<1x16xf32>
    %17 = arith.mulf %15, %16 : vector<1x16xf32>
    %18 = vector.broadcast %17 : vector<1x16xf32> to vector<400x16xf32>
    %19 = arith.subf %4, %18 : vector<400x16xf32>
    %cst_17 = arith.constant 0.000000e+00 : f32
    %20 = vector.shape_cast %9 : vector<400x1xi1> to vector<400x1xi1>
    %21 = vector.broadcast %20 : vector<400x1xi1> to vector<400x16xi1>
    %22 = vector.broadcast %cst_17 : f32 to vector<400x16xf32>
    %23 = arith.select %21, %19, %22 : vector<400x16xi1>, vector<400x16xf32>
    %24 = arith.mulf %23, %23 : vector<400x16xf32>
    %cst_18 = arith.constant dense<0.000000e+00> : vector<16xf32>
    %25 = vector.multi_reduction <add>, %24, %cst_18 [0] : vector<400x16xf32> to vector<16xf32>
    %26 = vector.shape_cast %25 : vector<16xf32> to vector<1x16xf32>
    %cst_19 = arith.constant 0.00255102036 : f32
    %27 = vector.broadcast %cst_19 : f32 to vector<1x16xf32>
    %28 = arith.mulf %26, %27 : vector<1x16xf32>
    %cst_20 = arith.constant 9.99999974E-6 : f32
    %29 = vector.broadcast %cst_20 : f32 to vector<1x16xf32>
    %30 = arith.addf %28, %29 : vector<1x16xf32>
    %31 = math.rsqrt %30 : vector<1x16xf32>
    %32 = arith.mulf %6, %31 : vector<1x16xf32>
    %33 = arith.mulf %17, %32 : vector<1x16xf32>
    %34 = arith.subf %7, %33 : vector<1x16xf32>
    %c0_21 = arith.constant 0 : index
    %c0_22 = arith.constant 0 : index
    %35 = vector.load %arg17[%c0_21, %c0_22] : memref<400x16xf32, #tpu.memory_space<vmem>>, vector<400x16xf32>
    %36 = vector.broadcast %32 : vector<1x16xf32> to vector<400x16xf32>
    %37 = arith.mulf %35, %36 : vector<400x16xf32>
    %38 = vector.broadcast %34 : vector<1x16xf32> to vector<400x16xf32>
    %39 = arith.addf %37, %38 : vector<400x16xf32>
    %cst_23 = arith.constant 0.000000e+00 : f32
    %40 = vector.broadcast %cst_23 : f32 to vector<400x16xf32>
    %41 = arith.maximumf %39, %40 : vector<400x16xf32>
    %c0_24 = arith.constant 0 : index
    %c0_25 = arith.constant 0 : index
    %42 = vector.load %arg17[%c0_24, %c0_25] : memref<400x16xf32, #tpu.memory_space<vmem>>, vector<400x16xf32>
    tpu.vector_store %arg17[%c0_24, %c0_25], %41 {strides = array<i32>} : memref<400x16xf32, #tpu.memory_space<vmem>>, vector<400x16xf32>,
    %cst_26 = arith.constant 0.000000e+00 : f32
    %43 = vector.broadcast %cst_26 : f32 to vector<80x400xf32>
    %c0_27 = arith.constant 0 : index
    %c0_28 = arith.constant 0 : index
    %44 = vector.load %arg18[%c0_27, %c0_28] : memref<80x400xf32, #tpu.memory_space<vmem>>, vector<80x400xf32>
    tpu.vector_store %arg18[%c0_27, %c0_28], %43 {strides = array<i32>} : memref<80x400xf32, #tpu.memory_space<vmem>>, vector<80x400xf32>,
    %c0_29 = arith.constant 0 : index
    %c0_30 = arith.constant 0 : index
    %45 = vector.load %arg17[%c0_29, %c0_30] : memref<400x16xf32, #tpu.memory_space<vmem>>, vector<35x16xf32>
    %c0_31 = arith.constant 0 : index
    %c0_32 = arith.constant 0 : index
    %46 = vector.load %arg18[%c0_31, %c0_32] : memref<80x400xf32, #tpu.memory_space<vmem>>, vector<35x16xf32>
    tpu.vector_store %arg18[%c0_31, %c0_32], %45 {strides = array<i32>} : memref<80x400xf32, #tpu.memory_space<vmem>>, vector<35x16xf32>,
    %c49 = arith.constant 49 : index
    %c0_33 = arith.constant 0 : index
    %47 = vector.load %arg17[%c49, %c0_33] : memref<400x16xf32, #tpu.memory_space<vmem>>, vector<35x16xf32>
    %c0_34 = arith.constant 0 : index
    %c16 = arith.constant 16 : index
    %48 = vector.load %arg18[%c0_34, %c16] : memref<80x400xf32, #tpu.memory_space<vmem>>, vector<35x16xf32>
    tpu.vector_store %arg18[%c0_34, %c16], %47 {strides = array<i32>} : memref<80x400xf32, #tpu.memory_space<vmem>>, vector<35x16xf32>,
    %c1 = arith.constant 1 : index
    %c0_35 = arith.constant 0 : index
    %49 = vector.load %arg17[%c1, %c0_35] : memref<400x16xf32, #tpu.memory_space<vmem>>, vector<35x16xf32>
    %c0_36 = arith.constant 0 : index
    %c32 = arith.constant 32 : index
    %50 = vector.load %arg18[%c0_36, %c32] : memref<80x400xf32, #tpu.memory_space<vmem>>, vector<35x16xf32>
    tpu.vector_store %arg18[%c0_36, %c32], %49 {strides = array<i32>} : memref<80x400xf32, #tpu.memory_space<vmem>>, vector<35x16xf32>,
    %c50 = arith.constant 50 : index
    %c0_37 = arith.constant 0 : index
    %51 = vector.load %arg17[%c50, %c0_37] : memref<400x16xf32, #tpu.memory_space<vmem>>, vector<35x16xf32>
    %c0_38 = arith.constant 0 : index
    %c48 = arith.constant 48 : index
    %52 = vector.load %arg18[%c0_38, %c48] : memref<80x400xf32, #tpu.memory_space<vmem>>, vector<35x16xf32>
    tpu.vector_store %arg18[%c0_38, %c48], %51 {strides = array<i32>} : memref<80x400xf32, #tpu.memory_space<vmem>>, vector<35x16xf32>,
    %c2 = arith.constant 2 : index
    %c0_39 = arith.constant 0 : index
    %53 = vector.load %arg17[%c2, %c0_39] : memref<400x16xf32, #tpu.memory_space<vmem>>, vector<35x16xf32>
    %c0_40 = arith.constant 0 : index
    %c64 = arith.constant 64 : index
    %54 = vector.load %arg18[%c0_40, %c64] : memref<80x400xf32, #tpu.memory_space<vmem>>, vector<35x16xf32>
    tpu.vector_store %arg18[%c0_40, %c64], %53 {strides = array<i32>} : memref<80x400xf32, #tpu.memory_space<vmem>>, vector<35x16xf32>,
    %c98 = arith.constant 98 : index
    %c0_41 = arith.constant 0 : index
    %55 = vector.load %arg17[%c98, %c0_41] : memref<400x16xf32, #tpu.memory_space<vmem>>, vector<35x16xf32>
    %c0_42 = arith.constant 0 : index
    %c80 = arith.constant 80 : index
    %56 = vector.load %arg18[%c0_42, %c80] : memref<80x400xf32, #tpu.memory_space<vmem>>, vector<35x16xf32>
    tpu.vector_store %arg18[%c0_42, %c80], %55 {strides = array<i32>} : memref<80x400xf32, #tpu.memory_space<vmem>>, vector<35x16xf32>,
    %c147 = arith.constant 147 : index
    %c0_43 = arith.constant 0 : index
    %57 = vector.load %arg17[%c147, %c0_43] : memref<400x16xf32, #tpu.memory_space<vmem>>, vector<35x16xf32>
    %c0_44 = arith.constant 0 : index
    %c96 = arith.constant 96 : index
    %58 = vector.load %arg18[%c0_44, %c96] : memref<80x400xf32, #tpu.memory_space<vmem>>, vector<35x16xf32>
    tpu.vector_store %arg18[%c0_44, %c96], %57 {strides = array<i32>} : memref<80x400xf32, #tpu.memory_space<vmem>>, vector<35x16xf32>,
    %c99 = arith.constant 99 : index
    %c0_45 = arith.constant 0 : index
    %59 = vector.load %arg17[%c99, %c0_45] : memref<400x16xf32, #tpu.memory_space<vmem>>, vector<35x16xf32>
    %c0_46 = arith.constant 0 : index
    %c112 = arith.constant 112 : index
    %60 = vector.load %arg18[%c0_46, %c112] : memref<80x400xf32, #tpu.memory_space<vmem>>, vector<35x16xf32>
    tpu.vector_store %arg18[%c0_46, %c112], %59 {strides = array<i32>} : memref<80x400xf32, #tpu.memory_space<vmem>>, vector<35x16xf32>,
    %c148 = arith.constant 148 : index
    %c0_47 = arith.constant 0 : index
    %61 = vector.load %arg17[%c148, %c0_47] : memref<400x16xf32, #tpu.memory_space<vmem>>, vector<35x16xf32>
    %c0_48 = arith.constant 0 : index
    %c128 = arith.constant 128 : index
    %62 = vector.load %arg18[%c0_48, %c128] : memref<80x400xf32, #tpu.memory_space<vmem>>, vector<35x16xf32>
    tpu.vector_store %arg18[%c0_48, %c128], %61 {strides = array<i32>} : memref<80x400xf32, #tpu.memory_space<vmem>>, vector<35x16xf32>,
    %c100 = arith.constant 100 : index
    %c0_49 = arith.constant 0 : index
    %63 = vector.load %arg17[%c100, %c0_49] : memref<400x16xf32, #tpu.memory_space<vmem>>, vector<35x16xf32>
    %c0_50 = arith.constant 0 : index
    %c144 = arith.constant 144 : index
    %64 = vector.load %arg18[%c0_50, %c144] : memref<80x400xf32, #tpu.memory_space<vmem>>, vector<35x16xf32>
    tpu.vector_store %arg18[%c0_50, %c144], %63 {strides = array<i32>} : memref<80x400xf32, #tpu.memory_space<vmem>>, vector<35x16xf32>,
    %c7 = arith.constant 7 : index
    %c0_51 = arith.constant 0 : index
    %65 = vector.load %arg17[%c7, %c0_51] : memref<400x16xf32, #tpu.memory_space<vmem>>, vector<35x16xf32>
    %c0_52 = arith.constant 0 : index
    %c160 = arith.constant 160 : index
    %66 = vector.load %arg18[%c0_52, %c160] : memref<80x400xf32, #tpu.memory_space<vmem>>, vector<35x16xf32>
    tpu.vector_store %arg18[%c0_52, %c160], %65 {strides = array<i32>} : memref<80x400xf32, #tpu.memory_space<vmem>>, vector<35x16xf32>,
    %c56 = arith.constant 56 : index
    %c0_53 = arith.constant 0 : index
    %67 = vector.load %arg17[%c56, %c0_53] : memref<400x16xf32, #tpu.memory_space<vmem>>, vector<35x16xf32>
    %c0_54 = arith.constant 0 : index
    %c176 = arith.constant 176 : index
    %68 = vector.load %arg18[%c0_54, %c176] : memref<80x400xf32, #tpu.memory_space<vmem>>, vector<35x16xf32>
    tpu.vector_store %arg18[%c0_54, %c176], %67 {strides = array<i32>} : memref<80x400xf32, #tpu.memory_space<vmem>>, vector<35x16xf32>,
    %c8 = arith.constant 8 : index
    %c0_55 = arith.constant 0 : index
    %69 = vector.load %arg17[%c8, %c0_55] : memref<400x16xf32, #tpu.memory_space<vmem>>, vector<35x16xf32>
    %c0_56 = arith.constant 0 : index
    %c192 = arith.constant 192 : index
    %70 = vector.load %arg18[%c0_56, %c192] : memref<80x400xf32, #tpu.memory_space<vmem>>, vector<35x16xf32>
    tpu.vector_store %arg18[%c0_56, %c192], %69 {strides = array<i32>} : memref<80x400xf32, #tpu.memory_space<vmem>>, vector<35x16xf32>,
    %c57 = arith.constant 57 : index
    %c0_57 = arith.constant 0 : index
    %71 = vector.load %arg17[%c57, %c0_57] : memref<400x16xf32, #tpu.memory_space<vmem>>, vector<35x16xf32>
    %c0_58 = arith.constant 0 : index
    %c208 = arith.constant 208 : index
    %72 = vector.load %arg18[%c0_58, %c208] : memref<80x400xf32, #tpu.memory_space<vmem>>, vector<35x16xf32>
    tpu.vector_store %arg18[%c0_58, %c208], %71 {strides = array<i32>} : memref<80x400xf32, #tpu.memory_space<vmem>>, vector<35x16xf32>,
    %c9 = arith.constant 9 : index
    %c0_59 = arith.constant 0 : index
    %73 = vector.load %arg17[%c9, %c0_59] : memref<400x16xf32, #tpu.memory_space<vmem>>, vector<35x16xf32>
    %c0_60 = arith.constant 0 : index
    %c224 = arith.constant 224 : index
    %74 = vector.load %arg18[%c0_60, %c224] : memref<80x400xf32, #tpu.memory_space<vmem>>, vector<35x16xf32>
    tpu.vector_store %arg18[%c0_60, %c224], %73 {strides = array<i32>} : memref<80x400xf32, #tpu.memory_space<vmem>>, vector<35x16xf32>,
    %c105 = arith.constant 105 : index
    %c0_61 = arith.constant 0 : index
    %75 = vector.load %arg17[%c105, %c0_61] : memref<400x16xf32, #tpu.memory_space<vmem>>, vector<35x16xf32>
    %c0_62 = arith.constant 0 : index
    %c240 = arith.constant 240 : index
    %76 = vector.load %arg18[%c0_62, %c240] : memref<80x400xf32, #tpu.memory_space<vmem>>, vector<35x16xf32>
    tpu.vector_store %arg18[%c0_62, %c240], %75 {strides = array<i32>} : memref<80x400xf32, #tpu.memory_space<vmem>>, vector<35x16xf32>,
    %c154 = arith.constant 154 : index
    %c0_63 = arith.constant 0 : index
    %77 = vector.load %arg17[%c154, %c0_63] : memref<400x16xf32, #tpu.memory_space<vmem>>, vector<35x16xf32>
    %c0_64 = arith.constant 0 : index
    %c256 = arith.constant 256 : index
    %78 = vector.load %arg18[%c0_64, %c256] : memref<80x400xf32, #tpu.memory_space<vmem>>, vector<35x16xf32>
    tpu.vector_store %arg18[%c0_64, %c256], %77 {strides = array<i32>} : memref<80x400xf32, #tpu.memory_space<vmem>>, vector<35x16xf32>,
    %c106 = arith.constant 106 : index
    %c0_65 = arith.constant 0 : index
    %79 = vector.load %arg17[%c106, %c0_65] : memref<400x16xf32, #tpu.memory_space<vmem>>, vector<35x16xf32>
    %c0_66 = arith.constant 0 : index
    %c272 = arith.constant 272 : index
    %80 = vector.load %arg18[%c0_66, %c272] : memref<80x400xf32, #tpu.memory_space<vmem>>, vector<35x16xf32>
    tpu.vector_store %arg18[%c0_66, %c272], %79 {strides = array<i32>} : memref<80x400xf32, #tpu.memory_space<vmem>>, vector<35x16xf32>,
    %c155 = arith.constant 155 : index
    %c0_67 = arith.constant 0 : index
    %81 = vector.load %arg17[%c155, %c0_67] : memref<400x16xf32, #tpu.memory_space<vmem>>, vector<35x16xf32>
    %c0_68 = arith.constant 0 : index
    %c288 = arith.constant 288 : index
    %82 = vector.load %arg18[%c0_68, %c288] : memref<80x400xf32, #tpu.memory_space<vmem>>, vector<35x16xf32>
    tpu.vector_store %arg18[%c0_68, %c288], %81 {strides = array<i32>} : memref<80x400xf32, #tpu.memory_space<vmem>>, vector<35x16xf32>,
    %c107 = arith.constant 107 : index
    %c0_69 = arith.constant 0 : index
    %83 = vector.load %arg17[%c107, %c0_69] : memref<400x16xf32, #tpu.memory_space<vmem>>, vector<35x16xf32>
    %c0_70 = arith.constant 0 : index
    %c304 = arith.constant 304 : index
    %84 = vector.load %arg18[%c0_70, %c304] : memref<80x400xf32, #tpu.memory_space<vmem>>, vector<35x16xf32>
    tpu.vector_store %arg18[%c0_70, %c304], %83 {strides = array<i32>} : memref<80x400xf32, #tpu.memory_space<vmem>>, vector<35x16xf32>,
    %c14 = arith.constant 14 : index
    %c0_71 = arith.constant 0 : index
    %85 = vector.load %arg17[%c14, %c0_71] : memref<400x16xf32, #tpu.memory_space<vmem>>, vector<35x16xf32>
    %c0_72 = arith.constant 0 : index
    %c320 = arith.constant 320 : index
    %86 = vector.load %arg18[%c0_72, %c320] : memref<80x400xf32, #tpu.memory_space<vmem>>, vector<35x16xf32>
    tpu.vector_store %arg18[%c0_72, %c320], %85 {strides = array<i32>} : memref<80x400xf32, #tpu.memory_space<vmem>>, vector<35x16xf32>,
    %c63 = arith.constant 63 : index
    %c0_73 = arith.constant 0 : index
    %87 = vector.load %arg17[%c63, %c0_73] : memref<400x16xf32, #tpu.memory_space<vmem>>, vector<35x16xf32>
    %c0_74 = arith.constant 0 : index
    %c336 = arith.constant 336 : index
    %88 = vector.load %arg18[%c0_74, %c336] : memref<80x400xf32, #tpu.memory_space<vmem>>, vector<35x16xf32>
    tpu.vector_store %arg18[%c0_74, %c336], %87 {strides = array<i32>} : memref<80x400xf32, #tpu.memory_space<vmem>>, vector<35x16xf32>,
    %c15 = arith.constant 15 : index
    %c0_75 = arith.constant 0 : index
    %89 = vector.load %arg17[%c15, %c0_75] : memref<400x16xf32, #tpu.memory_space<vmem>>, vector<35x16xf32>
    %c0_76 = arith.constant 0 : index
    %c352 = arith.constant 352 : index
    %90 = vector.load %arg18[%c0_76, %c352] : memref<80x400xf32, #tpu.memory_space<vmem>>, vector<35x16xf32>
    tpu.vector_store %arg18[%c0_76, %c352], %89 {strides = array<i32>} : memref<80x400xf32, #tpu.memory_space<vmem>>, vector<35x16xf32>,
    %c64_77 = arith.constant 64 : index
    %c0_78 = arith.constant 0 : index
    %91 = vector.load %arg17[%c64_77, %c0_78] : memref<400x16xf32, #tpu.memory_space<vmem>>, vector<35x16xf32>
    %c0_79 = arith.constant 0 : index
    %c368 = arith.constant 368 : index
    %92 = vector.load %arg18[%c0_79, %c368] : memref<80x400xf32, #tpu.memory_space<vmem>>, vector<35x16xf32>
    tpu.vector_store %arg18[%c0_79, %c368], %91 {strides = array<i32>} : memref<80x400xf32, #tpu.memory_space<vmem>>, vector<35x16xf32>,
    %c16_80 = arith.constant 16 : index
    %c0_81 = arith.constant 0 : index
    %93 = vector.load %arg17[%c16_80, %c0_81] : memref<400x16xf32, #tpu.memory_space<vmem>>, vector<35x16xf32>
    %c0_82 = arith.constant 0 : index
    %c384 = arith.constant 384 : index
    %94 = vector.load %arg18[%c0_82, %c384] : memref<80x400xf32, #tpu.memory_space<vmem>>, vector<35x16xf32>
    tpu.vector_store %arg18[%c0_82, %c384], %93 {strides = array<i32>} : memref<80x400xf32, #tpu.memory_space<vmem>>, vector<35x16xf32>,
    %c200 = arith.constant 200 : index
    %c0_83 = arith.constant 0 : index
    %95 = vector.load %arg17[%c200, %c0_83] : memref<400x16xf32, #tpu.memory_space<vmem>>, vector<35x16xf32>
    %c40 = arith.constant 40 : index
    %c0_84 = arith.constant 0 : index
    %96 = vector.load %arg18[%c40, %c0_84] : memref<80x400xf32, #tpu.memory_space<vmem>>, vector<35x16xf32>
    tpu.vector_store %arg18[%c40, %c0_84], %95 {strides = array<i32>} : memref<80x400xf32, #tpu.memory_space<vmem>>, vector<35x16xf32>,
    %c249 = arith.constant 249 : index
    %c0_85 = arith.constant 0 : index
    %97 = vector.load %arg17[%c249, %c0_85] : memref<400x16xf32, #tpu.memory_space<vmem>>, vector<35x16xf32>
    %c40_86 = arith.constant 40 : index
    %c16_87 = arith.constant 16 : index
    %98 = vector.load %arg18[%c40_86, %c16_87] : memref<80x400xf32, #tpu.memory_space<vmem>>, vector<35x16xf32>
    tpu.vector_store %arg18[%c40_86, %c16_87], %97 {strides = array<i32>} : memref<80x400xf32, #tpu.memory_space<vmem>>, vector<35x16xf32>,
    %c201 = arith.constant 201 : index
    %c0_88 = arith.constant 0 : index
    %99 = vector.load %arg17[%c201, %c0_88] : memref<400x16xf32, #tpu.memory_space<vmem>>, vector<35x16xf32>
    %c40_89 = arith.constant 40 : index
    %c32_90 = arith.constant 32 : index
    %100 = vector.load %arg18[%c40_89, %c32_90] : memref<80x400xf32, #tpu.memory_space<vmem>>, vector<35x16xf32>
    tpu.vector_store %arg18[%c40_89, %c32_90], %99 {strides = array<i32>} : memref<80x400xf32, #tpu.memory_space<vmem>>, vector<35x16xf32>,
    %c250 = arith.constant 250 : index
    %c0_91 = arith.constant 0 : index
    %101 = vector.load %arg17[%c250, %c0_91] : memref<400x16xf32, #tpu.memory_space<vmem>>, vector<35x16xf32>
    %c40_92 = arith.constant 40 : index
    %c48_93 = arith.constant 48 : index
    %102 = vector.load %arg18[%c40_92, %c48_93] : memref<80x400xf32, #tpu.memory_space<vmem>>, vector<35x16xf32>
    tpu.vector_store %arg18[%c40_92, %c48_93], %101 {strides = array<i32>} : memref<80x400xf32, #tpu.memory_space<vmem>>, vector<35x16xf32>,
    %c202 = arith.constant 202 : index
    %c0_94 = arith.constant 0 : index
    %103 = vector.load %arg17[%c202, %c0_94] : memref<400x16xf32, #tpu.memory_space<vmem>>, vector<35x16xf32>
    %c40_95 = arith.constant 40 : index
    %c64_96 = arith.constant 64 : index
    %104 = vector.load %arg18[%c40_95, %c64_96] : memref<80x400xf32, #tpu.memory_space<vmem>>, vector<35x16xf32>
    tpu.vector_store %arg18[%c40_95, %c64_96], %103 {strides = array<i32>} : memref<80x400xf32, #tpu.memory_space<vmem>>, vector<35x16xf32>,
    %c298 = arith.constant 298 : index
    %c0_97 = arith.constant 0 : index
    %105 = vector.load %arg17[%c298, %c0_97] : memref<400x16xf32, #tpu.memory_space<vmem>>, vector<35x16xf32>
    %c40_98 = arith.constant 40 : index
    %c80_99 = arith.constant 80 : index
    %106 = vector.load %arg18[%c40_98, %c80_99] : memref<80x400xf32, #tpu.memory_space<vmem>>, vector<35x16xf32>
    tpu.vector_store %arg18[%c40_98, %c80_99], %105 {strides = array<i32>} : memref<80x400xf32, #tpu.memory_space<vmem>>, vector<35x16xf32>,
    %c347 = arith.constant 347 : index
    %c0_100 = arith.constant 0 : index
    %107 = vector.load %arg17[%c347, %c0_100] : memref<400x16xf32, #tpu.memory_space<vmem>>, vector<35x16xf32>
    %c40_101 = arith.constant 40 : index
    %c96_102 = arith.constant 96 : index
    %108 = vector.load %arg18[%c40_101, %c96_102] : memref<80x400xf32, #tpu.memory_space<vmem>>, vector<35x16xf32>
    tpu.vector_store %arg18[%c40_101, %c96_102], %107 {strides = array<i32>} : memref<80x400xf32, #tpu.memory_space<vmem>>, vector<35x16xf32>,
    %c299 = arith.constant 299 : index
    %c0_103 = arith.constant 0 : index
    %109 = vector.load %arg17[%c299, %c0_103] : memref<400x16xf32, #tpu.memory_space<vmem>>, vector<35x16xf32>
    %c40_104 = arith.constant 40 : index
    %c112_105 = arith.constant 112 : index
    %110 = vector.load %arg18[%c40_104, %c112_105] : memref<80x400xf32, #tpu.memory_space<vmem>>, vector<35x16xf32>
    tpu.vector_store %arg18[%c40_104, %c112_105], %109 {strides = array<i32>} : memref<80x400xf32, #tpu.memory_space<vmem>>, vector<35x16xf32>,
    %c348 = arith.constant 348 : index
    %c0_106 = arith.constant 0 : index
    %111 = vector.load %arg17[%c348, %c0_106] : memref<400x16xf32, #tpu.memory_space<vmem>>, vector<35x16xf32>
    %c40_107 = arith.constant 40 : index
    %c128_108 = arith.constant 128 : index
    %112 = vector.load %arg18[%c40_107, %c128_108] : memref<80x400xf32, #tpu.memory_space<vmem>>, vector<35x16xf32>
    tpu.vector_store %arg18[%c40_107, %c128_108], %111 {strides = array<i32>} : memref<80x400xf32, #tpu.memory_space<vmem>>, vector<35x16xf32>,
    %c300 = arith.constant 300 : index
    %c0_109 = arith.constant 0 : index
    %113 = vector.load %arg17[%c300, %c0_109] : memref<400x16xf32, #tpu.memory_space<vmem>>, vector<35x16xf32>
    %c40_110 = arith.constant 40 : index
    %c144_111 = arith.constant 144 : index
    %114 = vector.load %arg18[%c40_110, %c144_111] : memref<80x400xf32, #tpu.memory_space<vmem>>, vector<35x16xf32>
    tpu.vector_store %arg18[%c40_110, %c144_111], %113 {strides = array<i32>} : memref<80x400xf32, #tpu.memory_space<vmem>>, vector<35x16xf32>,
    %c207 = arith.constant 207 : index
    %c0_112 = arith.constant 0 : index
    %115 = vector.load %arg17[%c207, %c0_112] : memref<400x16xf32, #tpu.memory_space<vmem>>, vector<35x16xf32>
    %c40_113 = arith.constant 40 : index
    %c160_114 = arith.constant 160 : index
    %116 = vector.load %arg18[%c40_113, %c160_114] : memref<80x400xf32, #tpu.memory_space<vmem>>, vector<35x16xf32>
    tpu.vector_store %arg18[%c40_113, %c160_114], %115 {strides = array<i32>} : memref<80x400xf32, #tpu.memory_space<vmem>>, vector<35x16xf32>,
    %c256_115 = arith.constant 256 : index
    %c0_116 = arith.constant 0 : index
    %117 = vector.load %arg17[%c256_115, %c0_116] : memref<400x16xf32, #tpu.memory_space<vmem>>, vector<35x16xf32>
    %c40_117 = arith.constant 40 : index
    %c176_118 = arith.constant 176 : index
    %118 = vector.load %arg18[%c40_117, %c176_118] : memref<80x400xf32, #tpu.memory_space<vmem>>, vector<35x16xf32>
    tpu.vector_store %arg18[%c40_117, %c176_118], %117 {strides = array<i32>} : memref<80x400xf32, #tpu.memory_space<vmem>>, vector<35x16xf32>,
    %c208_119 = arith.constant 208 : index
    %c0_120 = arith.constant 0 : index
    %119 = vector.load %arg17[%c208_119, %c0_120] : memref<400x16xf32, #tpu.memory_space<vmem>>, vector<35x16xf32>
    %c40_121 = arith.constant 40 : index
    %c192_122 = arith.constant 192 : index
    %120 = vector.load %arg18[%c40_121, %c192_122] : memref<80x400xf32, #tpu.memory_space<vmem>>, vector<35x16xf32>
    tpu.vector_store %arg18[%c40_121, %c192_122], %119 {strides = array<i32>} : memref<80x400xf32, #tpu.memory_space<vmem>>, vector<35x16xf32>,
    %c257 = arith.constant 257 : index
    %c0_123 = arith.constant 0 : index
    %121 = vector.load %arg17[%c257, %c0_123] : memref<400x16xf32, #tpu.memory_space<vmem>>, vector<35x16xf32>
    %c40_124 = arith.constant 40 : index
    %c208_125 = arith.constant 208 : index
    %122 = vector.load %arg18[%c40_124, %c208_125] : memref<80x400xf32, #tpu.memory_space<vmem>>, vector<35x16xf32>
    tpu.vector_store %arg18[%c40_124, %c208_125], %121 {strides = array<i32>} : memref<80x400xf32, #tpu.memory_space<vmem>>, vector<35x16xf32>,
    %c209 = arith.constant 209 : index
    %c0_126 = arith.constant 0 : index
    %123 = vector.load %arg17[%c209, %c0_126] : memref<400x16xf32, #tpu.memory_space<vmem>>, vector<35x16xf32>
    %c40_127 = arith.constant 40 : index
    %c224_128 = arith.constant 224 : index
    %124 = vector.load %arg18[%c40_127, %c224_128] : memref<80x400xf32, #tpu.memory_space<vmem>>, vector<35x16xf32>
    tpu.vector_store %arg18[%c40_127, %c224_128], %123 {strides = array<i32>} : memref<80x400xf32, #tpu.memory_space<vmem>>, vector<35x16xf32>,
    %c305 = arith.constant 305 : index
    %c0_129 = arith.constant 0 : index
    %125 = vector.load %arg17[%c305, %c0_129] : memref<400x16xf32, #tpu.memory_space<vmem>>, vector<35x16xf32>
    %c40_130 = arith.constant 40 : index
    %c240_131 = arith.constant 240 : index
    %126 = vector.load %arg18[%c40_130, %c240_131] : memref<80x400xf32, #tpu.memory_space<vmem>>, vector<35x16xf32>
    tpu.vector_store %arg18[%c40_130, %c240_131], %125 {strides = array<i32>} : memref<80x400xf32, #tpu.memory_space<vmem>>, vector<35x16xf32>,
    %c354 = arith.constant 354 : index
    %c0_132 = arith.constant 0 : index
    %127 = vector.load %arg17[%c354, %c0_132] : memref<400x16xf32, #tpu.memory_space<vmem>>, vector<35x16xf32>
    %c40_133 = arith.constant 40 : index
    %c256_134 = arith.constant 256 : index
    %128 = vector.load %arg18[%c40_133, %c256_134] : memref<80x400xf32, #tpu.memory_space<vmem>>, vector<35x16xf32>
    tpu.vector_store %arg18[%c40_133, %c256_134], %127 {strides = array<i32>} : memref<80x400xf32, #tpu.memory_space<vmem>>, vector<35x16xf32>,
    %c306 = arith.constant 306 : index
    %c0_135 = arith.constant 0 : index
    %129 = vector.load %arg17[%c306, %c0_135] : memref<400x16xf32, #tpu.memory_space<vmem>>, vector<35x16xf32>
    %c40_136 = arith.constant 40 : index
    %c272_137 = arith.constant 272 : index
    %130 = vector.load %arg18[%c40_136, %c272_137] : memref<80x400xf32, #tpu.memory_space<vmem>>, vector<35x16xf32>
    tpu.vector_store %arg18[%c40_136, %c272_137], %129 {strides = array<i32>} : memref<80x400xf32, #tpu.memory_space<vmem>>, vector<35x16xf32>,
    %c355 = arith.constant 355 : index
    %c0_138 = arith.constant 0 : index
    %131 = vector.load %arg17[%c355, %c0_138] : memref<400x16xf32, #tpu.memory_space<vmem>>, vector<35x16xf32>
    %c40_139 = arith.constant 40 : index
    %c288_140 = arith.constant 288 : index
    %132 = vector.load %arg18[%c40_139, %c288_140] : memref<80x400xf32, #tpu.memory_space<vmem>>, vector<35x16xf32>
    tpu.vector_store %arg18[%c40_139, %c288_140], %131 {strides = array<i32>} : memref<80x400xf32, #tpu.memory_space<vmem>>, vector<35x16xf32>,
    %c307 = arith.constant 307 : index
    %c0_141 = arith.constant 0 : index
    %133 = vector.load %arg17[%c307, %c0_141] : memref<400x16xf32, #tpu.memory_space<vmem>>, vector<35x16xf32>
    %c40_142 = arith.constant 40 : index
    %c304_143 = arith.constant 304 : index
    %134 = vector.load %arg18[%c40_142, %c304_143] : memref<80x400xf32, #tpu.memory_space<vmem>>, vector<35x16xf32>
    tpu.vector_store %arg18[%c40_142, %c304_143], %133 {strides = array<i32>} : memref<80x400xf32, #tpu.memory_space<vmem>>, vector<35x16xf32>,
    %c214 = arith.constant 214 : index
    %c0_144 = arith.constant 0 : index
    %135 = vector.load %arg17[%c214, %c0_144] : memref<400x16xf32, #tpu.memory_space<vmem>>, vector<35x16xf32>
    %c40_145 = arith.constant 40 : index
    %c320_146 = arith.constant 320 : index
    %136 = vector.load %arg18[%c40_145, %c320_146] : memref<80x400xf32, #tpu.memory_space<vmem>>, vector<35x16xf32>
    tpu.vector_store %arg18[%c40_145, %c320_146], %135 {strides = array<i32>} : memref<80x400xf32, #tpu.memory_space<vmem>>, vector<35x16xf32>,
    %c263 = arith.constant 263 : index
    %c0_147 = arith.constant 0 : index
    %137 = vector.load %arg17[%c263, %c0_147] : memref<400x16xf32, #tpu.memory_space<vmem>>, vector<35x16xf32>
    %c40_148 = arith.constant 40 : index
    %c336_149 = arith.constant 336 : index
    %138 = vector.load %arg18[%c40_148, %c336_149] : memref<80x400xf32, #tpu.memory_space<vmem>>, vector<35x16xf32>
    tpu.vector_store %arg18[%c40_148, %c336_149], %137 {strides = array<i32>} : memref<80x400xf32, #tpu.memory_space<vmem>>, vector<35x16xf32>,
    %c215 = arith.constant 215 : index
    %c0_150 = arith.constant 0 : index
    %139 = vector.load %arg17[%c215, %c0_150] : memref<400x16xf32, #tpu.memory_space<vmem>>, vector<35x16xf32>
    %c40_151 = arith.constant 40 : index
    %c352_152 = arith.constant 352 : index
    %140 = vector.load %arg18[%c40_151, %c352_152] : memref<80x400xf32, #tpu.memory_space<vmem>>, vector<35x16xf32>
    tpu.vector_store %arg18[%c40_151, %c352_152], %139 {strides = array<i32>} : memref<80x400xf32, #tpu.memory_space<vmem>>, vector<35x16xf32>,
    %c264 = arith.constant 264 : index
    %c0_153 = arith.constant 0 : index
    %141 = vector.load %arg17[%c264, %c0_153] : memref<400x16xf32, #tpu.memory_space<vmem>>, vector<35x16xf32>
    %c40_154 = arith.constant 40 : index
    %c368_155 = arith.constant 368 : index
    %142 = vector.load %arg18[%c40_154, %c368_155] : memref<80x400xf32, #tpu.memory_space<vmem>>, vector<35x16xf32>
    tpu.vector_store %arg18[%c40_154, %c368_155], %141 {strides = array<i32>} : memref<80x400xf32, #tpu.memory_space<vmem>>, vector<35x16xf32>,
    %c216 = arith.constant 216 : index
    %c0_156 = arith.constant 0 : index
    %143 = vector.load %arg17[%c216, %c0_156] : memref<400x16xf32, #tpu.memory_space<vmem>>, vector<35x16xf32>
    %c40_157 = arith.constant 40 : index
    %c384_158 = arith.constant 384 : index
    %144 = vector.load %arg18[%c40_157, %c384_158] : memref<80x400xf32, #tpu.memory_space<vmem>>, vector<35x16xf32>
    tpu.vector_store %arg18[%c40_157, %c384_158], %143 {strides = array<i32>} : memref<80x400xf32, #tpu.memory_space<vmem>>, vector<35x16xf32>,
    %c0_159 = arith.constant 0 : index
    %c0_160 = arith.constant 0 : index
    %145 = vector.load %arg18[%c0_159, %c0_160] : memref<80x400xf32, #tpu.memory_space<vmem>>, vector<80x400xf32>
    %c0_161 = arith.constant 0 : index
    %c0_162 = arith.constant 0 : index
    %146 = vector.load %arg6[%c0_161, %c0_162] : memref<400x32xf32, #tpu.memory_space<vmem>>, vector<400x32xf32>
    %cst_163 = arith.constant dense<0.000000e+00> : vector<80x32xf32>
    %147 = tpu.matmul %145, %146, %cst_163 {dimension_numbers = #tpu.dot_dimension_numbers<[1], [0], [0], [1], [0, 0, 1, 1], [], []>} : vector<80x400xf32>, vector<400x32xf32>, vector<80x32xf32> -> vector<80x32xf32>
    %c0_164 = arith.constant 0 : index
    %c0_165 = arith.constant 0 : index
    %148 = vector.load %arg19[%c0_164, %c0_165] : memref<80x32xf32, #tpu.memory_space<vmem>>, vector<80x32xf32>
    tpu.vector_store %arg19[%c0_164, %c0_165], %147 {strides = array<i32>} : memref<80x32xf32, #tpu.memory_space<vmem>>, vector<80x32xf32>,
    %c0_166 = arith.constant 0 : index
    %c0_167 = arith.constant 0 : index
    %149 = vector.load %arg19[%c0_166, %c0_167] : memref<80x32xf32, #tpu.memory_space<vmem>>, vector<80x32xf32>
    %c0_168 = arith.constant 0 : index
    %c0_169 = arith.constant 0 : index
    %150 = vector.load %arg9[%c0_168, %c0_169] : memref<80x1xf32, #tpu.memory_space<vmem>>, vector<80x1xf32>
    %c0_170 = arith.constant 0 : index
    %c0_171 = arith.constant 0 : index
    %151 = vector.load %arg7[%c0_170, %c0_171] : memref<1x32xf32, #tpu.memory_space<vmem>>, vector<1x32xf32>
    %c0_172 = arith.constant 0 : index
    %c0_173 = arith.constant 0 : index
    %152 = vector.load %arg8[%c0_172, %c0_173] : memref<1x32xf32, #tpu.memory_space<vmem>>, vector<1x32xf32>
    %cst_174 = arith.constant 5.000000e-01 : f32
    %153 = vector.broadcast %cst_174 : f32 to vector<80x1xf32>
    %154 = arith.cmpf ogt, %150, %153 : vector<80x1xf32>
    %cst_175 = arith.constant 0.000000e+00 : f32
    %155 = vector.shape_cast %154 : vector<80x1xi1> to vector<80x1xi1>
    %156 = vector.broadcast %155 : vector<80x1xi1> to vector<80x32xi1>
    %157 = vector.broadcast %cst_175 : f32 to vector<80x32xf32>
    %158 = arith.select %156, %149, %157 : vector<80x32xi1>, vector<80x32xf32>
    %cst_176 = arith.constant dense<0.000000e+00> : vector<32xf32>
    %159 = vector.multi_reduction <add>, %158, %cst_176 [0] : vector<80x32xf32> to vector<32xf32>
    %160 = vector.shape_cast %159 : vector<32xf32> to vector<1x32xf32>
    %cst_177 = arith.constant 2.000000e-02 : f32
    %161 = vector.broadcast %cst_177 : f32 to vector<1x32xf32>
    %162 = arith.mulf %160, %161 : vector<1x32xf32>
    %163 = vector.broadcast %162 : vector<1x32xf32> to vector<80x32xf32>
    %164 = arith.subf %149, %163 : vector<80x32xf32>
    %cst_178 = arith.constant 0.000000e+00 : f32
    %165 = vector.shape_cast %154 : vector<80x1xi1> to vector<80x1xi1>
    %166 = vector.broadcast %165 : vector<80x1xi1> to vector<80x32xi1>
    %167 = vector.broadcast %cst_178 : f32 to vector<80x32xf32>
    %168 = arith.select %166, %164, %167 : vector<80x32xi1>, vector<80x32xf32>
    %169 = arith.mulf %168, %168 : vector<80x32xf32>
    %cst_179 = arith.constant dense<0.000000e+00> : vector<32xf32>
    %170 = vector.multi_reduction <add>, %169, %cst_179 [0] : vector<80x32xf32> to vector<32xf32>
    %171 = vector.shape_cast %170 : vector<32xf32> to vector<1x32xf32>
    %cst_180 = arith.constant 2.000000e-02 : f32
    %172 = vector.broadcast %cst_180 : f32 to vector<1x32xf32>
    %173 = arith.mulf %171, %172 : vector<1x32xf32>
    %cst_181 = arith.constant 9.99999974E-6 : f32
    %174 = vector.broadcast %cst_181 : f32 to vector<1x32xf32>
    %175 = arith.addf %173, %174 : vector<1x32xf32>
    %176 = math.rsqrt %175 : vector<1x32xf32>
    %177 = arith.mulf %151, %176 : vector<1x32xf32>
    %178 = arith.mulf %162, %177 : vector<1x32xf32>
    %179 = arith.subf %152, %178 : vector<1x32xf32>
    %c0_182 = arith.constant 0 : index
    %c0_183 = arith.constant 0 : index
    %180 = vector.load %arg19[%c0_182, %c0_183] : memref<80x32xf32, #tpu.memory_space<vmem>>, vector<80x32xf32>
    %181 = vector.broadcast %177 : vector<1x32xf32> to vector<80x32xf32>
    %182 = arith.mulf %180, %181 : vector<80x32xf32>
    %183 = vector.broadcast %179 : vector<1x32xf32> to vector<80x32xf32>
    %184 = arith.addf %182, %183 : vector<80x32xf32>
    %cst_184 = arith.constant 0.000000e+00 : f32
    %185 = vector.broadcast %cst_184 : f32 to vector<80x32xf32>
    %186 = arith.maximumf %184, %185 : vector<80x32xf32>
    %c0_185 = arith.constant 0 : index
    %c0_186 = arith.constant 0 : index
    %187 = vector.load %arg19[%c0_185, %c0_186] : memref<80x32xf32, #tpu.memory_space<vmem>>, vector<80x32xf32>
    tpu.vector_store %arg19[%c0_185, %c0_186], %186 {strides = array<i32>} : memref<80x32xf32, #tpu.memory_space<vmem>>, vector<80x32xf32>,
    %cst_187 = arith.constant 0.000000e+00 : f32
    %188 = vector.broadcast %cst_187 : f32 to vector<80x32xf32>
    %c0_188 = arith.constant 0 : index
    %c0_189 = arith.constant 0 : index
    %189 = vector.load %arg20[%c0_188, %c0_189] : memref<80x32xf32, #tpu.memory_space<vmem>>, vector<80x32xf32>
    tpu.vector_store %arg20[%c0_188, %c0_189], %188 {strides = array<i32>} : memref<80x32xf32, #tpu.memory_space<vmem>>, vector<80x32xf32>,
    %c0_190 = arith.constant 0 : index
    %c0_191 = arith.constant 0 : index
    %190 = tpu.strided_load %arg19[%c0_190, %c0_191] {strides = array<i32: 2, 1>} : memref<80x32xf32, #tpu.memory_space<vmem>>, vector<3x32xf32>
    %c0_192 = arith.constant 0 : index
    %c0_193 = arith.constant 0 : index
    %191 = vector.load %arg20[%c0_192, %c0_193] : memref<80x32xf32, #tpu.memory_space<vmem>>, vector<3x32xf32>
    tpu.vector_store %arg20[%c0_192, %c0_193], %190 {strides = array<i32>} : memref<80x32xf32, #tpu.memory_space<vmem>>, vector<3x32xf32>,
    %c1_194 = arith.constant 1 : index
    %c0_195 = arith.constant 0 : index
    %192 = tpu.strided_load %arg19[%c1_194, %c0_195] {strides = array<i32: 2, 1>} : memref<80x32xf32, #tpu.memory_space<vmem>>, vector<2x32xf32>
    %c9_196 = arith.constant 9 : index
    %c0_197 = arith.constant 0 : index
    %193 = vector.load %arg20[%c9_196, %c0_197] : memref<80x32xf32, #tpu.memory_space<vmem>>, vector<2x32xf32>
    tpu.vector_store %arg20[%c9_196, %c0_197], %192 {strides = array<i32>} : memref<80x32xf32, #tpu.memory_space<vmem>>, vector<2x32xf32>,
    %c7_198 = arith.constant 7 : index
    %c0_199 = arith.constant 0 : index
    %194 = tpu.strided_load %arg19[%c7_198, %c0_199] {strides = array<i32: 2, 1>} : memref<80x32xf32, #tpu.memory_space<vmem>>, vector<3x32xf32>
    %c18 = arith.constant 18 : index
    %c0_200 = arith.constant 0 : index
    %195 = vector.load %arg20[%c18, %c0_200] : memref<80x32xf32, #tpu.memory_space<vmem>>, vector<3x32xf32>
    tpu.vector_store %arg20[%c18, %c0_200], %194 {strides = array<i32>} : memref<80x32xf32, #tpu.memory_space<vmem>>, vector<3x32xf32>,
    %c8_201 = arith.constant 8 : index
    %c0_202 = arith.constant 0 : index
    %196 = tpu.strided_load %arg19[%c8_201, %c0_202] {strides = array<i32: 2, 1>} : memref<80x32xf32, #tpu.memory_space<vmem>>, vector<2x32xf32>
    %c27 = arith.constant 27 : index
    %c0_203 = arith.constant 0 : index
    %197 = vector.load %arg20[%c27, %c0_203] : memref<80x32xf32, #tpu.memory_space<vmem>>, vector<2x32xf32>
    tpu.vector_store %arg20[%c27, %c0_203], %196 {strides = array<i32>} : memref<80x32xf32, #tpu.memory_space<vmem>>, vector<2x32xf32>,
    %c14_204 = arith.constant 14 : index
    %c0_205 = arith.constant 0 : index
    %198 = tpu.strided_load %arg19[%c14_204, %c0_205] {strides = array<i32: 2, 1>} : memref<80x32xf32, #tpu.memory_space<vmem>>, vector<3x32xf32>
    %c3 = arith.constant 3 : index
    %c0_206 = arith.constant 0 : index
    %199 = vector.load %arg20[%c3, %c0_206] : memref<80x32xf32, #tpu.memory_space<vmem>>, vector<3x32xf32>
    tpu.vector_store %arg20[%c3, %c0_206], %198 {strides = array<i32>} : memref<80x32xf32, #tpu.memory_space<vmem>>, vector<3x32xf32>,
    %c15_207 = arith.constant 15 : index
    %c0_208 = arith.constant 0 : index
    %200 = tpu.strided_load %arg19[%c15_207, %c0_208] {strides = array<i32: 2, 1>} : memref<80x32xf32, #tpu.memory_space<vmem>>, vector<2x32xf32>
    %c12 = arith.constant 12 : index
    %c0_209 = arith.constant 0 : index
    %201 = vector.load %arg20[%c12, %c0_209] : memref<80x32xf32, #tpu.memory_space<vmem>>, vector<2x32xf32>
    tpu.vector_store %arg20[%c12, %c0_209], %200 {strides = array<i32>} : memref<80x32xf32, #tpu.memory_space<vmem>>, vector<2x32xf32>,
    %c21 = arith.constant 21 : index
    %c0_210 = arith.constant 0 : index
    %202 = tpu.strided_load %arg19[%c21, %c0_210] {strides = array<i32: 2, 1>} : memref<80x32xf32, #tpu.memory_space<vmem>>, vector<3x32xf32>
    %c21_211 = arith.constant 21 : index
    %c0_212 = arith.constant 0 : index
    %203 = vector.load %arg20[%c21_211, %c0_212] : memref<80x32xf32, #tpu.memory_space<vmem>>, vector<3x32xf32>
    tpu.vector_store %arg20[%c21_211, %c0_212], %202 {strides = array<i32>} : memref<80x32xf32, #tpu.memory_space<vmem>>, vector<3x32xf32>,
    %c22 = arith.constant 22 : index
    %c0_213 = arith.constant 0 : index
    %204 = tpu.strided_load %arg19[%c22, %c0_213] {strides = array<i32: 2, 1>} : memref<80x32xf32, #tpu.memory_space<vmem>>, vector<2x32xf32>
    %c30 = arith.constant 30 : index
    %c0_214 = arith.constant 0 : index
    %205 = vector.load %arg20[%c30, %c0_214] : memref<80x32xf32, #tpu.memory_space<vmem>>, vector<2x32xf32>
    tpu.vector_store %arg20[%c30, %c0_214], %204 {strides = array<i32>} : memref<80x32xf32, #tpu.memory_space<vmem>>, vector<2x32xf32>,
    %c28 = arith.constant 28 : index
    %c0_215 = arith.constant 0 : index
    %206 = tpu.strided_load %arg19[%c28, %c0_215] {strides = array<i32: 2, 1>} : memref<80x32xf32, #tpu.memory_space<vmem>>, vector<3x32xf32>
    %c6 = arith.constant 6 : index
    %c0_216 = arith.constant 0 : index
    %207 = vector.load %arg20[%c6, %c0_216] : memref<80x32xf32, #tpu.memory_space<vmem>>, vector<3x32xf32>
    tpu.vector_store %arg20[%c6, %c0_216], %206 {strides = array<i32>} : memref<80x32xf32, #tpu.memory_space<vmem>>, vector<3x32xf32>,
    %c29 = arith.constant 29 : index
    %c0_217 = arith.constant 0 : index
    %208 = tpu.strided_load %arg19[%c29, %c0_217] {strides = array<i32: 2, 1>} : memref<80x32xf32, #tpu.memory_space<vmem>>, vector<2x32xf32>
    %c15_218 = arith.constant 15 : index
    %c0_219 = arith.constant 0 : index
    %209 = vector.load %arg20[%c15_218, %c0_219] : memref<80x32xf32, #tpu.memory_space<vmem>>, vector<2x32xf32>
    tpu.vector_store %arg20[%c15_218, %c0_219], %208 {strides = array<i32>} : memref<80x32xf32, #tpu.memory_space<vmem>>, vector<2x32xf32>,
    %c40_220 = arith.constant 40 : index
    %c0_221 = arith.constant 0 : index
    %210 = tpu.strided_load %arg19[%c40_220, %c0_221] {strides = array<i32: 2, 1>} : memref<80x32xf32, #tpu.memory_space<vmem>>, vector<3x32xf32>
    %c40_222 = arith.constant 40 : index
    %c0_223 = arith.constant 0 : index
    %211 = vector.load %arg20[%c40_222, %c0_223] : memref<80x32xf32, #tpu.memory_space<vmem>>, vector<3x32xf32>
    tpu.vector_store %arg20[%c40_222, %c0_223], %210 {strides = array<i32>} : memref<80x32xf32, #tpu.memory_space<vmem>>, vector<3x32xf32>,
    %c41 = arith.constant 41 : index
    %c0_224 = arith.constant 0 : index
    %212 = tpu.strided_load %arg19[%c41, %c0_224] {strides = array<i32: 2, 1>} : memref<80x32xf32, #tpu.memory_space<vmem>>, vector<2x32xf32>
    %c49_225 = arith.constant 49 : index
    %c0_226 = arith.constant 0 : index
    %213 = vector.load %arg20[%c49_225, %c0_226] : memref<80x32xf32, #tpu.memory_space<vmem>>, vector<2x32xf32>
    tpu.vector_store %arg20[%c49_225, %c0_226], %212 {strides = array<i32>} : memref<80x32xf32, #tpu.memory_space<vmem>>, vector<2x32xf32>,
    %c47 = arith.constant 47 : index
    %c0_227 = arith.constant 0 : index
    %214 = tpu.strided_load %arg19[%c47, %c0_227] {strides = array<i32: 2, 1>} : memref<80x32xf32, #tpu.memory_space<vmem>>, vector<3x32xf32>
    %c58 = arith.constant 58 : index
    %c0_228 = arith.constant 0 : index
    %215 = vector.load %arg20[%c58, %c0_228] : memref<80x32xf32, #tpu.memory_space<vmem>>, vector<3x32xf32>
    tpu.vector_store %arg20[%c58, %c0_228], %214 {strides = array<i32>} : memref<80x32xf32, #tpu.memory_space<vmem>>, vector<3x32xf32>,
    %c48_229 = arith.constant 48 : index
    %c0_230 = arith.constant 0 : index
    %216 = tpu.strided_load %arg19[%c48_229, %c0_230] {strides = array<i32: 2, 1>} : memref<80x32xf32, #tpu.memory_space<vmem>>, vector<2x32xf32>
    %c67 = arith.constant 67 : index
    %c0_231 = arith.constant 0 : index
    %217 = vector.load %arg20[%c67, %c0_231] : memref<80x32xf32, #tpu.memory_space<vmem>>, vector<2x32xf32>
    tpu.vector_store %arg20[%c67, %c0_231], %216 {strides = array<i32>} : memref<80x32xf32, #tpu.memory_space<vmem>>, vector<2x32xf32>,
    %c54 = arith.constant 54 : index
    %c0_232 = arith.constant 0 : index
    %218 = tpu.strided_load %arg19[%c54, %c0_232] {strides = array<i32: 2, 1>} : memref<80x32xf32, #tpu.memory_space<vmem>>, vector<3x32xf32>
    %c43 = arith.constant 43 : index
    %c0_233 = arith.constant 0 : index
    %219 = vector.load %arg20[%c43, %c0_233] : memref<80x32xf32, #tpu.memory_space<vmem>>, vector<3x32xf32>
    tpu.vector_store %arg20[%c43, %c0_233], %218 {strides = array<i32>} : memref<80x32xf32, #tpu.memory_space<vmem>>, vector<3x32xf32>,
    %c55 = arith.constant 55 : index
    %c0_234 = arith.constant 0 : index
    %220 = tpu.strided_load %arg19[%c55, %c0_234] {strides = array<i32: 2, 1>} : memref<80x32xf32, #tpu.memory_space<vmem>>, vector<2x32xf32>
    %c52 = arith.constant 52 : index
    %c0_235 = arith.constant 0 : index
    %221 = vector.load %arg20[%c52, %c0_235] : memref<80x32xf32, #tpu.memory_space<vmem>>, vector<2x32xf32>
    tpu.vector_store %arg20[%c52, %c0_235], %220 {strides = array<i32>} : memref<80x32xf32, #tpu.memory_space<vmem>>, vector<2x32xf32>,
    %c61 = arith.constant 61 : index
    %c0_236 = arith.constant 0 : index
    %222 = tpu.strided_load %arg19[%c61, %c0_236] {strides = array<i32: 2, 1>} : memref<80x32xf32, #tpu.memory_space<vmem>>, vector<3x32xf32>
    %c61_237 = arith.constant 61 : index
    %c0_238 = arith.constant 0 : index
    %223 = vector.load %arg20[%c61_237, %c0_238] : memref<80x32xf32, #tpu.memory_space<vmem>>, vector<3x32xf32>
    tpu.vector_store %arg20[%c61_237, %c0_238], %222 {strides = array<i32>} : memref<80x32xf32, #tpu.memory_space<vmem>>, vector<3x32xf32>,
    %c62 = arith.constant 62 : index
    %c0_239 = arith.constant 0 : index
    %224 = tpu.strided_load %arg19[%c62, %c0_239] {strides = array<i32: 2, 1>} : memref<80x32xf32, #tpu.memory_space<vmem>>, vector<2x32xf32>
    %c70 = arith.constant 70 : index
    %c0_240 = arith.constant 0 : index
    %225 = vector.load %arg20[%c70, %c0_240] : memref<80x32xf32, #tpu.memory_space<vmem>>, vector<2x32xf32>
    tpu.vector_store %arg20[%c70, %c0_240], %224 {strides = array<i32>} : memref<80x32xf32, #tpu.memory_space<vmem>>, vector<2x32xf32>,
    %c68 = arith.constant 68 : index
    %c0_241 = arith.constant 0 : index
    %226 = tpu.strided_load %arg19[%c68, %c0_241] {strides = array<i32: 2, 1>} : memref<80x32xf32, #tpu.memory_space<vmem>>, vector<3x32xf32>
    %c46 = arith.constant 46 : index
    %c0_242 = arith.constant 0 : index
    %227 = vector.load %arg20[%c46, %c0_242] : memref<80x32xf32, #tpu.memory_space<vmem>>, vector<3x32xf32>
    tpu.vector_store %arg20[%c46, %c0_242], %226 {strides = array<i32>} : memref<80x32xf32, #tpu.memory_space<vmem>>, vector<3x32xf32>,
    %c69 = arith.constant 69 : index
    %c0_243 = arith.constant 0 : index
    %228 = tpu.strided_load %arg19[%c69, %c0_243] {strides = array<i32: 2, 1>} : memref<80x32xf32, #tpu.memory_space<vmem>>, vector<2x32xf32>
    %c55_244 = arith.constant 55 : index
    %c0_245 = arith.constant 0 : index
    %229 = vector.load %arg20[%c55_244, %c0_245] : memref<80x32xf32, #tpu.memory_space<vmem>>, vector<2x32xf32>
    tpu.vector_store %arg20[%c55_244, %c0_245], %228 {strides = array<i32>} : memref<80x32xf32, #tpu.memory_space<vmem>>, vector<2x32xf32>,
    %cst_246 = arith.constant 0.000000e+00 : f32
    %230 = vector.broadcast %cst_246 : f32 to vector<16x800xf32>
    %c0_247 = arith.constant 0 : index
    %c0_248 = arith.constant 0 : index
    %231 = vector.load %arg21[%c0_247, %c0_248] : memref<16x800xf32, #tpu.memory_space<vmem>>, vector<16x800xf32>
    tpu.vector_store %arg21[%c0_247, %c0_248], %230 {strides = array<i32>} : memref<16x800xf32, #tpu.memory_space<vmem>>, vector<16x800xf32>,
    %c0_249 = arith.constant 0 : index
    %c0_250 = arith.constant 0 : index
    %232 = vector.load %arg20[%c0_249, %c0_250] : memref<80x32xf32, #tpu.memory_space<vmem>>, vector<3x32xf32>
    %c0_251 = arith.constant 0 : index
    %c0_252 = arith.constant 0 : index
    %233 = vector.load %arg21[%c0_251, %c0_252] : memref<16x800xf32, #tpu.memory_space<vmem>>, vector<3x32xf32>
    tpu.vector_store %arg21[%c0_251, %c0_252], %232 {strides = array<i32>} : memref<16x800xf32, #tpu.memory_space<vmem>>, vector<3x32xf32>,
    %c9_253 = arith.constant 9 : index
    %c0_254 = arith.constant 0 : index
    %234 = vector.load %arg20[%c9_253, %c0_254] : memref<80x32xf32, #tpu.memory_space<vmem>>, vector<3x32xf32>
    %c0_255 = arith.constant 0 : index
    %c32_256 = arith.constant 32 : index
    %235 = vector.load %arg21[%c0_255, %c32_256] : memref<16x800xf32, #tpu.memory_space<vmem>>, vector<3x32xf32>
    tpu.vector_store %arg21[%c0_255, %c32_256], %234 {strides = array<i32>} : memref<16x800xf32, #tpu.memory_space<vmem>>, vector<3x32xf32>,
    %c1_257 = arith.constant 1 : index
    %c0_258 = arith.constant 0 : index
    %236 = vector.load %arg20[%c1_257, %c0_258] : memref<80x32xf32, #tpu.memory_space<vmem>>, vector<3x32xf32>
    %c0_259 = arith.constant 0 : index
    %c64_260 = arith.constant 64 : index
    %237 = vector.load %arg21[%c0_259, %c64_260] : memref<16x800xf32, #tpu.memory_space<vmem>>, vector<3x32xf32>
    tpu.vector_store %arg21[%c0_259, %c64_260], %236 {strides = array<i32>} : memref<16x800xf32, #tpu.memory_space<vmem>>, vector<3x32xf32>,
    %c10 = arith.constant 10 : index
    %c0_261 = arith.constant 0 : index
    %238 = vector.load %arg20[%c10, %c0_261] : memref<80x32xf32, #tpu.memory_space<vmem>>, vector<3x32xf32>
    %c0_262 = arith.constant 0 : index
    %c96_263 = arith.constant 96 : index
    %239 = vector.load %arg21[%c0_262, %c96_263] : memref<16x800xf32, #tpu.memory_space<vmem>>, vector<3x32xf32>
    tpu.vector_store %arg21[%c0_262, %c96_263], %238 {strides = array<i32>} : memref<16x800xf32, #tpu.memory_space<vmem>>, vector<3x32xf32>,
    %c2_264 = arith.constant 2 : index
    %c0_265 = arith.constant 0 : index
    %240 = vector.load %arg20[%c2_264, %c0_265] : memref<80x32xf32, #tpu.memory_space<vmem>>, vector<3x32xf32>
    %c0_266 = arith.constant 0 : index
    %c128_267 = arith.constant 128 : index
    %241 = vector.load %arg21[%c0_266, %c128_267] : memref<16x800xf32, #tpu.memory_space<vmem>>, vector<3x32xf32>
    tpu.vector_store %arg21[%c0_266, %c128_267], %240 {strides = array<i32>} : memref<16x800xf32, #tpu.memory_space<vmem>>, vector<3x32xf32>,
    %c18_268 = arith.constant 18 : index
    %c0_269 = arith.constant 0 : index
    %242 = vector.load %arg20[%c18_268, %c0_269] : memref<80x32xf32, #tpu.memory_space<vmem>>, vector<3x32xf32>
    %c0_270 = arith.constant 0 : index
    %c160_271 = arith.constant 160 : index
    %243 = vector.load %arg21[%c0_270, %c160_271] : memref<16x800xf32, #tpu.memory_space<vmem>>, vector<3x32xf32>
    tpu.vector_store %arg21[%c0_270, %c160_271], %242 {strides = array<i32>} : memref<16x800xf32, #tpu.memory_space<vmem>>, vector<3x32xf32>,
    %c27_272 = arith.constant 27 : index
    %c0_273 = arith.constant 0 : index
    %244 = vector.load %arg20[%c27_272, %c0_273] : memref<80x32xf32, #tpu.memory_space<vmem>>, vector<3x32xf32>
    %c0_274 = arith.constant 0 : index
    %c192_275 = arith.constant 192 : index
    %245 = vector.load %arg21[%c0_274, %c192_275] : memref<16x800xf32, #tpu.memory_space<vmem>>, vector<3x32xf32>
    tpu.vector_store %arg21[%c0_274, %c192_275], %244 {strides = array<i32>} : memref<16x800xf32, #tpu.memory_space<vmem>>, vector<3x32xf32>,
    %c19 = arith.constant 19 : index
    %c0_276 = arith.constant 0 : index
    %246 = vector.load %arg20[%c19, %c0_276] : memref<80x32xf32, #tpu.memory_space<vmem>>, vector<3x32xf32>
    %c0_277 = arith.constant 0 : index
    %c224_278 = arith.constant 224 : index
    %247 = vector.load %arg21[%c0_277, %c224_278] : memref<16x800xf32, #tpu.memory_space<vmem>>, vector<3x32xf32>
    tpu.vector_store %arg21[%c0_277, %c224_278], %246 {strides = array<i32>} : memref<16x800xf32, #tpu.memory_space<vmem>>, vector<3x32xf32>,
    %c28_279 = arith.constant 28 : index
    %c0_280 = arith.constant 0 : index
    %248 = vector.load %arg20[%c28_279, %c0_280] : memref<80x32xf32, #tpu.memory_space<vmem>>, vector<3x32xf32>
    %c0_281 = arith.constant 0 : index
    %c256_282 = arith.constant 256 : index
    %249 = vector.load %arg21[%c0_281, %c256_282] : memref<16x800xf32, #tpu.memory_space<vmem>>, vector<3x32xf32>
    tpu.vector_store %arg21[%c0_281, %c256_282], %248 {strides = array<i32>} : memref<16x800xf32, #tpu.memory_space<vmem>>, vector<3x32xf32>,
    %c20 = arith.constant 20 : index
    %c0_283 = arith.constant 0 : index
    %250 = vector.load %arg20[%c20, %c0_283] : memref<80x32xf32, #tpu.memory_space<vmem>>, vector<3x32xf32>
    %c0_284 = arith.constant 0 : index
    %c288_285 = arith.constant 288 : index
    %251 = vector.load %arg21[%c0_284, %c288_285] : memref<16x800xf32, #tpu.memory_space<vmem>>, vector<3x32xf32>
    tpu.vector_store %arg21[%c0_284, %c288_285], %250 {strides = array<i32>} : memref<16x800xf32, #tpu.memory_space<vmem>>, vector<3x32xf32>,
    %c3_286 = arith.constant 3 : index
    %c0_287 = arith.constant 0 : index
    %252 = vector.load %arg20[%c3_286, %c0_287] : memref<80x32xf32, #tpu.memory_space<vmem>>, vector<3x32xf32>
    %c0_288 = arith.constant 0 : index
    %c320_289 = arith.constant 320 : index
    %253 = vector.load %arg21[%c0_288, %c320_289] : memref<16x800xf32, #tpu.memory_space<vmem>>, vector<3x32xf32>
    tpu.vector_store %arg21[%c0_288, %c320_289], %252 {strides = array<i32>} : memref<16x800xf32, #tpu.memory_space<vmem>>, vector<3x32xf32>,
    %c12_290 = arith.constant 12 : index
    %c0_291 = arith.constant 0 : index
    %254 = vector.load %arg20[%c12_290, %c0_291] : memref<80x32xf32, #tpu.memory_space<vmem>>, vector<3x32xf32>
    %c0_292 = arith.constant 0 : index
    %c352_293 = arith.constant 352 : index
    %255 = vector.load %arg21[%c0_292, %c352_293] : memref<16x800xf32, #tpu.memory_space<vmem>>, vector<3x32xf32>
    tpu.vector_store %arg21[%c0_292, %c352_293], %254 {strides = array<i32>} : memref<16x800xf32, #tpu.memory_space<vmem>>, vector<3x32xf32>,
    %c4 = arith.constant 4 : index
    %c0_294 = arith.constant 0 : index
    %256 = vector.load %arg20[%c4, %c0_294] : memref<80x32xf32, #tpu.memory_space<vmem>>, vector<3x32xf32>
    %c0_295 = arith.constant 0 : index
    %c384_296 = arith.constant 384 : index
    %257 = vector.load %arg21[%c0_295, %c384_296] : memref<16x800xf32, #tpu.memory_space<vmem>>, vector<3x32xf32>
    tpu.vector_store %arg21[%c0_295, %c384_296], %256 {strides = array<i32>} : memref<16x800xf32, #tpu.memory_space<vmem>>, vector<3x32xf32>,
    %c13 = arith.constant 13 : index
    %c0_297 = arith.constant 0 : index
    %258 = vector.load %arg20[%c13, %c0_297] : memref<80x32xf32, #tpu.memory_space<vmem>>, vector<3x32xf32>
    %c0_298 = arith.constant 0 : index
    %c416 = arith.constant 416 : index
    %259 = vector.load %arg21[%c0_298, %c416] : memref<16x800xf32, #tpu.memory_space<vmem>>, vector<3x32xf32>
    tpu.vector_store %arg21[%c0_298, %c416], %258 {strides = array<i32>} : memref<16x800xf32, #tpu.memory_space<vmem>>, vector<3x32xf32>,
    %c5 = arith.constant 5 : index
    %c0_299 = arith.constant 0 : index
    %260 = vector.load %arg20[%c5, %c0_299] : memref<80x32xf32, #tpu.memory_space<vmem>>, vector<3x32xf32>
    %c0_300 = arith.constant 0 : index
    %c448 = arith.constant 448 : index
    %261 = vector.load %arg21[%c0_300, %c448] : memref<16x800xf32, #tpu.memory_space<vmem>>, vector<3x32xf32>
    tpu.vector_store %arg21[%c0_300, %c448], %260 {strides = array<i32>} : memref<16x800xf32, #tpu.memory_space<vmem>>, vector<3x32xf32>,
    %c21_301 = arith.constant 21 : index
    %c0_302 = arith.constant 0 : index
    %262 = vector.load %arg20[%c21_301, %c0_302] : memref<80x32xf32, #tpu.memory_space<vmem>>, vector<3x32xf32>
    %c0_303 = arith.constant 0 : index
    %c480 = arith.constant 480 : index
    %263 = vector.load %arg21[%c0_303, %c480] : memref<16x800xf32, #tpu.memory_space<vmem>>, vector<3x32xf32>
    tpu.vector_store %arg21[%c0_303, %c480], %262 {strides = array<i32>} : memref<16x800xf32, #tpu.memory_space<vmem>>, vector<3x32xf32>,
    %c30_304 = arith.constant 30 : index
    %c0_305 = arith.constant 0 : index
    %264 = vector.load %arg20[%c30_304, %c0_305] : memref<80x32xf32, #tpu.memory_space<vmem>>, vector<3x32xf32>
    %c0_306 = arith.constant 0 : index
    %c512 = arith.constant 512 : index
    %265 = vector.load %arg21[%c0_306, %c512] : memref<16x800xf32, #tpu.memory_space<vmem>>, vector<3x32xf32>
    tpu.vector_store %arg21[%c0_306, %c512], %264 {strides = array<i32>} : memref<16x800xf32, #tpu.memory_space<vmem>>, vector<3x32xf32>,
    %c22_307 = arith.constant 22 : index
    %c0_308 = arith.constant 0 : index
    %266 = vector.load %arg20[%c22_307, %c0_308] : memref<80x32xf32, #tpu.memory_space<vmem>>, vector<3x32xf32>
    %c0_309 = arith.constant 0 : index
    %c544 = arith.constant 544 : index
    %267 = vector.load %arg21[%c0_309, %c544] : memref<16x800xf32, #tpu.memory_space<vmem>>, vector<3x32xf32>
    tpu.vector_store %arg21[%c0_309, %c544], %266 {strides = array<i32>} : memref<16x800xf32, #tpu.memory_space<vmem>>, vector<3x32xf32>,
    %c31 = arith.constant 31 : index
    %c0_310 = arith.constant 0 : index
    %268 = vector.load %arg20[%c31, %c0_310] : memref<80x32xf32, #tpu.memory_space<vmem>>, vector<3x32xf32>
    %c0_311 = arith.constant 0 : index
    %c576 = arith.constant 576 : index
    %269 = vector.load %arg21[%c0_311, %c576] : memref<16x800xf32, #tpu.memory_space<vmem>>, vector<3x32xf32>
    tpu.vector_store %arg21[%c0_311, %c576], %268 {strides = array<i32>} : memref<16x800xf32, #tpu.memory_space<vmem>>, vector<3x32xf32>,
    %c23 = arith.constant 23 : index
    %c0_312 = arith.constant 0 : index
    %270 = vector.load %arg20[%c23, %c0_312] : memref<80x32xf32, #tpu.memory_space<vmem>>, vector<3x32xf32>
    %c0_313 = arith.constant 0 : index
    %c608 = arith.constant 608 : index
    %271 = vector.load %arg21[%c0_313, %c608] : memref<16x800xf32, #tpu.memory_space<vmem>>, vector<3x32xf32>
    tpu.vector_store %arg21[%c0_313, %c608], %270 {strides = array<i32>} : memref<16x800xf32, #tpu.memory_space<vmem>>, vector<3x32xf32>,
    %c6_314 = arith.constant 6 : index
    %c0_315 = arith.constant 0 : index
    %272 = vector.load %arg20[%c6_314, %c0_315] : memref<80x32xf32, #tpu.memory_space<vmem>>, vector<3x32xf32>
    %c0_316 = arith.constant 0 : index
    %c640 = arith.constant 640 : index
    %273 = vector.load %arg21[%c0_316, %c640] : memref<16x800xf32, #tpu.memory_space<vmem>>, vector<3x32xf32>
    tpu.vector_store %arg21[%c0_316, %c640], %272 {strides = array<i32>} : memref<16x800xf32, #tpu.memory_space<vmem>>, vector<3x32xf32>,
    %c15_317 = arith.constant 15 : index
    %c0_318 = arith.constant 0 : index
    %274 = vector.load %arg20[%c15_317, %c0_318] : memref<80x32xf32, #tpu.memory_space<vmem>>, vector<3x32xf32>
    %c0_319 = arith.constant 0 : index
    %c672 = arith.constant 672 : index
    %275 = vector.load %arg21[%c0_319, %c672] : memref<16x800xf32, #tpu.memory_space<vmem>>, vector<3x32xf32>
    tpu.vector_store %arg21[%c0_319, %c672], %274 {strides = array<i32>} : memref<16x800xf32, #tpu.memory_space<vmem>>, vector<3x32xf32>,
    %c7_320 = arith.constant 7 : index
    %c0_321 = arith.constant 0 : index
    %276 = vector.load %arg20[%c7_320, %c0_321] : memref<80x32xf32, #tpu.memory_space<vmem>>, vector<3x32xf32>
    %c0_322 = arith.constant 0 : index
    %c704 = arith.constant 704 : index
    %277 = vector.load %arg21[%c0_322, %c704] : memref<16x800xf32, #tpu.memory_space<vmem>>, vector<3x32xf32>
    tpu.vector_store %arg21[%c0_322, %c704], %276 {strides = array<i32>} : memref<16x800xf32, #tpu.memory_space<vmem>>, vector<3x32xf32>,
    %c16_323 = arith.constant 16 : index
    %c0_324 = arith.constant 0 : index
    %278 = vector.load %arg20[%c16_323, %c0_324] : memref<80x32xf32, #tpu.memory_space<vmem>>, vector<3x32xf32>
    %c0_325 = arith.constant 0 : index
    %c736 = arith.constant 736 : index
    %279 = vector.load %arg21[%c0_325, %c736] : memref<16x800xf32, #tpu.memory_space<vmem>>, vector<3x32xf32>
    tpu.vector_store %arg21[%c0_325, %c736], %278 {strides = array<i32>} : memref<16x800xf32, #tpu.memory_space<vmem>>, vector<3x32xf32>,
    %c8_326 = arith.constant 8 : index
    %c0_327 = arith.constant 0 : index
    %280 = vector.load %arg20[%c8_326, %c0_327] : memref<80x32xf32, #tpu.memory_space<vmem>>, vector<3x32xf32>
    %c0_328 = arith.constant 0 : index
    %c768 = arith.constant 768 : index
    %281 = vector.load %arg21[%c0_328, %c768] : memref<16x800xf32, #tpu.memory_space<vmem>>, vector<3x32xf32>
    tpu.vector_store %arg21[%c0_328, %c768], %280 {strides = array<i32>} : memref<16x800xf32, #tpu.memory_space<vmem>>, vector<3x32xf32>,
    %c40_329 = arith.constant 40 : index
    %c0_330 = arith.constant 0 : index
    %282 = vector.load %arg20[%c40_329, %c0_330] : memref<80x32xf32, #tpu.memory_space<vmem>>, vector<3x32xf32>
    %c8_331 = arith.constant 8 : index
    %c0_332 = arith.constant 0 : index
    %283 = vector.load %arg21[%c8_331, %c0_332] : memref<16x800xf32, #tpu.memory_space<vmem>>, vector<3x32xf32>
    tpu.vector_store %arg21[%c8_331, %c0_332], %282 {strides = array<i32>} : memref<16x800xf32, #tpu.memory_space<vmem>>, vector<3x32xf32>,
    %c49_333 = arith.constant 49 : index
    %c0_334 = arith.constant 0 : index
    %284 = vector.load %arg20[%c49_333, %c0_334] : memref<80x32xf32, #tpu.memory_space<vmem>>, vector<3x32xf32>
    %c8_335 = arith.constant 8 : index
    %c32_336 = arith.constant 32 : index
    %285 = vector.load %arg21[%c8_335, %c32_336] : memref<16x800xf32, #tpu.memory_space<vmem>>, vector<3x32xf32>
    tpu.vector_store %arg21[%c8_335, %c32_336], %284 {strides = array<i32>} : memref<16x800xf32, #tpu.memory_space<vmem>>, vector<3x32xf32>,
    %c41_337 = arith.constant 41 : index
    %c0_338 = arith.constant 0 : index
    %286 = vector.load %arg20[%c41_337, %c0_338] : memref<80x32xf32, #tpu.memory_space<vmem>>, vector<3x32xf32>
    %c8_339 = arith.constant 8 : index
    %c64_340 = arith.constant 64 : index
    %287 = vector.load %arg21[%c8_339, %c64_340] : memref<16x800xf32, #tpu.memory_space<vmem>>, vector<3x32xf32>
    tpu.vector_store %arg21[%c8_339, %c64_340], %286 {strides = array<i32>} : memref<16x800xf32, #tpu.memory_space<vmem>>, vector<3x32xf32>,
    %c50_341 = arith.constant 50 : index
    %c0_342 = arith.constant 0 : index
    %288 = vector.load %arg20[%c50_341, %c0_342] : memref<80x32xf32, #tpu.memory_space<vmem>>, vector<3x32xf32>
    %c8_343 = arith.constant 8 : index
    %c96_344 = arith.constant 96 : index
    %289 = vector.load %arg21[%c8_343, %c96_344] : memref<16x800xf32, #tpu.memory_space<vmem>>, vector<3x32xf32>
    tpu.vector_store %arg21[%c8_343, %c96_344], %288 {strides = array<i32>} : memref<16x800xf32, #tpu.memory_space<vmem>>, vector<3x32xf32>,
    %c42 = arith.constant 42 : index
    %c0_345 = arith.constant 0 : index
    %290 = vector.load %arg20[%c42, %c0_345] : memref<80x32xf32, #tpu.memory_space<vmem>>, vector<3x32xf32>
    %c8_346 = arith.constant 8 : index
    %c128_347 = arith.constant 128 : index
    %291 = vector.load %arg21[%c8_346, %c128_347] : memref<16x800xf32, #tpu.memory_space<vmem>>, vector<3x32xf32>
    tpu.vector_store %arg21[%c8_346, %c128_347], %290 {strides = array<i32>} : memref<16x800xf32, #tpu.memory_space<vmem>>, vector<3x32xf32>,
    %c58_348 = arith.constant 58 : index
    %c0_349 = arith.constant 0 : index
    %292 = vector.load %arg20[%c58_348, %c0_349] : memref<80x32xf32, #tpu.memory_space<vmem>>, vector<3x32xf32>
    %c8_350 = arith.constant 8 : index
    %c160_351 = arith.constant 160 : index
    %293 = vector.load %arg21[%c8_350, %c160_351] : memref<16x800xf32, #tpu.memory_space<vmem>>, vector<3x32xf32>
    tpu.vector_store %arg21[%c8_350, %c160_351], %292 {strides = array<i32>} : memref<16x800xf32, #tpu.memory_space<vmem>>, vector<3x32xf32>,
    %c67_352 = arith.constant 67 : index
    %c0_353 = arith.constant 0 : index
    %294 = vector.load %arg20[%c67_352, %c0_353] : memref<80x32xf32, #tpu.memory_space<vmem>>, vector<3x32xf32>
    %c8_354 = arith.constant 8 : index
    %c192_355 = arith.constant 192 : index
    %295 = vector.load %arg21[%c8_354, %c192_355] : memref<16x800xf32, #tpu.memory_space<vmem>>, vector<3x32xf32>
    tpu.vector_store %arg21[%c8_354, %c192_355], %294 {strides = array<i32>} : memref<16x800xf32, #tpu.memory_space<vmem>>, vector<3x32xf32>,
    %c59 = arith.constant 59 : index
    %c0_356 = arith.constant 0 : index
    %296 = vector.load %arg20[%c59, %c0_356] : memref<80x32xf32, #tpu.memory_space<vmem>>, vector<3x32xf32>
    %c8_357 = arith.constant 8 : index
    %c224_358 = arith.constant 224 : index
    %297 = vector.load %arg21[%c8_357, %c224_358] : memref<16x800xf32, #tpu.memory_space<vmem>>, vector<3x32xf32>
    tpu.vector_store %arg21[%c8_357, %c224_358], %296 {strides = array<i32>} : memref<16x800xf32, #tpu.memory_space<vmem>>, vector<3x32xf32>,
    %c68_359 = arith.constant 68 : index
    %c0_360 = arith.constant 0 : index
    %298 = vector.load %arg20[%c68_359, %c0_360] : memref<80x32xf32, #tpu.memory_space<vmem>>, vector<3x32xf32>
    %c8_361 = arith.constant 8 : index
    %c256_362 = arith.constant 256 : index
    %299 = vector.load %arg21[%c8_361, %c256_362] : memref<16x800xf32, #tpu.memory_space<vmem>>, vector<3x32xf32>
    tpu.vector_store %arg21[%c8_361, %c256_362], %298 {strides = array<i32>} : memref<16x800xf32, #tpu.memory_space<vmem>>, vector<3x32xf32>,
    %c60 = arith.constant 60 : index
    %c0_363 = arith.constant 0 : index
    %300 = vector.load %arg20[%c60, %c0_363] : memref<80x32xf32, #tpu.memory_space<vmem>>, vector<3x32xf32>
    %c8_364 = arith.constant 8 : index
    %c288_365 = arith.constant 288 : index
    %301 = vector.load %arg21[%c8_364, %c288_365] : memref<16x800xf32, #tpu.memory_space<vmem>>, vector<3x32xf32>
    tpu.vector_store %arg21[%c8_364, %c288_365], %300 {strides = array<i32>} : memref<16x800xf32, #tpu.memory_space<vmem>>, vector<3x32xf32>,
    %c43_366 = arith.constant 43 : index
    %c0_367 = arith.constant 0 : index
    %302 = vector.load %arg20[%c43_366, %c0_367] : memref<80x32xf32, #tpu.memory_space<vmem>>, vector<3x32xf32>
    %c8_368 = arith.constant 8 : index
    %c320_369 = arith.constant 320 : index
    %303 = vector.load %arg21[%c8_368, %c320_369] : memref<16x800xf32, #tpu.memory_space<vmem>>, vector<3x32xf32>
    tpu.vector_store %arg21[%c8_368, %c320_369], %302 {strides = array<i32>} : memref<16x800xf32, #tpu.memory_space<vmem>>, vector<3x32xf32>,
    %c52_370 = arith.constant 52 : index
    %c0_371 = arith.constant 0 : index
    %304 = vector.load %arg20[%c52_370, %c0_371] : memref<80x32xf32, #tpu.memory_space<vmem>>, vector<3x32xf32>
    %c8_372 = arith.constant 8 : index
    %c352_373 = arith.constant 352 : index
    %305 = vector.load %arg21[%c8_372, %c352_373] : memref<16x800xf32, #tpu.memory_space<vmem>>, vector<3x32xf32>
    tpu.vector_store %arg21[%c8_372, %c352_373], %304 {strides = array<i32>} : memref<16x800xf32, #tpu.memory_space<vmem>>, vector<3x32xf32>,
    %c44 = arith.constant 44 : index
    %c0_374 = arith.constant 0 : index
    %306 = vector.load %arg20[%c44, %c0_374] : memref<80x32xf32, #tpu.memory_space<vmem>>, vector<3x32xf32>
    %c8_375 = arith.constant 8 : index
    %c384_376 = arith.constant 384 : index
    %307 = vector.load %arg21[%c8_375, %c384_376] : memref<16x800xf32, #tpu.memory_space<vmem>>, vector<3x32xf32>
    tpu.vector_store %arg21[%c8_375, %c384_376], %306 {strides = array<i32>} : memref<16x800xf32, #tpu.memory_space<vmem>>, vector<3x32xf32>,
    %c53 = arith.constant 53 : index
    %c0_377 = arith.constant 0 : index
    %308 = vector.load %arg20[%c53, %c0_377] : memref<80x32xf32, #tpu.memory_space<vmem>>, vector<3x32xf32>
    %c8_378 = arith.constant 8 : index
    %c416_379 = arith.constant 416 : index
    %309 = vector.load %arg21[%c8_378, %c416_379] : memref<16x800xf32, #tpu.memory_space<vmem>>, vector<3x32xf32>
    tpu.vector_store %arg21[%c8_378, %c416_379], %308 {strides = array<i32>} : memref<16x800xf32, #tpu.memory_space<vmem>>, vector<3x32xf32>,
    %c45 = arith.constant 45 : index
    %c0_380 = arith.constant 0 : index
    %310 = vector.load %arg20[%c45, %c0_380] : memref<80x32xf32, #tpu.memory_space<vmem>>, vector<3x32xf32>
    %c8_381 = arith.constant 8 : index
    %c448_382 = arith.constant 448 : index
    %311 = vector.load %arg21[%c8_381, %c448_382] : memref<16x800xf32, #tpu.memory_space<vmem>>, vector<3x32xf32>
    tpu.vector_store %arg21[%c8_381, %c448_382], %310 {strides = array<i32>} : memref<16x800xf32, #tpu.memory_space<vmem>>, vector<3x32xf32>,
    %c61_383 = arith.constant 61 : index
    %c0_384 = arith.constant 0 : index
    %312 = vector.load %arg20[%c61_383, %c0_384] : memref<80x32xf32, #tpu.memory_space<vmem>>, vector<3x32xf32>
    %c8_385 = arith.constant 8 : index
    %c480_386 = arith.constant 480 : index
    %313 = vector.load %arg21[%c8_385, %c480_386] : memref<16x800xf32, #tpu.memory_space<vmem>>, vector<3x32xf32>
    tpu.vector_store %arg21[%c8_385, %c480_386], %312 {strides = array<i32>} : memref<16x800xf32, #tpu.memory_space<vmem>>, vector<3x32xf32>,
    %c70_387 = arith.constant 70 : index
    %c0_388 = arith.constant 0 : index
    %314 = vector.load %arg20[%c70_387, %c0_388] : memref<80x32xf32, #tpu.memory_space<vmem>>, vector<3x32xf32>
    %c8_389 = arith.constant 8 : index
    %c512_390 = arith.constant 512 : index
    %315 = vector.load %arg21[%c8_389, %c512_390] : memref<16x800xf32, #tpu.memory_space<vmem>>, vector<3x32xf32>
    tpu.vector_store %arg21[%c8_389, %c512_390], %314 {strides = array<i32>} : memref<16x800xf32, #tpu.memory_space<vmem>>, vector<3x32xf32>,
    %c62_391 = arith.constant 62 : index
    %c0_392 = arith.constant 0 : index
    %316 = vector.load %arg20[%c62_391, %c0_392] : memref<80x32xf32, #tpu.memory_space<vmem>>, vector<3x32xf32>
    %c8_393 = arith.constant 8 : index
    %c544_394 = arith.constant 544 : index
    %317 = vector.load %arg21[%c8_393, %c544_394] : memref<16x800xf32, #tpu.memory_space<vmem>>, vector<3x32xf32>
    tpu.vector_store %arg21[%c8_393, %c544_394], %316 {strides = array<i32>} : memref<16x800xf32, #tpu.memory_space<vmem>>, vector<3x32xf32>,
    %c71 = arith.constant 71 : index
    %c0_395 = arith.constant 0 : index
    %318 = vector.load %arg20[%c71, %c0_395] : memref<80x32xf32, #tpu.memory_space<vmem>>, vector<3x32xf32>
    %c8_396 = arith.constant 8 : index
    %c576_397 = arith.constant 576 : index
    %319 = vector.load %arg21[%c8_396, %c576_397] : memref<16x800xf32, #tpu.memory_space<vmem>>, vector<3x32xf32>
    tpu.vector_store %arg21[%c8_396, %c576_397], %318 {strides = array<i32>} : memref<16x800xf32, #tpu.memory_space<vmem>>, vector<3x32xf32>,
    %c63_398 = arith.constant 63 : index
    %c0_399 = arith.constant 0 : index
    %320 = vector.load %arg20[%c63_398, %c0_399] : memref<80x32xf32, #tpu.memory_space<vmem>>, vector<3x32xf32>
    %c8_400 = arith.constant 8 : index
    %c608_401 = arith.constant 608 : index
    %321 = vector.load %arg21[%c8_400, %c608_401] : memref<16x800xf32, #tpu.memory_space<vmem>>, vector<3x32xf32>
    tpu.vector_store %arg21[%c8_400, %c608_401], %320 {strides = array<i32>} : memref<16x800xf32, #tpu.memory_space<vmem>>, vector<3x32xf32>,
    %c46_402 = arith.constant 46 : index
    %c0_403 = arith.constant 0 : index
    %322 = vector.load %arg20[%c46_402, %c0_403] : memref<80x32xf32, #tpu.memory_space<vmem>>, vector<3x32xf32>
    %c8_404 = arith.constant 8 : index
    %c640_405 = arith.constant 640 : index
    %323 = vector.load %arg21[%c8_404, %c640_405] : memref<16x800xf32, #tpu.memory_space<vmem>>, vector<3x32xf32>
    tpu.vector_store %arg21[%c8_404, %c640_405], %322 {strides = array<i32>} : memref<16x800xf32, #tpu.memory_space<vmem>>, vector<3x32xf32>,
    %c55_406 = arith.constant 55 : index
    %c0_407 = arith.constant 0 : index
    %324 = vector.load %arg20[%c55_406, %c0_407] : memref<80x32xf32, #tpu.memory_space<vmem>>, vector<3x32xf32>
    %c8_408 = arith.constant 8 : index
    %c672_409 = arith.constant 672 : index
    %325 = vector.load %arg21[%c8_408, %c672_409] : memref<16x800xf32, #tpu.memory_space<vmem>>, vector<3x32xf32>
    tpu.vector_store %arg21[%c8_408, %c672_409], %324 {strides = array<i32>} : memref<16x800xf32, #tpu.memory_space<vmem>>, vector<3x32xf32>,
    %c47_410 = arith.constant 47 : index
    %c0_411 = arith.constant 0 : index
    %326 = vector.load %arg20[%c47_410, %c0_411] : memref<80x32xf32, #tpu.memory_space<vmem>>, vector<3x32xf32>
    %c8_412 = arith.constant 8 : index
    %c704_413 = arith.constant 704 : index
    %327 = vector.load %arg21[%c8_412, %c704_413] : memref<16x800xf32, #tpu.memory_space<vmem>>, vector<3x32xf32>
    tpu.vector_store %arg21[%c8_412, %c704_413], %326 {strides = array<i32>} : memref<16x800xf32, #tpu.memory_space<vmem>>, vector<3x32xf32>,
    %c56_414 = arith.constant 56 : index
    %c0_415 = arith.constant 0 : index
    %328 = vector.load %arg20[%c56_414, %c0_415] : memref<80x32xf32, #tpu.memory_space<vmem>>, vector<3x32xf32>
    %c8_416 = arith.constant 8 : index
    %c736_417 = arith.constant 736 : index
    %329 = vector.load %arg21[%c8_416, %c736_417] : memref<16x800xf32, #tpu.memory_space<vmem>>, vector<3x32xf32>
    tpu.vector_store %arg21[%c8_416, %c736_417], %328 {strides = array<i32>} : memref<16x800xf32, #tpu.memory_space<vmem>>, vector<3x32xf32>,
    %c48_418 = arith.constant 48 : index
    %c0_419 = arith.constant 0 : index
    %330 = vector.load %arg20[%c48_418, %c0_419] : memref<80x32xf32, #tpu.memory_space<vmem>>, vector<3x32xf32>
    %c8_420 = arith.constant 8 : index
    %c768_421 = arith.constant 768 : index
    %331 = vector.load %arg21[%c8_420, %c768_421] : memref<16x800xf32, #tpu.memory_space<vmem>>, vector<3x32xf32>
    tpu.vector_store %arg21[%c8_420, %c768_421], %330 {strides = array<i32>} : memref<16x800xf32, #tpu.memory_space<vmem>>, vector<3x32xf32>,
    %c0_422 = arith.constant 0 : index
    %c0_423 = arith.constant 0 : index
    %332 = vector.load %arg21[%c0_422, %c0_423] : memref<16x800xf32, #tpu.memory_space<vmem>>, vector<16x800xf32>
    %c0_424 = arith.constant 0 : index
    %c0_425 = arith.constant 0 : index
    %333 = vector.load %arg10[%c0_424, %c0_425] : memref<800x32xf32, #tpu.memory_space<vmem>>, vector<800x32xf32>
    %cst_426 = arith.constant dense<0.000000e+00> : vector<16x32xf32>
    %334 = tpu.matmul %332, %333, %cst_426 {dimension_numbers = #tpu.dot_dimension_numbers<[1], [0], [0], [1], [0, 0, 1, 1], [], []>} : vector<16x800xf32>, vector<800x32xf32>, vector<16x32xf32> -> vector<16x32xf32>
    %c0_427 = arith.constant 0 : index
    %c0_428 = arith.constant 0 : index
    %335 = vector.load %arg13[%c0_427, %c0_428] : memref<16x1xf32, #tpu.memory_space<vmem>>, vector<16x1xf32>
    %c0_429 = arith.constant 0 : index
    %c0_430 = arith.constant 0 : index
    %336 = vector.load %arg11[%c0_429, %c0_430] : memref<1x32xf32, #tpu.memory_space<vmem>>, vector<1x32xf32>
    %c0_431 = arith.constant 0 : index
    %c0_432 = arith.constant 0 : index
    %337 = vector.load %arg12[%c0_431, %c0_432] : memref<1x32xf32, #tpu.memory_space<vmem>>, vector<1x32xf32>
    %cst_433 = arith.constant 5.000000e-01 : f32
    %338 = vector.broadcast %cst_433 : f32 to vector<16x1xf32>
    %339 = arith.cmpf ogt, %335, %338 : vector<16x1xf32>
    %cst_434 = arith.constant 0.000000e+00 : f32
    %340 = vector.shape_cast %339 : vector<16x1xi1> to vector<16x1xi1>
    %341 = vector.broadcast %340 : vector<16x1xi1> to vector<16x32xi1>
    %342 = vector.broadcast %cst_434 : f32 to vector<16x32xf32>
    %343 = arith.select %341, %334, %342 : vector<16x32xi1>, vector<16x32xf32>
    %cst_435 = arith.constant dense<0.000000e+00> : vector<32xf32>
    %344 = vector.multi_reduction <add>, %343, %cst_435 [0] : vector<16x32xf32> to vector<32xf32>
    %345 = vector.shape_cast %344 : vector<32xf32> to vector<1x32xf32>
    %cst_436 = arith.constant 5.000000e-01 : f32
    %346 = vector.broadcast %cst_436 : f32 to vector<1x32xf32>
    %347 = arith.mulf %345, %346 : vector<1x32xf32>
    %348 = vector.broadcast %347 : vector<1x32xf32> to vector<16x32xf32>
    %349 = arith.subf %334, %348 : vector<16x32xf32>
    %cst_437 = arith.constant 0.000000e+00 : f32
    %350 = vector.shape_cast %339 : vector<16x1xi1> to vector<16x1xi1>
    %351 = vector.broadcast %350 : vector<16x1xi1> to vector<16x32xi1>
    %352 = vector.broadcast %cst_437 : f32 to vector<16x32xf32>
    %353 = arith.select %351, %349, %352 : vector<16x32xi1>, vector<16x32xf32>
    %354 = arith.mulf %353, %353 : vector<16x32xf32>
    %cst_438 = arith.constant dense<0.000000e+00> : vector<32xf32>
    %355 = vector.multi_reduction <add>, %354, %cst_438 [0] : vector<16x32xf32> to vector<32xf32>
    %356 = vector.shape_cast %355 : vector<32xf32> to vector<1x32xf32>
    %cst_439 = arith.constant 5.000000e-01 : f32
    %357 = vector.broadcast %cst_439 : f32 to vector<1x32xf32>
    %358 = arith.mulf %356, %357 : vector<1x32xf32>
    %cst_440 = arith.constant 9.99999974E-6 : f32
    %359 = vector.broadcast %cst_440 : f32 to vector<1x32xf32>
    %360 = arith.addf %358, %359 : vector<1x32xf32>
    %361 = math.rsqrt %360 : vector<1x32xf32>
    %362 = arith.mulf %336, %361 : vector<1x32xf32>
    %363 = arith.mulf %347, %362 : vector<1x32xf32>
    %364 = arith.subf %337, %363 : vector<1x32xf32>
    %365 = vector.broadcast %362 : vector<1x32xf32> to vector<16x32xf32>
    %366 = arith.mulf %334, %365 : vector<16x32xf32>
    %367 = vector.broadcast %364 : vector<1x32xf32> to vector<16x32xf32>
    %368 = arith.addf %366, %367 : vector<16x32xf32>
    %cst_441 = arith.constant 0.000000e+00 : f32
    %369 = vector.broadcast %cst_441 : f32 to vector<16x32xf32>
    %370 = arith.maximumf %368, %369 : vector<16x32xf32>
    %cst_442 = arith.constant 0.000000e+00 : f32
    %371 = vector.broadcast %cst_442 : f32 to vector<8x32xf32>
    %c0_443 = arith.constant 0 : index
    %c0_444 = arith.constant 0 : index
    %372 = vector.load %arg22[%c0_443, %c0_444] : memref<8x32xf32, #tpu.memory_space<vmem>>, vector<8x32xf32>
    tpu.vector_store %arg22[%c0_443, %c0_444], %371 {strides = array<i32>} : memref<8x32xf32, #tpu.memory_space<vmem>>, vector<8x32xf32>,
    %373 = vector.extract_strided_slice %370 {offsets = [0, 0], sizes = [1, 32], strides = [1, 1]} : vector<16x32xf32> to vector<1x32xf32>
    %c0_445 = arith.constant 0 : index
    %c0_446 = arith.constant 0 : index
    %374 = vector.load %arg22[%c0_445, %c0_446] : memref<8x32xf32, #tpu.memory_space<vmem>>, vector<1x32xf32>
    tpu.vector_store %arg22[%c0_445, %c0_446], %373 {strides = array<i32>} : memref<8x32xf32, #tpu.memory_space<vmem>>, vector<1x32xf32>,
    %375 = vector.extract_strided_slice %370 {offsets = [8, 0], sizes = [1, 32], strides = [1, 1]} : vector<16x32xf32> to vector<1x32xf32>
    %c1_447 = arith.constant 1 : index
    %c0_448 = arith.constant 0 : index
    %376 = vector.load %arg22[%c1_447, %c0_448] : memref<8x32xf32, #tpu.memory_space<vmem>>, vector<1x32xf32>
    tpu.vector_store %arg22[%c1_447, %c0_448], %375 {strides = array<i32>} : memref<8x32xf32, #tpu.memory_space<vmem>>, vector<1x32xf32>,
    %c0_449 = arith.constant 0 : index
    %c0_450 = arith.constant 0 : index
    %377 = vector.load %arg22[%c0_449, %c0_450] : memref<8x32xf32, #tpu.memory_space<vmem>>, vector<8x32xf32>
    %c0_451 = arith.constant 0 : index
    %c0_452 = arith.constant 0 : index
    %378 = vector.load %arg14[%c0_451, %c0_452] : memref<32x4xf32, #tpu.memory_space<vmem>>, vector<32x4xf32>
    %cst_453 = arith.constant dense<0.000000e+00> : vector<8x4xf32>
    %379 = tpu.matmul %377, %378, %cst_453 {dimension_numbers = #tpu.dot_dimension_numbers<[1], [0], [0], [1], [0, 0, 1, 1], [], []>} : vector<8x32xf32>, vector<32x4xf32>, vector<8x4xf32> -> vector<8x4xf32>
    %c0_454 = arith.constant 0 : index
    %c0_455 = arith.constant 0 : index
    %380 = vector.load %arg15[%c0_454, %c0_455] : memref<1x4xf32, #tpu.memory_space<vmem>>, vector<1x4xf32>
    %381 = vector.broadcast %380 : vector<1x4xf32> to vector<8x4xf32>
    %382 = arith.addf %379, %381 : vector<8x4xf32>
    %383 = vector.extract_strided_slice %382 {offsets = [0, 0], sizes = [2, 4], strides = [1, 1]} : vector<8x4xf32> to vector<2x4xf32>
    %c0_456 = arith.constant 0 : index
    %c0_457 = arith.constant 0 : index
    %384 = vector.load %arg16[%c0_456, %c0_457] : memref<2x4xf32, #tpu.memory_space<vmem>>, vector<2x4xf32>
    tpu.vector_store %arg16[%c0_456, %c0_457], %383 {strides = array<i32>} : memref<2x4xf32, #tpu.memory_space<vmem>>, vector<2x4xf32>,
    return
  }
  func.func @transform_0(%arg0: i32) -> (i32, i32) {
    %c0_i32 = arith.constant 0 : i32
    %c0_i32_0 = arith.constant 0 : i32
    %c0_i32_1 = arith.constant 0 : i32
    return %c0_i32, %c0_i32_0 : i32, i32
  }
  func.func @transform_1(%arg0: i32) -> (i32, i32) {
    %c0_i32 = arith.constant 0 : i32
    %c0_i32_0 = arith.constant 0 : i32
    %c0_i32_1 = arith.constant 0 : i32
    return %c0_i32, %c0_i32_0 : i32, i32
  }
  func.func @transform_2(%arg0: i32) -> (i32, i32) {
    %c0_i32 = arith.constant 0 : i32
    %c0_i32_0 = arith.constant 0 : i32
    %c0_i32_1 = arith.constant 0 : i32
    return %c0_i32, %c0_i32_0 : i32, i32
  }
  func.func @transform_3(%arg0: i32) -> (i32, i32) {
    %c0_i32 = arith.constant 0 : i32
    %c0_i32_0 = arith.constant 0 : i32
    %c0_i32_1 = arith.constant 0 : i32
    return %c0_i32, %c0_i32_0 : i32, i32
  }
  func.func @transform_4(%arg0: i32) -> (i32, i32) {
    %c0_i32 = arith.constant 0 : i32
    %c0_i32_0 = arith.constant 0 : i32
    %c0_i32_1 = arith.constant 0 : i32
    return %c0_i32, %c0_i32_0 : i32, i32
  }
  func.func @transform_5(%arg0: i32) -> (i32, i32) {
    %c0_i32 = arith.constant 0 : i32
    %c0_i32_0 = arith.constant 0 : i32
    %c0_i32_1 = arith.constant 0 : i32
    return %c0_i32, %c0_i32_0 : i32, i32
  }
  func.func @transform_6(%arg0: i32) -> (i32, i32) {
    %c0_i32 = arith.constant 0 : i32
    %c0_i32_0 = arith.constant 0 : i32
    %c0_i32_1 = arith.constant 0 : i32
    return %c0_i32, %c0_i32_0 : i32, i32
  }
  func.func @transform_7(%arg0: i32) -> (i32, i32) {
    %c0_i32 = arith.constant 0 : i32
    %c0_i32_0 = arith.constant 0 : i32
    %c0_i32_1 = arith.constant 0 : i32
    return %c0_i32, %c0_i32_0 : i32, i32
  }
  func.func @transform_8(%arg0: i32) -> (i32, i32) {
    %c0_i32 = arith.constant 0 : i32
    %c0_i32_0 = arith.constant 0 : i32
    %c0_i32_1 = arith.constant 0 : i32
    return %c0_i32, %c0_i32_0 : i32, i32
  }
  func.func @transform_9(%arg0: i32) -> (i32, i32) {
    %c0_i32 = arith.constant 0 : i32
    %c0_i32_0 = arith.constant 0 : i32
    %c0_i32_1 = arith.constant 0 : i32
    return %c0_i32, %c0_i32_0 : i32, i32
  }
  func.func @transform_10(%arg0: i32) -> (i32, i32) {
    %c0_i32 = arith.constant 0 : i32
    %c0_i32_0 = arith.constant 0 : i32
    %c0_i32_1 = arith.constant 0 : i32
    return %c0_i32, %c0_i32_0 : i32, i32
  }
  func.func @transform_11(%arg0: i32) -> (i32, i32) {
    %c0_i32 = arith.constant 0 : i32
    %c0_i32_0 = arith.constant 0 : i32
    %c0_i32_1 = arith.constant 0 : i32
    return %c0_i32, %c0_i32_0 : i32, i32
  }
  func.func @transform_12(%arg0: i32) -> (i32, i32) {
    %c0_i32 = arith.constant 0 : i32
    %c0_i32_0 = arith.constant 0 : i32
    %c0_i32_1 = arith.constant 0 : i32
    return %c0_i32, %c0_i32_0 : i32, i32
  }
  func.func @transform_13(%arg0: i32) -> (i32, i32) {
    %c0_i32 = arith.constant 0 : i32
    %c0_i32_0 = arith.constant 0 : i32
    %c0_i32_1 = arith.constant 0 : i32
    return %c0_i32, %c0_i32_0 : i32, i32
  }
  func.func @transform_14(%arg0: i32) -> (i32, i32) {
    %c0_i32 = arith.constant 0 : i32
    %c0_i32_0 = arith.constant 0 : i32
    %c0_i32_1 = arith.constant 0 : i32
    return %c0_i32, %c0_i32_0 : i32, i32
  }
  func.func @transform_15(%arg0: i32) -> (i32, i32) {
    %c0_i32 = arith.constant 0 : i32
    %c0_i32_0 = arith.constant 0 : i32
    %c0_i32_1 = arith.constant 0 : i32
    return %c0_i32, %c0_i32_0 : i32, i32
  }
}

</mosaic_0001>

<llo_original>
// kernel: dqn_forward.1
$region0: #{dqn_forward.1}
  #allocation0 [shape = 'u32[]', space=smem, size = 0x4, offset = 0x4, fixed_abs, tag = 'smem constant byte address 0x4 - core index']
  #allocation1 [shape = 'u32[144,128]{1,0:T(1,128)}', space=vmem, size = 0x12000, scoped, tag = 'internal scratch']
  #allocation2 [shape = 'f32[400,16]{1,0:T(8,128)}', space=vmem, size = 0x32000, scoped, tag = 'scratch operand']
  #allocation3 [shape = 'f32[80,400]{1,0:T(8,128)}', space=vmem, size = 0x28000, scoped, tag = 'scratch operand']
  #allocation4 [shape = 'f32[80,32]{1,0:T(8,128)}', space=vmem, size = 0xa000, scoped, tag = 'scratch operand']
  #allocation5 [shape = 'f32[80,32]{1,0:T(8,128)}', space=vmem, size = 0xa000, scoped, tag = 'scratch operand']
  #allocation6 [shape = 'f32[16,800]{1,0:T(8,128)}', space=vmem, size = 0xe000, scoped, tag = 'scratch operand']
  #allocation7 [shape = 'f32[8,32]{1,0:T(8,128)}', space=vmem, size = 0x1000, scoped, tag = 'scratch operand']
  %s0 = inlined_call_operand.vmem [shape: f32[400,80], index: 0, kind: input, shape index: {}]
  %s1 = inlined_call_operand.vmem [shape: f32[80,16], index: 1, kind: input, shape index: {}]
  %s2 = inlined_call_operand.vmem [shape: f32[1,16], index: 2, kind: input, shape index: {}]
  %s3 = inlined_call_operand.vmem [shape: f32[1,16], index: 3, kind: input, shape index: {}]
  %s4 = inlined_call_operand.vmem [shape: f32[400,1], index: 4, kind: input, shape index: {}]
  %s5 = inlined_call_operand.vmem [shape: f32[400,32], index: 5, kind: input, shape index: {}]
  %s6 = inlined_call_operand.vmem [shape: f32[1,32], index: 6, kind: input, shape index: {}]
  %s7 = inlined_call_operand.vmem [shape: f32[1,32], index: 7, kind: input, shape index: {}]
  %s8 = inlined_call_operand.vmem [shape: f32[80,1], index: 8, kind: input, shape index: {}]
  %s9 = inlined_call_operand.vmem [shape: f32[800,32], index: 9, kind: input, shape index: {}]
  %s10 = inlined_call_operand.vmem [shape: f32[1,32], index: 10, kind: input, shape index: {}]
  %s11 = inlined_call_operand.vmem [shape: f32[1,32], index: 11, kind: input, shape index: {}]
  %s12 = inlined_call_operand.vmem [shape: f32[16,1], index: 12, kind: input, shape index: {}]
  %s13 = inlined_call_operand.vmem [shape: f32[32,4], index: 13, kind: input, shape index: {}]
  %s14 = inlined_call_operand.vmem [shape: f32[1,4], index: 14, kind: input, shape index: {}]
  %s15 = inlined_call_operand.hbm [shape: f32[2,4], index: 15, kind: output, shape index: {}]
  %s16 = sld [smem:[#allocation0]]
  $region70: #{dqn_forward.1} parent=0
    _
  %s18 = ssub.s32 1, %s16
  %s19 = scalar_select 0, %s18, %s16
  $region1: #{dqn_forward.1} parent=0
    #allocation8 [shape = 'u8[1024]{0}', space=vmem, size = 0x400, scoped, tag = 'output window, operand 0, single buffered']
    #allocation9 [shape = 's32[1]{0}', space=sflag, size = 0x4, scoped, tag = 'scoped memory for dqn_forward.1']
    %20 = vsyncpa [#allocation9], 0
    // Predicated region
    $region2: #{dqn_forward.1} parent=1 // pred_check
      _
    $region3: #{dqn_forward.1} parent=1 // pred_check_branch
      %22 = sbr.rel (0) target = $region5
    $region4: #{dqn_forward.1} parent=1 // pred_region
      _
    $region5: #{dqn_forward.1} parent=1 // pred_fallthru
      _
    // Predicated region
    $region6: #{dqn_forward.1} parent=1 // pred_check
      _
    $region7: #{dqn_forward.1} parent=1 // pred_check_branch
      %24 = sbr.rel (0) target = $region9
    $region8: #{dqn_forward.1} parent=1 // pred_region
      _
    $region9: #{dqn_forward.1} parent=1 // pred_fallthru
      _
    // Predicated region
    $region10: #{dqn_forward.1} parent=1 // pred_check
      _
    $region11: #{dqn_forward.1} parent=1 // pred_check_branch
      %26 = sbr.rel (0) target = $region13
    $region12: #{dqn_forward.1} parent=1 // pred_region
      _
    $region13: #{dqn_forward.1} parent=1 // pred_fallthru
      _
    // Predicated region
    $region14: #{dqn_forward.1} parent=1 // pred_check
      _
    $region15: #{dqn_forward.1} parent=1 // pred_check_branch
      %28 = sbr.rel (0) target = $region17
    $region16: #{dqn_forward.1} parent=1 // pred_region
      _
    $region17: #{dqn_forward.1} parent=1 // pred_fallthru
      _
    // Predicated region
    $region18: #{dqn_forward.1} parent=1 // pred_check
      _
    $region19: #{dqn_forward.1} parent=1 // pred_check_branch
      %30 = sbr.rel (0) target = $region21
    $region20: #{dqn_forward.1} parent=1 // pred_region
      _
    $region21: #{dqn_forward.1} parent=1 // pred_fallthru
      _
    // Predicated region
    $region22: #{dqn_forward.1} parent=1 // pred_check
      _
    $region23: #{dqn_forward.1} parent=1 // pred_check_branch
      %32 = sbr.rel (0) target = $region25
    $region24: #{dqn_forward.1} parent=1 // pred_region
      _
    $region25: #{dqn_forward.1} parent=1 // pred_fallthru
      _
    // Predicated region
    $region26: #{dqn_forward.1} parent=1 // pred_check
      _
    $region27: #{dqn_forward.1} parent=1 // pred_check_branch
      %34 = sbr.rel (0) target = $region29
    $region28: #{dqn_forward.1} parent=1 // pred_region
      _
    $region29: #{dqn_forward.1} parent=1 // pred_fallthru
      _
    // Predicated region
    $region30: #{dqn_forward.1} parent=1 // pred_check
      _
    $region31: #{dqn_forward.1} parent=1 // pred_check_branch
      %36 = sbr.rel (0) target = $region33
    $region32: #{dqn_forward.1} parent=1 // pred_region
      _
    $region33: #{dqn_forward.1} parent=1 // pred_fallthru
      _
    // Predicated region
    $region34: #{dqn_forward.1} parent=1 // pred_check
      _
    $region35: #{dqn_forward.1} parent=1 // pred_check_branch
      %38 = sbr.rel (0) target = $region37
    $region36: #{dqn_forward.1} parent=1 // pred_region
      _
    $region37: #{dqn_forward.1} parent=1 // pred_fallthru
      _
    // Predicated region
    $region38: #{dqn_forward.1} parent=1 // pred_check
      _
    $region39: #{dqn_forward.1} parent=1 // pred_check_branch
      %40 = sbr.rel (0) target = $region41
    $region40: #{dqn_forward.1} parent=1 // pred_region
      _
    $region41: #{dqn_forward.1} parent=1 // pred_fallthru
      _
    // Predicated region
    $region42: #{dqn_forward.1} parent=1 // pred_check
      _
    $region43: #{dqn_forward.1} parent=1 // pred_check_branch
      %42 = sbr.rel (0) target = $region45
    $region44: #{dqn_forward.1} parent=1 // pred_region
      _
    $region45: #{dqn_forward.1} parent=1 // pred_fallthru
      _
    // Predicated region
    $region46: #{dqn_forward.1} parent=1 // pred_check
      _
    $region47: #{dqn_forward.1} parent=1 // pred_check_branch
      %44 = sbr.rel (0) target = $region49
    $region48: #{dqn_forward.1} parent=1 // pred_region
      _
    $region49: #{dqn_forward.1} parent=1 // pred_fallthru
      _
    // Predicated region
    $region50: #{dqn_forward.1} parent=1 // pred_check
      _
    $region51: #{dqn_forward.1} parent=1 // pred_check_branch
      %46 = sbr.rel (0) target = $region53
    $region52: #{dqn_forward.1} parent=1 // pred_region
      _
    $region53: #{dqn_forward.1} parent=1 // pred_fallthru
      _
    // Predicated region
    $region54: #{dqn_forward.1} parent=1 // pred_check
      _
    $region55: #{dqn_forward.1} parent=1 // pred_check_branch
      %48 = sbr.rel (0) target = $region57
    $region56: #{dqn_forward.1} parent=1 // pred_region
      _
    $region57: #{dqn_forward.1} parent=1 // pred_fallthru
      _
    // Predicated region
    $region58: #{dqn_forward.1} parent=1 // pred_check
      _
    $region59: #{dqn_forward.1} parent=1 // pred_check_branch
      %50 = sbr.rel (0) target = $region61
    $region60: #{dqn_forward.1} parent=1 // pred_region
      _
    $region61: #{dqn_forward.1} parent=1 // pred_fallthru
      _
    %v51 = vld [vmem:[%s0] sm:$0xff]
    %v52 = vld [vmem:[%s0 + $0x8] sm:$0xff]
    %v53 = vld [vmem:[%s0 + $0x10] sm:$0xff]
    %v54 = vld [vmem:[%s0 + $0x18] sm:$0xff]
    %v55 = vld [vmem:[%s0 + $0x20] sm:$0xff]
    %v56 = vld [vmem:[%s0 + $0x28] sm:$0xff]
    %v57 = vld [vmem:[%s0 + $0x30] sm:$0xff]
    %v58 = vld [vmem:[%s0 + $0x38] sm:$0xff]
    %v59 = vld [vmem:[%s0 + $0x40] sm:$0xff]
    %v60 = vld [vmem:[%s0 + $0x48] sm:$0xff]
    %v61 = vld [vmem:[%s0 + $0x50] sm:$0xff]
    %v62 = vld [vmem:[%s0 + $0x58] sm:$0xff]
    %v63 = vld [vmem:[%s0 + $0x60] sm:$0xff]
    %v64 = vld [vmem:[%s0 + $0x68] sm:$0xff]
    %v65 = vld [vmem:[%s0 + $0x70] sm:$0xff]
    %v66 = vld [vmem:[%s0 + $0x78] sm:$0xff]
    %v67 = vld [vmem:[%s0 + $0x80] sm:$0xff]
    %v68 = vld [vmem:[%s0 + $0x88] sm:$0xff]
    %v69 = vld [vmem:[%s0 + $0x90] sm:$0xff]
    %v70 = vld [vmem:[%s0 + $0x98] sm:$0xff]
    %v71 = vld [vmem:[%s0 + $0xa0] sm:$0xff]
    %v72 = vld [vmem:[%s0 + $0xa8] sm:$0xff]
    %v73 = vld [vmem:[%s0 + $0xb0] sm:$0xff]
    %v74 = vld [vmem:[%s0 + $0xb8] sm:$0xff]
    %v75 = vld [vmem:[%s0 + $0xc0] sm:$0xff]
    %v76 = vld [vmem:[%s0 + $0xc8] sm:$0xff]
    %v77 = vld [vmem:[%s0 + $0xd0] sm:$0xff]
    %v78 = vld [vmem:[%s0 + $0xd8] sm:$0xff]
    %v79 = vld [vmem:[%s0 + $0xe0] sm:$0xff]
    %v80 = vld [vmem:[%s0 + $0xe8] sm:$0xff]
    %v81 = vld [vmem:[%s0 + $0xf0] sm:$0xff]
    %v82 = vld [vmem:[%s0 + $0xf8] sm:$0xff]
    %v83 = vld [vmem:[%s0 + $0x100] sm:$0xff]
    %v84 = vld [vmem:[%s0 + $0x108] sm:$0xff]
    %v85 = vld [vmem:[%s0 + $0x110] sm:$0xff]
    %v86 = vld [vmem:[%s0 + $0x118] sm:$0xff]
    %v87 = vld [vmem:[%s0 + $0x120] sm:$0xff]
    %v88 = vld [vmem:[%s0 + $0x128] sm:$0xff]
    %v89 = vld [vmem:[%s0 + $0x130] sm:$0xff]
    %v90 = vld [vmem:[%s0 + $0x138] sm:$0xff]
    %v91 = vld [vmem:[%s0 + $0x140] sm:$0xff]
    %v92 = vld [vmem:[%s0 + $0x148] sm:$0xff]
    %v93 = vld [vmem:[%s0 + $0x150] sm:$0xff]
    %v94 = vld [vmem:[%s0 + $0x158] sm:$0xff]
    %v95 = vld [vmem:[%s0 + $0x160] sm:$0xff]
    %v96 = vld [vmem:[%s0 + $0x168] sm:$0xff]
    %v97 = vld [vmem:[%s0 + $0x170] sm:$0xff]
    %v98 = vld [vmem:[%s0 + $0x178] sm:$0xff]
    %v99 = vld [vmem:[%s0 + $0x180] sm:$0xff]
    %v100 = vld [vmem:[%s0 + $0x188] sm:$0xff]
    %v101 = vld [vmem:[%s1] sm:$0xff]
    %v102 = vld [vmem:[%s1 + $0x8] sm:$0xff]
    %v103 = vld [vmem:[%s1 + $0x10] sm:$0xff]
    %v104 = vld [vmem:[%s1 + $0x18] sm:$0xff]
    %v105 = vld [vmem:[%s1 + $0x20] sm:$0xff]
    %v106 = vld [vmem:[%s1 + $0x28] sm:$0xff]
    %v107 = vld [vmem:[%s1 + $0x30] sm:$0xff]
    %v108 = vld [vmem:[%s1 + $0x38] sm:$0xff]
    %v109 = vld [vmem:[%s1 + $0x40] sm:$0xff]
    %v110 = vld [vmem:[%s1 + $0x48] sm:$0xff]
    %vm111 = vcmask 654336
    %v113 = vsel %vm111, %v51, 0
    %v116 = vsel %vm111, %v52, 0
    %v119 = vsel %vm111, %v53, 0
    %v122 = vsel %vm111, %v54, 0
    %v125 = vsel %vm111, %v55, 0
    %v128 = vsel %vm111, %v56, 0
    %v131 = vsel %vm111, %v57, 0
    %v134 = vsel %vm111, %v58, 0
    %v137 = vsel %vm111, %v59, 0
    %v140 = vsel %vm111, %v60, 0
    %v143 = vsel %vm111, %v61, 0
    %v146 = vsel %vm111, %v62, 0
    %v149 = vsel %vm111, %v63, 0
    %v152 = vsel %vm111, %v64, 0
    %v155 = vsel %vm111, %v65, 0
    %v158 = vsel %vm111, %v66, 0
    %v161 = vsel %vm111, %v67, 0
    %v164 = vsel %vm111, %v68, 0
    %v167 = vsel %vm111, %v69, 0
    %v170 = vsel %vm111, %v70, 0
    %v173 = vsel %vm111, %v71, 0
    %v176 = vsel %vm111, %v72, 0
    %v179 = vsel %vm111, %v73, 0
    %v182 = vsel %vm111, %v74, 0
    %v185 = vsel %vm111, %v75, 0
    %v188 = vsel %vm111, %v76, 0
    %v191 = vsel %vm111, %v77, 0
    %v194 = vsel %vm111, %v78, 0
    %v197 = vsel %vm111, %v79, 0
    %v200 = vsel %vm111, %v80, 0
    %v203 = vsel %vm111, %v81, 0
    %v206 = vsel %vm111, %v82, 0
    %v209 = vsel %vm111, %v83, 0
    %v212 = vsel %vm111, %v84, 0
    %v215 = vsel %vm111, %v85, 0
    %v218 = vsel %vm111, %v86, 0
    %v221 = vsel %vm111, %v87, 0
    %v224 = vsel %vm111, %v88, 0
    %v227 = vsel %vm111, %v89, 0
    %v230 = vsel %vm111, %v90, 0
    %v233 = vsel %vm111, %v91, 0
    %v236 = vsel %vm111, %v92, 0
    %v239 = vsel %vm111, %v93, 0
    %v242 = vsel %vm111, %v94, 0
    %v245 = vsel %vm111, %v95, 0
    %v248 = vsel %vm111, %v96, 0
    %v251 = vsel %vm111, %v97, 0
    %v254 = vsel %vm111, %v98, 0
    %v257 = vsel %vm111, %v99, 0
    %v260 = vsel %vm111, %v100, 0
    %262 = vmatprep.subr.mxu0 0.0
    %263 = vmatpush1.msra.mxu0 %v101
    %264 = vmatprep.subr.mxu0 0.0
    %265 = vmatpush1.msra.mxu0 %v102
    %266 = vmatprep.subr.mxu0 0.0
    %267 = vmatpush1.msra.mxu0 %v103
    %268 = vmatprep.subr.mxu0 0.0
    %269 = vmatpush1.msra.mxu0 %v104
    %270 = vmatprep.subr.mxu0 0.0
    %271 = vmatpush1.msra.mxu0 %v105
    %272 = vmatprep.subr.mxu0 0.0
    %273 = vmatpush1.msra.mxu0 %v106
    %274 = vmatprep.subr.mxu0 0.0
    %275 = vmatpush1.msra.mxu0 %v107
    %276 = vmatprep.subr.mxu0 0.0
    %277 = vmatpush1.msra.mxu0 %v108
    %278 = vmatprep.subr.mxu0 0.0
    %279 = vmatpush1.msra.mxu0 %v109
    %280 = vmatprep.subr.mxu0 0.0
    %281 = vmatpush1.msra.mxu0 %v110
    %282 = vmatprep.subr.mxu0 0.0
    %283 = vmatpush1.msra.mxu0 0.0
    %284 = vmatprep.subr.mxu0 0.0
    %285 = vmatpush1.msra.mxu0 0.0
    %286 = vmatprep.subr.mxu0 0.0
    %287 = vmatpush1.msra.mxu0 0.0
    %288 = vmatprep.subr.mxu0 0.0
    %289 = vmatpush1.msra.mxu0 0.0
    %290 = vmatprep.subr.mxu0 0.0
    %291 = vmatpush1.msra.mxu0 0.0
    %292 = vmatprep.subr.mxu0 0.0
    %293 = vmatpush1.msra.mxu0 0.0
    %294 = vmatprep.subr.mxu0 0.0
    %295 = vmatpush1.msra.mxu0 0.0
    %296 = vmatprep.subr.mxu0 0.0
    %297 = vmatpush1.msra.mxu0 0.0
    %298 = vmatprep.subr.mxu0 0.0
    %299 = vmatpush1.msra.mxu0 0.0
    %300 = vmatprep.subr.mxu0 0.0
    %301 = vmatpush1.msra.mxu0 0.0
    %302 = vmatprep.subr.mxu0 0.0
    %303 = vmatpush1.msra.mxu0 0.0
    %304 = vmatprep.subr.mxu0 0.0
    %305 = vmatpush1.msra.mxu0 0.0
    %306 = vmatprep.subr.mxu0 0.0
    %307 = vmatpush1.msra.mxu0 0.0
    %308 = vmatprep.subr.mxu0 0.0
    %309 = vmatpush1.msra.mxu0 0.0
    %310 = vmatprep.subr.mxu0 0.0
    %311 = vmatpush1.msra.mxu0 0.0
    %312 = vmatprep.subr.mxu0 0.0
    %313 = vmatpush1.msra.mxu0 0.0
    %314 = vmatprep.subr.mxu0 0.0
    %315 = vmatpush1.msra.mxu0 0.0
    %316 = vmatprep.subr.mxu0 0.0
    %317 = vmatpush1.msra.mxu0 0.0
    %318 = vmatprep.subr.mxu0 0.0
    %319 = vmatpush1.msra.mxu0 0.0
    %320 = vmatprep.subr.mxu0 0.0
    %321 = vmatpush1.msra.mxu0 0.0
    %322 = vmatprep.subr.mxu0 0.0
    %323 = vmatpush1.msra.mxu0 0.0
    %324 = vmatprep.subr.mxu0 0.0
    %325 = vmatpush1.msra.mxu0 0.0
    %326 = vmatprep.mubr.f32.mxu0 0.0
    %327 = vmatmul.mubr.f32.gmra.mrb[0].mxu0 %v113
    %v328 = vpop.f32.mrb[0].mxu0
    %v329 = vadd.f32 0.0, %v328
    %v330 = vpop.f32.mrb[0].mxu0
    %331 = vmatprep.mubr.f32.mxu0 0.0
    %332 = vmatmul.mubr.f32.gmra.mrb[0].mxu0 %v116
    %v333 = vpop.f32.mrb[0].mxu0
    %v334 = vadd.f32 0.0, %v333
    %v335 = vpop.f32.mrb[0].mxu0
    %336 = vmatprep.mubr.f32.mxu0 0.0
    %337 = vmatmul.mubr.f32.gmra.mrb[0].mxu0 %v119
    %v338 = vpop.f32.mrb[0].mxu0
    %v339 = vadd.f32 0.0, %v338
    %v340 = vpop.f32.mrb[0].mxu0
    %341 = vmatprep.mubr.f32.mxu0 0.0
    %342 = vmatmul.mubr.f32.gmra.mrb[0].mxu0 %v122
    %v343 = vpop.f32.mrb[0].mxu0
    %v344 = vadd.f32 0.0, %v343
    %v345 = vpop.f32.mrb[0].mxu0
    %346 = vmatprep.mubr.f32.mxu0 0.0
    %347 = vmatmul.mubr.f32.gmra.mrb[0].mxu0 %v125
    %v348 = vpop.f32.mrb[0].mxu0
    %v349 = vadd.f32 0.0, %v348
    %v350 = vpop.f32.mrb[0].mxu0
    %351 = vmatprep.mubr.f32.mxu0 0.0
    %352 = vmatmul.mubr.f32.gmra.mrb[0].mxu0 %v128
    %v353 = vpop.f32.mrb[0].mxu0
    %v354 = vadd.f32 0.0, %v353
    %v355 = vpop.f32.mrb[0].mxu0
    %356 = vmatprep.mubr.f32.mxu0 0.0
    %357 = vmatmul.mubr.f32.gmra.mrb[0].mxu0 %v131
    %v358 = vpop.f32.mrb[0].mxu0
    %v359 = vadd.f32 0.0, %v358
    %v360 = vpop.f32.mrb[0].mxu0
    %361 = vmatprep.mubr.f32.mxu0 0.0
    %362 = vmatmul.mubr.f32.gmra.mrb[0].mxu0 %v134
    %v363 = vpop.f32.mrb[0].mxu0
    %v364 = vadd.f32 0.0, %v363
    %v365 = vpop.f32.mrb[0].mxu0
    %366 = vmatprep.mubr.f32.mxu0 0.0
    %367 = vmatmul.mubr.f32.gmra.mrb[0].mxu0 %v137
    %v368 = vpop.f32.mrb[0].mxu0
    %v369 = vadd.f32 0.0, %v368
    %v370 = vpop.f32.mrb[0].mxu0
    %371 = vmatprep.mubr.f32.mxu0 0.0
    %372 = vmatmul.mubr.f32.gmra.mrb[0].mxu0 %v140
    %v373 = vpop.f32.mrb[0].mxu0
    %v374 = vadd.f32 0.0, %v373
    %v375 = vpop.f32.mrb[0].mxu0
    %376 = vmatprep.mubr.f32.mxu0 0.0
    %377 = vmatmul.mubr.f32.gmra.mrb[0].mxu0 %v143
    %v378 = vpop.f32.mrb[0].mxu0
    %v379 = vadd.f32 0.0, %v378
    %v380 = vpop.f32.mrb[0].mxu0
    %381 = vmatprep.mubr.f32.mxu0 0.0
    %382 = vmatmul.mubr.f32.gmra.mrb[0].mxu0 %v146
    %v383 = vpop.f32.mrb[0].mxu0
    %v384 = vadd.f32 0.0, %v383
    %v385 = vpop.f32.mrb[0].mxu0
    %386 = vmatprep.mubr.f32.mxu0 0.0
    %387 = vmatmul.mubr.f32.gmra.mrb[0].mxu0 %v149
    %v388 = vpop.f32.mrb[0].mxu0
    %v389 = vadd.f32 0.0, %v388
    %v390 = vpop.f32.mrb[0].mxu0
    %391 = vmatprep.mubr.f32.mxu0 0.0
    %392 = vmatmul.mubr.f32.gmra.mrb[0].mxu0 %v152
    %v393 = vpop.f32.mrb[0].mxu0
    %v394 = vadd.f32 0.0, %v393
    %v395 = vpop.f32.mrb[0].mxu0
    %396 = vmatprep.mubr.f32.mxu0 0.0
    %397 = vmatmul.mubr.f32.gmra.mrb[0].mxu0 %v155
    %v398 = vpop.f32.mrb[0].mxu0
    %v399 = vadd.f32 0.0, %v398
    %v400 = vpop.f32.mrb[0].mxu0
    %401 = vmatprep.mubr.f32.mxu0 0.0
    %402 = vmatmul.mubr.f32.gmra.mrb[0].mxu0 %v158
    %v403 = vpop.f32.mrb[0].mxu0
    %v404 = vadd.f32 0.0, %v403
    %v405 = vpop.f32.mrb[0].mxu0
    %406 = vmatprep.mubr.f32.mxu0 0.0
    %407 = vmatmul.mubr.f32.gmra.mrb[0].mxu0 %v161
    %v408 = vpop.f32.mrb[0].mxu0
    %v409 = vadd.f32 0.0, %v408
    %v410 = vpop.f32.mrb[0].mxu0
    %411 = vmatprep.mubr.f32.mxu0 0.0
    %412 = vmatmul.mubr.f32.gmra.mrb[0].mxu0 %v164
    %v413 = vpop.f32.mrb[0].mxu0
    %v414 = vadd.f32 0.0, %v413
    %v415 = vpop.f32.mrb[0].mxu0
    %416 = vmatprep.mubr.f32.mxu0 0.0
    %417 = vmatmul.mubr.f32.gmra.mrb[0].mxu0 %v167
    %v418 = vpop.f32.mrb[0].mxu0
    %v419 = vadd.f32 0.0, %v418
    %v420 = vpop.f32.mrb[0].mxu0
    %421 = vmatprep.mubr.f32.mxu0 0.0
    %422 = vmatmul.mubr.f32.gmra.mrb[0].mxu0 %v170
    %v423 = vpop.f32.mrb[0].mxu0
    %v424 = vadd.f32 0.0, %v423
    %v425 = vpop.f32.mrb[0].mxu0
    %426 = vmatprep.mubr.f32.mxu0 0.0
    %427 = vmatmul.mubr.f32.gmra.mrb[0].mxu0 %v173
    %v428 = vpop.f32.mrb[0].mxu0
    %v429 = vadd.f32 0.0, %v428
    %v430 = vpop.f32.mrb[0].mxu0
    %431 = vmatprep.mubr.f32.mxu0 0.0
    %432 = vmatmul.mubr.f32.gmra.mrb[0].mxu0 %v176
    %v433 = vpop.f32.mrb[0].mxu0
    %v434 = vadd.f32 0.0, %v433
    %v435 = vpop.f32.mrb[0].mxu0
    %436 = vmatprep.mubr.f32.mxu0 0.0
    %437 = vmatmul.mubr.f32.gmra.mrb[0].mxu0 %v179
    %v438 = vpop.f32.mrb[0].mxu0
    %v439 = vadd.f32 0.0, %v438
    %v440 = vpop.f32.mrb[0].mxu0
    %441 = vmatprep.mubr.f32.mxu0 0.0
    %442 = vmatmul.mubr.f32.gmra.mrb[0].mxu0 %v182
    %v443 = vpop.f32.mrb[0].mxu0
    %v444 = vadd.f32 0.0, %v443
    %v445 = vpop.f32.mrb[0].mxu0
    %446 = vmatprep.mubr.f32.mxu0 0.0
    %447 = vmatmul.mubr.f32.gmra.mrb[0].mxu0 %v185
    %v448 = vpop.f32.mrb[0].mxu0
    %v449 = vadd.f32 0.0, %v448
    %v450 = vpop.f32.mrb[0].mxu0
    %451 = vmatprep.mubr.f32.mxu0 0.0
    %452 = vmatmul.mubr.f32.gmra.mrb[0].mxu0 %v188
    %v453 = vpop.f32.mrb[0].mxu0
    %v454 = vadd.f32 0.0, %v453
    %v455 = vpop.f32.mrb[0].mxu0
    %456 = vmatprep.mubr.f32.mxu0 0.0
    %457 = vmatmul.mubr.f32.gmra.mrb[0].mxu0 %v191
    %v458 = vpop.f32.mrb[0].mxu0
    %v459 = vadd.f32 0.0, %v458
    %v460 = vpop.f32.mrb[0].mxu0
    %461 = vmatprep.mubr.f32.mxu0 0.0
    %462 = vmatmul.mubr.f32.gmra.mrb[0].mxu0 %v194
    %v463 = vpop.f32.mrb[0].mxu0
    %v464 = vadd.f32 0.0, %v463
    %v465 = vpop.f32.mrb[0].mxu0
    %466 = vmatprep.mubr.f32.mxu0 0.0
    %467 = vmatmul.mubr.f32.gmra.mrb[0].mxu0 %v197
    %v468 = vpop.f32.mrb[0].mxu0
    %v469 = vadd.f32 0.0, %v468
    %v470 = vpop.f32.mrb[0].mxu0
    %471 = vmatprep.mubr.f32.mxu0 0.0
    %472 = vmatmul.mubr.f32.gmra.mrb[0].mxu0 %v200
    %v473 = vpop.f32.mrb[0].mxu0
    %v474 = vadd.f32 0.0, %v473
    %v475 = vpop.f32.mrb[0].mxu0
    %476 = vmatprep.mubr.f32.mxu0 0.0
    %477 = vmatmul.mubr.f32.gmra.mrb[0].mxu0 %v203
    %v478 = vpop.f32.mrb[0].mxu0
    %v479 = vadd.f32 0.0, %v478
    %v480 = vpop.f32.mrb[0].mxu0
    %481 = vmatprep.mubr.f32.mxu0 0.0
    %482 = vmatmul.mubr.f32.gmra.mrb[0].mxu0 %v206
    %v483 = vpop.f32.mrb[0].mxu0
    %v484 = vadd.f32 0.0, %v483
    %v485 = vpop.f32.mrb[0].mxu0
    %486 = vmatprep.mubr.f32.mxu0 0.0
    %487 = vmatmul.mubr.f32.gmra.mrb[0].mxu0 %v209
    %v488 = vpop.f32.mrb[0].mxu0
    %v489 = vadd.f32 0.0, %v488
    %v490 = vpop.f32.mrb[0].mxu0
    %491 = vmatprep.mubr.f32.mxu0 0.0
    %492 = vmatmul.mubr.f32.gmra.mrb[0].mxu0 %v212
    %v493 = vpop.f32.mrb[0].mxu0
    %v494 = vadd.f32 0.0, %v493
    %v495 = vpop.f32.mrb[0].mxu0
    %496 = vmatprep.mubr.f32.mxu0 0.0
    %497 = vmatmul.mubr.f32.gmra.mrb[0].mxu0 %v215
    %v498 = vpop.f32.mrb[0].mxu0
    %v499 = vadd.f32 0.0, %v498
    %v500 = vpop.f32.mrb[0].mxu0
    %501 = vmatprep.mubr.f32.mxu0 0.0
    %502 = vmatmul.mubr.f32.gmra.mrb[0].mxu0 %v218
    %v503 = vpop.f32.mrb[0].mxu0
    %v504 = vadd.f32 0.0, %v503
    %v505 = vpop.f32.mrb[0].mxu0
    %506 = vmatprep.mubr.f32.mxu0 0.0
    %507 = vmatmul.mubr.f32.gmra.mrb[0].mxu0 %v221
    %v508 = vpop.f32.mrb[0].mxu0
    %v509 = vadd.f32 0.0, %v508
    %v510 = vpop.f32.mrb[0].mxu0
    %511 = vmatprep.mubr.f32.mxu0 0.0
    %512 = vmatmul.mubr.f32.gmra.mrb[0].mxu0 %v224
    %v513 = vpop.f32.mrb[0].mxu0
    %v514 = vadd.f32 0.0, %v513
    %v515 = vpop.f32.mrb[0].mxu0
    %516 = vmatprep.mubr.f32.mxu0 0.0
    %517 = vmatmul.mubr.f32.gmra.mrb[0].mxu0 %v227
    %v518 = vpop.f32.mrb[0].mxu0
    %v519 = vadd.f32 0.0, %v518
    %v520 = vpop.f32.mrb[0].mxu0
    %521 = vmatprep.mubr.f32.mxu0 0.0
    %522 = vmatmul.mubr.f32.gmra.mrb[0].mxu0 %v230
    %v523 = vpop.f32.mrb[0].mxu0
    %v524 = vadd.f32 0.0, %v523
    %v525 = vpop.f32.mrb[0].mxu0
    %526 = vmatprep.mubr.f32.mxu0 0.0
    %527 = vmatmul.mubr.f32.gmra.mrb[0].mxu0 %v233
    %v528 = vpop.f32.mrb[0].mxu0
    %v529 = vadd.f32 0.0, %v528
    %v530 = vpop.f32.mrb[0].mxu0
    %531 = vmatprep.mubr.f32.mxu0 0.0
    %532 = vmatmul.mubr.f32.gmra.mrb[0].mxu0 %v236
    %v533 = vpop.f32.mrb[0].mxu0
    %v534 = vadd.f32 0.0, %v533
    %v535 = vpop.f32.mrb[0].mxu0
    %536 = vmatprep.mubr.f32.mxu0 0.0
    %537 = vmatmul.mubr.f32.gmra.mrb[0].mxu0 %v239
    %v538 = vpop.f32.mrb[0].mxu0
    %v539 = vadd.f32 0.0, %v538
    %v540 = vpop.f32.mrb[0].mxu0
    %541 = vmatprep.mubr.f32.mxu0 0.0
    %542 = vmatmul.mubr.f32.gmra.mrb[0].mxu0 %v242
    %v543 = vpop.f32.mrb[0].mxu0
    %v544 = vadd.f32 0.0, %v543
    %v545 = vpop.f32.mrb[0].mxu0
    %546 = vmatprep.mubr.f32.mxu0 0.0
    %547 = vmatmul.mubr.f32.gmra.mrb[0].mxu0 %v245
    %v548 = vpop.f32.mrb[0].mxu0
    %v549 = vadd.f32 0.0, %v548
    %v550 = vpop.f32.mrb[0].mxu0
    %551 = vmatprep.mubr.f32.mxu0 0.0
    %552 = vmatmul.mubr.f32.gmra.mrb[0].mxu0 %v248
    %v553 = vpop.f32.mrb[0].mxu0
    %v554 = vadd.f32 0.0, %v553
    %v555 = vpop.f32.mrb[0].mxu0
    %556 = vmatprep.mubr.f32.mxu0 0.0
    %557 = vmatmul.mubr.f32.gmra.mrb[0].mxu0 %v251
    %v558 = vpop.f32.mrb[0].mxu0
    %v559 = vadd.f32 0.0, %v558
    %v560 = vpop.f32.mrb[0].mxu0
    %561 = vmatprep.mubr.f32.mxu0 0.0
    %562 = vmatmul.mubr.f32.gmra.mrb[0].mxu0 %v254
    %v563 = vpop.f32.mrb[0].mxu0
    %v564 = vadd.f32 0.0, %v563
    %v565 = vpop.f32.mrb[0].mxu0
    %566 = vmatprep.mubr.f32.mxu0 0.0
    %567 = vmatmul.mubr.f32.gmra.mrb[0].mxu0 %v257
    %v568 = vpop.f32.mrb[0].mxu0
    %v569 = vadd.f32 0.0, %v568
    %v570 = vpop.f32.mrb[0].mxu0
    %571 = vmatprep.mubr.f32.mxu0 0.0
    %572 = vmatmul.mubr.f32.gmra.mrb[0].mxu0 %v260
    %v573 = vpop.f32.mrb[0].mxu0
    %v574 = vadd.f32 0.0, %v573
    %v575 = vpop.f32.mrb[0].mxu0
    %576 = vdwg.mxu0
    %vm577 = vcmask 130048
    %578 = vst.msk [vmem:[#allocation2] sm:$0xff] %vm577, %v329
    %579 = vst.msk [vmem:[#allocation2 + $0x8] sm:$0xff] %vm577, %v334
    %580 = vst.msk [vmem:[#allocation2 + $0x10] sm:$0xff] %vm577, %v339
    %581 = vst.msk [vmem:[#allocation2 + $0x18] sm:$0xff] %vm577, %v344
    %582 = vst.msk [vmem:[#allocation2 + $0x20] sm:$0xff] %vm577, %v349
    %583 = vst.msk [vmem:[#allocation2 + $0x28] sm:$0xff] %vm577, %v354
    %584 = vst.msk [vmem:[#allocation2 + $0x30] sm:$0xff] %vm577, %v359
    %585 = vst.msk [vmem:[#allocation2 + $0x38] sm:$0xff] %vm577, %v364
    %586 = vst.msk [vmem:[#allocation2 + $0x40] sm:$0xff] %vm577, %v369
    %587 = vst.msk [vmem:[#allocation2 + $0x48] sm:$0xff] %vm577, %v374
    %588 = vst.msk [vmem:[#allocation2 + $0x50] sm:$0xff] %vm577, %v379
    %589 = vst.msk [vmem:[#allocation2 + $0x58] sm:$0xff] %vm577, %v384
    %590 = vst.msk [vmem:[#allocation2 + $0x60] sm:$0xff] %vm577, %v389
    %591 = vst.msk [vmem:[#allocation2 + $0x68] sm:$0xff] %vm577, %v394
    %592 = vst.msk [vmem:[#allocation2 + $0x70] sm:$0xff] %vm577, %v399
    %593 = vst.msk [vmem:[#allocation2 + $0x78] sm:$0xff] %vm577, %v404
    %594 = vst.msk [vmem:[#allocation2 + $0x80] sm:$0xff] %vm577, %v409
    %595 = vst.msk [vmem:[#allocation2 + $0x88] sm:$0xff] %vm577, %v414
    %596 = vst.msk [vmem:[#allocation2 + $0x90] sm:$0xff] %vm577, %v419
    %597 = vst.msk [vmem:[#allocation2 + $0x98] sm:$0xff] %vm577, %v424
    %598 = vst.msk [vmem:[#allocation2 + $0xa0] sm:$0xff] %vm577, %v429
    %599 = vst.msk [vmem:[#allocation2 + $0xa8] sm:$0xff] %vm577, %v434
    %600 = vst.msk [vmem:[#allocation2 + $0xb0] sm:$0xff] %vm577, %v439
    %601 = vst.msk [vmem:[#allocation2 + $0xb8] sm:$0xff] %vm577, %v444
    %602 = vst.msk [vmem:[#allocation2 + $0xc0] sm:$0xff] %vm577, %v449
    %603 = vst.msk [vmem:[#allocation2 + $0xc8] sm:$0xff] %vm577, %v454
    %604 = vst.msk [vmem:[#allocation2 + $0xd0] sm:$0xff] %vm577, %v459
    %605 = vst.msk [vmem:[#allocation2 + $0xd8] sm:$0xff] %vm577, %v464
    %606 = vst.msk [vmem:[#allocation2 + $0xe0] sm:$0xff] %vm577, %v469
    %607 = vst.msk [vmem:[#allocation2 + $0xe8] sm:$0xff] %vm577, %v474
    %608 = vst.msk [vmem:[#allocation2 + $0xf0] sm:$0xff] %vm577, %v479
    %609 = vst.msk [vmem:[#allocation2 + $0xf8] sm:$0xff] %vm577, %v484
    %610 = vst.msk [vmem:[#allocation2 + $0x100] sm:$0xff] %vm577, %v489
    %611 = vst.msk [vmem:[#allocation2 + $0x108] sm:$0xff] %vm577, %v494
    %612 = vst.msk [vmem:[#allocation2 + $0x110] sm:$0xff] %vm577, %v499
    %613 = vst.msk [vmem:[#allocation2 + $0x118] sm:$0xff] %vm577, %v504
    %614 = vst.msk [vmem:[#allocation2 + $0x120] sm:$0xff] %vm577, %v509
    %615 = vst.msk [vmem:[#allocation2 + $0x128] sm:$0xff] %vm577, %v514
    %616 = vst.msk [vmem:[#allocation2 + $0x130] sm:$0xff] %vm577, %v519
    %617 = vst.msk [vmem:[#allocation2 + $0x138] sm:$0xff] %vm577, %v524
    %618 = vst.msk [vmem:[#allocation2 + $0x140] sm:$0xff] %vm577, %v529
    %619 = vst.msk [vmem:[#allocation2 + $0x148] sm:$0xff] %vm577, %v534
    %620 = vst.msk [vmem:[#allocation2 + $0x150] sm:$0xff] %vm577, %v539
    %621 = vst.msk [vmem:[#allocation2 + $0x158] sm:$0xff] %vm577, %v544
    %622 = vst.msk [vmem:[#allocation2 + $0x160] sm:$0xff] %vm577, %v549
    %623 = vst.msk [vmem:[#allocation2 + $0x168] sm:$0xff] %vm577, %v554
    %624 = vst.msk [vmem:[#allocation2 + $0x170] sm:$0xff] %vm577, %v559
    %625 = vst.msk [vmem:[#allocation2 + $0x178] sm:$0xff] %vm577, %v564
    %626 = vst.msk [vmem:[#allocation2 + $0x180] sm:$0xff] %vm577, %v569
    %627 = vst.msk [vmem:[#allocation2 + $0x188] sm:$0xff] %vm577, %v574
    %v628 = vld [vmem:[#allocation2] sm:$0xff]
    %v629 = vld [vmem:[#allocation2 + $0x8] sm:$0xff]
    %v630 = vld [vmem:[#allocation2 + $0x10] sm:$0xff]
    %v631 = vld [vmem:[#allocation2 + $0x18] sm:$0xff]
    %v632 = vld [vmem:[#allocation2 + $0x20] sm:$0xff]
    %v633 = vld [vmem:[#allocation2 + $0x28] sm:$0xff]
    %v634 = vld [vmem:[#allocation2 + $0x30] sm:$0xff]
    %v635 = vld [vmem:[#allocation2 + $0x38] sm:$0xff]
    %v636 = vld [vmem:[#allocation2 + $0x40] sm:$0xff]
    %v637 = vld [vmem:[#allocation2 + $0x48] sm:$0xff]
    %v638 = vld [vmem:[#allocation2 + $0x50] sm:$0xff]
    %v639 = vld [vmem:[#allocation2 + $0x58] sm:$0xff]
    %v640 = vld [vmem:[#allocation2 + $0x60] sm:$0xff]
    %v641 = vld [vmem:[#allocation2 + $0x68] sm:$0xff]
    %v642 = vld [vmem:[#allocation2 + $0x70] sm:$0xff]
    %v643 = vld [vmem:[#allocation2 + $0x78] sm:$0xff]
    %v644 = vld [vmem:[#allocation2 + $0x80] sm:$0xff]
    %v645 = vld [vmem:[#allocation2 + $0x88] sm:$0xff]
    %v646 = vld [vmem:[#allocation2 + $0x90] sm:$0xff]
    %v647 = vld [vmem:[#allocation2 + $0x98] sm:$0xff]
    %v648 = vld [vmem:[#allocation2 + $0xa0] sm:$0xff]
    %v649 = vld [vmem:[#allocation2 + $0xa8] sm:$0xff]
    %v650 = vld [vmem:[#allocation2 + $0xb0] sm:$0xff]
    %v651 = vld [vmem:[#allocation2 + $0xb8] sm:$0xff]
    %v652 = vld [vmem:[#allocation2 + $0xc0] sm:$0xff]
    %v653 = vld [vmem:[#allocation2 + $0xc8] sm:$0xff]
    %v654 = vld [vmem:[#allocation2 + $0xd0] sm:$0xff]
    %v655 = vld [vmem:[#allocation2 + $0xd8] sm:$0xff]
    %v656 = vld [vmem:[#allocation2 + $0xe0] sm:$0xff]
    %v657 = vld [vmem:[#allocation2 + $0xe8] sm:$0xff]
    %v658 = vld [vmem:[#allocation2 + $0xf0] sm:$0xff]
    %v659 = vld [vmem:[#allocation2 + $0xf8] sm:$0xff]
    %v660 = vld [vmem:[#allocation2 + $0x100] sm:$0xff]
    %v661 = vld [vmem:[#allocation2 + $0x108] sm:$0xff]
    %v662 = vld [vmem:[#allocation2 + $0x110] sm:$0xff]
    %v663 = vld [vmem:[#allocation2 + $0x118] sm:$0xff]
    %v664 = vld [vmem:[#allocation2 + $0x120] sm:$0xff]
    %v665 = vld [vmem:[#allocation2 + $0x128] sm:$0xff]
    %v666 = vld [vmem:[#allocation2 + $0x130] sm:$0xff]
    %v667 = vld [vmem:[#allocation2 + $0x138] sm:$0xff]
    %v668 = vld [vmem:[#allocation2 + $0x140] sm:$0xff]
    %v669 = vld [vmem:[#allocation2 + $0x148] sm:$0xff]
    %v670 = vld [vmem:[#allocation2 + $0x150] sm:$0xff]
    %v671 = vld [vmem:[#allocation2 + $0x158] sm:$0xff]
    %v672 = vld [vmem:[#allocation2 + $0x160] sm:$0xff]
    %v673 = vld [vmem:[#allocation2 + $0x168] sm:$0xff]
    %v674 = vld [vmem:[#allocation2 + $0x170] sm:$0xff]
    %v675 = vld [vmem:[#allocation2 + $0x178] sm:$0xff]
    %v676 = vld [vmem:[#allocation2 + $0x180] sm:$0xff]
    %v677 = vld [vmem:[#allocation2 + $0x188] sm:$0xff]
    %v678 = vld [vmem:[%s4] sm:$0xff]
    %v679 = vld [vmem:[%s4 + $0x8] sm:$0xff]
    %v680 = vld [vmem:[%s4 + $0x10] sm:$0xff]
    %v681 = vld [vmem:[%s4 + $0x18] sm:$0xff]
    %v682 = vld [vmem:[%s4 + $0x20] sm:$0xff]
    %v683 = vld [vmem:[%s4 + $0x28] sm:$0xff]
    %v684 = vld [vmem:[%s4 + $0x30] sm:$0xff]
    %v685 = vld [vmem:[%s4 + $0x38] sm:$0xff]
    %v686 = vld [vmem:[%s4 + $0x40] sm:$0xff]
    %v687 = vld [vmem:[%s4 + $0x48] sm:$0xff]
    %v688 = vld [vmem:[%s4 + $0x50] sm:$0xff]
    %v689 = vld [vmem:[%s4 + $0x58] sm:$0xff]
    %v690 = vld [vmem:[%s4 + $0x60] sm:$0xff]
    %v691 = vld [vmem:[%s4 + $0x68] sm:$0xff]
    %v692 = vld [vmem:[%s4 + $0x70] sm:$0xff]
    %v693 = vld [vmem:[%s4 + $0x78] sm:$0xff]
    %v694 = vld [vmem:[%s4 + $0x80] sm:$0xff]
    %v695 = vld [vmem:[%s4 + $0x88] sm:$0xff]
    %v696 = vld [vmem:[%s4 + $0x90] sm:$0xff]
    %v697 = vld [vmem:[%s4 + $0x98] sm:$0xff]
    %v698 = vld [vmem:[%s4 + $0xa0] sm:$0xff]
    %v699 = vld [vmem:[%s4 + $0xa8] sm:$0xff]
    %v700 = vld [vmem:[%s4 + $0xb0] sm:$0xff]
    %v701 = vld [vmem:[%s4 + $0xb8] sm:$0xff]
    %v702 = vld [vmem:[%s4 + $0xc0] sm:$0xff]
    %v703 = vld [vmem:[%s4 + $0xc8] sm:$0xff]
    %v704 = vld [vmem:[%s4 + $0xd0] sm:$0xff]
    %v705 = vld [vmem:[%s4 + $0xd8] sm:$0xff]
    %v706 = vld [vmem:[%s4 + $0xe0] sm:$0xff]
    %v707 = vld [vmem:[%s4 + $0xe8] sm:$0xff]
    %v708 = vld [vmem:[%s4 + $0xf0] sm:$0xff]
    %v709 = vld [vmem:[%s4 + $0xf8] sm:$0xff]
    %v710 = vld [vmem:[%s4 + $0x100] sm:$0xff]
    %v711 = vld [vmem:[%s4 + $0x108] sm:$0xff]
    %v712 = vld [vmem:[%s4 + $0x110] sm:$0xff]
    %v713 = vld [vmem:[%s4 + $0x118] sm:$0xff]
    %v714 = vld [vmem:[%s4 + $0x120] sm:$0xff]
    %v715 = vld [vmem:[%s4 + $0x128] sm:$0xff]
    %v716 = vld [vmem:[%s4 + $0x130] sm:$0xff]
    %v717 = vld [vmem:[%s4 + $0x138] sm:$0xff]
    %v718 = vld [vmem:[%s4 + $0x140] sm:$0xff]
    %v719 = vld [vmem:[%s4 + $0x148] sm:$0xff]
    %v720 = vld [vmem:[%s4 + $0x150] sm:$0xff]
    %v721 = vld [vmem:[%s4 + $0x158] sm:$0xff]
    %v722 = vld [vmem:[%s4 + $0x160] sm:$0xff]
    %v723 = vld [vmem:[%s4 + $0x168] sm:$0xff]
    %v724 = vld [vmem:[%s4 + $0x170] sm:$0xff]
    %v725 = vld [vmem:[%s4 + $0x178] sm:$0xff]
    %v726 = vld [vmem:[%s4 + $0x180] sm:$0xff]
    %v727 = vld [vmem:[%s4 + $0x188] sm:$0xff]
    %v728 = vld [vmem:[%s2] sm:$0x1]
    %v729 = vld [vmem:[%s3] sm:$0x1]
    %vm730 = vcmp.gt.f32.partialorder %v678, 0.5
    %vm731 = vcmp.gt.f32.partialorder %v679, 0.5
    %vm732 = vcmp.gt.f32.partialorder %v680, 0.5
    %vm733 = vcmp.gt.f32.partialorder %v681, 0.5
    %vm734 = vcmp.gt.f32.partialorder %v682, 0.5
    %vm735 = vcmp.gt.f32.partialorder %v683, 0.5
    %vm736 = vcmp.gt.f32.partialorder %v684, 0.5
    %vm737 = vcmp.gt.f32.partialorder %v685, 0.5
    %vm738 = vcmp.gt.f32.partialorder %v686, 0.5
    %vm739 = vcmp.gt.f32.partialorder %v687, 0.5
    %vm740 = vcmp.gt.f32.partialorder %v688, 0.5
    %vm741 = vcmp.gt.f32.partialorder %v689, 0.5
    %vm742 = vcmp.gt.f32.partialorder %v690, 0.5
    %vm743 = vcmp.gt.f32.partialorder %v691, 0.5
    %vm744 = vcmp.gt.f32.partialorder %v692, 0.5
    %vm745 = vcmp.gt.f32.partialorder %v693, 0.5
    %vm746 = vcmp.gt.f32.partialorder %v694, 0.5
    %vm747 = vcmp.gt.f32.partialorder %v695, 0.5
    %vm748 = vcmp.gt.f32.partialorder %v696, 0.5
    %vm749 = vcmp.gt.f32.partialorder %v697, 0.5
    %vm750 = vcmp.gt.f32.partialorder %v698, 0.5
    %vm751 = vcmp.gt.f32.partialorder %v699, 0.5
    %vm752 = vcmp.gt.f32.partialorder %v700, 0.5
    %vm753 = vcmp.gt.f32.partialorder %v701, 0.5
    %vm754 = vcmp.gt.f32.partialorder %v702, 0.5
    %vm755 = vcmp.gt.f32.partialorder %v703, 0.5
    %vm756 = vcmp.gt.f32.partialorder %v704, 0.5
    %vm757 = vcmp.gt.f32.partialorder %v705, 0.5
    %vm758 = vcmp.gt.f32.partialorder %v706, 0.5
    %vm759 = vcmp.gt.f32.partialorder %v707, 0.5
    %vm760 = vcmp.gt.f32.partialorder %v708, 0.5
    %vm761 = vcmp.gt.f32.partialorder %v709, 0.5
    %vm762 = vcmp.gt.f32.partialorder %v710, 0.5
    %vm763 = vcmp.gt.f32.partialorder %v711, 0.5
    %vm764 = vcmp.gt.f32.partialorder %v712, 0.5
    %vm765 = vcmp.gt.f32.partialorder %v713, 0.5
    %vm766 = vcmp.gt.f32.partialorder %v714, 0.5
    %vm767 = vcmp.gt.f32.partialorder %v715, 0.5
    %vm768 = vcmp.gt.f32.partialorder %v716, 0.5
    %vm769 = vcmp.gt.f32.partialorder %v717, 0.5
    %vm770 = vcmp.gt.f32.partialorder %v718, 0.5
    %vm771 = vcmp.gt.f32.partialorder %v719, 0.5
    %vm772 = vcmp.gt.f32.partialorder %v720, 0.5
    %vm773 = vcmp.gt.f32.partialorder %v721, 0.5
    %vm774 = vcmp.gt.f32.partialorder %v722, 0.5
    %vm775 = vcmp.gt.f32.partialorder %v723, 0.5
    %vm776 = vcmp.gt.f32.partialorder %v724, 0.5
    %vm777 = vcmp.gt.f32.partialorder %v725, 0.5
    %vm778 = vcmp.gt.f32.partialorder %v726, 0.5
    %vm779 = vcmp.gt.f32.partialorder %v727, 0.5
    %v780 = vsel %vm730, 1, 0
    %v781 = vsel %vm731, 1, 0
    %v782 = vsel %vm732, 1, 0
    %v783 = vsel %vm733, 1, 0
    %v784 = vsel %vm734, 1, 0
    %v785 = vsel %vm735, 1, 0
    %v786 = vsel %vm736, 1, 0
    %v787 = vsel %vm737, 1, 0
    %v788 = vsel %vm738, 1, 0
    %v789 = vsel %vm739, 1, 0
    %v790 = vsel %vm740, 1, 0
    %v791 = vsel %vm741, 1, 0
    %v792 = vsel %vm742, 1, 0
    %v793 = vsel %vm743, 1, 0
    %v794 = vsel %vm744, 1, 0
    %v795 = vsel %vm745, 1, 0
    %v796 = vsel %vm746, 1, 0
    %v797 = vsel %vm747, 1, 0
    %v798 = vsel %vm748, 1, 0
    %v799 = vsel %vm749, 1, 0
    %v800 = vsel %vm750, 1, 0
    %v801 = vsel %vm751, 1, 0
    %v802 = vsel %vm752, 1, 0
    %v803 = vsel %vm753, 1, 0
    %v804 = vsel %vm754, 1, 0
    %v805 = vsel %vm755, 1, 0
    %v806 = vsel %vm756, 1, 0
    %v807 = vsel %vm757, 1, 0
    %v808 = vsel %vm758, 1, 0
    %v809 = vsel %vm759, 1, 0
    %v810 = vsel %vm760, 1, 0
    %v811 = vsel %vm761, 1, 0
    %v812 = vsel %vm762, 1, 0
    %v813 = vsel %vm763, 1, 0
    %v814 = vsel %vm764, 1, 0
    %v815 = vsel %vm765, 1, 0
    %v816 = vsel %vm766, 1, 0
    %v817 = vsel %vm767, 1, 0
    %v818 = vsel %vm768, 1, 0
    %v819 = vsel %vm769, 1, 0
    %v820 = vsel %vm770, 1, 0
    %v821 = vsel %vm771, 1, 0
    %v822 = vsel %vm772, 1, 0
    %v823 = vsel %vm773, 1, 0
    %v824 = vsel %vm774, 1, 0
    %v825 = vsel %vm775, 1, 0
    %v826 = vsel %vm776, 1, 0
    %v827 = vsel %vm777, 1, 0
    %v828 = vsel %vm778, 1, 0
    %v829 = vsel %vm779, 1, 0
    %830 = vset.pattern.permute.xlu0 0
    %831 = vperm.xlu0 %830, %v780
    %v832 = vpop.permute.xlu0 %831
    %833 = vset.pattern.permute.xlu0 0
    %834 = vperm.xlu0 %833, %v781
    %v835 = vpop.permute.xlu0 %834
    %836 = vset.pattern.permute.xlu0 0
    %837 = vperm.xlu0 %836, %v782
    %v838 = vpop.permute.xlu0 %837
    %839 = vset.pattern.permute.xlu0 0
    %840 = vperm.xlu0 %839, %v783
    %v841 = vpop.permute.xlu0 %840
    %842 = vset.pattern.permute.xlu0 0
    %843 = vperm.xlu0 %842, %v784
    %v844 = vpop.permute.xlu0 %843
    %845 = vset.pattern.permute.xlu0 0
    %846 = vperm.xlu0 %845, %v785
    %v847 = vpop.permute.xlu0 %846
    %848 = vset.pattern.permute.xlu0 0
    %849 = vperm.xlu0 %848, %v786
    %v850 = vpop.permute.xlu0 %849
    %851 = vset.pattern.permute.xlu0 0
    %852 = vperm.xlu0 %851, %v787
    %v853 = vpop.permute.xlu0 %852
    %854 = vset.pattern.permute.xlu0 0
    %855 = vperm.xlu0 %854, %v788
    %v856 = vpop.permute.xlu0 %855
    %857 = vset.pattern.permute.xlu0 0
    %858 = vperm.xlu0 %857, %v789
    %v859 = vpop.permute.xlu0 %858
    %860 = vset.pattern.permute.xlu0 0
    %861 = vperm.xlu0 %860, %v790
    %v862 = vpop.permute.xlu0 %861
    %863 = vset.pattern.permute.xlu0 0
    %864 = vperm.xlu0 %863, %v791
    %v865 = vpop.permute.xlu0 %864
    %866 = vset.pattern.permute.xlu0 0
    %867 = vperm.xlu0 %866, %v792
    %v868 = vpop.permute.xlu0 %867
    %869 = vset.pattern.permute.xlu0 0
    %870 = vperm.xlu0 %869, %v793
    %v871 = vpop.permute.xlu0 %870
    %872 = vset.pattern.permute.xlu0 0
    %873 = vperm.xlu0 %872, %v794
    %v874 = vpop.permute.xlu0 %873
    %875 = vset.pattern.permute.xlu0 0
    %876 = vperm.xlu0 %875, %v795
    %v877 = vpop.permute.xlu0 %876
    %878 = vset.pattern.permute.xlu0 0
    %879 = vperm.xlu0 %878, %v796
    %v880 = vpop.permute.xlu0 %879
    %881 = vset.pattern.permute.xlu0 0
    %882 = vperm.xlu0 %881, %v797
    %v883 = vpop.permute.xlu0 %882
    %884 = vset.pattern.permute.xlu0 0
    %885 = vperm.xlu0 %884, %v798
    %v886 = vpop.permute.xlu0 %885
    %887 = vset.pattern.permute.xlu0 0
    %888 = vperm.xlu0 %887, %v799
    %v889 = vpop.permute.xlu0 %888
    %890 = vset.pattern.permute.xlu0 0
    %891 = vperm.xlu0 %890, %v800
    %v892 = vpop.permute.xlu0 %891
    %893 = vset.pattern.permute.xlu0 0
    %894 = vperm.xlu0 %893, %v801
    %v895 = vpop.permute.xlu0 %894
    %896 = vset.pattern.permute.xlu0 0
    %897 = vperm.xlu0 %896, %v802
    %v898 = vpop.permute.xlu0 %897
    %899 = vset.pattern.permute.xlu0 0
    %900 = vperm.xlu0 %899, %v803
    %v901 = vpop.permute.xlu0 %900
    %902 = vset.pattern.permute.xlu0 0
    %903 = vperm.xlu0 %902, %v804
    %v904 = vpop.permute.xlu0 %903
    %905 = vset.pattern.permute.xlu0 0
    %906 = vperm.xlu0 %905, %v805
    %v907 = vpop.permute.xlu0 %906
    %908 = vset.pattern.permute.xlu0 0
    %909 = vperm.xlu0 %908, %v806
    %v910 = vpop.permute.xlu0 %909
    %911 = vset.pattern.permute.xlu0 0
    %912 = vperm.xlu0 %911, %v807
    %v913 = vpop.permute.xlu0 %912
    %914 = vset.pattern.permute.xlu0 0
    %915 = vperm.xlu0 %914, %v808
    %v916 = vpop.permute.xlu0 %915
    %917 = vset.pattern.permute.xlu0 0
    %918 = vperm.xlu0 %917, %v809
    %v919 = vpop.permute.xlu0 %918
    %920 = vset.pattern.permute.xlu0 0
    %921 = vperm.xlu0 %920, %v810
    %v922 = vpop.permute.xlu0 %921
    %923 = vset.pattern.permute.xlu0 0
    %924 = vperm.xlu0 %923, %v811
    %v925 = vpop.permute.xlu0 %924
    %926 = vset.pattern.permute.xlu0 0
    %927 = vperm.xlu0 %926, %v812
    %v928 = vpop.permute.xlu0 %927
    %929 = vset.pattern.permute.xlu0 0
    %930 = vperm.xlu0 %929, %v813
    %v931 = vpop.permute.xlu0 %930
    %932 = vset.pattern.permute.xlu0 0
    %933 = vperm.xlu0 %932, %v814
    %v934 = vpop.permute.xlu0 %933
    %935 = vset.pattern.permute.xlu0 0
    %936 = vperm.xlu0 %935, %v815
    %v937 = vpop.permute.xlu0 %936
    %938 = vset.pattern.permute.xlu0 0
    %939 = vperm.xlu0 %938, %v816
    %v940 = vpop.permute.xlu0 %939
    %941 = vset.pattern.permute.xlu0 0
    %942 = vperm.xlu0 %941, %v817
    %v943 = vpop.permute.xlu0 %942
    %944 = vset.pattern.permute.xlu0 0
    %945 = vperm.xlu0 %944, %v818
    %v946 = vpop.permute.xlu0 %945
    %947 = vset.pattern.permute.xlu0 0
    %948 = vperm.xlu0 %947, %v819
    %v949 = vpop.permute.xlu0 %948
    %950 = vset.pattern.permute.xlu0 0
    %951 = vperm.xlu0 %950, %v820
    %v952 = vpop.permute.xlu0 %951
    %953 = vset.pattern.permute.xlu0 0
    %954 = vperm.xlu0 %953, %v821
    %v955 = vpop.permute.xlu0 %954
    %956 = vset.pattern.permute.xlu0 0
    %957 = vperm.xlu0 %956, %v822
    %v958 = vpop.permute.xlu0 %957
    %959 = vset.pattern.permute.xlu0 0
    %960 = vperm.xlu0 %959, %v823
    %v961 = vpop.permute.xlu0 %960
    %962 = vset.pattern.permute.xlu0 0
    %963 = vperm.xlu0 %962, %v824
    %v964 = vpop.permute.xlu0 %963
    %965 = vset.pattern.permute.xlu0 0
    %966 = vperm.xlu0 %965, %v825
    %v967 = vpop.permute.xlu0 %966
    %968 = vset.pattern.permute.xlu0 0
    %969 = vperm.xlu0 %968, %v826
    %v970 = vpop.permute.xlu0 %969
    %971 = vset.pattern.permute.xlu0 0
    %972 = vperm.xlu0 %971, %v827
    %v973 = vpop.permute.xlu0 %972
    %974 = vset.pattern.permute.xlu0 0
    %975 = vperm.xlu0 %974, %v828
    %v976 = vpop.permute.xlu0 %975
    %977 = vset.pattern.permute.xlu0 0
    %978 = vperm.xlu0 %977, %v829
    %v979 = vpop.permute.xlu0 %978
    %vm980 = vcmp.eq.s32.totalorder %v832, 1
    %vm981 = vcmp.eq.s32.totalorder %v835, 1
    %vm982 = vcmp.eq.s32.totalorder %v838, 1
    %vm983 = vcmp.eq.s32.totalorder %v841, 1
    %vm984 = vcmp.eq.s32.totalorder %v844, 1
    %vm985 = vcmp.eq.s32.totalorder %v847, 1
    %vm986 = vcmp.eq.s32.totalorder %v850, 1
    %vm987 = vcmp.eq.s32.totalorder %v853, 1
    %vm988 = vcmp.eq.s32.totalorder %v856, 1
    %vm989 = vcmp.eq.s32.totalorder %v859, 1
    %vm990 = vcmp.eq.s32.totalorder %v862, 1
    %vm991 = vcmp.eq.s32.totalorder %v865, 1
    %vm992 = vcmp.eq.s32.totalorder %v868, 1
    %vm993 = vcmp.eq.s32.totalorder %v871, 1
    %vm994 = vcmp.eq.s32.totalorder %v874, 1
    %vm995 = vcmp.eq.s32.totalorder %v877, 1
    %vm996 = vcmp.eq.s32.totalorder %v880, 1
    %vm997 = vcmp.eq.s32.totalorder %v883, 1
    %vm998 = vcmp.eq.s32.totalorder %v886, 1
    %vm999 = vcmp.eq.s32.totalorder %v889, 1
    %vm1000 = vcmp.eq.s32.totalorder %v892, 1
    %vm1001 = vcmp.eq.s32.totalorder %v895, 1
    %vm1002 = vcmp.eq.s32.totalorder %v898, 1
    %vm1003 = vcmp.eq.s32.totalorder %v901, 1
    %vm1004 = vcmp.eq.s32.totalorder %v904, 1
    %vm1005 = vcmp.eq.s32.totalorder %v907, 1
    %vm1006 = vcmp.eq.s32.totalorder %v910, 1
    %vm1007 = vcmp.eq.s32.totalorder %v913, 1
    %vm1008 = vcmp.eq.s32.totalorder %v916, 1
    %vm1009 = vcmp.eq.s32.totalorder %v919, 1
    %vm1010 = vcmp.eq.s32.totalorder %v922, 1
    %vm1011 = vcmp.eq.s32.totalorder %v925, 1
    %vm1012 = vcmp.eq.s32.totalorder %v928, 1
    %vm1013 = vcmp.eq.s32.totalorder %v931, 1
    %vm1014 = vcmp.eq.s32.totalorder %v934, 1
    %vm1015 = vcmp.eq.s32.totalorder %v937, 1
    %vm1016 = vcmp.eq.s32.totalorder %v940, 1
    %vm1017 = vcmp.eq.s32.totalorder %v943, 1
    %vm1018 = vcmp.eq.s32.totalorder %v946, 1
    %vm1019 = vcmp.eq.s32.totalorder %v949, 1
    %vm1020 = vcmp.eq.s32.totalorder %v952, 1
    %vm1021 = vcmp.eq.s32.totalorder %v955, 1
    %vm1022 = vcmp.eq.s32.totalorder %v958, 1
    %vm1023 = vcmp.eq.s32.totalorder %v961, 1
    %vm1024 = vcmp.eq.s32.totalorder %v964, 1
    %vm1025 = vcmp.eq.s32.totalorder %v967, 1
    %vm1026 = vcmp.eq.s32.totalorder %v970, 1
    %vm1027 = vcmp.eq.s32.totalorder %v973, 1
    %vm1028 = vcmp.eq.s32.totalorder %v976, 1
    %vm1029 = vcmp.eq.s32.totalorder %v979, 1
    %v1030 = vsel %vm980, %v628, 0.0
    %v1031 = vsel %vm981, %v629, 0.0
    %v1032 = vsel %vm982, %v630, 0.0
    %v1033 = vsel %vm983, %v631, 0.0
    %v1034 = vsel %vm984, %v632, 0.0
    %v1035 = vsel %vm985, %v633, 0.0
    %v1036 = vsel %vm986, %v634, 0.0
    %v1037 = vsel %vm987, %v635, 0.0
    %v1038 = vsel %vm988, %v636, 0.0
    %v1039 = vsel %vm989, %v637, 0.0
    %v1040 = vsel %vm990, %v638, 0.0
    %v1041 = vsel %vm991, %v639, 0.0
    %v1042 = vsel %vm992, %v640, 0.0
    %v1043 = vsel %vm993, %v641, 0.0
    %v1044 = vsel %vm994, %v642, 0.0
    %v1045 = vsel %vm995, %v643, 0.0
    %v1046 = vsel %vm996, %v644, 0.0
    %v1047 = vsel %vm997, %v645, 0.0
    %v1048 = vsel %vm998, %v646, 0.0
    %v1049 = vsel %vm999, %v647, 0.0
    %v1050 = vsel %vm1000, %v648, 0.0
    %v1051 = vsel %vm1001, %v649, 0.0
    %v1052 = vsel %vm1002, %v650, 0.0
    %v1053 = vsel %vm1003, %v651, 0.0
    %v1054 = vsel %vm1004, %v652, 0.0
    %v1055 = vsel %vm1005, %v653, 0.0
    %v1056 = vsel %vm1006, %v654, 0.0
    %v1057 = vsel %vm1007, %v655, 0.0
    %v1058 = vsel %vm1008, %v656, 0.0
    %v1059 = vsel %vm1009, %v657, 0.0
    %v1060 = vsel %vm1010, %v658, 0.0
    %v1061 = vsel %vm1011, %v659, 0.0
    %v1062 = vsel %vm1012, %v660, 0.0
    %v1063 = vsel %vm1013, %v661, 0.0
    %v1064 = vsel %vm1014, %v662, 0.0
    %v1065 = vsel %vm1015, %v663, 0.0
    %v1066 = vsel %vm1016, %v664, 0.0
    %v1067 = vsel %vm1017, %v665, 0.0
    %v1068 = vsel %vm1018, %v666, 0.0
    %v1069 = vsel %vm1019, %v667, 0.0
    %v1070 = vsel %vm1020, %v668, 0.0
    %v1071 = vsel %vm1021, %v669, 0.0
    %v1072 = vsel %vm1022, %v670, 0.0
    %v1073 = vsel %vm1023, %v671, 0.0
    %v1074 = vsel %vm1024, %v672, 0.0
    %v1075 = vsel %vm1025, %v673, 0.0
    %v1076 = vsel %vm1026, %v674, 0.0
    %v1077 = vsel %vm1027, %v675, 0.0
    %v1078 = vsel %vm1028, %v676, 0.0
    %v1079 = vsel %vm1029, %v677, 0.0
    %v1080 = vsel %vm577, %v1030, 0.0
    %v1081 = vsel %vm577, %v1031, 0.0
    %v1082 = vadd.f32 %v1080, %v1081
    %v1083 = vsel %vm577, %v1032, 0.0
    %v1084 = vadd.f32 %v1082, %v1083
    %v1085 = vsel %vm577, %v1033, 0.0
    %v1086 = vadd.f32 %v1084, %v1085
    %v1087 = vsel %vm577, %v1034, 0.0
    %v1088 = vadd.f32 %v1086, %v1087
    %v1089 = vsel %vm577, %v1035, 0.0
    %v1090 = vadd.f32 %v1088, %v1089
    %v1091 = vsel %vm577, %v1036, 0.0
    %v1092 = vadd.f32 %v1090, %v1091
    %v1093 = vsel %vm577, %v1037, 0.0
    %v1094 = vadd.f32 %v1092, %v1093
    %v1095 = vsel %vm577, %v1038, 0.0
    %v1096 = vadd.f32 %v1094, %v1095
    %v1097 = vsel %vm577, %v1039, 0.0
    %v1098 = vadd.f32 %v1096, %v1097
    %v1099 = vsel %vm577, %v1040, 0.0
    %v1100 = vadd.f32 %v1098, %v1099
    %v1101 = vsel %vm577, %v1041, 0.0
    %v1102 = vadd.f32 %v1100, %v1101
    %v1103 = vsel %vm577, %v1042, 0.0
    %v1104 = vadd.f32 %v1102, %v1103
    %v1105 = vsel %vm577, %v1043, 0.0
    %v1106 = vadd.f32 %v1104, %v1105
    %v1107 = vsel %vm577, %v1044, 0.0
    %v1108 = vadd.f32 %v1106, %v1107
    %v1109 = vsel %vm577, %v1045, 0.0
    %v1110 = vadd.f32 %v1108, %v1109
    %v1111 = vsel %vm577, %v1046, 0.0
    %v1112 = vadd.f32 %v1110, %v1111
    %v1113 = vsel %vm577, %v1047, 0.0
    %v1114 = vadd.f32 %v1112, %v1113
    %v1115 = vsel %vm577, %v1048, 0.0
    %v1116 = vadd.f32 %v1114, %v1115
    %v1117 = vsel %vm577, %v1049, 0.0
    %v1118 = vadd.f32 %v1116, %v1117
    %v1119 = vsel %vm577, %v1050, 0.0
    %v1120 = vadd.f32 %v1118, %v1119
    %v1121 = vsel %vm577, %v1051, 0.0
    %v1122 = vadd.f32 %v1120, %v1121
    %v1123 = vsel %vm577, %v1052, 0.0
    %v1124 = vadd.f32 %v1122, %v1123
    %v1125 = vsel %vm577, %v1053, 0.0
    %v1126 = vadd.f32 %v1124, %v1125
    %v1127 = vsel %vm577, %v1054, 0.0
    %v1128 = vadd.f32 %v1126, %v1127
    %v1129 = vsel %vm577, %v1055, 0.0
    %v1130 = vadd.f32 %v1128, %v1129
    %v1131 = vsel %vm577, %v1056, 0.0
    %v1132 = vadd.f32 %v1130, %v1131
    %v1133 = vsel %vm577, %v1057, 0.0
    %v1134 = vadd.f32 %v1132, %v1133
    %v1135 = vsel %vm577, %v1058, 0.0
    %v1136 = vadd.f32 %v1134, %v1135
    %v1137 = vsel %vm577, %v1059, 0.0
    %v1138 = vadd.f32 %v1136, %v1137
    %v1139 = vsel %vm577, %v1060, 0.0
    %v1140 = vadd.f32 %v1138, %v1139
    %v1141 = vsel %vm577, %v1061, 0.0
    %v1142 = vadd.f32 %v1140, %v1141
    %v1143 = vsel %vm577, %v1062, 0.0
    %v1144 = vadd.f32 %v1142, %v1143
    %v1145 = vsel %vm577, %v1063, 0.0
    %v1146 = vadd.f32 %v1144, %v1145
    %v1147 = vsel %vm577, %v1064, 0.0
    %v1148 = vadd.f32 %v1146, %v1147
    %v1149 = vsel %vm577, %v1065, 0.0
    %v1150 = vadd.f32 %v1148, %v1149
    %v1151 = vsel %vm577, %v1066, 0.0
    %v1152 = vadd.f32 %v1150, %v1151
    %v1153 = vsel %vm577, %v1067, 0.0
    %v1154 = vadd.f32 %v1152, %v1153
    %v1155 = vsel %vm577, %v1068, 0.0
    %v1156 = vadd.f32 %v1154, %v1155
    %v1157 = vsel %vm577, %v1069, 0.0
    %v1158 = vadd.f32 %v1156, %v1157
    %v1159 = vsel %vm577, %v1070, 0.0
    %v1160 = vadd.f32 %v1158, %v1159
    %v1161 = vsel %vm577, %v1071, 0.0
    %v1162 = vadd.f32 %v1160, %v1161
    %v1163 = vsel %vm577, %v1072, 0.0
    %v1164 = vadd.f32 %v1162, %v1163
    %v1165 = vsel %vm577, %v1073, 0.0
    %v1166 = vadd.f32 %v1164, %v1165
    %v1167 = vsel %vm577, %v1074, 0.0
    %v1168 = vadd.f32 %v1166, %v1167
    %v1169 = vsel %vm577, %v1075, 0.0
    %v1170 = vadd.f32 %v1168, %v1169
    %v1171 = vsel %vm577, %v1076, 0.0
    %v1172 = vadd.f32 %v1170, %v1171
    %v1173 = vsel %vm577, %v1077, 0.0
    %v1174 = vadd.f32 %v1172, %v1173
    %v1175 = vsel %vm577, %v1078, 0.0
    %v1176 = vadd.f32 %v1174, %v1175
    %v1177 = vsel %vm577, %v1079, 0.0
    %v1178 = vadd.f32 %v1176, %v1177
    %v1179 = vrot.slane %v1178, 4
    %v1180 = vadd.f32 %v1178, %v1179
    %v1181 = vrot.slane %v1180, 2
    %v1182 = vadd.f32 %v1180, %v1181
    %v1183 = vrot.slane %v1182, 1
    %v1184 = vadd.f32 %v1182, %v1183
    %v1185 = vmul.f32 %v1184, 0.0025510204
    %v1186 = vsub.f32 %v628, %v1185
    %v1187 = vsub.f32 %v629, %v1185
    %v1188 = vsub.f32 %v630, %v1185
    %v1189 = vsub.f32 %v631, %v1185
    %v1190 = vsub.f32 %v632, %v1185
    %v1191 = vsub.f32 %v633, %v1185
    %v1192 = vsub.f32 %v634, %v1185
    %v1193 = vsub.f32 %v635, %v1185
    %v1194 = vsub.f32 %v636, %v1185
    %v1195 = vsub.f32 %v637, %v1185
    %v1196 = vsub.f32 %v638, %v1185
    %v1197 = vsub.f32 %v639, %v1185
    %v1198 = vsub.f32 %v640, %v1185
    %v1199 = vsub.f32 %v641, %v1185
    %v1200 = vsub.f32 %v642, %v1185
    %v1201 = vsub.f32 %v643, %v1185
    %v1202 = vsub.f32 %v644, %v1185
    %v1203 = vsub.f32 %v645, %v1185
    %v1204 = vsub.f32 %v646, %v1185
    %v1205 = vsub.f32 %v647, %v1185
    %v1206 = vsub.f32 %v648, %v1185
    %v1207 = vsub.f32 %v649, %v1185
    %v1208 = vsub.f32 %v650, %v1185
    %v1209 = vsub.f32 %v651, %v1185
    %v1210 = vsub.f32 %v652, %v1185
    %v1211 = vsub.f32 %v653, %v1185
    %v1212 = vsub.f32 %v654, %v1185
    %v1213 = vsub.f32 %v655, %v1185
    %v1214 = vsub.f32 %v656, %v1185
    %v1215 = vsub.f32 %v657, %v1185
    %v1216 = vsub.f32 %v658, %v1185
    %v1217 = vsub.f32 %v659, %v1185
    %v1218 = vsub.f32 %v660, %v1185
    %v1219 = vsub.f32 %v661, %v1185
    %v1220 = vsub.f32 %v662, %v1185
    %v1221 = vsub.f32 %v663, %v1185
    %v1222 = vsub.f32 %v664, %v1185
    %v1223 = vsub.f32 %v665, %v1185
    %v1224 = vsub.f32 %v666, %v1185
    %v1225 = vsub.f32 %v667, %v1185
    %v1226 = vsub.f32 %v668, %v1185
    %v1227 = vsub.f32 %v669, %v1185
    %v1228 = vsub.f32 %v670, %v1185
    %v1229 = vsub.f32 %v671, %v1185
    %v1230 = vsub.f32 %v672, %v1185
    %v1231 = vsub.f32 %v673, %v1185
    %v1232 = vsub.f32 %v674, %v1185
    %v1233 = vsub.f32 %v675, %v1185
    %v1234 = vsub.f32 %v676, %v1185
    %v1235 = vsub.f32 %v677, %v1185
    %v1236 = vsel %vm980, %v1186, 0.0
    %v1237 = vsel %vm981, %v1187, 0.0
    %v1238 = vsel %vm982, %v1188, 0.0
    %v1239 = vsel %vm983, %v1189, 0.0
    %v1240 = vsel %vm984, %v1190, 0.0
    %v1241 = vsel %vm985, %v1191, 0.0
    %v1242 = vsel %vm986, %v1192, 0.0
    %v1243 = vsel %vm987, %v1193, 0.0
    %v1244 = vsel %vm988, %v1194, 0.0
    %v1245 = vsel %vm989, %v1195, 0.0
    %v1246 = vsel %vm990, %v1196, 0.0
    %v1247 = vsel %vm991, %v1197, 0.0
    %v1248 = vsel %vm992, %v1198, 0.0
    %v1249 = vsel %vm993, %v1199, 0.0
    %v1250 = vsel %vm994, %v1200, 0.0
    %v1251 = vsel %vm995, %v1201, 0.0
    %v1252 = vsel %vm996, %v1202, 0.0
    %v1253 = vsel %vm997, %v1203, 0.0
    %v1254 = vsel %vm998, %v1204, 0.0
    %v1255 = vsel %vm999, %v1205, 0.0
    %v1256 = vsel %vm1000, %v1206, 0.0
    %v1257 = vsel %vm1001, %v1207, 0.0
    %v1258 = vsel %vm1002, %v1208, 0.0
    %v1259 = vsel %vm1003, %v1209, 0.0
    %v1260 = vsel %vm1004, %v1210, 0.0
    %v1261 = vsel %vm1005, %v1211, 0.0
    %v1262 = vsel %vm1006, %v1212, 0.0
    %v1263 = vsel %vm1007, %v1213, 0.0
    %v1264 = vsel %vm1008, %v1214, 0.0
    %v1265 = vsel %vm1009, %v1215, 0.0
    %v1266 = vsel %vm1010, %v1216, 0.0
    %v1267 = vsel %vm1011, %v1217, 0.0
    %v1268 = vsel %vm1012, %v1218, 0.0
    %v1269 = vsel %vm1013, %v1219, 0.0
    %v1270 = vsel %vm1014, %v1220, 0.0
    %v1271 = vsel %vm1015, %v1221, 0.0
    %v1272 = vsel %vm1016, %v1222, 0.0
    %v1273 = vsel %vm1017, %v1223, 0.0
    %v1274 = vsel %vm1018, %v1224, 0.0
    %v1275 = vsel %vm1019, %v1225, 0.0
    %v1276 = vsel %vm1020, %v1226, 0.0
    %v1277 = vsel %vm1021, %v1227, 0.0
    %v1278 = vsel %vm1022, %v1228, 0.0
    %v1279 = vsel %vm1023, %v1229, 0.0
    %v1280 = vsel %vm1024, %v1230, 0.0
    %v1281 = vsel %vm1025, %v1231, 0.0
    %v1282 = vsel %vm1026, %v1232, 0.0
    %v1283 = vsel %vm1027, %v1233, 0.0
    %v1284 = vsel %vm1028, %v1234, 0.0
    %v1285 = vsel %vm1029, %v1235, 0.0
    %v1286 = vmul.f32 %v1236, %v1236
    %v1287 = vmul.f32 %v1237, %v1237
    %v1288 = vmul.f32 %v1238, %v1238
    %v1289 = vmul.f32 %v1239, %v1239
    %v1290 = vmul.f32 %v1240, %v1240
    %v1291 = vmul.f32 %v1241, %v1241
    %v1292 = vmul.f32 %v1242, %v1242
    %v1293 = vmul.f32 %v1243, %v1243
    %v1294 = vmul.f32 %v1244, %v1244
    %v1295 = vmul.f32 %v1245, %v1245
    %v1296 = vmul.f32 %v1246, %v1246
    %v1297 = vmul.f32 %v1247, %v1247
    %v1298 = vmul.f32 %v1248, %v1248
    %v1299 = vmul.f32 %v1249, %v1249
    %v1300 = vmul.f32 %v1250, %v1250
    %v1301 = vmul.f32 %v1251, %v1251
    %v1302 = vmul.f32 %v1252, %v1252
    %v1303 = vmul.f32 %v1253, %v1253
    %v1304 = vmul.f32 %v1254, %v1254
    %v1305 = vmul.f32 %v1255, %v1255
    %v1306 = vmul.f32 %v1256, %v1256
    %v1307 = vmul.f32 %v1257, %v1257
    %v1308 = vmul.f32 %v1258, %v1258
    %v1309 = vmul.f32 %v1259, %v1259
    %v1310 = vmul.f32 %v1260, %v1260
    %v1311 = vmul.f32 %v1261, %v1261
    %v1312 = vmul.f32 %v1262, %v1262
    %v1313 = vmul.f32 %v1263, %v1263
    %v1314 = vmul.f32 %v1264, %v1264
    %v1315 = vmul.f32 %v1265, %v1265
    %v1316 = vmul.f32 %v1266, %v1266
    %v1317 = vmul.f32 %v1267, %v1267
    %v1318 = vmul.f32 %v1268, %v1268
    %v1319 = vmul.f32 %v1269, %v1269
    %v1320 = vmul.f32 %v1270, %v1270
    %v1321 = vmul.f32 %v1271, %v1271
    %v1322 = vmul.f32 %v1272, %v1272
    %v1323 = vmul.f32 %v1273, %v1273
    %v1324 = vmul.f32 %v1274, %v1274
    %v1325 = vmul.f32 %v1275, %v1275
    %v1326 = vmul.f32 %v1276, %v1276
    %v1327 = vmul.f32 %v1277, %v1277
    %v1328 = vmul.f32 %v1278, %v1278
    %v1329 = vmul.f32 %v1279, %v1279
    %v1330 = vmul.f32 %v1280, %v1280
    %v1331 = vmul.f32 %v1281, %v1281
    %v1332 = vmul.f32 %v1282, %v1282
    %v1333 = vmul.f32 %v1283, %v1283
    %v1334 = vmul.f32 %v1284, %v1284
    %v1335 = vmul.f32 %v1285, %v1285
    %v1336 = vsel %vm577, %v1286, 0.0
    %v1337 = vsel %vm577, %v1287, 0.0
    %v1338 = vadd.f32 %v1336, %v1337
    %v1339 = vsel %vm577, %v1288, 0.0
    %v1340 = vadd.f32 %v1338, %v1339
    %v1341 = vsel %vm577, %v1289, 0.0
    %v1342 = vadd.f32 %v1340, %v1341
    %v1343 = vsel %vm577, %v1290, 0.0
    %v1344 = vadd.f32 %v1342, %v1343
    %v1345 = vsel %vm577, %v1291, 0.0
    %v1346 = vadd.f32 %v1344, %v1345
    %v1347 = vsel %vm577, %v1292, 0.0
    %v1348 = vadd.f32 %v1346, %v1347
    %v1349 = vsel %vm577, %v1293, 0.0
    %v1350 = vadd.f32 %v1348, %v1349
    %v1351 = vsel %vm577, %v1294, 0.0
    %v1352 = vadd.f32 %v1350, %v1351
    %v1353 = vsel %vm577, %v1295, 0.0
    %v1354 = vadd.f32 %v1352, %v1353
    %v1355 = vsel %vm577, %v1296, 0.0
    %v1356 = vadd.f32 %v1354, %v1355
    %v1357 = vsel %vm577, %v1297, 0.0
    %v1358 = vadd.f32 %v1356, %v1357
    %v1359 = vsel %vm577, %v1298, 0.0
    %v1360 = vadd.f32 %v1358, %v1359
    %v1361 = vsel %vm577, %v1299, 0.0
    %v1362 = vadd.f32 %v1360, %v1361
    %v1363 = vsel %vm577, %v1300, 0.0
    %v1364 = vadd.f32 %v1362, %v1363
    %v1365 = vsel %vm577, %v1301, 0.0
    %v1366 = vadd.f32 %v1364, %v1365
    %v1367 = vsel %vm577, %v1302, 0.0
    %v1368 = vadd.f32 %v1366, %v1367
    %v1369 = vsel %vm577, %v1303, 0.0
    %v1370 = vadd.f32 %v1368, %v1369
    %v1371 = vsel %vm577, %v1304, 0.0
    %v1372 = vadd.f32 %v1370, %v1371
    %v1373 = vsel %vm577, %v1305, 0.0
    %v1374 = vadd.f32 %v1372, %v1373
    %v1375 = vsel %vm577, %v1306, 0.0
    %v1376 = vadd.f32 %v1374, %v1375
    %v1377 = vsel %vm577, %v1307, 0.0
    %v1378 = vadd.f32 %v1376, %v1377
    %v1379 = vsel %vm577, %v1308, 0.0
    %v1380 = vadd.f32 %v1378, %v1379
    %v1381 = vsel %vm577, %v1309, 0.0
    %v1382 = vadd.f32 %v1380, %v1381
    %v1383 = vsel %vm577, %v1310, 0.0
    %v1384 = vadd.f32 %v1382, %v1383
    %v1385 = vsel %vm577, %v1311, 0.0
    %v1386 = vadd.f32 %v1384, %v1385
    %v1387 = vsel %vm577, %v1312, 0.0
    %v1388 = vadd.f32 %v1386, %v1387
    %v1389 = vsel %vm577, %v1313, 0.0
    %v1390 = vadd.f32 %v1388, %v1389
    %v1391 = vsel %vm577, %v1314, 0.0
    %v1392 = vadd.f32 %v1390, %v1391
    %v1393 = vsel %vm577, %v1315, 0.0
    %v1394 = vadd.f32 %v1392, %v1393
    %v1395 = vsel %vm577, %v1316, 0.0
    %v1396 = vadd.f32 %v1394, %v1395
    %v1397 = vsel %vm577, %v1317, 0.0
    %v1398 = vadd.f32 %v1396, %v1397
    %v1399 = vsel %vm577, %v1318, 0.0
    %v1400 = vadd.f32 %v1398, %v1399
    %v1401 = vsel %vm577, %v1319, 0.0
    %v1402 = vadd.f32 %v1400, %v1401
    %v1403 = vsel %vm577, %v1320, 0.0
    %v1404 = vadd.f32 %v1402, %v1403
    %v1405 = vsel %vm577, %v1321, 0.0
    %v1406 = vadd.f32 %v1404, %v1405
    %v1407 = vsel %vm577, %v1322, 0.0
    %v1408 = vadd.f32 %v1406, %v1407
    %v1409 = vsel %vm577, %v1323, 0.0
    %v1410 = vadd.f32 %v1408, %v1409
    %v1411 = vsel %vm577, %v1324, 0.0
    %v1412 = vadd.f32 %v1410, %v1411
    %v1413 = vsel %vm577, %v1325, 0.0
    %v1414 = vadd.f32 %v1412, %v1413
    %v1415 = vsel %vm577, %v1326, 0.0
    %v1416 = vadd.f32 %v1414, %v1415
    %v1417 = vsel %vm577, %v1327, 0.0
    %v1418 = vadd.f32 %v1416, %v1417
    %v1419 = vsel %vm577, %v1328, 0.0
    %v1420 = vadd.f32 %v1418, %v1419
    %v1421 = vsel %vm577, %v1329, 0.0
    %v1422 = vadd.f32 %v1420, %v1421
    %v1423 = vsel %vm577, %v1330, 0.0
    %v1424 = vadd.f32 %v1422, %v1423
    %v1425 = vsel %vm577, %v1331, 0.0
    %v1426 = vadd.f32 %v1424, %v1425
    %v1427 = vsel %vm577, %v1332, 0.0
    %v1428 = vadd.f32 %v1426, %v1427
    %v1429 = vsel %vm577, %v1333, 0.0
    %v1430 = vadd.f32 %v1428, %v1429
    %v1431 = vsel %vm577, %v1334, 0.0
    %v1432 = vadd.f32 %v1430, %v1431
    %v1433 = vsel %vm577, %v1335, 0.0
    %v1434 = vadd.f32 %v1432, %v1433
    %v1435 = vrot.slane %v1434, 4
    %v1436 = vadd.f32 %v1434, %v1435
    %v1437 = vrot.slane %v1436, 2
    %v1438 = vadd.f32 %v1436, %v1437
    %v1439 = vrot.slane %v1438, 1
    %v1440 = vadd.f32 %v1438, %v1439
    %v1441 = vmul.f32 %v1440, 0.0025510204
    %v1442 = vadd.f32 %v1441, 1e-05
    %v1443 = vrsqrt.pop %v1442
    %v1444 = vmul.f32 %v728, %v1443
    %v1445 = vmul.f32 %v1185, %v1444
    %v1446 = vsub.f32 %v729, %v1445
    %v1448 = vlaneseq
    %v1449 = vshrl.u32 %v1448, 7
    %v1450 = vsub.s32 0, %v1449
    %v1451 = vrot.slane %v1444, %v1450
    %v1453 = vmul.f32 %v628, %v1451
    %v1454 = vmul.f32 %v629, %v1451
    %v1455 = vmul.f32 %v630, %v1451
    %v1456 = vmul.f32 %v631, %v1451
    %v1457 = vmul.f32 %v632, %v1451
    %v1458 = vmul.f32 %v633, %v1451
    %v1459 = vmul.f32 %v634, %v1451
    %v1460 = vmul.f32 %v635, %v1451
    %v1461 = vmul.f32 %v636, %v1451
    %v1462 = vmul.f32 %v637, %v1451
    %v1463 = vmul.f32 %v638, %v1451
    %v1464 = vmul.f32 %v639, %v1451
    %v1465 = vmul.f32 %v640, %v1451
    %v1466 = vmul.f32 %v641, %v1451
    %v1467 = vmul.f32 %v642, %v1451
    %v1468 = vmul.f32 %v643, %v1451
    %v1469 = vmul.f32 %v644, %v1451
    %v1470 = vmul.f32 %v645, %v1451
    %v1471 = vmul.f32 %v646, %v1451
    %v1472 = vmul.f32 %v647, %v1451
    %v1473 = vmul.f32 %v648, %v1451
    %v1474 = vmul.f32 %v649, %v1451
    %v1475 = vmul.f32 %v650, %v1451
    %v1476 = vmul.f32 %v651, %v1451
    %v1477 = vmul.f32 %v652, %v1451
    %v1478 = vmul.f32 %v653, %v1451
    %v1479 = vmul.f32 %v654, %v1451
    %v1480 = vmul.f32 %v655, %v1451
    %v1481 = vmul.f32 %v656, %v1451
    %v1482 = vmul.f32 %v657, %v1451
    %v1483 = vmul.f32 %v658, %v1451
    %v1484 = vmul.f32 %v659, %v1451
    %v1485 = vmul.f32 %v660, %v1451
    %v1486 = vmul.f32 %v661, %v1451
    %v1487 = vmul.f32 %v662, %v1451
    %v1488 = vmul.f32 %v663, %v1451
    %v1489 = vmul.f32 %v664, %v1451
    %v1490 = vmul.f32 %v665, %v1451
    %v1491 = vmul.f32 %v666, %v1451
    %v1492 = vmul.f32 %v667, %v1451
    %v1493 = vmul.f32 %v668, %v1451
    %v1494 = vmul.f32 %v669, %v1451
    %v1495 = vmul.f32 %v670, %v1451
    %v1496 = vmul.f32 %v671, %v1451
    %v1497 = vmul.f32 %v672, %v1451
    %v1498 = vmul.f32 %v673, %v1451
    %v1499 = vmul.f32 %v674, %v1451
    %v1500 = vmul.f32 %v675, %v1451
    %v1501 = vmul.f32 %v676, %v1451
    %v1502 = vmul.f32 %v677, %v1451
    %v1504 = vlaneseq
    %v1505 = vshrl.u32 %v1504, 7
    %v1506 = vsub.s32 0, %v1505
    %v1507 = vrot.slane %v1446, %v1506
    %v1509 = vadd.f32 %v1453, %v1507
    %v1510 = vadd.f32 %v1454, %v1507
    %v1511 = vadd.f32 %v1455, %v1507
    %v1512 = vadd.f32 %v1456, %v1507
    %v1513 = vadd.f32 %v1457, %v1507
    %v1514 = vadd.f32 %v1458, %v1507
    %v1515 = vadd.f32 %v1459, %v1507
    %v1516 = vadd.f32 %v1460, %v1507
    %v1517 = vadd.f32 %v1461, %v1507
    %v1518 = vadd.f32 %v1462, %v1507
    %v1519 = vadd.f32 %v1463, %v1507
    %v1520 = vadd.f32 %v1464, %v1507
    %v1521 = vadd.f32 %v1465, %v1507
    %v1522 = vadd.f32 %v1466, %v1507
    %v1523 = vadd.f32 %v1467, %v1507
    %v1524 = vadd.f32 %v1468, %v1507
    %v1525 = vadd.f32 %v1469, %v1507
    %v1526 = vadd.f32 %v1470, %v1507
    %v1527 = vadd.f32 %v1471, %v1507
    %v1528 = vadd.f32 %v1472, %v1507
    %v1529 = vadd.f32 %v1473, %v1507
    %v1530 = vadd.f32 %v1474, %v1507
    %v1531 = vadd.f32 %v1475, %v1507
    %v1532 = vadd.f32 %v1476, %v1507
    %v1533 = vadd.f32 %v1477, %v1507
    %v1534 = vadd.f32 %v1478, %v1507
    %v1535 = vadd.f32 %v1479, %v1507
    %v1536 = vadd.f32 %v1480, %v1507
    %v1537 = vadd.f32 %v1481, %v1507
    %v1538 = vadd.f32 %v1482, %v1507
    %v1539 = vadd.f32 %v1483, %v1507
    %v1540 = vadd.f32 %v1484, %v1507
    %v1541 = vadd.f32 %v1485, %v1507
    %v1542 = vadd.f32 %v1486, %v1507
    %v1543 = vadd.f32 %v1487, %v1507
    %v1544 = vadd.f32 %v1488, %v1507
    %v1545 = vadd.f32 %v1489, %v1507
    %v1546 = vadd.f32 %v1490, %v1507
    %v1547 = vadd.f32 %v1491, %v1507
    %v1548 = vadd.f32 %v1492, %v1507
    %v1549 = vadd.f32 %v1493, %v1507
    %v1550 = vadd.f32 %v1494, %v1507
    %v1551 = vadd.f32 %v1495, %v1507
    %v1552 = vadd.f32 %v1496, %v1507
    %v1553 = vadd.f32 %v1497, %v1507
    %v1554 = vadd.f32 %v1498, %v1507
    %v1555 = vadd.f32 %v1499, %v1507
    %v1556 = vadd.f32 %v1500, %v1507
    %v1557 = vadd.f32 %v1501, %v1507
    %v1558 = vadd.f32 %v1502, %v1507
    %v1559 = vmax.f32 %v1509, 0.0
    %v1560 = vmax.f32 %v1510, 0.0
    %v1561 = vmax.f32 %v1511, 0.0
    %v1562 = vmax.f32 %v1512, 0.0
    %v1563 = vmax.f32 %v1513, 0.0
    %v1564 = vmax.f32 %v1514, 0.0
    %v1565 = vmax.f32 %v1515, 0.0
    %v1566 = vmax.f32 %v1516, 0.0
    %v1567 = vmax.f32 %v1517, 0.0
    %v1568 = vmax.f32 %v1518, 0.0
    %v1569 = vmax.f32 %v1519, 0.0
    %v1570 = vmax.f32 %v1520, 0.0
    %v1571 = vmax.f32 %v1521, 0.0
    %v1572 = vmax.f32 %v1522, 0.0
    %v1573 = vmax.f32 %v1523, 0.0
    %v1574 = vmax.f32 %v1524, 0.0
    %v1575 = vmax.f32 %v1525, 0.0
    %v1576 = vmax.f32 %v1526, 0.0
    %v1577 = vmax.f32 %v1527, 0.0
    %v1578 = vmax.f32 %v1528, 0.0
    %v1579 = vmax.f32 %v1529, 0.0
    %v1580 = vmax.f32 %v1530, 0.0
    %v1581 = vmax.f32 %v1531, 0.0
    %v1582 = vmax.f32 %v1532, 0.0
    %v1583 = vmax.f32 %v1533, 0.0
    %v1584 = vmax.f32 %v1534, 0.0
    %v1585 = vmax.f32 %v1535, 0.0
    %v1586 = vmax.f32 %v1536, 0.0
    %v1587 = vmax.f32 %v1537, 0.0
    %v1588 = vmax.f32 %v1538, 0.0
    %v1589 = vmax.f32 %v1539, 0.0
    %v1590 = vmax.f32 %v1540, 0.0
    %v1591 = vmax.f32 %v1541, 0.0
    %v1592 = vmax.f32 %v1542, 0.0
    %v1593 = vmax.f32 %v1543, 0.0
    %v1594 = vmax.f32 %v1544, 0.0
    %v1595 = vmax.f32 %v1545, 0.0
    %v1596 = vmax.f32 %v1546, 0.0
    %v1597 = vmax.f32 %v1547, 0.0
    %v1598 = vmax.f32 %v1548, 0.0
    %v1599 = vmax.f32 %v1549, 0.0
    %v1600 = vmax.f32 %v1550, 0.0
    %v1601 = vmax.f32 %v1551, 0.0
    %v1602 = vmax.f32 %v1552, 0.0
    %v1603 = vmax.f32 %v1553, 0.0
    %v1604 = vmax.f32 %v1554, 0.0
    %v1605 = vmax.f32 %v1555, 0.0
    %v1606 = vmax.f32 %v1556, 0.0
    %v1607 = vmax.f32 %v1557, 0.0
    %v1608 = vmax.f32 %v1558, 0.0
    %1609 = vst.msk [vmem:[#allocation2] sm:$0xff] %vm577, %v1559
    %1610 = vst.msk [vmem:[#allocation2 + $0x8] sm:$0xff] %vm577, %v1560
    %1611 = vst.msk [vmem:[#allocation2 + $0x10] sm:$0xff] %vm577, %v1561
    %1612 = vst.msk [vmem:[#allocation2 + $0x18] sm:$0xff] %vm577, %v1562
    %1613 = vst.msk [vmem:[#allocation2 + $0x20] sm:$0xff] %vm577, %v1563
    %1614 = vst.msk [vmem:[#allocation2 + $0x28] sm:$0xff] %vm577, %v1564
    %1615 = vst.msk [vmem:[#allocation2 + $0x30] sm:$0xff] %vm577, %v1565
    %1616 = vst.msk [vmem:[#allocation2 + $0x38] sm:$0xff] %vm577, %v1566
    %1617 = vst.msk [vmem:[#allocation2 + $0x40] sm:$0xff] %vm577, %v1567
    %1618 = vst.msk [vmem:[#allocation2 + $0x48] sm:$0xff] %vm577, %v1568
    %1619 = vst.msk [vmem:[#allocation2 + $0x50] sm:$0xff] %vm577, %v1569
    %1620 = vst.msk [vmem:[#allocation2 + $0x58] sm:$0xff] %vm577, %v1570
    %1621 = vst.msk [vmem:[#allocation2 + $0x60] sm:$0xff] %vm577, %v1571
    %1622 = vst.msk [vmem:[#allocation2 + $0x68] sm:$0xff] %vm577, %v1572
    %1623 = vst.msk [vmem:[#allocation2 + $0x70] sm:$0xff] %vm577, %v1573
    %1624 = vst.msk [vmem:[#allocation2 + $0x78] sm:$0xff] %vm577, %v1574
    %1625 = vst.msk [vmem:[#allocation2 + $0x80] sm:$0xff] %vm577, %v1575
    %1626 = vst.msk [vmem:[#allocation2 + $0x88] sm:$0xff] %vm577, %v1576
    %1627 = vst.msk [vmem:[#allocation2 + $0x90] sm:$0xff] %vm577, %v1577
    %1628 = vst.msk [vmem:[#allocation2 + $0x98] sm:$0xff] %vm577, %v1578
    %1629 = vst.msk [vmem:[#allocation2 + $0xa0] sm:$0xff] %vm577, %v1579
    %1630 = vst.msk [vmem:[#allocation2 + $0xa8] sm:$0xff] %vm577, %v1580
    %1631 = vst.msk [vmem:[#allocation2 + $0xb0] sm:$0xff] %vm577, %v1581
    %1632 = vst.msk [vmem:[#allocation2 + $0xb8] sm:$0xff] %vm577, %v1582
    %1633 = vst.msk [vmem:[#allocation2 + $0xc0] sm:$0xff] %vm577, %v1583
    %1634 = vst.msk [vmem:[#allocation2 + $0xc8] sm:$0xff] %vm577, %v1584
    %1635 = vst.msk [vmem:[#allocation2 + $0xd0] sm:$0xff] %vm577, %v1585
    %1636 = vst.msk [vmem:[#allocation2 + $0xd8] sm:$0xff] %vm577, %v1586
    %1637 = vst.msk [vmem:[#allocation2 + $0xe0] sm:$0xff] %vm577, %v1587
    %1638 = vst.msk [vmem:[#allocation2 + $0xe8] sm:$0xff] %vm577, %v1588
    %1639 = vst.msk [vmem:[#allocation2 + $0xf0] sm:$0xff] %vm577, %v1589
    %1640 = vst.msk [vmem:[#allocation2 + $0xf8] sm:$0xff] %vm577, %v1590
    %1641 = vst.msk [vmem:[#allocation2 + $0x100] sm:$0xff] %vm577, %v1591
    %1642 = vst.msk [vmem:[#allocation2 + $0x108] sm:$0xff] %vm577, %v1592
    %1643 = vst.msk [vmem:[#allocation2 + $0x110] sm:$0xff] %vm577, %v1593
    %1644 = vst.msk [vmem:[#allocation2 + $0x118] sm:$0xff] %vm577, %v1594
    %1645 = vst.msk [vmem:[#allocation2 + $0x120] sm:$0xff] %vm577, %v1595
    %1646 = vst.msk [vmem:[#allocation2 + $0x128] sm:$0xff] %vm577, %v1596
    %1647 = vst.msk [vmem:[#allocation2 + $0x130] sm:$0xff] %vm577, %v1597
    %1648 = vst.msk [vmem:[#allocation2 + $0x138] sm:$0xff] %vm577, %v1598
    %1649 = vst.msk [vmem:[#allocation2 + $0x140] sm:$0xff] %vm577, %v1599
    %1650 = vst.msk [vmem:[#allocation2 + $0x148] sm:$0xff] %vm577, %v1600
    %1651 = vst.msk [vmem:[#allocation2 + $0x150] sm:$0xff] %vm577, %v1601
    %1652 = vst.msk [vmem:[#allocation2 + $0x158] sm:$0xff] %vm577, %v1602
    %1653 = vst.msk [vmem:[#allocation2 + $0x160] sm:$0xff] %vm577, %v1603
    %1654 = vst.msk [vmem:[#allocation2 + $0x168] sm:$0xff] %vm577, %v1604
    %1655 = vst.msk [vmem:[#allocation2 + $0x170] sm:$0xff] %vm577, %v1605
    %1656 = vst.msk [vmem:[#allocation2 + $0x178] sm:$0xff] %vm577, %v1606
    %1657 = vst.msk [vmem:[#allocation2 + $0x180] sm:$0xff] %vm577, %v1607
    %1658 = vst.msk [vmem:[#allocation2 + $0x188] sm:$0xff] %vm577, %v1608
    %1659 = vst [vmem:[#allocation3] sm:$0xff] 0.0
    %1660 = vst [vmem:[#allocation3 + $0x8] sm:$0xff] 0.0
    %1661 = vst [vmem:[#allocation3 + $0x10] sm:$0xff] 0.0
    %1662 = vst.msk [vmem:[#allocation3 + $0x18] sm:$0xff] %vm577, 0.0
    %1663 = vst [vmem:[#allocation3 + $0x20] sm:$0xff] 0.0
    %1664 = vst [vmem:[#allocation3 + $0x28] sm:$0xff] 0.0
    %1665 = vst [vmem:[#allocation3 + $0x30] sm:$0xff] 0.0
    %1666 = vst.msk [vmem:[#allocation3 + $0x38] sm:$0xff] %vm577, 0.0
    %1667 = vst [vmem:[#allocation3 + $0x40] sm:$0xff] 0.0
    %1668 = vst [vmem:[#allocation3 + $0x48] sm:$0xff] 0.0
    %1669 = vst [vmem:[#allocation3 + $0x50] sm:$0xff] 0.0
    %1670 = vst.msk [vmem:[#allocation3 + $0x58] sm:$0xff] %vm577, 0.0
    %1671 = vst [vmem:[#allocation3 + $0x60] sm:$0xff] 0.0
    %1672 = vst [vmem:[#allocation3 + $0x68] sm:$0xff] 0.0
    %1673 = vst [vmem:[#allocation3 + $0x70] sm:$0xff] 0.0
    %1674 = vst.msk [vmem:[#allocation3 + $0x78] sm:$0xff] %vm577, 0.0
    %1675 = vst [vmem:[#allocation3 + $0x80] sm:$0xff] 0.0
    %1676 = vst [vmem:[#allocation3 + $0x88] sm:$0xff] 0.0
    %1677 = vst [vmem:[#allocation3 + $0x90] sm:$0xff] 0.0
    %1678 = vst.msk [vmem:[#allocation3 + $0x98] sm:$0xff] %vm577, 0.0
    %1679 = vst [vmem:[#allocation3 + $0xa0] sm:$0xff] 0.0
    %1680 = vst [vmem:[#allocation3 + $0xa8] sm:$0xff] 0.0
    %1681 = vst [vmem:[#allocation3 + $0xb0] sm:$0xff] 0.0
    %1682 = vst.msk [vmem:[#allocation3 + $0xb8] sm:$0xff] %vm577, 0.0
    %1683 = vst [vmem:[#allocation3 + $0xc0] sm:$0xff] 0.0
    %1684 = vst [vmem:[#allocation3 + $0xc8] sm:$0xff] 0.0
    %1685 = vst [vmem:[#allocation3 + $0xd0] sm:$0xff] 0.0
    %1686 = vst.msk [vmem:[#allocation3 + $0xd8] sm:$0xff] %vm577, 0.0
    %1687 = vst [vmem:[#allocation3 + $0xe0] sm:$0xff] 0.0
    %1688 = vst [vmem:[#allocation3 + $0xe8] sm:$0xff] 0.0
    %1689 = vst [vmem:[#allocation3 + $0xf0] sm:$0xff] 0.0
    %1690 = vst.msk [vmem:[#allocation3 + $0xf8] sm:$0xff] %vm577, 0.0
    %1691 = vst [vmem:[#allocation3 + $0x100] sm:$0xff] 0.0
    %1692 = vst [vmem:[#allocation3 + $0x108] sm:$0xff] 0.0
    %1693 = vst [vmem:[#allocation3 + $0x110] sm:$0xff] 0.0
    %1694 = vst.msk [vmem:[#allocation3 + $0x118] sm:$0xff] %vm577, 0.0
    %1695 = vst [vmem:[#allocation3 + $0x120] sm:$0xff] 0.0
    %1696 = vst [vmem:[#allocation3 + $0x128] sm:$0xff] 0.0
    %1697 = vst [vmem:[#allocation3 + $0x130] sm:$0xff] 0.0
    %1698 = vst.msk [vmem:[#allocation3 + $0x138] sm:$0xff] %vm577, 0.0
    %v1699 = vld [vmem:[#allocation2] sm:$0xff]
    %v1700 = vld [vmem:[#allocation2 + $0x8] sm:$0xff]
    %v1701 = vld [vmem:[#allocation2 + $0x10] sm:$0xff]
    %v1702 = vld [vmem:[#allocation2 + $0x18] sm:$0xff]
    %v1703 = vld [vmem:[#allocation2 + $0x20] sm:$0x7]
    %1704 = vst.msk [vmem:[#allocation3] sm:$0xff] %vm577, %v1699
    %1705 = vst.msk [vmem:[#allocation3 + $0x20] sm:$0xff] %vm577, %v1700
    %1706 = vst.msk [vmem:[#allocation3 + $0x40] sm:$0xff] %vm577, %v1701
    %1707 = vst.msk [vmem:[#allocation3 + $0x60] sm:$0xff] %vm577, %v1702
    %vm1708 = vcmask 124928
    %1709 = vst.msk [vmem:[#allocation3 + $0x80] sm:$0x7] %vm1708, %v1703
    %v1710 = vld [vmem:[#allocation2 + $0x31] sm:$0xff]
    %v1711 = vld [vmem:[#allocation2 + $0x39] sm:$0xff]
    %v1712 = vld [vmem:[#allocation2 + $0x41] sm:$0xff]
    %v1713 = vld [vmem:[#allocation2 + $0x49] sm:$0xff]
    %v1714 = vld [vmem:[#allocation2 + $0x51] sm:$0x7]
    %1720 = vrot.lane.b32.xlu0 %v1710, 16
    %v1721 = vpop.permute.xlu0 %1720
    %1722 = vrot.lane.b32.xlu0 %v1711, 16
    %v1723 = vpop.permute.xlu0 %1722
    %1724 = vrot.lane.b32.xlu0 %v1712, 16
    %v1725 = vpop.permute.xlu0 %1724
    %1726 = vrot.lane.b32.xlu0 %v1713, 16
    %v1727 = vpop.permute.xlu0 %1726
    %1728 = vrot.lane.b32.xlu0 %v1714, 16
    %v1729 = vpop.permute.xlu0 %1728
    %vm1735 = vcmask 261248
    %1736 = vst.msk [vmem:[#allocation3] sm:$0xff] %vm1735, %v1721
    %1737 = vst.msk [vmem:[#allocation3 + $0x20] sm:$0xff] %vm1735, %v1723
    %1738 = vst.msk [vmem:[#allocation3 + $0x40] sm:$0xff] %vm1735, %v1725
    %1739 = vst.msk [vmem:[#allocation3 + $0x60] sm:$0xff] %vm1735, %v1727
    %vm1740 = vcmask 256128
    %1741 = vst.msk [vmem:[#allocation3 + $0x80] sm:$0x7] %vm1740, %v1729
    %v1742 = vld [vmem:[#allocation2 + $0x1] sm:$0xff]
    %v1743 = vld [vmem:[#allocation2 + $0x9] sm:$0xff]
    %v1744 = vld [vmem:[#allocation2 + $0x11] sm:$0xff]
    %v1745 = vld [vmem:[#allocation2 + $0x19] sm:$0xff]
    %v1746 = vld [vmem:[#allocation2 + $0x21] sm:$0x7]
    %1752 = vrot.lane.b32.xlu0 %v1742, 32
    %v1753 = vpop.permute.xlu0 %1752
    %1754 = vrot.lane.b32.xlu0 %v1743, 32
    %v1755 = vpop.permute.xlu0 %1754
    %1756 = vrot.lane.b32.xlu0 %v1744, 32
    %v1757 = vpop.permute.xlu0 %1756
    %1758 = vrot.lane.b32.xlu0 %v1745, 32
    %v1759 = vpop.permute.xlu0 %1758
    %1760 = vrot.lane.b32.xlu0 %v1746, 32
    %v1761 = vpop.permute.xlu0 %1760
    %vm1767 = vcmask 392448
    %1768 = vst.msk [vmem:[#allocation3] sm:$0xff] %vm1767, %v1753
    %1769 = vst.msk [vmem:[#allocation3 + $0x20] sm:$0xff] %vm1767, %v1755
    %1770 = vst.msk [vmem:[#allocation3 + $0x40] sm:$0xff] %vm1767, %v1757
    %1771 = vst.msk [vmem:[#allocation3 + $0x60] sm:$0xff] %vm1767, %v1759
    %vm1772 = vcmask 387328
    %1773 = vst.msk [vmem:[#allocation3 + $0x80] sm:$0x7] %vm1772, %v1761
    %v1774 = vld [vmem:[#allocation2 + $0x32] sm:$0xff]
    %v1775 = vld [vmem:[#allocation2 + $0x3a] sm:$0xff]
    %v1776 = vld [vmem:[#allocation2 + $0x42] sm:$0xff]
    %v1777 = vld [vmem:[#allocation2 + $0x4a] sm:$0xff]
    %v1778 = vld [vmem:[#allocation2 + $0x52] sm:$0x7]
    %1784 = vrot.lane.b32.xlu0 %v1774, 48
    %v1785 = vpop.permute.xlu0 %1784
    %1786 = vrot.lane.b32.xlu0 %v1775, 48
    %v1787 = vpop.permute.xlu0 %1786
    %1788 = vrot.lane.b32.xlu0 %v1776, 48
    %v1789 = vpop.permute.xlu0 %1788
    %1790 = vrot.lane.b32.xlu0 %v1777, 48
    %v1791 = vpop.permute.xlu0 %1790
    %1792 = vrot.lane.b32.xlu0 %v1778, 48
    %v1793 = vpop.permute.xlu0 %1792
    %vm1799 = vcmask 523648
    %1800 = vst.msk [vmem:[#allocation3] sm:$0xff] %vm1799, %v1785
    %1801 = vst.msk [vmem:[#allocation3 + $0x20] sm:$0xff] %vm1799, %v1787
    %1802 = vst.msk [vmem:[#allocation3 + $0x40] sm:$0xff] %vm1799, %v1789
    %1803 = vst.msk [vmem:[#allocation3 + $0x60] sm:$0xff] %vm1799, %v1791
    %vm1804 = vcmask 518528
    %1805 = vst.msk [vmem:[#allocation3 + $0x80] sm:$0x7] %vm1804, %v1793
    %v1806 = vld [vmem:[#allocation2 + $0x2] sm:$0xff]
    %v1807 = vld [vmem:[#allocation2 + $0xa] sm:$0xff]
    %v1808 = vld [vmem:[#allocation2 + $0x12] sm:$0xff]
    %v1809 = vld [vmem:[#allocation2 + $0x1a] sm:$0xff]
    %v1810 = vld [vmem:[#allocation2 + $0x22] sm:$0x7]
    %1816 = vrot.lane.b32.xlu0 %v1806, 64
    %v1817 = vpop.permute.xlu0 %1816
    %1818 = vrot.lane.b32.xlu0 %v1807, 64
    %v1819 = vpop.permute.xlu0 %1818
    %1820 = vrot.lane.b32.xlu0 %v1808, 64
    %v1821 = vpop.permute.xlu0 %1820
    %1822 = vrot.lane.b32.xlu0 %v1809, 64
    %v1823 = vpop.permute.xlu0 %1822
    %1824 = vrot.lane.b32.xlu0 %v1810, 64
    %v1825 = vpop.permute.xlu0 %1824
    %vm1831 = vcmask 654848
    %1832 = vst.msk [vmem:[#allocation3] sm:$0xff] %vm1831, %v1817
    %1833 = vst.msk [vmem:[#allocation3 + $0x20] sm:$0xff] %vm1831, %v1819
    %1834 = vst.msk [vmem:[#allocation3 + $0x40] sm:$0xff] %vm1831, %v1821
    %1835 = vst.msk [vmem:[#allocation3 + $0x60] sm:$0xff] %vm1831, %v1823
    %vm1836 = vcmask 649728
    %1837 = vst.msk [vmem:[#allocation3 + $0x80] sm:$0x7] %vm1836, %v1825
    %v1838 = vld [vmem:[#allocation2 + $0x62] sm:$0xff]
    %v1839 = vld [vmem:[#allocation2 + $0x6a] sm:$0xff]
    %v1840 = vld [vmem:[#allocation2 + $0x72] sm:$0xff]
    %v1841 = vld [vmem:[#allocation2 + $0x7a] sm:$0xff]
    %v1842 = vld [vmem:[#allocation2 + $0x82] sm:$0x7]
    %1848 = vrot.lane.b32.xlu0 %v1838, 80
    %v1849 = vpop.permute.xlu0 %1848
    %1850 = vrot.lane.b32.xlu0 %v1839, 80
    %v1851 = vpop.permute.xlu0 %1850
    %1852 = vrot.lane.b32.xlu0 %v1840, 80
    %v1853 = vpop.permute.xlu0 %1852
    %1854 = vrot.lane.b32.xlu0 %v1841, 80
    %v1855 = vpop.permute.xlu0 %1854
    %1856 = vrot.lane.b32.xlu0 %v1842, 80
    %v1857 = vpop.permute.xlu0 %1856
    %vm1863 = vcmask 786048
    %1864 = vst.msk [vmem:[#allocation3] sm:$0xff] %vm1863, %v1849
    %1865 = vst.msk [vmem:[#allocation3 + $0x20] sm:$0xff] %vm1863, %v1851
    %1866 = vst.msk [vmem:[#allocation3 + $0x40] sm:$0xff] %vm1863, %v1853
    %1867 = vst.msk [vmem:[#allocation3 + $0x60] sm:$0xff] %vm1863, %v1855
    %vm1868 = vcmask 780928
    %1869 = vst.msk [vmem:[#allocation3 + $0x80] sm:$0x7] %vm1868, %v1857
    %v1870 = vld [vmem:[#allocation2 + $0x93] sm:$0xff]
    %v1871 = vld [vmem:[#allocation2 + $0x9b] sm:$0xff]
    %v1872 = vld [vmem:[#allocation2 + $0xa3] sm:$0xff]
    %v1873 = vld [vmem:[#allocation2 + $0xab] sm:$0xff]
    %v1874 = vld [vmem:[#allocation2 + $0xb3] sm:$0x7]
    %1880 = vrot.lane.b32.xlu0 %v1870, 96
    %v1881 = vpop.permute.xlu0 %1880
    %1882 = vrot.lane.b32.xlu0 %v1871, 96
    %v1883 = vpop.permute.xlu0 %1882
    %1884 = vrot.lane.b32.xlu0 %v1872, 96
    %v1885 = vpop.permute.xlu0 %1884
    %1886 = vrot.lane.b32.xlu0 %v1873, 96
    %v1887 = vpop.permute.xlu0 %1886
    %1888 = vrot.lane.b32.xlu0 %v1874, 96
    %v1889 = vpop.permute.xlu0 %1888
    %vm1895 = vcmask 917248
    %1896 = vst.msk [vmem:[#allocation3] sm:$0xff] %vm1895, %v1881
    %1897 = vst.msk [vmem:[#allocation3 + $0x20] sm:$0xff] %vm1895, %v1883
    %1898 = vst.msk [vmem:[#allocation3 + $0x40] sm:$0xff] %vm1895, %v1885
    %1899 = vst.msk [vmem:[#allocation3 + $0x60] sm:$0xff] %vm1895, %v1887
    %vm1900 = vcmask 912128
    %1901 = vst.msk [vmem:[#allocation3 + $0x80] sm:$0x7] %vm1900, %v1889
    %v1902 = vld [vmem:[#allocation2 + $0x63] sm:$0xff]
    %v1903 = vld [vmem:[#allocation2 + $0x6b] sm:$0xff]
    %v1904 = vld [vmem:[#allocation2 + $0x73] sm:$0xff]
    %v1905 = vld [vmem:[#allocation2 + $0x7b] sm:$0xff]
    %v1906 = vld [vmem:[#allocation2 + $0x83] sm:$0x7]
    %1912 = vrot.lane.b32.xlu0 %v1902, 112
    %v1913 = vpop.permute.xlu0 %1912
    %1914 = vrot.lane.b32.xlu0 %v1903, 112
    %v1915 = vpop.permute.xlu0 %1914
    %1916 = vrot.lane.b32.xlu0 %v1904, 112
    %v1917 = vpop.permute.xlu0 %1916
    %1918 = vrot.lane.b32.xlu0 %v1905, 112
    %v1919 = vpop.permute.xlu0 %1918
    %1920 = vrot.lane.b32.xlu0 %v1906, 112
    %v1921 = vpop.permute.xlu0 %1920
    %vm1927 = vcmask 1048448
    %1928 = vst.msk [vmem:[#allocation3] sm:$0xff] %vm1927, %v1913
    %1929 = vst.msk [vmem:[#allocation3 + $0x20] sm:$0xff] %vm1927, %v1915
    %1930 = vst.msk [vmem:[#allocation3 + $0x40] sm:$0xff] %vm1927, %v1917
    %1931 = vst.msk [vmem:[#allocation3 + $0x60] sm:$0xff] %vm1927, %v1919
    %vm1932 = vcmask 1043328
    %1933 = vst.msk [vmem:[#allocation3 + $0x80] sm:$0x7] %vm1932, %v1921
    %v1934 = vld [vmem:[#allocation2 + $0x94] sm:$0xff]
    %v1935 = vld [vmem:[#allocation2 + $0x9c] sm:$0xff]
    %v1936 = vld [vmem:[#allocation2 + $0xa4] sm:$0xff]
    %v1937 = vld [vmem:[#allocation2 + $0xac] sm:$0xff]
    %v1938 = vld [vmem:[#allocation2 + $0xb4] sm:$0x7]
    %1939 = vst.msk [vmem:[#allocation3 + $0x8] sm:$0xff] %vm577, %v1934
    %1940 = vst.msk [vmem:[#allocation3 + $0x28] sm:$0xff] %vm577, %v1935
    %1941 = vst.msk [vmem:[#allocation3 + $0x48] sm:$0xff] %vm577, %v1936
    %1942 = vst.msk [vmem:[#allocation3 + $0x68] sm:$0xff] %vm577, %v1937
    %1943 = vst.msk [vmem:[#allocation3 + $0x88] sm:$0x7] %vm1708, %v1938
    %v1944 = vld [vmem:[#allocation2 + $0x64] sm:$0xff]
    %v1945 = vld [vmem:[#allocation2 + $0x6c] sm:$0xff]
    %v1946 = vld [vmem:[#allocation2 + $0x74] sm:$0xff]
    %v1947 = vld [vmem:[#allocation2 + $0x7c] sm:$0xff]
    %v1948 = vld [vmem:[#allocation2 + $0x84] sm:$0x7]
    %1954 = vrot.lane.b32.xlu0 %v1944, 16
    %v1955 = vpop.permute.xlu0 %1954
    %1956 = vrot.lane.b32.xlu0 %v1945, 16
    %v1957 = vpop.permute.xlu0 %1956
    %1958 = vrot.lane.b32.xlu0 %v1946, 16
    %v1959 = vpop.permute.xlu0 %1958
    %1960 = vrot.lane.b32.xlu0 %v1947, 16
    %v1961 = vpop.permute.xlu0 %1960
    %1962 = vrot.lane.b32.xlu0 %v1948, 16
    %v1963 = vpop.permute.xlu0 %1962
    %1969 = vst.msk [vmem:[#allocation3 + $0x8] sm:$0xff] %vm1735, %v1955
    %1970 = vst.msk [vmem:[#allocation3 + $0x28] sm:$0xff] %vm1735, %v1957
    %1971 = vst.msk [vmem:[#allocation3 + $0x48] sm:$0xff] %vm1735, %v1959
    %1972 = vst.msk [vmem:[#allocation3 + $0x68] sm:$0xff] %vm1735, %v1961
    %1973 = vst.msk [vmem:[#allocation3 + $0x88] sm:$0x7] %vm1740, %v1963
    %v1974 = vld [vmem:[#allocation2 + $0x7] sm:$0xff]
    %v1975 = vld [vmem:[#allocation2 + $0xf] sm:$0xff]
    %v1976 = vld [vmem:[#allocation2 + $0x17] sm:$0xff]
    %v1977 = vld [vmem:[#allocation2 + $0x1f] sm:$0xff]
    %v1978 = vld [vmem:[#allocation2 + $0x27] sm:$0x7]
    %1984 = vrot.lane.b32.xlu0 %v1974, 32
    %v1985 = vpop.permute.xlu0 %1984
    %1986 = vrot.lane.b32.xlu0 %v1975, 32
    %v1987 = vpop.permute.xlu0 %1986
    %1988 = vrot.lane.b32.xlu0 %v1976, 32
    %v1989 = vpop.permute.xlu0 %1988
    %1990 = vrot.lane.b32.xlu0 %v1977, 32
    %v1991 = vpop.permute.xlu0 %1990
    %1992 = vrot.lane.b32.xlu0 %v1978, 32
    %v1993 = vpop.permute.xlu0 %1992
    %1999 = vst.msk [vmem:[#allocation3 + $0x8] sm:$0xff] %vm1767, %v1985
    %2000 = vst.msk [vmem:[#allocation3 + $0x28] sm:$0xff] %vm1767, %v1987
    %2001 = vst.msk [vmem:[#allocation3 + $0x48] sm:$0xff] %vm1767, %v1989
    %2002 = vst.msk [vmem:[#allocation3 + $0x68] sm:$0xff] %vm1767, %v1991
    %2003 = vst.msk [vmem:[#allocation3 + $0x88] sm:$0x7] %vm1772, %v1993
    %v2004 = vld [vmem:[#allocation2 + $0x38] sm:$0xff]
    %v2005 = vld [vmem:[#allocation2 + $0x40] sm:$0xff]
    %v2006 = vld [vmem:[#allocation2 + $0x48] sm:$0xff]
    %v2007 = vld [vmem:[#allocation2 + $0x50] sm:$0xff]
    %v2008 = vld [vmem:[#allocation2 + $0x58] sm:$0x7]
    %2014 = vrot.lane.b32.xlu0 %v2004, 48
    %v2015 = vpop.permute.xlu0 %2014
    %2016 = vrot.lane.b32.xlu0 %v2005, 48
    %v2017 = vpop.permute.xlu0 %2016
    %2018 = vrot.lane.b32.xlu0 %v2006, 48
    %v2019 = vpop.permute.xlu0 %2018
    %2020 = vrot.lane.b32.xlu0 %v2007, 48
    %v2021 = vpop.permute.xlu0 %2020
    %2022 = vrot.lane.b32.xlu0 %v2008, 48
    %v2023 = vpop.permute.xlu0 %2022
    %2029 = vst.msk [vmem:[#allocation3 + $0x8] sm:$0xff] %vm1799, %v2015
    %2030 = vst.msk [vmem:[#allocation3 + $0x28] sm:$0xff] %vm1799, %v2017
    %2031 = vst.msk [vmem:[#allocation3 + $0x48] sm:$0xff] %vm1799, %v2019
    %2032 = vst.msk [vmem:[#allocation3 + $0x68] sm:$0xff] %vm1799, %v2021
    %2033 = vst.msk [vmem:[#allocation3 + $0x88] sm:$0x7] %vm1804, %v2023
    %v2034 = vld [vmem:[#allocation2 + $0x8] sm:$0xff]
    %v2035 = vld [vmem:[#allocation2 + $0x10] sm:$0xff]
    %v2036 = vld [vmem:[#allocation2 + $0x18] sm:$0xff]
    %v2037 = vld [vmem:[#allocation2 + $0x20] sm:$0xff]
    %v2038 = vld [vmem:[#allocation2 + $0x28] sm:$0x7]
    %2044 = vrot.lane.b32.xlu0 %v2034, 64
    %v2045 = vpop.permute.xlu0 %2044
    %2046 = vrot.lane.b32.xlu0 %v2035, 64
    %v2047 = vpop.permute.xlu0 %2046
    %2048 = vrot.lane.b32.xlu0 %v2036, 64
    %v2049 = vpop.permute.xlu0 %2048
    %2050 = vrot.lane.b32.xlu0 %v2037, 64
    %v2051 = vpop.permute.xlu0 %2050
    %2052 = vrot.lane.b32.xlu0 %v2038, 64
    %v2053 = vpop.permute.xlu0 %2052
    %2059 = vst.msk [vmem:[#allocation3 + $0x8] sm:$0xff] %vm1831, %v2045
    %2060 = vst.msk [vmem:[#allocation3 + $0x28] sm:$0xff] %vm1831, %v2047
    %2061 = vst.msk [vmem:[#allocation3 + $0x48] sm:$0xff] %vm1831, %v2049
    %2062 = vst.msk [vmem:[#allocation3 + $0x68] sm:$0xff] %vm1831, %v2051
    %2063 = vst.msk [vmem:[#allocation3 + $0x88] sm:$0x7] %vm1836, %v2053
    %v2064 = vld [vmem:[#allocation2 + $0x39] sm:$0xff]
    %v2065 = vld [vmem:[#allocation2 + $0x41] sm:$0xff]
    %v2066 = vld [vmem:[#allocation2 + $0x49] sm:$0xff]
    %v2067 = vld [vmem:[#allocation2 + $0x51] sm:$0xff]
    %v2068 = vld [vmem:[#allocation2 + $0x59] sm:$0x7]
    %2074 = vrot.lane.b32.xlu0 %v2064, 80
    %v2075 = vpop.permute.xlu0 %2074
    %2076 = vrot.lane.b32.xlu0 %v2065, 80
    %v2077 = vpop.permute.xlu0 %2076
    %2078 = vrot.lane.b32.xlu0 %v2066, 80
    %v2079 = vpop.permute.xlu0 %2078
    %2080 = vrot.lane.b32.xlu0 %v2067, 80
    %v2081 = vpop.permute.xlu0 %2080
    %2082 = vrot.lane.b32.xlu0 %v2068, 80
    %v2083 = vpop.permute.xlu0 %2082
    %2089 = vst.msk [vmem:[#allocation3 + $0x8] sm:$0xff] %vm1863, %v2075
    %2090 = vst.msk [vmem:[#allocation3 + $0x28] sm:$0xff] %vm1863, %v2077
    %2091 = vst.msk [vmem:[#allocation3 + $0x48] sm:$0xff] %vm1863, %v2079
    %2092 = vst.msk [vmem:[#allocation3 + $0x68] sm:$0xff] %vm1863, %v2081
    %2093 = vst.msk [vmem:[#allocation3 + $0x88] sm:$0x7] %vm1868, %v2083
    %v2094 = vld [vmem:[#allocation2 + $0x9] sm:$0xff]
    %v2095 = vld [vmem:[#allocation2 + $0x11] sm:$0xff]
    %v2096 = vld [vmem:[#allocation2 + $0x19] sm:$0xff]
    %v2097 = vld [vmem:[#allocation2 + $0x21] sm:$0xff]
    %v2098 = vld [vmem:[#allocation2 + $0x29] sm:$0x7]
    %2104 = vrot.lane.b32.xlu0 %v2094, 96
    %v2105 = vpop.permute.xlu0 %2104
    %2106 = vrot.lane.b32.xlu0 %v2095, 96
    %v2107 = vpop.permute.xlu0 %2106
    %2108 = vrot.lane.b32.xlu0 %v2096, 96
    %v2109 = vpop.permute.xlu0 %2108
    %2110 = vrot.lane.b32.xlu0 %v2097, 96
    %v2111 = vpop.permute.xlu0 %2110
    %2112 = vrot.lane.b32.xlu0 %v2098, 96
    %v2113 = vpop.permute.xlu0 %2112
    %2119 = vst.msk [vmem:[#allocation3 + $0x8] sm:$0xff] %vm1895, %v2105
    %2120 = vst.msk [vmem:[#allocation3 + $0x28] sm:$0xff] %vm1895, %v2107
    %2121 = vst.msk [vmem:[#allocation3 + $0x48] sm:$0xff] %vm1895, %v2109
    %2122 = vst.msk [vmem:[#allocation3 + $0x68] sm:$0xff] %vm1895, %v2111
    %2123 = vst.msk [vmem:[#allocation3 + $0x88] sm:$0x7] %vm1900, %v2113
    %v2124 = vld [vmem:[#allocation2 + $0x69] sm:$0xff]
    %v2125 = vld [vmem:[#allocation2 + $0x71] sm:$0xff]
    %v2126 = vld [vmem:[#allocation2 + $0x79] sm:$0xff]
    %v2127 = vld [vmem:[#allocation2 + $0x81] sm:$0xff]
    %v2128 = vld [vmem:[#allocation2 + $0x89] sm:$0x7]
    %2134 = vrot.lane.b32.xlu0 %v2124, 112
    %v2135 = vpop.permute.xlu0 %2134
    %2136 = vrot.lane.b32.xlu0 %v2125, 112
    %v2137 = vpop.permute.xlu0 %2136
    %2138 = vrot.lane.b32.xlu0 %v2126, 112
    %v2139 = vpop.permute.xlu0 %2138
    %2140 = vrot.lane.b32.xlu0 %v2127, 112
    %v2141 = vpop.permute.xlu0 %2140
    %2142 = vrot.lane.b32.xlu0 %v2128, 112
    %v2143 = vpop.permute.xlu0 %2142
    %2149 = vst.msk [vmem:[#allocation3 + $0x8] sm:$0xff] %vm1927, %v2135
    %2150 = vst.msk [vmem:[#allocation3 + $0x28] sm:$0xff] %vm1927, %v2137
    %2151 = vst.msk [vmem:[#allocation3 + $0x48] sm:$0xff] %vm1927, %v2139
    %2152 = vst.msk [vmem:[#allocation3 + $0x68] sm:$0xff] %vm1927, %v2141
    %2153 = vst.msk [vmem:[#allocation3 + $0x88] sm:$0x7] %vm1932, %v2143
    %v2154 = vld [vmem:[#allocation2 + $0x9a] sm:$0xff]
    %v2155 = vld [vmem:[#allocation2 + $0xa2] sm:$0xff]
    %v2156 = vld [vmem:[#allocation2 + $0xaa] sm:$0xff]
    %v2157 = vld [vmem:[#allocation2 + $0xb2] sm:$0xff]
    %v2158 = vld [vmem:[#allocation2 + $0xba] sm:$0x7]
    %2159 = vst.msk [vmem:[#allocation3 + $0x10] sm:$0xff] %vm577, %v2154
    %2160 = vst.msk [vmem:[#allocation3 + $0x30] sm:$0xff] %vm577, %v2155
    %2161 = vst.msk [vmem:[#allocation3 + $0x50] sm:$0xff] %vm577, %v2156
    %2162 = vst.msk [vmem:[#allocation3 + $0x70] sm:$0xff] %vm577, %v2157
    %2163 = vst.msk [vmem:[#allocation3 + $0x90] sm:$0x7] %vm1708, %v2158
    %v2164 = vld [vmem:[#allocation2 + $0x6a] sm:$0xff]
    %v2165 = vld [vmem:[#allocation2 + $0x72] sm:$0xff]
    %v2166 = vld [vmem:[#allocation2 + $0x7a] sm:$0xff]
    %v2167 = vld [vmem:[#allocation2 + $0x82] sm:$0xff]
    %v2168 = vld [vmem:[#allocation2 + $0x8a] sm:$0x7]
    %2174 = vrot.lane.b32.xlu0 %v2164, 16
    %v2175 = vpop.permute.xlu0 %2174
    %2176 = vrot.lane.b32.xlu0 %v2165, 16
    %v2177 = vpop.permute.xlu0 %2176
    %2178 = vrot.lane.b32.xlu0 %v2166, 16
    %v2179 = vpop.permute.xlu0 %2178
    %2180 = vrot.lane.b32.xlu0 %v2167, 16
    %v2181 = vpop.permute.xlu0 %2180
    %2182 = vrot.lane.b32.xlu0 %v2168, 16
    %v2183 = vpop.permute.xlu0 %2182
    %2189 = vst.msk [vmem:[#allocation3 + $0x10] sm:$0xff] %vm1735, %v2175
    %2190 = vst.msk [vmem:[#allocation3 + $0x30] sm:$0xff] %vm1735, %v2177
    %2191 = vst.msk [vmem:[#allocation3 + $0x50] sm:$0xff] %vm1735, %v2179
    %2192 = vst.msk [vmem:[#allocation3 + $0x70] sm:$0xff] %vm1735, %v2181
    %2193 = vst.msk [vmem:[#allocation3 + $0x90] sm:$0x7] %vm1740, %v2183
    %v2194 = vld [vmem:[#allocation2 + $0x9b] sm:$0xff]
    %v2195 = vld [vmem:[#allocation2 + $0xa3] sm:$0xff]
    %v2196 = vld [vmem:[#allocation2 + $0xab] sm:$0xff]
    %v2197 = vld [vmem:[#allocation2 + $0xb3] sm:$0xff]
    %v2198 = vld [vmem:[#allocation2 + $0xbb] sm:$0x7]
    %2204 = vrot.lane.b32.xlu0 %v2194, 32
    %v2205 = vpop.permute.xlu0 %2204
    %2206 = vrot.lane.b32.xlu0 %v2195, 32
    %v2207 = vpop.permute.xlu0 %2206
    %2208 = vrot.lane.b32.xlu0 %v2196, 32
    %v2209 = vpop.permute.xlu0 %2208
    %2210 = vrot.lane.b32.xlu0 %v2197, 32
    %v2211 = vpop.permute.xlu0 %2210
    %2212 = vrot.lane.b32.xlu0 %v2198, 32
    %v2213 = vpop.permute.xlu0 %2212
    %2219 = vst.msk [vmem:[#allocation3 + $0x10] sm:$0xff] %vm1767, %v2205
    %2220 = vst.msk [vmem:[#allocation3 + $0x30] sm:$0xff] %vm1767, %v2207
    %2221 = vst.msk [vmem:[#allocation3 + $0x50] sm:$0xff] %vm1767, %v2209
    %2222 = vst.msk [vmem:[#allocation3 + $0x70] sm:$0xff] %vm1767, %v2211
    %2223 = vst.msk [vmem:[#allocation3 + $0x90] sm:$0x7] %vm1772, %v2213
    %v2224 = vld [vmem:[#allocation2 + $0x6b] sm:$0xff]
    %v2225 = vld [vmem:[#allocation2 + $0x73] sm:$0xff]
    %v2226 = vld [vmem:[#allocation2 + $0x7b] sm:$0xff]
    %v2227 = vld [vmem:[#allocation2 + $0x83] sm:$0xff]
    %v2228 = vld [vmem:[#allocation2 + $0x8b] sm:$0x7]
    %2234 = vrot.lane.b32.xlu0 %v2224, 48
    %v2235 = vpop.permute.xlu0 %2234
    %2236 = vrot.lane.b32.xlu0 %v2225, 48
    %v2237 = vpop.permute.xlu0 %2236
    %2238 = vrot.lane.b32.xlu0 %v2226, 48
    %v2239 = vpop.permute.xlu0 %2238
    %2240 = vrot.lane.b32.xlu0 %v2227, 48
    %v2241 = vpop.permute.xlu0 %2240
    %2242 = vrot.lane.b32.xlu0 %v2228, 48
    %v2243 = vpop.permute.xlu0 %2242
    %2249 = vst.msk [vmem:[#allocation3 + $0x10] sm:$0xff] %vm1799, %v2235
    %2250 = vst.msk [vmem:[#allocation3 + $0x30] sm:$0xff] %vm1799, %v2237
    %2251 = vst.msk [vmem:[#allocation3 + $0x50] sm:$0xff] %vm1799, %v2239
    %2252 = vst.msk [vmem:[#allocation3 + $0x70] sm:$0xff] %vm1799, %v2241
    %2253 = vst.msk [vmem:[#allocation3 + $0x90] sm:$0x7] %vm1804, %v2243
    %v2254 = vld [vmem:[#allocation2 + $0xe] sm:$0xff]
    %v2255 = vld [vmem:[#allocation2 + $0x16] sm:$0xff]
    %v2256 = vld [vmem:[#allocation2 + $0x1e] sm:$0xff]
    %v2257 = vld [vmem:[#allocation2 + $0x26] sm:$0xff]
    %v2258 = vld [vmem:[#allocation2 + $0x2e] sm:$0x7]
    %2264 = vrot.lane.b32.xlu0 %v2254, 64
    %v2265 = vpop.permute.xlu0 %2264
    %2266 = vrot.lane.b32.xlu0 %v2255, 64
    %v2267 = vpop.permute.xlu0 %2266
    %2268 = vrot.lane.b32.xlu0 %v2256, 64
    %v2269 = vpop.permute.xlu0 %2268
    %2270 = vrot.lane.b32.xlu0 %v2257, 64
    %v2271 = vpop.permute.xlu0 %2270
    %2272 = vrot.lane.b32.xlu0 %v2258, 64
    %v2273 = vpop.permute.xlu0 %2272
    %2279 = vst.msk [vmem:[#allocation3 + $0x10] sm:$0xff] %vm1831, %v2265
    %2280 = vst.msk [vmem:[#allocation3 + $0x30] sm:$0xff] %vm1831, %v2267
    %2281 = vst.msk [vmem:[#allocation3 + $0x50] sm:$0xff] %vm1831, %v2269
    %2282 = vst.msk [vmem:[#allocation3 + $0x70] sm:$0xff] %vm1831, %v2271
    %2283 = vst.msk [vmem:[#allocation3 + $0x90] sm:$0x7] %vm1836, %v2273
    %v2284 = vld [vmem:[#allocation2 + $0x3f] sm:$0xff]
    %v2285 = vld [vmem:[#allocation2 + $0x47] sm:$0xff]
    %v2286 = vld [vmem:[#allocation2 + $0x4f] sm:$0xff]
    %v2287 = vld [vmem:[#allocation2 + $0x57] sm:$0xff]
    %v2288 = vld [vmem:[#allocation2 + $0x5f] sm:$0x7]
    %2294 = vrot.lane.b32.xlu0 %v2284, 80
    %v2295 = vpop.permute.xlu0 %2294
    %2296 = vrot.lane.b32.xlu0 %v2285, 80
    %v2297 = vpop.permute.xlu0 %2296
    %2298 = vrot.lane.b32.xlu0 %v2286, 80
    %v2299 = vpop.permute.xlu0 %2298
    %2300 = vrot.lane.b32.xlu0 %v2287, 80
    %v2301 = vpop.permute.xlu0 %2300
    %2302 = vrot.lane.b32.xlu0 %v2288, 80
    %v2303 = vpop.permute.xlu0 %2302
    %2309 = vst.msk [vmem:[#allocation3 + $0x10] sm:$0xff] %vm1863, %v2295
    %2310 = vst.msk [vmem:[#allocation3 + $0x30] sm:$0xff] %vm1863, %v2297
    %2311 = vst.msk [vmem:[#allocation3 + $0x50] sm:$0xff] %vm1863, %v2299
    %2312 = vst.msk [vmem:[#allocation3 + $0x70] sm:$0xff] %vm1863, %v2301
    %2313 = vst.msk [vmem:[#allocation3 + $0x90] sm:$0x7] %vm1868, %v2303
    %v2314 = vld [vmem:[#allocation2 + $0xf] sm:$0xff]
    %v2315 = vld [vmem:[#allocation2 + $0x17] sm:$0xff]
    %v2316 = vld [vmem:[#allocation2 + $0x1f] sm:$0xff]
    %v2317 = vld [vmem:[#allocation2 + $0x27] sm:$0xff]
    %v2318 = vld [vmem:[#allocation2 + $0x2f] sm:$0x7]
    %2324 = vrot.lane.b32.xlu0 %v2314, 96
    %v2325 = vpop.permute.xlu0 %2324
    %2326 = vrot.lane.b32.xlu0 %v2315, 96
    %v2327 = vpop.permute.xlu0 %2326
    %2328 = vrot.lane.b32.xlu0 %v2316, 96
    %v2329 = vpop.permute.xlu0 %2328
    %2330 = vrot.lane.b32.xlu0 %v2317, 96
    %v2331 = vpop.permute.xlu0 %2330
    %2332 = vrot.lane.b32.xlu0 %v2318, 96
    %v2333 = vpop.permute.xlu0 %2332
    %2339 = vst.msk [vmem:[#allocation3 + $0x10] sm:$0xff] %vm1895, %v2325
    %2340 = vst.msk [vmem:[#allocation3 + $0x30] sm:$0xff] %vm1895, %v2327
    %2341 = vst.msk [vmem:[#allocation3 + $0x50] sm:$0xff] %vm1895, %v2329
    %2342 = vst.msk [vmem:[#allocation3 + $0x70] sm:$0xff] %vm1895, %v2331
    %2343 = vst.msk [vmem:[#allocation3 + $0x90] sm:$0x7] %vm1900, %v2333
    %v2344 = vld [vmem:[#allocation2 + $0x40] sm:$0xff]
    %v2345 = vld [vmem:[#allocation2 + $0x48] sm:$0xff]
    %v2346 = vld [vmem:[#allocation2 + $0x50] sm:$0xff]
    %v2347 = vld [vmem:[#allocation2 + $0x58] sm:$0xff]
    %v2348 = vld [vmem:[#allocation2 + $0x60] sm:$0x7]
    %2354 = vrot.lane.b32.xlu0 %v2344, 112
    %v2355 = vpop.permute.xlu0 %2354
    %2356 = vrot.lane.b32.xlu0 %v2345, 112
    %v2357 = vpop.permute.xlu0 %2356
    %2358 = vrot.lane.b32.xlu0 %v2346, 112
    %v2359 = vpop.permute.xlu0 %2358
    %2360 = vrot.lane.b32.xlu0 %v2347, 112
    %v2361 = vpop.permute.xlu0 %2360
    %2362 = vrot.lane.b32.xlu0 %v2348, 112
    %v2363 = vpop.permute.xlu0 %2362
    %2369 = vst.msk [vmem:[#allocation3 + $0x10] sm:$0xff] %vm1927, %v2355
    %2370 = vst.msk [vmem:[#allocation3 + $0x30] sm:$0xff] %vm1927, %v2357
    %2371 = vst.msk [vmem:[#allocation3 + $0x50] sm:$0xff] %vm1927, %v2359
    %2372 = vst.msk [vmem:[#allocation3 + $0x70] sm:$0xff] %vm1927, %v2361
    %2373 = vst.msk [vmem:[#allocation3 + $0x90] sm:$0x7] %vm1932, %v2363
    %v2374 = vld [vmem:[#allocation2 + $0x10] sm:$0xff]
    %v2375 = vld [vmem:[#allocation2 + $0x18] sm:$0xff]
    %v2376 = vld [vmem:[#allocation2 + $0x20] sm:$0xff]
    %v2377 = vld [vmem:[#allocation2 + $0x28] sm:$0xff]
    %v2378 = vld [vmem:[#allocation2 + $0x30] sm:$0x7]
    %2379 = vst.msk [vmem:[#allocation3 + $0x18] sm:$0xff] %vm577, %v2374
    %2380 = vst.msk [vmem:[#allocation3 + $0x38] sm:$0xff] %vm577, %v2375
    %2381 = vst.msk [vmem:[#allocation3 + $0x58] sm:$0xff] %vm577, %v2376
    %2382 = vst.msk [vmem:[#allocation3 + $0x78] sm:$0xff] %vm577, %v2377
    %2383 = vst.msk [vmem:[#allocation3 + $0x98] sm:$0x7] %vm1708, %v2378
    %v2384 = vld [vmem:[#allocation2 + $0xc8] sm:$0xff]
    %v2385 = vld [vmem:[#allocation2 + $0xd0] sm:$0xff]
    %v2386 = vld [vmem:[#allocation2 + $0xd8] sm:$0xff]
    %v2387 = vld [vmem:[#allocation2 + $0xe0] sm:$0xff]
    %v2388 = vld [vmem:[#allocation2 + $0xe8] sm:$0x7]
    %2389 = vst.msk [vmem:[#allocation3 + $0xa0] sm:$0xff] %vm577, %v2384
    %2390 = vst.msk [vmem:[#allocation3 + $0xc0] sm:$0xff] %vm577, %v2385
    %2391 = vst.msk [vmem:[#allocation3 + $0xe0] sm:$0xff] %vm577, %v2386
    %2392 = vst.msk [vmem:[#allocation3 + $0x100] sm:$0xff] %vm577, %v2387
    %2393 = vst.msk [vmem:[#allocation3 + $0x120] sm:$0x7] %vm1708, %v2388
    %v2394 = vld [vmem:[#allocation2 + $0xf9] sm:$0xff]
    %v2395 = vld [vmem:[#allocation2 + $0x101] sm:$0xff]
    %v2396 = vld [vmem:[#allocation2 + $0x109] sm:$0xff]
    %v2397 = vld [vmem:[#allocation2 + $0x111] sm:$0xff]
    %v2398 = vld [vmem:[#allocation2 + $0x119] sm:$0x7]
    %2404 = vrot.lane.b32.xlu0 %v2394, 16
    %v2405 = vpop.permute.xlu0 %2404
    %2406 = vrot.lane.b32.xlu0 %v2395, 16
    %v2407 = vpop.permute.xlu0 %2406
    %2408 = vrot.lane.b32.xlu0 %v2396, 16
    %v2409 = vpop.permute.xlu0 %2408
    %2410 = vrot.lane.b32.xlu0 %v2397, 16
    %v2411 = vpop.permute.xlu0 %2410
    %2412 = vrot.lane.b32.xlu0 %v2398, 16
    %v2413 = vpop.permute.xlu0 %2412
    %2419 = vst.msk [vmem:[#allocation3 + $0xa0] sm:$0xff] %vm1735, %v2405
    %2420 = vst.msk [vmem:[#allocation3 + $0xc0] sm:$0xff] %vm1735, %v2407
    %2421 = vst.msk [vmem:[#allocation3 + $0xe0] sm:$0xff] %vm1735, %v2409
    %2422 = vst.msk [vmem:[#allocation3 + $0x100] sm:$0xff] %vm1735, %v2411
    %2423 = vst.msk [vmem:[#allocation3 + $0x120] sm:$0x7] %vm1740, %v2413
    %v2424 = vld [vmem:[#allocation2 + $0xc9] sm:$0xff]
    %v2425 = vld [vmem:[#allocation2 + $0xd1] sm:$0xff]
    %v2426 = vld [vmem:[#allocation2 + $0xd9] sm:$0xff]
    %v2427 = vld [vmem:[#allocation2 + $0xe1] sm:$0xff]
    %v2428 = vld [vmem:[#allocation2 + $0xe9] sm:$0x7]
    %2434 = vrot.lane.b32.xlu0 %v2424, 32
    %v2435 = vpop.permute.xlu0 %2434
    %2436 = vrot.lane.b32.xlu0 %v2425, 32
    %v2437 = vpop.permute.xlu0 %2436
    %2438 = vrot.lane.b32.xlu0 %v2426, 32
    %v2439 = vpop.permute.xlu0 %2438
    %2440 = vrot.lane.b32.xlu0 %v2427, 32
    %v2441 = vpop.permute.xlu0 %2440
    %2442 = vrot.lane.b32.xlu0 %v2428, 32
    %v2443 = vpop.permute.xlu0 %2442
    %2449 = vst.msk [vmem:[#allocation3 + $0xa0] sm:$0xff] %vm1767, %v2435
    %2450 = vst.msk [vmem:[#allocation3 + $0xc0] sm:$0xff] %vm1767, %v2437
    %2451 = vst.msk [vmem:[#allocation3 + $0xe0] sm:$0xff] %vm1767, %v2439
    %2452 = vst.msk [vmem:[#allocation3 + $0x100] sm:$0xff] %vm1767, %v2441
    %2453 = vst.msk [vmem:[#allocation3 + $0x120] sm:$0x7] %vm1772, %v2443
    %v2454 = vld [vmem:[#allocation2 + $0xfa] sm:$0xff]
    %v2455 = vld [vmem:[#allocation2 + $0x102] sm:$0xff]
    %v2456 = vld [vmem:[#allocation2 + $0x10a] sm:$0xff]
    %v2457 = vld [vmem:[#allocation2 + $0x112] sm:$0xff]
    %v2458 = vld [vmem:[#allocation2 + $0x11a] sm:$0x7]
    %2464 = vrot.lane.b32.xlu0 %v2454, 48
    %v2465 = vpop.permute.xlu0 %2464
    %2466 = vrot.lane.b32.xlu0 %v2455, 48
    %v2467 = vpop.permute.xlu0 %2466
    %2468 = vrot.lane.b32.xlu0 %v2456, 48
    %v2469 = vpop.permute.xlu0 %2468
    %2470 = vrot.lane.b32.xlu0 %v2457, 48
    %v2471 = vpop.permute.xlu0 %2470
    %2472 = vrot.lane.b32.xlu0 %v2458, 48
    %v2473 = vpop.permute.xlu0 %2472
    %2479 = vst.msk [vmem:[#allocation3 + $0xa0] sm:$0xff] %vm1799, %v2465
    %2480 = vst.msk [vmem:[#allocation3 + $0xc0] sm:$0xff] %vm1799, %v2467
    %2481 = vst.msk [vmem:[#allocation3 + $0xe0] sm:$0xff] %vm1799, %v2469
    %2482 = vst.msk [vmem:[#allocation3 + $0x100] sm:$0xff] %vm1799, %v2471
    %2483 = vst.msk [vmem:[#allocation3 + $0x120] sm:$0x7] %vm1804, %v2473
    %v2484 = vld [vmem:[#allocation2 + $0xca] sm:$0xff]
    %v2485 = vld [vmem:[#allocation2 + $0xd2] sm:$0xff]
    %v2486 = vld [vmem:[#allocation2 + $0xda] sm:$0xff]
    %v2487 = vld [vmem:[#allocation2 + $0xe2] sm:$0xff]
    %v2488 = vld [vmem:[#allocation2 + $0xea] sm:$0x7]
    %2494 = vrot.lane.b32.xlu0 %v2484, 64
    %v2495 = vpop.permute.xlu0 %2494
    %2496 = vrot.lane.b32.xlu0 %v2485, 64
    %v2497 = vpop.permute.xlu0 %2496
    %2498 = vrot.lane.b32.xlu0 %v2486, 64
    %v2499 = vpop.permute.xlu0 %2498
    %2500 = vrot.lane.b32.xlu0 %v2487, 64
    %v2501 = vpop.permute.xlu0 %2500
    %2502 = vrot.lane.b32.xlu0 %v2488, 64
    %v2503 = vpop.permute.xlu0 %2502
    %2509 = vst.msk [vmem:[#allocation3 + $0xa0] sm:$0xff] %vm1831, %v2495
    %2510 = vst.msk [vmem:[#allocation3 + $0xc0] sm:$0xff] %vm1831, %v2497
    %2511 = vst.msk [vmem:[#allocation3 + $0xe0] sm:$0xff] %vm1831, %v2499
    %2512 = vst.msk [vmem:[#allocation3 + $0x100] sm:$0xff] %vm1831, %v2501
    %2513 = vst.msk [vmem:[#allocation3 + $0x120] sm:$0x7] %vm1836, %v2503
    %v2514 = vld [vmem:[#allocation2 + $0x12a] sm:$0xff]
    %v2515 = vld [vmem:[#allocation2 + $0x132] sm:$0xff]
    %v2516 = vld [vmem:[#allocation2 + $0x13a] sm:$0xff]
    %v2517 = vld [vmem:[#allocation2 + $0x142] sm:$0xff]
    %v2518 = vld [vmem:[#allocation2 + $0x14a] sm:$0x7]
    %2524 = vrot.lane.b32.xlu0 %v2514, 80
    %v2525 = vpop.permute.xlu0 %2524
    %2526 = vrot.lane.b32.xlu0 %v2515, 80
    %v2527 = vpop.permute.xlu0 %2526
    %2528 = vrot.lane.b32.xlu0 %v2516, 80
    %v2529 = vpop.permute.xlu0 %2528
    %2530 = vrot.lane.b32.xlu0 %v2517, 80
    %v2531 = vpop.permute.xlu0 %2530
    %2532 = vrot.lane.b32.xlu0 %v2518, 80
    %v2533 = vpop.permute.xlu0 %2532
    %2539 = vst.msk [vmem:[#allocation3 + $0xa0] sm:$0xff] %vm1863, %v2525
    %2540 = vst.msk [vmem:[#allocation3 + $0xc0] sm:$0xff] %vm1863, %v2527
    %2541 = vst.msk [vmem:[#allocation3 + $0xe0] sm:$0xff] %vm1863, %v2529
    %2542 = vst.msk [vmem:[#allocation3 + $0x100] sm:$0xff] %vm1863, %v2531
    %2543 = vst.msk [vmem:[#allocation3 + $0x120] sm:$0x7] %vm1868, %v2533
    %v2544 = vld [vmem:[#allocation2 + $0x15b] sm:$0xff]
    %v2545 = vld [vmem:[#allocation2 + $0x163] sm:$0xff]
    %v2546 = vld [vmem:[#allocation2 + $0x16b] sm:$0xff]
    %v2547 = vld [vmem:[#allocation2 + $0x173] sm:$0xff]
    %v2548 = vld [vmem:[#allocation2 + $0x17b] sm:$0x7]
    %2554 = vrot.lane.b32.xlu0 %v2544, 96
    %v2555 = vpop.permute.xlu0 %2554
    %2556 = vrot.lane.b32.xlu0 %v2545, 96
    %v2557 = vpop.permute.xlu0 %2556
    %2558 = vrot.lane.b32.xlu0 %v2546, 96
    %v2559 = vpop.permute.xlu0 %2558
    %2560 = vrot.lane.b32.xlu0 %v2547, 96
    %v2561 = vpop.permute.xlu0 %2560
    %2562 = vrot.lane.b32.xlu0 %v2548, 96
    %v2563 = vpop.permute.xlu0 %2562
    %2569 = vst.msk [vmem:[#allocation3 + $0xa0] sm:$0xff] %vm1895, %v2555
    %2570 = vst.msk [vmem:[#allocation3 + $0xc0] sm:$0xff] %vm1895, %v2557
    %2571 = vst.msk [vmem:[#allocation3 + $0xe0] sm:$0xff] %vm1895, %v2559
    %2572 = vst.msk [vmem:[#allocation3 + $0x100] sm:$0xff] %vm1895, %v2561
    %2573 = vst.msk [vmem:[#allocation3 + $0x120] sm:$0x7] %vm1900, %v2563
    %v2574 = vld [vmem:[#allocation2 + $0x12b] sm:$0xff]
    %v2575 = vld [vmem:[#allocation2 + $0x133] sm:$0xff]
    %v2576 = vld [vmem:[#allocation2 + $0x13b] sm:$0xff]
    %v2577 = vld [vmem:[#allocation2 + $0x143] sm:$0xff]
    %v2578 = vld [vmem:[#allocation2 + $0x14b] sm:$0x7]
    %2584 = vrot.lane.b32.xlu0 %v2574, 112
    %v2585 = vpop.permute.xlu0 %2584
    %2586 = vrot.lane.b32.xlu0 %v2575, 112
    %v2587 = vpop.permute.xlu0 %2586
    %2588 = vrot.lane.b32.xlu0 %v2576, 112
    %v2589 = vpop.permute.xlu0 %2588
    %2590 = vrot.lane.b32.xlu0 %v2577, 112
    %v2591 = vpop.permute.xlu0 %2590
    %2592 = vrot.lane.b32.xlu0 %v2578, 112
    %v2593 = vpop.permute.xlu0 %2592
    %2599 = vst.msk [vmem:[#allocation3 + $0xa0] sm:$0xff] %vm1927, %v2585
    %2600 = vst.msk [vmem:[#allocation3 + $0xc0] sm:$0xff] %vm1927, %v2587
    %2601 = vst.msk [vmem:[#allocation3 + $0xe0] sm:$0xff] %vm1927, %v2589
    %2602 = vst.msk [vmem:[#allocation3 + $0x100] sm:$0xff] %vm1927, %v2591
    %2603 = vst.msk [vmem:[#allocation3 + $0x120] sm:$0x7] %vm1932, %v2593
    %v2604 = vld [vmem:[#allocation2 + $0x15c] sm:$0xff]
    %v2605 = vld [vmem:[#allocation2 + $0x164] sm:$0xff]
    %v2606 = vld [vmem:[#allocation2 + $0x16c] sm:$0xff]
    %v2607 = vld [vmem:[#allocation2 + $0x174] sm:$0xff]
    %v2608 = vld [vmem:[#allocation2 + $0x17c] sm:$0x7]
    %2609 = vst.msk [vmem:[#allocation3 + $0xa8] sm:$0xff] %vm577, %v2604
    %2610 = vst.msk [vmem:[#allocation3 + $0xc8] sm:$0xff] %vm577, %v2605
    %2611 = vst.msk [vmem:[#allocation3 + $0xe8] sm:$0xff] %vm577, %v2606
    %2612 = vst.msk [vmem:[#allocation3 + $0x108] sm:$0xff] %vm577, %v2607
    %2613 = vst.msk [vmem:[#allocation3 + $0x128] sm:$0x7] %vm1708, %v2608
    %v2614 = vld [vmem:[#allocation2 + $0x12c] sm:$0xff]
    %v2615 = vld [vmem:[#allocation2 + $0x134] sm:$0xff]
    %v2616 = vld [vmem:[#allocation2 + $0x13c] sm:$0xff]
    %v2617 = vld [vmem:[#allocation2 + $0x144] sm:$0xff]
    %v2618 = vld [vmem:[#allocation2 + $0x14c] sm:$0x7]
    %2624 = vrot.lane.b32.xlu0 %v2614, 16
    %v2625 = vpop.permute.xlu0 %2624
    %2626 = vrot.lane.b32.xlu0 %v2615, 16
    %v2627 = vpop.permute.xlu0 %2626
    %2628 = vrot.lane.b32.xlu0 %v2616, 16
    %v2629 = vpop.permute.xlu0 %2628
    %2630 = vrot.lane.b32.xlu0 %v2617, 16
    %v2631 = vpop.permute.xlu0 %2630
    %2632 = vrot.lane.b32.xlu0 %v2618, 16
    %v2633 = vpop.permute.xlu0 %2632
    %2639 = vst.msk [vmem:[#allocation3 + $0xa8] sm:$0xff] %vm1735, %v2625
    %2640 = vst.msk [vmem:[#allocation3 + $0xc8] sm:$0xff] %vm1735, %v2627
    %2641 = vst.msk [vmem:[#allocation3 + $0xe8] sm:$0xff] %vm1735, %v2629
    %2642 = vst.msk [vmem:[#allocation3 + $0x108] sm:$0xff] %vm1735, %v2631
    %2643 = vst.msk [vmem:[#allocation3 + $0x128] sm:$0x7] %vm1740, %v2633
    %v2644 = vld [vmem:[#allocation2 + $0xcf] sm:$0xff]
    %v2645 = vld [vmem:[#allocation2 + $0xd7] sm:$0xff]
    %v2646 = vld [vmem:[#allocation2 + $0xdf] sm:$0xff]
    %v2647 = vld [vmem:[#allocation2 + $0xe7] sm:$0xff]
    %v2648 = vld [vmem:[#allocation2 + $0xef] sm:$0x7]
    %2654 = vrot.lane.b32.xlu0 %v2644, 32
    %v2655 = vpop.permute.xlu0 %2654
    %2656 = vrot.lane.b32.xlu0 %v2645, 32
    %v2657 = vpop.permute.xlu0 %2656
    %2658 = vrot.lane.b32.xlu0 %v2646, 32
    %v2659 = vpop.permute.xlu0 %2658
    %2660 = vrot.lane.b32.xlu0 %v2647, 32
    %v2661 = vpop.permute.xlu0 %2660
    %2662 = vrot.lane.b32.xlu0 %v2648, 32
    %v2663 = vpop.permute.xlu0 %2662
    %2669 = vst.msk [vmem:[#allocation3 + $0xa8] sm:$0xff] %vm1767, %v2655
    %2670 = vst.msk [vmem:[#allocation3 + $0xc8] sm:$0xff] %vm1767, %v2657
    %2671 = vst.msk [vmem:[#allocation3 + $0xe8] sm:$0xff] %vm1767, %v2659
    %2672 = vst.msk [vmem:[#allocation3 + $0x108] sm:$0xff] %vm1767, %v2661
    %2673 = vst.msk [vmem:[#allocation3 + $0x128] sm:$0x7] %vm1772, %v2663
    %v2674 = vld [vmem:[#allocation2 + $0x100] sm:$0xff]
    %v2675 = vld [vmem:[#allocation2 + $0x108] sm:$0xff]
    %v2676 = vld [vmem:[#allocation2 + $0x110] sm:$0xff]
    %v2677 = vld [vmem:[#allocation2 + $0x118] sm:$0xff]
    %v2678 = vld [vmem:[#allocation2 + $0x120] sm:$0x7]
    %2684 = vrot.lane.b32.xlu0 %v2674, 48
    %v2685 = vpop.permute.xlu0 %2684
    %2686 = vrot.lane.b32.xlu0 %v2675, 48
    %v2687 = vpop.permute.xlu0 %2686
    %2688 = vrot.lane.b32.xlu0 %v2676, 48
    %v2689 = vpop.permute.xlu0 %2688
    %2690 = vrot.lane.b32.xlu0 %v2677, 48
    %v2691 = vpop.permute.xlu0 %2690
    %2692 = vrot.lane.b32.xlu0 %v2678, 48
    %v2693 = vpop.permute.xlu0 %2692
    %2699 = vst.msk [vmem:[#allocation3 + $0xa8] sm:$0xff] %vm1799, %v2685
    %2700 = vst.msk [vmem:[#allocation3 + $0xc8] sm:$0xff] %vm1799, %v2687
    %2701 = vst.msk [vmem:[#allocation3 + $0xe8] sm:$0xff] %vm1799, %v2689
    %2702 = vst.msk [vmem:[#allocation3 + $0x108] sm:$0xff] %vm1799, %v2691
    %2703 = vst.msk [vmem:[#allocation3 + $0x128] sm:$0x7] %vm1804, %v2693
    %v2704 = vld [vmem:[#allocation2 + $0xd0] sm:$0xff]
    %v2705 = vld [vmem:[#allocation2 + $0xd8] sm:$0xff]
    %v2706 = vld [vmem:[#allocation2 + $0xe0] sm:$0xff]
    %v2707 = vld [vmem:[#allocation2 + $0xe8] sm:$0xff]
    %v2708 = vld [vmem:[#allocation2 + $0xf0] sm:$0x7]
    %2714 = vrot.lane.b32.xlu0 %v2704, 64
    %v2715 = vpop.permute.xlu0 %2714
    %2716 = vrot.lane.b32.xlu0 %v2705, 64
    %v2717 = vpop.permute.xlu0 %2716
    %2718 = vrot.lane.b32.xlu0 %v2706, 64
    %v2719 = vpop.permute.xlu0 %2718
    %2720 = vrot.lane.b32.xlu0 %v2707, 64
    %v2721 = vpop.permute.xlu0 %2720
    %2722 = vrot.lane.b32.xlu0 %v2708, 64
    %v2723 = vpop.permute.xlu0 %2722
    %2729 = vst.msk [vmem:[#allocation3 + $0xa8] sm:$0xff] %vm1831, %v2715
    %2730 = vst.msk [vmem:[#allocation3 + $0xc8] sm:$0xff] %vm1831, %v2717
    %2731 = vst.msk [vmem:[#allocation3 + $0xe8] sm:$0xff] %vm1831, %v2719
    %2732 = vst.msk [vmem:[#allocation3 + $0x108] sm:$0xff] %vm1831, %v2721
    %2733 = vst.msk [vmem:[#allocation3 + $0x128] sm:$0x7] %vm1836, %v2723
    %v2734 = vld [vmem:[#allocation2 + $0x101] sm:$0xff]
    %v2735 = vld [vmem:[#allocation2 + $0x109] sm:$0xff]
    %v2736 = vld [vmem:[#allocation2 + $0x111] sm:$0xff]
    %v2737 = vld [vmem:[#allocation2 + $0x119] sm:$0xff]
    %v2738 = vld [vmem:[#allocation2 + $0x121] sm:$0x7]
    %2744 = vrot.lane.b32.xlu0 %v2734, 80
    %v2745 = vpop.permute.xlu0 %2744
    %2746 = vrot.lane.b32.xlu0 %v2735, 80
    %v2747 = vpop.permute.xlu0 %2746
    %2748 = vrot.lane.b32.xlu0 %v2736, 80
    %v2749 = vpop.permute.xlu0 %2748
    %2750 = vrot.lane.b32.xlu0 %v2737, 80
    %v2751 = vpop.permute.xlu0 %2750
    %2752 = vrot.lane.b32.xlu0 %v2738, 80
    %v2753 = vpop.permute.xlu0 %2752
    %2759 = vst.msk [vmem:[#allocation3 + $0xa8] sm:$0xff] %vm1863, %v2745
    %2760 = vst.msk [vmem:[#allocation3 + $0xc8] sm:$0xff] %vm1863, %v2747
    %2761 = vst.msk [vmem:[#allocation3 + $0xe8] sm:$0xff] %vm1863, %v2749
    %2762 = vst.msk [vmem:[#allocation3 + $0x108] sm:$0xff] %vm1863, %v2751
    %2763 = vst.msk [vmem:[#allocation3 + $0x128] sm:$0x7] %vm1868, %v2753
    %v2764 = vld [vmem:[#allocation2 + $0xd1] sm:$0xff]
    %v2765 = vld [vmem:[#allocation2 + $0xd9] sm:$0xff]
    %v2766 = vld [vmem:[#allocation2 + $0xe1] sm:$0xff]
    %v2767 = vld [vmem:[#allocation2 + $0xe9] sm:$0xff]
    %v2768 = vld [vmem:[#allocation2 + $0xf1] sm:$0x7]
    %2774 = vrot.lane.b32.xlu0 %v2764, 96
    %v2775 = vpop.permute.xlu0 %2774
    %2776 = vrot.lane.b32.xlu0 %v2765, 96
    %v2777 = vpop.permute.xlu0 %2776
    %2778 = vrot.lane.b32.xlu0 %v2766, 96
    %v2779 = vpop.permute.xlu0 %2778
    %2780 = vrot.lane.b32.xlu0 %v2767, 96
    %v2781 = vpop.permute.xlu0 %2780
    %2782 = vrot.lane.b32.xlu0 %v2768, 96
    %v2783 = vpop.permute.xlu0 %2782
    %2789 = vst.msk [vmem:[#allocation3 + $0xa8] sm:$0xff] %vm1895, %v2775
    %2790 = vst.msk [vmem:[#allocation3 + $0xc8] sm:$0xff] %vm1895, %v2777
    %2791 = vst.msk [vmem:[#allocation3 + $0xe8] sm:$0xff] %vm1895, %v2779
    %2792 = vst.msk [vmem:[#allocation3 + $0x108] sm:$0xff] %vm1895, %v2781
    %2793 = vst.msk [vmem:[#allocation3 + $0x128] sm:$0x7] %vm1900, %v2783
    %v2794 = vld [vmem:[#allocation2 + $0x131] sm:$0xff]
    %v2795 = vld [vmem:[#allocation2 + $0x139] sm:$0xff]
    %v2796 = vld [vmem:[#allocation2 + $0x141] sm:$0xff]
    %v2797 = vld [vmem:[#allocation2 + $0x149] sm:$0xff]
    %v2798 = vld [vmem:[#allocation2 + $0x151] sm:$0x7]
    %2804 = vrot.lane.b32.xlu0 %v2794, 112
    %v2805 = vpop.permute.xlu0 %2804
    %2806 = vrot.lane.b32.xlu0 %v2795, 112
    %v2807 = vpop.permute.xlu0 %2806
    %2808 = vrot.lane.b32.xlu0 %v2796, 112
    %v2809 = vpop.permute.xlu0 %2808
    %2810 = vrot.lane.b32.xlu0 %v2797, 112
    %v2811 = vpop.permute.xlu0 %2810
    %2812 = vrot.lane.b32.xlu0 %v2798, 112
    %v2813 = vpop.permute.xlu0 %2812
    %2819 = vst.msk [vmem:[#allocation3 + $0xa8] sm:$0xff] %vm1927, %v2805
    %2820 = vst.msk [vmem:[#allocation3 + $0xc8] sm:$0xff] %vm1927, %v2807
    %2821 = vst.msk [vmem:[#allocation3 + $0xe8] sm:$0xff] %vm1927, %v2809
    %2822 = vst.msk [vmem:[#allocation3 + $0x108] sm:$0xff] %vm1927, %v2811
    %2823 = vst.msk [vmem:[#allocation3 + $0x128] sm:$0x7] %vm1932, %v2813
    %v2824 = vld [vmem:[#allocation2 + $0x162] sm:$0xff]
    %v2825 = vld [vmem:[#allocation2 + $0x16a] sm:$0xff]
    %v2826 = vld [vmem:[#allocation2 + $0x172] sm:$0xff]
    %v2827 = vld [vmem:[#allocation2 + $0x17a] sm:$0xff]
    %v2828 = vld [vmem:[#allocation2 + $0x182] sm:$0x7]
    %2829 = vst.msk [vmem:[#allocation3 + $0xb0] sm:$0xff] %vm577, %v2824
    %2830 = vst.msk [vmem:[#allocation3 + $0xd0] sm:$0xff] %vm577, %v2825
    %2831 = vst.msk [vmem:[#allocation3 + $0xf0] sm:$0xff] %vm577, %v2826
    %2832 = vst.msk [vmem:[#allocation3 + $0x110] sm:$0xff] %vm577, %v2827
    %2833 = vst.msk [vmem:[#allocation3 + $0x130] sm:$0x7] %vm1708, %v2828
    %v2834 = vld [vmem:[#allocation2 + $0x132] sm:$0xff]
    %v2835 = vld [vmem:[#allocation2 + $0x13a] sm:$0xff]
    %v2836 = vld [vmem:[#allocation2 + $0x142] sm:$0xff]
    %v2837 = vld [vmem:[#allocation2 + $0x14a] sm:$0xff]
    %v2838 = vld [vmem:[#allocation2 + $0x152] sm:$0x7]
    %2844 = vrot.lane.b32.xlu0 %v2834, 16
    %v2845 = vpop.permute.xlu0 %2844
    %2846 = vrot.lane.b32.xlu0 %v2835, 16
    %v2847 = vpop.permute.xlu0 %2846
    %2848 = vrot.lane.b32.xlu0 %v2836, 16
    %v2849 = vpop.permute.xlu0 %2848
    %2850 = vrot.lane.b32.xlu0 %v2837, 16
    %v2851 = vpop.permute.xlu0 %2850
    %2852 = vrot.lane.b32.xlu0 %v2838, 16
    %v2853 = vpop.permute.xlu0 %2852
    %2859 = vst.msk [vmem:[#allocation3 + $0xb0] sm:$0xff] %vm1735, %v2845
    %2860 = vst.msk [vmem:[#allocation3 + $0xd0] sm:$0xff] %vm1735, %v2847
    %2861 = vst.msk [vmem:[#allocation3 + $0xf0] sm:$0xff] %vm1735, %v2849
    %2862 = vst.msk [vmem:[#allocation3 + $0x110] sm:$0xff] %vm1735, %v2851
    %2863 = vst.msk [vmem:[#allocation3 + $0x130] sm:$0x7] %vm1740, %v2853
    %v2864 = vld [vmem:[#allocation2 + $0x163] sm:$0xff]
    %v2865 = vld [vmem:[#allocation2 + $0x16b] sm:$0xff]
    %v2866 = vld [vmem:[#allocation2 + $0x173] sm:$0xff]
    %v2867 = vld [vmem:[#allocation2 + $0x17b] sm:$0xff]
    %v2868 = vld [vmem:[#allocation2 + $0x183] sm:$0x7]
    %2874 = vrot.lane.b32.xlu0 %v2864, 32
    %v2875 = vpop.permute.xlu0 %2874
    %2876 = vrot.lane.b32.xlu0 %v2865, 32
    %v2877 = vpop.permute.xlu0 %2876
    %2878 = vrot.lane.b32.xlu0 %v2866, 32
    %v2879 = vpop.permute.xlu0 %2878
    %2880 = vrot.lane.b32.xlu0 %v2867, 32
    %v2881 = vpop.permute.xlu0 %2880
    %2882 = vrot.lane.b32.xlu0 %v2868, 32
    %v2883 = vpop.permute.xlu0 %2882
    %2889 = vst.msk [vmem:[#allocation3 + $0xb0] sm:$0xff] %vm1767, %v2875
    %2890 = vst.msk [vmem:[#allocation3 + $0xd0] sm:$0xff] %vm1767, %v2877
    %2891 = vst.msk [vmem:[#allocation3 + $0xf0] sm:$0xff] %vm1767, %v2879
    %2892 = vst.msk [vmem:[#allocation3 + $0x110] sm:$0xff] %vm1767, %v2881
    %2893 = vst.msk [vmem:[#allocation3 + $0x130] sm:$0x7] %vm1772, %v2883
    %v2894 = vld [vmem:[#allocation2 + $0x133] sm:$0xff]
    %v2895 = vld [vmem:[#allocation2 + $0x13b] sm:$0xff]
    %v2896 = vld [vmem:[#allocation2 + $0x143] sm:$0xff]
    %v2897 = vld [vmem:[#allocation2 + $0x14b] sm:$0xff]
    %v2898 = vld [vmem:[#allocation2 + $0x153] sm:$0x7]
    %2904 = vrot.lane.b32.xlu0 %v2894, 48
    %v2905 = vpop.permute.xlu0 %2904
    %2906 = vrot.lane.b32.xlu0 %v2895, 48
    %v2907 = vpop.permute.xlu0 %2906
    %2908 = vrot.lane.b32.xlu0 %v2896, 48
    %v2909 = vpop.permute.xlu0 %2908
    %2910 = vrot.lane.b32.xlu0 %v2897, 48
    %v2911 = vpop.permute.xlu0 %2910
    %2912 = vrot.lane.b32.xlu0 %v2898, 48
    %v2913 = vpop.permute.xlu0 %2912
    %2919 = vst.msk [vmem:[#allocation3 + $0xb0] sm:$0xff] %vm1799, %v2905
    %2920 = vst.msk [vmem:[#allocation3 + $0xd0] sm:$0xff] %vm1799, %v2907
    %2921 = vst.msk [vmem:[#allocation3 + $0xf0] sm:$0xff] %vm1799, %v2909
    %2922 = vst.msk [vmem:[#allocation3 + $0x110] sm:$0xff] %vm1799, %v2911
    %2923 = vst.msk [vmem:[#allocation3 + $0x130] sm:$0x7] %vm1804, %v2913
    %v2924 = vld [vmem:[#allocation2 + $0xd6] sm:$0xff]
    %v2925 = vld [vmem:[#allocation2 + $0xde] sm:$0xff]
    %v2926 = vld [vmem:[#allocation2 + $0xe6] sm:$0xff]
    %v2927 = vld [vmem:[#allocation2 + $0xee] sm:$0xff]
    %v2928 = vld [vmem:[#allocation2 + $0xf6] sm:$0x7]
    %2934 = vrot.lane.b32.xlu0 %v2924, 64
    %v2935 = vpop.permute.xlu0 %2934
    %2936 = vrot.lane.b32.xlu0 %v2925, 64
    %v2937 = vpop.permute.xlu0 %2936
    %2938 = vrot.lane.b32.xlu0 %v2926, 64
    %v2939 = vpop.permute.xlu0 %2938
    %2940 = vrot.lane.b32.xlu0 %v2927, 64
    %v2941 = vpop.permute.xlu0 %2940
    %2942 = vrot.lane.b32.xlu0 %v2928, 64
    %v2943 = vpop.permute.xlu0 %2942
    %2949 = vst.msk [vmem:[#allocation3 + $0xb0] sm:$0xff] %vm1831, %v2935
    %2950 = vst.msk [vmem:[#allocation3 + $0xd0] sm:$0xff] %vm1831, %v2937
    %2951 = vst.msk [vmem:[#allocation3 + $0xf0] sm:$0xff] %vm1831, %v2939
    %2952 = vst.msk [vmem:[#allocation3 + $0x110] sm:$0xff] %vm1831, %v2941
    %2953 = vst.msk [vmem:[#allocation3 + $0x130] sm:$0x7] %vm1836, %v2943
    %v2954 = vld [vmem:[#allocation2 + $0x107] sm:$0xff]
    %v2955 = vld [vmem:[#allocation2 + $0x10f] sm:$0xff]
    %v2956 = vld [vmem:[#allocation2 + $0x117] sm:$0xff]
    %v2957 = vld [vmem:[#allocation2 + $0x11f] sm:$0xff]
    %v2958 = vld [vmem:[#allocation2 + $0x127] sm:$0x7]
    %2964 = vrot.lane.b32.xlu0 %v2954, 80
    %v2965 = vpop.permute.xlu0 %2964
    %2966 = vrot.lane.b32.xlu0 %v2955, 80
    %v2967 = vpop.permute.xlu0 %2966
    %2968 = vrot.lane.b32.xlu0 %v2956, 80
    %v2969 = vpop.permute.xlu0 %2968
    %2970 = vrot.lane.b32.xlu0 %v2957, 80
    %v2971 = vpop.permute.xlu0 %2970
    %2972 = vrot.lane.b32.xlu0 %v2958, 80
    %v2973 = vpop.permute.xlu0 %2972
    %2979 = vst.msk [vmem:[#allocation3 + $0xb0] sm:$0xff] %vm1863, %v2965
    %2980 = vst.msk [vmem:[#allocation3 + $0xd0] sm:$0xff] %vm1863, %v2967
    %2981 = vst.msk [vmem:[#allocation3 + $0xf0] sm:$0xff] %vm1863, %v2969
    %2982 = vst.msk [vmem:[#allocation3 + $0x110] sm:$0xff] %vm1863, %v2971
    %2983 = vst.msk [vmem:[#allocation3 + $0x130] sm:$0x7] %vm1868, %v2973
    %v2984 = vld [vmem:[#allocation2 + $0xd7] sm:$0xff]
    %v2985 = vld [vmem:[#allocation2 + $0xdf] sm:$0xff]
    %v2986 = vld [vmem:[#allocation2 + $0xe7] sm:$0xff]
    %v2987 = vld [vmem:[#allocation2 + $0xef] sm:$0xff]
    %v2988 = vld [vmem:[#allocation2 + $0xf7] sm:$0x7]
    %2994 = vrot.lane.b32.xlu0 %v2984, 96
    %v2995 = vpop.permute.xlu0 %2994
    %2996 = vrot.lane.b32.xlu0 %v2985, 96
    %v2997 = vpop.permute.xlu0 %2996
    %2998 = vrot.lane.b32.xlu0 %v2986, 96
    %v2999 = vpop.permute.xlu0 %2998
    %3000 = vrot.lane.b32.xlu0 %v2987, 96
    %v3001 = vpop.permute.xlu0 %3000
    %3002 = vrot.lane.b32.xlu0 %v2988, 96
    %v3003 = vpop.permute.xlu0 %3002
    %3009 = vst.msk [vmem:[#allocation3 + $0xb0] sm:$0xff] %vm1895, %v2995
    %3010 = vst.msk [vmem:[#allocation3 + $0xd0] sm:$0xff] %vm1895, %v2997
    %3011 = vst.msk [vmem:[#allocation3 + $0xf0] sm:$0xff] %vm1895, %v2999
    %3012 = vst.msk [vmem:[#allocation3 + $0x110] sm:$0xff] %vm1895, %v3001
    %3013 = vst.msk [vmem:[#allocation3 + $0x130] sm:$0x7] %vm1900, %v3003
    %v3014 = vld [vmem:[#allocation2 + $0x108] sm:$0xff]
    %v3015 = vld [vmem:[#allocation2 + $0x110] sm:$0xff]
    %v3016 = vld [vmem:[#allocation2 + $0x118] sm:$0xff]
    %v3017 = vld [vmem:[#allocation2 + $0x120] sm:$0xff]
    %v3018 = vld [vmem:[#allocation2 + $0x128] sm:$0x7]
    %3024 = vrot.lane.b32.xlu0 %v3014, 112
    %v3025 = vpop.permute.xlu0 %3024
    %3026 = vrot.lane.b32.xlu0 %v3015, 112
    %v3027 = vpop.permute.xlu0 %3026
    %3028 = vrot.lane.b32.xlu0 %v3016, 112
    %v3029 = vpop.permute.xlu0 %3028
    %3030 = vrot.lane.b32.xlu0 %v3017, 112
    %v3031 = vpop.permute.xlu0 %3030
    %3032 = vrot.lane.b32.xlu0 %v3018, 112
    %v3033 = vpop.permute.xlu0 %3032
    %3039 = vst.msk [vmem:[#allocation3 + $0xb0] sm:$0xff] %vm1927, %v3025
    %3040 = vst.msk [vmem:[#allocation3 + $0xd0] sm:$0xff] %vm1927, %v3027
    %3041 = vst.msk [vmem:[#allocation3 + $0xf0] sm:$0xff] %vm1927, %v3029
    %3042 = vst.msk [vmem:[#allocation3 + $0x110] sm:$0xff] %vm1927, %v3031
    %3043 = vst.msk [vmem:[#allocation3 + $0x130] sm:$0x7] %vm1932, %v3033
    %v3044 = vld [vmem:[#allocation2 + $0xd8] sm:$0xff]
    %v3045 = vld [vmem:[#allocation2 + $0xe0] sm:$0xff]
    %v3046 = vld [vmem:[#allocation2 + $0xe8] sm:$0xff]
    %v3047 = vld [vmem:[#allocation2 + $0xf0] sm:$0xff]
    %v3048 = vld [vmem:[#allocation2 + $0xf8] sm:$0x7]
    %3049 = vst.msk [vmem:[#allocation3 + $0xb8] sm:$0xff] %vm577, %v3044
    %3050 = vst.msk [vmem:[#allocation3 + $0xd8] sm:$0xff] %vm577, %v3045
    %3051 = vst.msk [vmem:[#allocation3 + $0xf8] sm:$0xff] %vm577, %v3046
    %3052 = vst.msk [vmem:[#allocation3 + $0x118] sm:$0xff] %vm577, %v3047
    %3053 = vst.msk [vmem:[#allocation3 + $0x138] sm:$0x7] %vm1708, %v3048
    %v3054 = vld [vmem:[#allocation3] sm:$0xff]
    %v3055 = vld [vmem:[#allocation3 + $0x8] sm:$0xff]
    %v3056 = vld [vmem:[#allocation3 + $0x10] sm:$0xff]
    %v3057 = vld [vmem:[#allocation3 + $0x18] sm:$0xff]
    %v3058 = vld [vmem:[#allocation3 + $0x20] sm:$0xff]
    %v3059 = vld [vmem:[#allocation3 + $0x28] sm:$0xff]
    %v3060 = vld [vmem:[#allocation3 + $0x30] sm:$0xff]
    %v3061 = vld [vmem:[#allocation3 + $0x38] sm:$0xff]
    %v3062 = vld [vmem:[#allocation3 + $0x40] sm:$0xff]
    %v3063 = vld [vmem:[#allocation3 + $0x48] sm:$0xff]
    %v3064 = vld [vmem:[#allocation3 + $0x50] sm:$0xff]
    %v3065 = vld [vmem:[#allocation3 + $0x58] sm:$0xff]
    %v3066 = vld [vmem:[#allocation3 + $0x60] sm:$0xff]
    %v3067 = vld [vmem:[#allocation3 + $0x68] sm:$0xff]
    %v3068 = vld [vmem:[#allocation3 + $0x70] sm:$0xff]
    %v3069 = vld [vmem:[#allocation3 + $0x78] sm:$0xff]
    %v3070 = vld [vmem:[#allocation3 + $0x80] sm:$0xff]
    %v3071 = vld [vmem:[#allocation3 + $0x88] sm:$0xff]
    %v3072 = vld [vmem:[#allocation3 + $0x90] sm:$0xff]
    %v3073 = vld [vmem:[#allocation3 + $0x98] sm:$0xff]
    %v3074 = vld [vmem:[#allocation3 + $0xa0] sm:$0xff]
    %v3075 = vld [vmem:[#allocation3 + $0xa8] sm:$0xff]
    %v3076 = vld [vmem:[#allocation3 + $0xb0] sm:$0xff]
    %v3077 = vld [vmem:[#allocation3 + $0xb8] sm:$0xff]
    %v3078 = vld [vmem:[#allocation3 + $0xc0] sm:$0xff]
    %v3079 = vld [vmem:[#allocation3 + $0xc8] sm:$0xff]
    %v3080 = vld [vmem:[#allocation3 + $0xd0] sm:$0xff]
    %v3081 = vld [vmem:[#allocation3 + $0xd8] sm:$0xff]
    %v3082 = vld [vmem:[#allocation3 + $0xe0] sm:$0xff]
    %v3083 = vld [vmem:[#allocation3 + $0xe8] sm:$0xff]
    %v3084 = vld [vmem:[#allocation3 + $0xf0] sm:$0xff]
    %v3085 = vld [vmem:[#allocation3 + $0xf8] sm:$0xff]
    %v3086 = vld [vmem:[#allocation3 + $0x100] sm:$0xff]
    %v3087 = vld [vmem:[#allocation3 + $0x108] sm:$0xff]
    %v3088 = vld [vmem:[#allocation3 + $0x110] sm:$0xff]
    %v3089 = vld [vmem:[#allocation3 + $0x118] sm:$0xff]
    %v3090 = vld [vmem:[#allocation3 + $0x120] sm:$0xff]
    %v3091 = vld [vmem:[#allocation3 + $0x128] sm:$0xff]
    %v3092 = vld [vmem:[#allocation3 + $0x130] sm:$0xff]
    %v3093 = vld [vmem:[#allocation3 + $0x138] sm:$0xff]
    %v3094 = vld [vmem:[%s5] sm:$0xff]
    %v3095 = vld [vmem:[%s5 + $0x8] sm:$0xff]
    %v3096 = vld [vmem:[%s5 + $0x10] sm:$0xff]
    %v3097 = vld [vmem:[%s5 + $0x18] sm:$0xff]
    %v3098 = vld [vmem:[%s5 + $0x20] sm:$0xff]
    %v3099 = vld [vmem:[%s5 + $0x28] sm:$0xff]
    %v3100 = vld [vmem:[%s5 + $0x30] sm:$0xff]
    %v3101 = vld [vmem:[%s5 + $0x38] sm:$0xff]
    %v3102 = vld [vmem:[%s5 + $0x40] sm:$0xff]
    %v3103 = vld [vmem:[%s5 + $0x48] sm:$0xff]
    %v3104 = vld [vmem:[%s5 + $0x50] sm:$0xff]
    %v3105 = vld [vmem:[%s5 + $0x58] sm:$0xff]
    %v3106 = vld [vmem:[%s5 + $0x60] sm:$0xff]
    %v3107 = vld [vmem:[%s5 + $0x68] sm:$0xff]
    %v3108 = vld [vmem:[%s5 + $0x70] sm:$0xff]
    %v3109 = vld [vmem:[%s5 + $0x78] sm:$0xff]
    %v3110 = vld [vmem:[%s5 + $0x80] sm:$0xff]
    %v3111 = vld [vmem:[%s5 + $0x88] sm:$0xff]
    %v3112 = vld [vmem:[%s5 + $0x90] sm:$0xff]
    %v3113 = vld [vmem:[%s5 + $0x98] sm:$0xff]
    %v3114 = vld [vmem:[%s5 + $0xa0] sm:$0xff]
    %v3115 = vld [vmem:[%s5 + $0xa8] sm:$0xff]
    %v3116 = vld [vmem:[%s5 + $0xb0] sm:$0xff]
    %v3117 = vld [vmem:[%s5 + $0xb8] sm:$0xff]
    %v3118 = vld [vmem:[%s5 + $0xc0] sm:$0xff]
    %v3119 = vld [vmem:[%s5 + $0xc8] sm:$0xff]
    %v3120 = vld [vmem:[%s5 + $0xd0] sm:$0xff]
    %v3121 = vld [vmem:[%s5 + $0xd8] sm:$0xff]
    %v3122 = vld [vmem:[%s5 + $0xe0] sm:$0xff]
    %v3123 = vld [vmem:[%s5 + $0xe8] sm:$0xff]
    %v3124 = vld [vmem:[%s5 + $0xf0] sm:$0xff]
    %v3125 = vld [vmem:[%s5 + $0xf8] sm:$0xff]
    %v3126 = vld [vmem:[%s5 + $0x100] sm:$0xff]
    %v3127 = vld [vmem:[%s5 + $0x108] sm:$0xff]
    %v3128 = vld [vmem:[%s5 + $0x110] sm:$0xff]
    %v3129 = vld [vmem:[%s5 + $0x118] sm:$0xff]
    %v3130 = vld [vmem:[%s5 + $0x120] sm:$0xff]
    %v3131 = vld [vmem:[%s5 + $0x128] sm:$0xff]
    %v3132 = vld [vmem:[%s5 + $0x130] sm:$0xff]
    %v3133 = vld [vmem:[%s5 + $0x138] sm:$0xff]
    %v3134 = vld [vmem:[%s5 + $0x140] sm:$0xff]
    %v3135 = vld [vmem:[%s5 + $0x148] sm:$0xff]
    %v3136 = vld [vmem:[%s5 + $0x150] sm:$0xff]
    %v3137 = vld [vmem:[%s5 + $0x158] sm:$0xff]
    %v3138 = vld [vmem:[%s5 + $0x160] sm:$0xff]
    %v3139 = vld [vmem:[%s5 + $0x168] sm:$0xff]
    %v3140 = vld [vmem:[%s5 + $0x170] sm:$0xff]
    %v3141 = vld [vmem:[%s5 + $0x178] sm:$0xff]
    %v3142 = vld [vmem:[%s5 + $0x180] sm:$0xff]
    %v3143 = vld [vmem:[%s5 + $0x188] sm:$0xff]
    %v3145 = vsel %vm577, %v3057, 0
    %v3148 = vsel %vm577, %v3061, 0
    %v3151 = vsel %vm577, %v3065, 0
    %v3154 = vsel %vm577, %v3069, 0
    %v3157 = vsel %vm577, %v3073, 0
    %v3160 = vsel %vm577, %v3077, 0
    %v3163 = vsel %vm577, %v3081, 0
    %v3166 = vsel %vm577, %v3085, 0
    %v3169 = vsel %vm577, %v3089, 0
    %v3172 = vsel %vm577, %v3093, 0
    %3174 = vmatprep.subr.mxu0 0.0
    %3175 = vmatpush1.msra.mxu0 %v3094
    %3176 = vmatprep.subr.mxu0 0.0
    %3177 = vmatpush1.msra.mxu0 %v3095
    %3178 = vmatprep.subr.mxu0 0.0
    %3179 = vmatpush1.msra.mxu0 %v3096
    %3180 = vmatprep.subr.mxu0 0.0
    %3181 = vmatpush1.msra.mxu0 %v3097
    %3182 = vmatprep.subr.mxu0 0.0
    %3183 = vmatpush1.msra.mxu0 %v3098
    %3184 = vmatprep.subr.mxu0 0.0
    %3185 = vmatpush1.msra.mxu0 %v3099
    %3186 = vmatprep.subr.mxu0 0.0
    %3187 = vmatpush1.msra.mxu0 %v3100
    %3188 = vmatprep.subr.mxu0 0.0
    %3189 = vmatpush1.msra.mxu0 %v3101
    %3190 = vmatprep.subr.mxu0 0.0
    %3191 = vmatpush1.msra.mxu0 %v3102
    %3192 = vmatprep.subr.mxu0 0.0
    %3193 = vmatpush1.msra.mxu0 %v3103
    %3194 = vmatprep.subr.mxu0 0.0
    %3195 = vmatpush1.msra.mxu0 %v3104
    %3196 = vmatprep.subr.mxu0 0.0
    %3197 = vmatpush1.msra.mxu0 %v3105
    %3198 = vmatprep.subr.mxu0 0.0
    %3199 = vmatpush1.msra.mxu0 %v3106
    %3200 = vmatprep.subr.mxu0 0.0
    %3201 = vmatpush1.msra.mxu0 %v3107
    %3202 = vmatprep.subr.mxu0 0.0
    %3203 = vmatpush1.msra.mxu0 %v3108
    %3204 = vmatprep.subr.mxu0 0.0
    %3205 = vmatpush1.msra.mxu0 %v3109
    %3206 = vmatprep.subr.mxu0 0.0
    %3207 = vmatpush1.msra.mxu0 %v3110
    %3208 = vmatprep.subr.mxu0 0.0
    %3209 = vmatpush1.msra.mxu0 %v3111
    %3210 = vmatprep.subr.mxu0 0.0
    %3211 = vmatpush1.msra.mxu0 %v3112
    %3212 = vmatprep.subr.mxu0 0.0
    %3213 = vmatpush1.msra.mxu0 %v3113
    %3214 = vmatprep.subr.mxu0 0.0
    %3215 = vmatpush1.msra.mxu0 %v3114
    %3216 = vmatprep.subr.mxu0 0.0
    %3217 = vmatpush1.msra.mxu0 %v3115
    %3218 = vmatprep.subr.mxu0 0.0
    %3219 = vmatpush1.msra.mxu0 %v3116
    %3220 = vmatprep.subr.mxu0 0.0
    %3221 = vmatpush1.msra.mxu0 %v3117
    %3222 = vmatprep.subr.mxu0 0.0
    %3223 = vmatpush1.msra.mxu0 %v3118
    %3224 = vmatprep.subr.mxu0 0.0
    %3225 = vmatpush1.msra.mxu0 %v3119
    %3226 = vmatprep.subr.mxu0 0.0
    %3227 = vmatpush1.msra.mxu0 %v3120
    %3228 = vmatprep.subr.mxu0 0.0
    %3229 = vmatpush1.msra.mxu0 %v3121
    %3230 = vmatprep.subr.mxu0 0.0
    %3231 = vmatpush1.msra.mxu0 %v3122
    %3232 = vmatprep.subr.mxu0 0.0
    %3233 = vmatpush1.msra.mxu0 %v3123
    %3234 = vmatprep.subr.mxu0 0.0
    %3235 = vmatpush1.msra.mxu0 %v3124
    %3236 = vmatprep.subr.mxu0 0.0
    %3237 = vmatpush1.msra.mxu0 %v3125
    %3238 = vmatprep.mubr.f32.mxu0 %v3055
    %3239 = vmatmul.mubr.f32.gmra.mrb[0].mxu0 %v3054
    %v3240 = vpop.f32.mrb[0].mxu0
    %v3241 = vadd.f32 0.0, %v3240
    %v3242 = vpop.f32.mrb[0].mxu0
    %3243 = vmatprep.mubr.f32.mxu0 %v3059
    %3244 = vmatmul.mubr.f32.gmra.mrb[0].mxu0 %v3058
    %v3245 = vpop.f32.mrb[0].mxu0
    %v3246 = vadd.f32 0.0, %v3245
    %v3247 = vpop.f32.mrb[0].mxu0
    %3248 = vmatprep.mubr.f32.mxu0 %v3063
    %3249 = vmatmul.mubr.f32.gmra.mrb[0].mxu0 %v3062
    %v3250 = vpop.f32.mrb[0].mxu0
    %v3251 = vadd.f32 0.0, %v3250
    %v3252 = vpop.f32.mrb[0].mxu0
    %3253 = vmatprep.mubr.f32.mxu0 %v3067
    %3254 = vmatmul.mubr.f32.gmra.mrb[0].mxu0 %v3066
    %v3255 = vpop.f32.mrb[0].mxu0
    %v3256 = vadd.f32 0.0, %v3255
    %v3257 = vpop.f32.mrb[0].mxu0
    %3258 = vmatprep.mubr.f32.mxu0 %v3071
    %3259 = vmatmul.mubr.f32.gmra.mrb[0].mxu0 %v3070
    %v3260 = vpop.f32.mrb[0].mxu0
    %v3261 = vadd.f32 0.0, %v3260
    %v3262 = vpop.f32.mrb[0].mxu0
    %3263 = vmatprep.mubr.f32.mxu0 %v3075
    %3264 = vmatmul.mubr.f32.gmra.mrb[0].mxu0 %v3074
    %v3265 = vpop.f32.mrb[0].mxu0
    %v3266 = vadd.f32 0.0, %v3265
    %v3267 = vpop.f32.mrb[0].mxu0
    %3268 = vmatprep.mubr.f32.mxu0 %v3079
    %3269 = vmatmul.mubr.f32.gmra.mrb[0].mxu0 %v3078
    %v3270 = vpop.f32.mrb[0].mxu0
    %v3271 = vadd.f32 0.0, %v3270
    %v3272 = vpop.f32.mrb[0].mxu0
    %3273 = vmatprep.mubr.f32.mxu0 %v3083
    %3274 = vmatmul.mubr.f32.gmra.mrb[0].mxu0 %v3082
    %v3275 = vpop.f32.mrb[0].mxu0
    %v3276 = vadd.f32 0.0, %v3275
    %v3277 = vpop.f32.mrb[0].mxu0
    %3278 = vmatprep.mubr.f32.mxu0 %v3087
    %3279 = vmatmul.mubr.f32.gmra.mrb[0].mxu0 %v3086
    %v3280 = vpop.f32.mrb[0].mxu0
    %v3281 = vadd.f32 0.0, %v3280
    %v3282 = vpop.f32.mrb[0].mxu0
    %3283 = vmatprep.mubr.f32.mxu0 %v3091
    %3284 = vmatmul.mubr.f32.gmra.mrb[0].mxu0 %v3090
    %v3285 = vpop.f32.mrb[0].mxu0
    %v3286 = vadd.f32 0.0, %v3285
    %v3287 = vpop.f32.mrb[0].mxu0
    %3288 = vdwg.mxu0
    %3289 = vmatprep.subr.mxu0 0.0
    %3290 = vmatpush1.msra.mxu0 %v3126
    %3291 = vmatprep.subr.mxu0 0.0
    %3292 = vmatpush1.msra.mxu0 %v3127
    %3293 = vmatprep.subr.mxu0 0.0
    %3294 = vmatpush1.msra.mxu0 %v3128
    %3295 = vmatprep.subr.mxu0 0.0
    %3296 = vmatpush1.msra.mxu0 %v3129
    %3297 = vmatprep.subr.mxu0 0.0
    %3298 = vmatpush1.msra.mxu0 %v3130
    %3299 = vmatprep.subr.mxu0 0.0
    %3300 = vmatpush1.msra.mxu0 %v3131
    %3301 = vmatprep.subr.mxu0 0.0
    %3302 = vmatpush1.msra.mxu0 %v3132
    %3303 = vmatprep.subr.mxu0 0.0
    %3304 = vmatpush1.msra.mxu0 %v3133
    %3305 = vmatprep.subr.mxu0 0.0
    %3306 = vmatpush1.msra.mxu0 %v3134
    %3307 = vmatprep.subr.mxu0 0.0
    %3308 = vmatpush1.msra.mxu0 %v3135
    %3309 = vmatprep.subr.mxu0 0.0
    %3310 = vmatpush1.msra.mxu0 %v3136
    %3311 = vmatprep.subr.mxu0 0.0
    %3312 = vmatpush1.msra.mxu0 %v3137
    %3313 = vmatprep.subr.mxu0 0.0
    %3314 = vmatpush1.msra.mxu0 %v3138
    %3315 = vmatprep.subr.mxu0 0.0
    %3316 = vmatpush1.msra.mxu0 %v3139
    %3317 = vmatprep.subr.mxu0 0.0
    %3318 = vmatpush1.msra.mxu0 %v3140
    %3319 = vmatprep.subr.mxu0 0.0
    %3320 = vmatpush1.msra.mxu0 %v3141
    %3321 = vmatprep.subr.mxu0 0.0
    %3322 = vmatpush1.msra.mxu0 %v3142
    %3323 = vmatprep.subr.mxu0 0.0
    %3324 = vmatpush1.msra.mxu0 %v3143
    %3325 = vmatprep.subr.mxu0 0.0
    %3326 = vmatpush1.msra.mxu0 0.0
    %3327 = vmatprep.subr.mxu0 0.0
    %3328 = vmatpush1.msra.mxu0 0.0
    %3329 = vmatprep.subr.mxu0 0.0
    %3330 = vmatpush1.msra.mxu0 0.0
    %3331 = vmatprep.subr.mxu0 0.0
    %3332 = vmatpush1.msra.mxu0 0.0
    %3333 = vmatprep.subr.mxu0 0.0
    %3334 = vmatpush1.msra.mxu0 0.0
    %3335 = vmatprep.subr.mxu0 0.0
    %3336 = vmatpush1.msra.mxu0 0.0
    %3337 = vmatprep.subr.mxu0 0.0
    %3338 = vmatpush1.msra.mxu0 0.0
    %3339 = vmatprep.subr.mxu0 0.0
    %3340 = vmatpush1.msra.mxu0 0.0
    %3341 = vmatprep.subr.mxu0 0.0
    %3342 = vmatpush1.msra.mxu0 0.0
    %3343 = vmatprep.subr.mxu0 0.0
    %3344 = vmatpush1.msra.mxu0 0.0
    %3345 = vmatprep.subr.mxu0 0.0
    %3346 = vmatpush1.msra.mxu0 0.0
    %3347 = vmatprep.subr.mxu0 0.0
    %3348 = vmatpush1.msra.mxu0 0.0
    %3349 = vmatprep.subr.mxu0 0.0
    %3350 = vmatpush1.msra.mxu0 0.0
    %3351 = vmatprep.subr.mxu0 0.0
    %3352 = vmatpush1.msra.mxu0 0.0
    %3353 = vmatprep.mubr.f32.mxu0 %v3145
    %3354 = vmatmul.mubr.f32.gmra.mrb[0].mxu0 %v3056
    %v3355 = vpop.f32.mrb[0].mxu0
    %v3356 = vadd.f32 %v3241, %v3355
    %v3357 = vpop.f32.mrb[0].mxu0
    %3358 = vmatprep.mubr.f32.mxu0 %v3148
    %3359 = vmatmul.mubr.f32.gmra.mrb[0].mxu0 %v3060
    %v3360 = vpop.f32.mrb[0].mxu0
    %v3361 = vadd.f32 %v3246, %v3360
    %v3362 = vpop.f32.mrb[0].mxu0
    %3363 = vmatprep.mubr.f32.mxu0 %v3151
    %3364 = vmatmul.mubr.f32.gmra.mrb[0].mxu0 %v3064
    %v3365 = vpop.f32.mrb[0].mxu0
    %v3366 = vadd.f32 %v3251, %v3365
    %v3367 = vpop.f32.mrb[0].mxu0
    %3368 = vmatprep.mubr.f32.mxu0 %v3154
    %3369 = vmatmul.mubr.f32.gmra.mrb[0].mxu0 %v3068
    %v3370 = vpop.f32.mrb[0].mxu0
    %v3371 = vadd.f32 %v3256, %v3370
    %v3372 = vpop.f32.mrb[0].mxu0
    %3373 = vmatprep.mubr.f32.mxu0 %v3157
    %3374 = vmatmul.mubr.f32.gmra.mrb[0].mxu0 %v3072
    %v3375 = vpop.f32.mrb[0].mxu0
    %v3376 = vadd.f32 %v3261, %v3375
    %v3377 = vpop.f32.mrb[0].mxu0
    %3378 = vmatprep.mubr.f32.mxu0 %v3160
    %3379 = vmatmul.mubr.f32.gmra.mrb[0].mxu0 %v3076
    %v3380 = vpop.f32.mrb[0].mxu0
    %v3381 = vadd.f32 %v3266, %v3380
    %v3382 = vpop.f32.mrb[0].mxu0
    %3383 = vmatprep.mubr.f32.mxu0 %v3163
    %3384 = vmatmul.mubr.f32.gmra.mrb[0].mxu0 %v3080
    %v3385 = vpop.f32.mrb[0].mxu0
    %v3386 = vadd.f32 %v3271, %v3385
    %v3387 = vpop.f32.mrb[0].mxu0
    %3388 = vmatprep.mubr.f32.mxu0 %v3166
    %3389 = vmatmul.mubr.f32.gmra.mrb[0].mxu0 %v3084
    %v3390 = vpop.f32.mrb[0].mxu0
    %v3391 = vadd.f32 %v3276, %v3390
    %v3392 = vpop.f32.mrb[0].mxu0
    %3393 = vmatprep.mubr.f32.mxu0 %v3169
    %3394 = vmatmul.mubr.f32.gmra.mrb[0].mxu0 %v3088
    %v3395 = vpop.f32.mrb[0].mxu0
    %v3396 = vadd.f32 %v3281, %v3395
    %v3397 = vpop.f32.mrb[0].mxu0
    %3398 = vmatprep.mubr.f32.mxu0 %v3172
    %3399 = vmatmul.mubr.f32.gmra.mrb[0].mxu0 %v3092
    %v3400 = vpop.f32.mrb[0].mxu0
    %v3401 = vadd.f32 %v3286, %v3400
    %v3402 = vpop.f32.mrb[0].mxu0
    %3403 = vdwg.mxu0
    %vm3404 = vcmask 261120
    %3405 = vst.msk [vmem:[#allocation4] sm:$0xff] %vm3404, %v3356
    %3406 = vst.msk [vmem:[#allocation4 + $0x8] sm:$0xff] %vm3404, %v3361
    %3407 = vst.msk [vmem:[#allocation4 + $0x10] sm:$0xff] %vm3404, %v3366
    %3408 = vst.msk [vmem:[#allocation4 + $0x18] sm:$0xff] %vm3404, %v3371
    %3409 = vst.msk [vmem:[#allocation4 + $0x20] sm:$0xff] %vm3404, %v3376
    %3410 = vst.msk [vmem:[#allocation4 + $0x28] sm:$0xff] %vm3404, %v3381
    %3411 = vst.msk [vmem:[#allocation4 + $0x30] sm:$0xff] %vm3404, %v3386
    %3412 = vst.msk [vmem:[#allocation4 + $0x38] sm:$0xff] %vm3404, %v3391
    %3413 = vst.msk [vmem:[#allocation4 + $0x40] sm:$0xff] %vm3404, %v3396
    %3414 = vst.msk [vmem:[#allocation4 + $0x48] sm:$0xff] %vm3404, %v3401
    %v3415 = vld [vmem:[#allocation4] sm:$0xff]
    %v3416 = vld [vmem:[#allocation4 + $0x8] sm:$0xff]
    %v3417 = vld [vmem:[#allocation4 + $0x10] sm:$0xff]
    %v3418 = vld [vmem:[#allocation4 + $0x18] sm:$0xff]
    %v3419 = vld [vmem:[#allocation4 + $0x20] sm:$0xff]
    %v3420 = vld [vmem:[#allocation4 + $0x28] sm:$0xff]
    %v3421 = vld [vmem:[#allocation4 + $0x30] sm:$0xff]
    %v3422 = vld [vmem:[#allocation4 + $0x38] sm:$0xff]
    %v3423 = vld [vmem:[#allocation4 + $0x40] sm:$0xff]
    %v3424 = vld [vmem:[#allocation4 + $0x48] sm:$0xff]
    %v3425 = vld [vmem:[%s8] sm:$0xff]
    %v3426 = vld [vmem:[%s8 + $0x8] sm:$0xff]
    %v3427 = vld [vmem:[%s8 + $0x10] sm:$0xff]
    %v3428 = vld [vmem:[%s8 + $0x18] sm:$0xff]
    %v3429 = vld [vmem:[%s8 + $0x20] sm:$0xff]
    %v3430 = vld [vmem:[%s8 + $0x28] sm:$0xff]
    %v3431 = vld [vmem:[%s8 + $0x30] sm:$0xff]
    %v3432 = vld [vmem:[%s8 + $0x38] sm:$0xff]
    %v3433 = vld [vmem:[%s8 + $0x40] sm:$0xff]
    %v3434 = vld [vmem:[%s8 + $0x48] sm:$0xff]
    %v3435 = vld [vmem:[%s6] sm:$0x1]
    %v3436 = vld [vmem:[%s7] sm:$0x1]
    %vm3437 = vcmp.gt.f32.partialorder %v3425, 0.5
    %vm3438 = vcmp.gt.f32.partialorder %v3426, 0.5
    %vm3439 = vcmp.gt.f32.partialorder %v3427, 0.5
    %vm3440 = vcmp.gt.f32.partialorder %v3428, 0.5
    %vm3441 = vcmp.gt.f32.partialorder %v3429, 0.5
    %vm3442 = vcmp.gt.f32.partialorder %v3430, 0.5
    %vm3443 = vcmp.gt.f32.partialorder %v3431, 0.5
    %vm3444 = vcmp.gt.f32.partialorder %v3432, 0.5
    %vm3445 = vcmp.gt.f32.partialorder %v3433, 0.5
    %vm3446 = vcmp.gt.f32.partialorder %v3434, 0.5
    %v3447 = vsel %vm3437, 1, 0
    %v3448 = vsel %vm3438, 1, 0
    %v3449 = vsel %vm3439, 1, 0
    %v3450 = vsel %vm3440, 1, 0
    %v3451 = vsel %vm3441, 1, 0
    %v3452 = vsel %vm3442, 1, 0
    %v3453 = vsel %vm3443, 1, 0
    %v3454 = vsel %vm3444, 1, 0
    %v3455 = vsel %vm3445, 1, 0
    %v3456 = vsel %vm3446, 1, 0
    %3457 = vset.pattern.permute.xlu0 0
    %3458 = vperm.xlu0 %3457, %v3447
    %v3459 = vpop.permute.xlu0 %3458
    %3460 = vset.pattern.permute.xlu0 0
    %3461 = vperm.xlu0 %3460, %v3448
    %v3462 = vpop.permute.xlu0 %3461
    %3463 = vset.pattern.permute.xlu0 0
    %3464 = vperm.xlu0 %3463, %v3449
    %v3465 = vpop.permute.xlu0 %3464
    %3466 = vset.pattern.permute.xlu0 0
    %3467 = vperm.xlu0 %3466, %v3450
    %v3468 = vpop.permute.xlu0 %3467
    %3469 = vset.pattern.permute.xlu0 0
    %3470 = vperm.xlu0 %3469, %v3451
    %v3471 = vpop.permute.xlu0 %3470
    %3472 = vset.pattern.permute.xlu0 0
    %3473 = vperm.xlu0 %3472, %v3452
    %v3474 = vpop.permute.xlu0 %3473
    %3475 = vset.pattern.permute.xlu0 0
    %3476 = vperm.xlu0 %3475, %v3453
    %v3477 = vpop.permute.xlu0 %3476
    %3478 = vset.pattern.permute.xlu0 0
    %3479 = vperm.xlu0 %3478, %v3454
    %v3480 = vpop.permute.xlu0 %3479
    %3481 = vset.pattern.permute.xlu0 0
    %3482 = vperm.xlu0 %3481, %v3455
    %v3483 = vpop.permute.xlu0 %3482
    %3484 = vset.pattern.permute.xlu0 0
    %3485 = vperm.xlu0 %3484, %v3456
    %v3486 = vpop.permute.xlu0 %3485
    %vm3487 = vcmp.eq.s32.totalorder %v3459, 1
    %vm3488 = vcmp.eq.s32.totalorder %v3462, 1
    %vm3489 = vcmp.eq.s32.totalorder %v3465, 1
    %vm3490 = vcmp.eq.s32.totalorder %v3468, 1
    %vm3491 = vcmp.eq.s32.totalorder %v3471, 1
    %vm3492 = vcmp.eq.s32.totalorder %v3474, 1
    %vm3493 = vcmp.eq.s32.totalorder %v3477, 1
    %vm3494 = vcmp.eq.s32.totalorder %v3480, 1
    %vm3495 = vcmp.eq.s32.totalorder %v3483, 1
    %vm3496 = vcmp.eq.s32.totalorder %v3486, 1
    %v3497 = vsel %vm3487, %v3415, 0.0
    %v3498 = vsel %vm3488, %v3416, 0.0
    %v3499 = vsel %vm3489, %v3417, 0.0
    %v3500 = vsel %vm3490, %v3418, 0.0
    %v3501 = vsel %vm3491, %v3419, 0.0
    %v3502 = vsel %vm3492, %v3420, 0.0
    %v3503 = vsel %vm3493, %v3421, 0.0
    %v3504 = vsel %vm3494, %v3422, 0.0
    %v3505 = vsel %vm3495, %v3423, 0.0
    %v3506 = vsel %vm3496, %v3424, 0.0
    %v3507 = vsel %vm3404, %v3497, 0.0
    %v3508 = vsel %vm3404, %v3498, 0.0
    %v3509 = vadd.f32 %v3507, %v3508
    %v3510 = vsel %vm3404, %v3499, 0.0
    %v3511 = vadd.f32 %v3509, %v3510
    %v3512 = vsel %vm3404, %v3500, 0.0
    %v3513 = vadd.f32 %v3511, %v3512
    %v3514 = vsel %vm3404, %v3501, 0.0
    %v3515 = vadd.f32 %v3513, %v3514
    %v3516 = vsel %vm3404, %v3502, 0.0
    %v3517 = vadd.f32 %v3515, %v3516
    %v3518 = vsel %vm3404, %v3503, 0.0
    %v3519 = vadd.f32 %v3517, %v3518
    %v3520 = vsel %vm3404, %v3504, 0.0
    %v3521 = vadd.f32 %v3519, %v3520
    %v3522 = vsel %vm3404, %v3505, 0.0
    %v3523 = vadd.f32 %v3521, %v3522
    %v3524 = vsel %vm3404, %v3506, 0.0
    %v3525 = vadd.f32 %v3523, %v3524
    %v3526 = vrot.slane %v3525, 4
    %v3527 = vadd.f32 %v3525, %v3526
    %v3528 = vrot.slane %v3527, 2
    %v3529 = vadd.f32 %v3527, %v3528
    %v3530 = vrot.slane %v3529, 1
    %v3531 = vadd.f32 %v3529, %v3530
    %v3532 = vmul.f32 %v3531, 0.02
    %v3533 = vsub.f32 %v3415, %v3532
    %v3534 = vsub.f32 %v3416, %v3532
    %v3535 = vsub.f32 %v3417, %v3532
    %v3536 = vsub.f32 %v3418, %v3532
    %v3537 = vsub.f32 %v3419, %v3532
    %v3538 = vsub.f32 %v3420, %v3532
    %v3539 = vsub.f32 %v3421, %v3532
    %v3540 = vsub.f32 %v3422, %v3532
    %v3541 = vsub.f32 %v3423, %v3532
    %v3542 = vsub.f32 %v3424, %v3532
    %v3543 = vsel %vm3487, %v3533, 0.0
    %v3544 = vsel %vm3488, %v3534, 0.0
    %v3545 = vsel %vm3489, %v3535, 0.0
    %v3546 = vsel %vm3490, %v3536, 0.0
    %v3547 = vsel %vm3491, %v3537, 0.0
    %v3548 = vsel %vm3492, %v3538, 0.0
    %v3549 = vsel %vm3493, %v3539, 0.0
    %v3550 = vsel %vm3494, %v3540, 0.0
    %v3551 = vsel %vm3495, %v3541, 0.0
    %v3552 = vsel %vm3496, %v3542, 0.0
    %v3553 = vmul.f32 %v3543, %v3543
    %v3554 = vmul.f32 %v3544, %v3544
    %v3555 = vmul.f32 %v3545, %v3545
    %v3556 = vmul.f32 %v3546, %v3546
    %v3557 = vmul.f32 %v3547, %v3547
    %v3558 = vmul.f32 %v3548, %v3548
    %v3559 = vmul.f32 %v3549, %v3549
    %v3560 = vmul.f32 %v3550, %v3550
    %v3561 = vmul.f32 %v3551, %v3551
    %v3562 = vmul.f32 %v3552, %v3552
    %v3563 = vsel %vm3404, %v3553, 0.0
    %v3564 = vsel %vm3404, %v3554, 0.0
    %v3565 = vadd.f32 %v3563, %v3564
    %v3566 = vsel %vm3404, %v3555, 0.0
    %v3567 = vadd.f32 %v3565, %v3566
    %v3568 = vsel %vm3404, %v3556, 0.0
    %v3569 = vadd.f32 %v3567, %v3568
    %v3570 = vsel %vm3404, %v3557, 0.0
    %v3571 = vadd.f32 %v3569, %v3570
    %v3572 = vsel %vm3404, %v3558, 0.0
    %v3573 = vadd.f32 %v3571, %v3572
    %v3574 = vsel %vm3404, %v3559, 0.0
    %v3575 = vadd.f32 %v3573, %v3574
    %v3576 = vsel %vm3404, %v3560, 0.0
    %v3577 = vadd.f32 %v3575, %v3576
    %v3578 = vsel %vm3404, %v3561, 0.0
    %v3579 = vadd.f32 %v3577, %v3578
    %v3580 = vsel %vm3404, %v3562, 0.0
    %v3581 = vadd.f32 %v3579, %v3580
    %v3582 = vrot.slane %v3581, 4
    %v3583 = vadd.f32 %v3581, %v3582
    %v3584 = vrot.slane %v3583, 2
    %v3585 = vadd.f32 %v3583, %v3584
    %v3586 = vrot.slane %v3585, 1
    %v3587 = vadd.f32 %v3585, %v3586
    %v3588 = vmul.f32 %v3587, 0.02
    %v3589 = vadd.f32 %v3588, 1e-05
    %v3590 = vrsqrt.pop %v3589
    %v3591 = vmul.f32 %v3435, %v3590
    %v3592 = vmul.f32 %v3532, %v3591
    %v3593 = vsub.f32 %v3436, %v3592
    %v3595 = vlaneseq
    %v3596 = vshrl.u32 %v3595, 7
    %v3597 = vsub.s32 0, %v3596
    %v3598 = vrot.slane %v3591, %v3597
    %v3600 = vmul.f32 %v3415, %v3598
    %v3601 = vmul.f32 %v3416, %v3598
    %v3602 = vmul.f32 %v3417, %v3598
    %v3603 = vmul.f32 %v3418, %v3598
    %v3604 = vmul.f32 %v3419, %v3598
    %v3605 = vmul.f32 %v3420, %v3598
    %v3606 = vmul.f32 %v3421, %v3598
    %v3607 = vmul.f32 %v3422, %v3598
    %v3608 = vmul.f32 %v3423, %v3598
    %v3609 = vmul.f32 %v3424, %v3598
    %v3611 = vlaneseq
    %v3612 = vshrl.u32 %v3611, 7
    %v3613 = vsub.s32 0, %v3612
    %v3614 = vrot.slane %v3593, %v3613
    %v3616 = vadd.f32 %v3600, %v3614
    %v3617 = vadd.f32 %v3601, %v3614
    %v3618 = vadd.f32 %v3602, %v3614
    %v3619 = vadd.f32 %v3603, %v3614
    %v3620 = vadd.f32 %v3604, %v3614
    %v3621 = vadd.f32 %v3605, %v3614
    %v3622 = vadd.f32 %v3606, %v3614
    %v3623 = vadd.f32 %v3607, %v3614
    %v3624 = vadd.f32 %v3608, %v3614
    %v3625 = vadd.f32 %v3609, %v3614
    %v3626 = vmax.f32 %v3616, 0.0
    %v3627 = vmax.f32 %v3617, 0.0
    %v3628 = vmax.f32 %v3618, 0.0
    %v3629 = vmax.f32 %v3619, 0.0
    %v3630 = vmax.f32 %v3620, 0.0
    %v3631 = vmax.f32 %v3621, 0.0
    %v3632 = vmax.f32 %v3622, 0.0
    %v3633 = vmax.f32 %v3623, 0.0
    %v3634 = vmax.f32 %v3624, 0.0
    %v3635 = vmax.f32 %v3625, 0.0
    %3636 = vst.msk [vmem:[#allocation4] sm:$0xff] %vm3404, %v3626
    %3637 = vst.msk [vmem:[#allocation4 + $0x8] sm:$0xff] %vm3404, %v3627
    %3638 = vst.msk [vmem:[#allocation4 + $0x10] sm:$0xff] %vm3404, %v3628
    %3639 = vst.msk [vmem:[#allocation4 + $0x18] sm:$0xff] %vm3404, %v3629
    %3640 = vst.msk [vmem:[#allocation4 + $0x20] sm:$0xff] %vm3404, %v3630
    %3641 = vst.msk [vmem:[#allocation4 + $0x28] sm:$0xff] %vm3404, %v3631
    %3642 = vst.msk [vmem:[#allocation4 + $0x30] sm:$0xff] %vm3404, %v3632
    %3643 = vst.msk [vmem:[#allocation4 + $0x38] sm:$0xff] %vm3404, %v3633
    %3644 = vst.msk [vmem:[#allocation4 + $0x40] sm:$0xff] %vm3404, %v3634
    %3645 = vst.msk [vmem:[#allocation4 + $0x48] sm:$0xff] %vm3404, %v3635
    %3646 = vst.msk [vmem:[#allocation5] sm:$0xff] %vm3404, 0.0
    %3647 = vst.msk [vmem:[#allocation5 + $0x8] sm:$0xff] %vm3404, 0.0
    %3648 = vst.msk [vmem:[#allocation5 + $0x10] sm:$0xff] %vm3404, 0.0
    %3649 = vst.msk [vmem:[#allocation5 + $0x18] sm:$0xff] %vm3404, 0.0
    %3650 = vst.msk [vmem:[#allocation5 + $0x20] sm:$0xff] %vm3404, 0.0
    %3651 = vst.msk [vmem:[#allocation5 + $0x28] sm:$0xff] %vm3404, 0.0
    %3652 = vst.msk [vmem:[#allocation5 + $0x30] sm:$0xff] %vm3404, 0.0
    %3653 = vst.msk [vmem:[#allocation5 + $0x38] sm:$0xff] %vm3404, 0.0
    %3654 = vst.msk [vmem:[#allocation5 + $0x40] sm:$0xff] %vm3404, 0.0
    %3655 = vst.msk [vmem:[#allocation5 + $0x48] sm:$0xff] %vm3404, 0.0
    %v3656 = vld [vmem:[#allocation4] ss:$2 sm:$0x7]
    %vm3657 = vcmask 256000
    %3658 = vst.msk [vmem:[#allocation5] sm:$0x7] %vm3657, %v3656
    %s3659 = scalar_lea.vmem [#allocation4], 1
    %v3660 = vld [vmem:[%s3659] ss:$2 sm:$0x3]
    %vm3661 = vcmask 254976
    %3662 = vst.msk [vmem:[#allocation5 + $0x9] sm:$0x3] %vm3661, %v3660
    %s3663 = scalar_lea.vmem [#allocation4], 7
    %v3664 = vld [vmem:[%s3663] ss:$2 sm:$0x7]
    %3665 = vst.msk [vmem:[#allocation5 + $0x12] sm:$0x7] %vm3657, %v3664
    %s3666 = scalar_lea.vmem [#allocation4], 8
    %v3667 = vld [vmem:[%s3666] ss:$2 sm:$0x3]
    %3668 = vst.msk [vmem:[#allocation5 + $0x1b] sm:$0x3] %vm3661, %v3667
    %s3669 = scalar_lea.vmem [#allocation4], 14
    %v3670 = vld [vmem:[%s3669] ss:$2 sm:$0x7]
    %3671 = vst.msk [vmem:[#allocation5 + $0x3] sm:$0x7] %vm3657, %v3670
    %s3672 = scalar_lea.vmem [#allocation4], 15
    %v3673 = vld [vmem:[%s3672] ss:$2 sm:$0x3]
    %3674 = vst.msk [vmem:[#allocation5 + $0xc] sm:$0x3] %vm3661, %v3673
    %s3675 = scalar_lea.vmem [#allocation4], 21
    %v3676 = vld [vmem:[%s3675] ss:$2 sm:$0x7]
    %3677 = vst.msk [vmem:[#allocation5 + $0x15] sm:$0x7] %vm3657, %v3676
    %s3678 = scalar_lea.vmem [#allocation4], 22
    %v3679 = vld [vmem:[%s3678] ss:$2 sm:$0x3]
    %3680 = vst.msk [vmem:[#allocation5 + $0x1e] sm:$0x3] %vm3661, %v3679
    %s3681 = scalar_lea.vmem [#allocation4], 28
    %v3682 = vld [vmem:[%s3681] ss:$2 sm:$0x7]
    %3683 = vst.msk [vmem:[#allocation5 + $0x6] sm:$0x7] %vm3657, %v3682
    %s3684 = scalar_lea.vmem [#allocation4], 29
    %v3685 = vld [vmem:[%s3684] ss:$2 sm:$0x3]
    %3686 = vst.msk [vmem:[#allocation5 + $0xf] sm:$0x3] %vm3661, %v3685
    %s3687 = scalar_lea.vmem [#allocation4], 40
    %v3688 = vld [vmem:[%s3687] ss:$2 sm:$0x7]
    %3689 = vst.msk [vmem:[#allocation5 + $0x28] sm:$0x7] %vm3657, %v3688
    %s3690 = scalar_lea.vmem [#allocation4], 41
    %v3691 = vld [vmem:[%s3690] ss:$2 sm:$0x3]
    %3692 = vst.msk [vmem:[#allocation5 + $0x31] sm:$0x3] %vm3661, %v3691
    %s3693 = scalar_lea.vmem [#allocation4], 47
    %v3694 = vld [vmem:[%s3693] ss:$2 sm:$0x7]
    %3695 = vst.msk [vmem:[#allocation5 + $0x3a] sm:$0x7] %vm3657, %v3694
    %s3696 = scalar_lea.vmem [#allocation4], 48
    %v3697 = vld [vmem:[%s3696] ss:$2 sm:$0x3]
    %3698 = vst.msk [vmem:[#allocation5 + $0x43] sm:$0x3] %vm3661, %v3697
    %s3699 = scalar_lea.vmem [#allocation4], 54
    %v3700 = vld [vmem:[%s3699] ss:$2 sm:$0x7]
    %3701 = vst.msk [vmem:[#allocation5 + $0x2b] sm:$0x7] %vm3657, %v3700
    %s3702 = scalar_lea.vmem [#allocation4], 55
    %v3703 = vld [vmem:[%s3702] ss:$2 sm:$0x3]
    %3704 = vst.msk [vmem:[#allocation5 + $0x34] sm:$0x3] %vm3661, %v3703
    %s3705 = scalar_lea.vmem [#allocation4], 61
    %v3706 = vld [vmem:[%s3705] ss:$2 sm:$0x7]
    %3707 = vst.msk [vmem:[#allocation5 + $0x3d] sm:$0x7] %vm3657, %v3706
    %s3708 = scalar_lea.vmem [#allocation4], 62
    %v3709 = vld [vmem:[%s3708] ss:$2 sm:$0x3]
    %3710 = vst.msk [vmem:[#allocation5 + $0x46] sm:$0x3] %vm3661, %v3709
    %s3711 = scalar_lea.vmem [#allocation4], 68
    %v3712 = vld [vmem:[%s3711] ss:$2 sm:$0x7]
    %3713 = vst.msk [vmem:[#allocation5 + $0x2e] sm:$0x7] %vm3657, %v3712
    %s3714 = scalar_lea.vmem [#allocation4], 69
    %v3715 = vld [vmem:[%s3714] ss:$2 sm:$0x3]
    %3716 = vst.msk [vmem:[#allocation5 + $0x37] sm:$0x3] %vm3661, %v3715
    %3717 = vst [vmem:[#allocation6] sm:$0xff] 0.0
    %3718 = vst [vmem:[#allocation6 + $0x8] sm:$0xff] 0.0
    %3719 = vst [vmem:[#allocation6 + $0x10] sm:$0xff] 0.0
    %3720 = vst [vmem:[#allocation6 + $0x18] sm:$0xff] 0.0
    %3721 = vst [vmem:[#allocation6 + $0x20] sm:$0xff] 0.0
    %3722 = vst [vmem:[#allocation6 + $0x28] sm:$0xff] 0.0
    %3723 = vst.msk [vmem:[#allocation6 + $0x30] sm:$0xff] %vm3404, 0.0
    %3724 = vst [vmem:[#allocation6 + $0x38] sm:$0xff] 0.0
    %3725 = vst [vmem:[#allocation6 + $0x40] sm:$0xff] 0.0
    %3726 = vst [vmem:[#allocation6 + $0x48] sm:$0xff] 0.0
    %3727 = vst [vmem:[#allocation6 + $0x50] sm:$0xff] 0.0
    %3728 = vst [vmem:[#allocation6 + $0x58] sm:$0xff] 0.0
    %3729 = vst [vmem:[#allocation6 + $0x60] sm:$0xff] 0.0
    %3730 = vst.msk [vmem:[#allocation6 + $0x68] sm:$0xff] %vm3404, 0.0
    %v3731 = vld [vmem:[#allocation5] sm:$0x7]
    %3732 = vst.msk [vmem:[#allocation6] sm:$0x7] %vm3657, %v3731
    %v3733 = vld [vmem:[#allocation5 + $0x9] sm:$0x7]
    %3735 = vrot.lane.b32.xlu0 %v3733, 32
    %v3736 = vpop.permute.xlu0 %3735
    %vm3738 = vcmask 518400
    %3739 = vst.msk [vmem:[#allocation6] sm:$0x7] %vm3738, %v3736
    %v3740 = vld [vmem:[#allocation5 + $0x1] sm:$0x7]
    %3742 = vrot.lane.b32.xlu0 %v3740, 64
    %v3743 = vpop.permute.xlu0 %3742
    %vm3745 = vcmask 780800
    %3746 = vst.msk [vmem:[#allocation6] sm:$0x7] %vm3745, %v3743
    %v3747 = vld [vmem:[#allocation5 + $0xa] sm:$0x7]
    %3749 = vrot.lane.b32.xlu0 %v3747, 96
    %v3750 = vpop.permute.xlu0 %3749
    %vm3752 = vcmask 1043200
    %3753 = vst.msk [vmem:[#allocation6] sm:$0x7] %vm3752, %v3750
    %v3754 = vld [vmem:[#allocation5 + $0x2] sm:$0x7]
    %3755 = vst.msk [vmem:[#allocation6 + $0x8] sm:$0x7] %vm3657, %v3754
    %v3756 = vld [vmem:[#allocation5 + $0x12] sm:$0x7]
    %3758 = vrot.lane.b32.xlu0 %v3756, 32
    %v3759 = vpop.permute.xlu0 %3758
    %3761 = vst.msk [vmem:[#allocation6 + $0x8] sm:$0x7] %vm3738, %v3759
    %v3762 = vld [vmem:[#allocation5 + $0x1b] sm:$0x7]
    %3764 = vrot.lane.b32.xlu0 %v3762, 64
    %v3765 = vpop.permute.xlu0 %3764
    %3767 = vst.msk [vmem:[#allocation6 + $0x8] sm:$0x7] %vm3745, %v3765
    %v3768 = vld [vmem:[#allocation5 + $0x13] sm:$0x7]
    %3770 = vrot.lane.b32.xlu0 %v3768, 96
    %v3771 = vpop.permute.xlu0 %3770
    %3773 = vst.msk [vmem:[#allocation6 + $0x8] sm:$0x7] %vm3752, %v3771
    %v3774 = vld [vmem:[#allocation5 + $0x1c] sm:$0x7]
    %3775 = vst.msk [vmem:[#allocation6 + $0x10] sm:$0x7] %vm3657, %v3774
    %v3776 = vld [vmem:[#allocation5 + $0x14] sm:$0x7]
    %3778 = vrot.lane.b32.xlu0 %v3776, 32
    %v3779 = vpop.permute.xlu0 %3778
    %3781 = vst.msk [vmem:[#allocation6 + $0x10] sm:$0x7] %vm3738, %v3779
    %v3782 = vld [vmem:[#allocation5 + $0x3] sm:$0x7]
    %3784 = vrot.lane.b32.xlu0 %v3782, 64
    %v3785 = vpop.permute.xlu0 %3784
    %3787 = vst.msk [vmem:[#allocation6 + $0x10] sm:$0x7] %vm3745, %v3785
    %v3788 = vld [vmem:[#allocation5 + $0xc] sm:$0x7]
    %3790 = vrot.lane.b32.xlu0 %v3788, 96
    %v3791 = vpop.permute.xlu0 %3790
    %3793 = vst.msk [vmem:[#allocation6 + $0x10] sm:$0x7] %vm3752, %v3791
    %v3794 = vld [vmem:[#allocation5 + $0x4] sm:$0x7]
    %3795 = vst.msk [vmem:[#allocation6 + $0x18] sm:$0x7] %vm3657, %v3794
    %v3796 = vld [vmem:[#allocation5 + $0xd] sm:$0x7]
    %3798 = vrot.lane.b32.xlu0 %v3796, 32
    %v3799 = vpop.permute.xlu0 %3798
    %3801 = vst.msk [vmem:[#allocation6 + $0x18] sm:$0x7] %vm3738, %v3799
    %v3802 = vld [vmem:[#allocation5 + $0x5] sm:$0x7]
    %3804 = vrot.lane.b32.xlu0 %v3802, 64
    %v3805 = vpop.permute.xlu0 %3804
    %3807 = vst.msk [vmem:[#allocation6 + $0x18] sm:$0x7] %vm3745, %v3805
    %v3808 = vld [vmem:[#allocation5 + $0x15] sm:$0x7]
    %3810 = vrot.lane.b32.xlu0 %v3808, 96
    %v3811 = vpop.permute.xlu0 %3810
    %3813 = vst.msk [vmem:[#allocation6 + $0x18] sm:$0x7] %vm3752, %v3811
    %v3814 = vld [vmem:[#allocation5 + $0x1e] sm:$0x7]
    %3815 = vst.msk [vmem:[#allocation6 + $0x20] sm:$0x7] %vm3657, %v3814
    %v3816 = vld [vmem:[#allocation5 + $0x16] sm:$0x7]
    %3818 = vrot.lane.b32.xlu0 %v3816, 32
    %v3819 = vpop.permute.xlu0 %3818
    %3821 = vst.msk [vmem:[#allocation6 + $0x20] sm:$0x7] %vm3738, %v3819
    %v3822 = vld [vmem:[#allocation5 + $0x1f] sm:$0x7]
    %3824 = vrot.lane.b32.xlu0 %v3822, 64
    %v3825 = vpop.permute.xlu0 %3824
    %3827 = vst.msk [vmem:[#allocation6 + $0x20] sm:$0x7] %vm3745, %v3825
    %v3828 = vld [vmem:[#allocation5 + $0x17] sm:$0x7]
    %3830 = vrot.lane.b32.xlu0 %v3828, 96
    %v3831 = vpop.permute.xlu0 %3830
    %3833 = vst.msk [vmem:[#allocation6 + $0x20] sm:$0x7] %vm3752, %v3831
    %v3834 = vld [vmem:[#allocation5 + $0x6] sm:$0x7]
    %3835 = vst.msk [vmem:[#allocation6 + $0x28] sm:$0x7] %vm3657, %v3834
    %v3836 = vld [vmem:[#allocation5 + $0xf] sm:$0x7]
    %3838 = vrot.lane.b32.xlu0 %v3836, 32
    %v3839 = vpop.permute.xlu0 %3838
    %3841 = vst.msk [vmem:[#allocation6 + $0x28] sm:$0x7] %vm3738, %v3839
    %v3842 = vld [vmem:[#allocation5 + $0x7] sm:$0x7]
    %3844 = vrot.lane.b32.xlu0 %v3842, 64
    %v3845 = vpop.permute.xlu0 %3844
    %3847 = vst.msk [vmem:[#allocation6 + $0x28] sm:$0x7] %vm3745, %v3845
    %v3848 = vld [vmem:[#allocation5 + $0x10] sm:$0x7]
    %3850 = vrot.lane.b32.xlu0 %v3848, 96
    %v3851 = vpop.permute.xlu0 %3850
    %3853 = vst.msk [vmem:[#allocation6 + $0x28] sm:$0x7] %vm3752, %v3851
    %v3854 = vld [vmem:[#allocation5 + $0x8] sm:$0x7]
    %3855 = vst.msk [vmem:[#allocation6 + $0x30] sm:$0x7] %vm3657, %v3854
    %v3856 = vld [vmem:[#allocation5 + $0x28] sm:$0x7]
    %3857 = vst.msk [vmem:[#allocation6 + $0x38] sm:$0x7] %vm3657, %v3856
    %v3858 = vld [vmem:[#allocation5 + $0x31] sm:$0x7]
    %3860 = vrot.lane.b32.xlu0 %v3858, 32
    %v3861 = vpop.permute.xlu0 %3860
    %3863 = vst.msk [vmem:[#allocation6 + $0x38] sm:$0x7] %vm3738, %v3861
    %v3864 = vld [vmem:[#allocation5 + $0x29] sm:$0x7]
    %3866 = vrot.lane.b32.xlu0 %v3864, 64
    %v3867 = vpop.permute.xlu0 %3866
    %3869 = vst.msk [vmem:[#allocation6 + $0x38] sm:$0x7] %vm3745, %v3867
    %v3870 = vld [vmem:[#allocation5 + $0x32] sm:$0x7]
    %3872 = vrot.lane.b32.xlu0 %v3870, 96
    %v3873 = vpop.permute.xlu0 %3872
    %3875 = vst.msk [vmem:[#allocation6 + $0x38] sm:$0x7] %vm3752, %v3873
    %v3876 = vld [vmem:[#allocation5 + $0x2a] sm:$0x7]
    %3877 = vst.msk [vmem:[#allocation6 + $0x40] sm:$0x7] %vm3657, %v3876
    %v3878 = vld [vmem:[#allocation5 + $0x3a] sm:$0x7]
    %3880 = vrot.lane.b32.xlu0 %v3878, 32
    %v3881 = vpop.permute.xlu0 %3880
    %3883 = vst.msk [vmem:[#allocation6 + $0x40] sm:$0x7] %vm3738, %v3881
    %v3884 = vld [vmem:[#allocation5 + $0x43] sm:$0x7]
    %3886 = vrot.lane.b32.xlu0 %v3884, 64
    %v3887 = vpop.permute.xlu0 %3886
    %3889 = vst.msk [vmem:[#allocation6 + $0x40] sm:$0x7] %vm3745, %v3887
    %v3890 = vld [vmem:[#allocation5 + $0x3b] sm:$0x7]
    %3892 = vrot.lane.b32.xlu0 %v3890, 96
    %v3893 = vpop.permute.xlu0 %3892
    %3895 = vst.msk [vmem:[#allocation6 + $0x40] sm:$0x7] %vm3752, %v3893
    %v3896 = vld [vmem:[#allocation5 + $0x44] sm:$0x7]
    %3897 = vst.msk [vmem:[#allocation6 + $0x48] sm:$0x7] %vm3657, %v3896
    %v3898 = vld [vmem:[#allocation5 + $0x3c] sm:$0x7]
    %3900 = vrot.lane.b32.xlu0 %v3898, 32
    %v3901 = vpop.permute.xlu0 %3900
    %3903 = vst.msk [vmem:[#allocation6 + $0x48] sm:$0x7] %vm3738, %v3901
    %v3904 = vld [vmem:[#allocation5 + $0x2b] sm:$0x7]
    %3906 = vrot.lane.b32.xlu0 %v3904, 64
    %v3907 = vpop.permute.xlu0 %3906
    %3909 = vst.msk [vmem:[#allocation6 + $0x48] sm:$0x7] %vm3745, %v3907
    %v3910 = vld [vmem:[#allocation5 + $0x34] sm:$0x7]
    %3912 = vrot.lane.b32.xlu0 %v3910, 96
    %v3913 = vpop.permute.xlu0 %3912
    %3915 = vst.msk [vmem:[#allocation6 + $0x48] sm:$0x7] %vm3752, %v3913
    %v3916 = vld [vmem:[#allocation5 + $0x2c] sm:$0x7]
    %3917 = vst.msk [vmem:[#allocation6 + $0x50] sm:$0x7] %vm3657, %v3916
    %v3918 = vld [vmem:[#allocation5 + $0x35] sm:$0x7]
    %3920 = vrot.lane.b32.xlu0 %v3918, 32
    %v3921 = vpop.permute.xlu0 %3920
    %3923 = vst.msk [vmem:[#allocation6 + $0x50] sm:$0x7] %vm3738, %v3921
    %v3924 = vld [vmem:[#allocation5 + $0x2d] sm:$0x7]
    %3926 = vrot.lane.b32.xlu0 %v3924, 64
    %v3927 = vpop.permute.xlu0 %3926
    %3929 = vst.msk [vmem:[#allocation6 + $0x50] sm:$0x7] %vm3745, %v3927
    %v3930 = vld [vmem:[#allocation5 + $0x3d] sm:$0x7]
    %3932 = vrot.lane.b32.xlu0 %v3930, 96
    %v3933 = vpop.permute.xlu0 %3932
    %3935 = vst.msk [vmem:[#allocation6 + $0x50] sm:$0x7] %vm3752, %v3933
    %v3936 = vld [vmem:[#allocation5 + $0x46] sm:$0x7]
    %3937 = vst.msk [vmem:[#allocation6 + $0x58] sm:$0x7] %vm3657, %v3936
    %v3938 = vld [vmem:[#allocation5 + $0x3e] sm:$0x7]
    %3940 = vrot.lane.b32.xlu0 %v3938, 32
    %v3941 = vpop.permute.xlu0 %3940
    %3943 = vst.msk [vmem:[#allocation6 + $0x58] sm:$0x7] %vm3738, %v3941
    %v3944 = vld [vmem:[#allocation5 + $0x47] sm:$0x7]
    %3946 = vrot.lane.b32.xlu0 %v3944, 64
    %v3947 = vpop.permute.xlu0 %3946
    %3949 = vst.msk [vmem:[#allocation6 + $0x58] sm:$0x7] %vm3745, %v3947
    %v3950 = vld [vmem:[#allocation5 + $0x3f] sm:$0x7]
    %3952 = vrot.lane.b32.xlu0 %v3950, 96
    %v3953 = vpop.permute.xlu0 %3952
    %3955 = vst.msk [vmem:[#allocation6 + $0x58] sm:$0x7] %vm3752, %v3953
    %v3956 = vld [vmem:[#allocation5 + $0x2e] sm:$0x7]
    %3957 = vst.msk [vmem:[#allocation6 + $0x60] sm:$0x7] %vm3657, %v3956
    %v3958 = vld [vmem:[#allocation5 + $0x37] sm:$0x7]
    %3960 = vrot.lane.b32.xlu0 %v3958, 32
    %v3961 = vpop.permute.xlu0 %3960
    %3963 = vst.msk [vmem:[#allocation6 + $0x60] sm:$0x7] %vm3738, %v3961
    %v3964 = vld [vmem:[#allocation5 + $0x2f] sm:$0x7]
    %3966 = vrot.lane.b32.xlu0 %v3964, 64
    %v3967 = vpop.permute.xlu0 %3966
    %3969 = vst.msk [vmem:[#allocation6 + $0x60] sm:$0x7] %vm3745, %v3967
    %v3970 = vld [vmem:[#allocation5 + $0x38] sm:$0x7]
    %3972 = vrot.lane.b32.xlu0 %v3970, 96
    %v3973 = vpop.permute.xlu0 %3972
    %3975 = vst.msk [vmem:[#allocation6 + $0x60] sm:$0x7] %vm3752, %v3973
    %v3976 = vld [vmem:[#allocation5 + $0x30] sm:$0x7]
    %3977 = vst.msk [vmem:[#allocation6 + $0x68] sm:$0x7] %vm3657, %v3976
    %v3978 = vld [vmem:[#allocation6] sm:$0xff]
    %v3979 = vld [vmem:[#allocation6 + $0x8] sm:$0xff]
    %v3980 = vld [vmem:[#allocation6 + $0x10] sm:$0xff]
    %v3981 = vld [vmem:[#allocation6 + $0x18] sm:$0xff]
    %v3982 = vld [vmem:[#allocation6 + $0x20] sm:$0xff]
    %v3983 = vld [vmem:[#allocation6 + $0x28] sm:$0xff]
    %v3984 = vld [vmem:[#allocation6 + $0x30] sm:$0xff]
    %v3985 = vld [vmem:[#allocation6 + $0x38] sm:$0xff]
    %v3986 = vld [vmem:[#allocation6 + $0x40] sm:$0xff]
    %v3987 = vld [vmem:[#allocation6 + $0x48] sm:$0xff]
    %v3988 = vld [vmem:[#allocation6 + $0x50] sm:$0xff]
    %v3989 = vld [vmem:[#allocation6 + $0x58] sm:$0xff]
    %v3990 = vld [vmem:[#allocation6 + $0x60] sm:$0xff]
    %v3991 = vld [vmem:[#allocation6 + $0x68] sm:$0xff]
    %v3992 = vld [vmem:[%s9] sm:$0xff]
    %v3993 = vld [vmem:[%s9 + $0x8] sm:$0xff]
    %v3994 = vld [vmem:[%s9 + $0x10] sm:$0xff]
    %v3995 = vld [vmem:[%s9 + $0x18] sm:$0xff]
    %v3996 = vld [vmem:[%s9 + $0x20] sm:$0xff]
    %v3997 = vld [vmem:[%s9 + $0x28] sm:$0xff]
    %v3998 = vld [vmem:[%s9 + $0x30] sm:$0xff]
    %v3999 = vld [vmem:[%s9 + $0x38] sm:$0xff]
    %v4000 = vld [vmem:[%s9 + $0x40] sm:$0xff]
    %v4001 = vld [vmem:[%s9 + $0x48] sm:$0xff]
    %v4002 = vld [vmem:[%s9 + $0x50] sm:$0xff]
    %v4003 = vld [vmem:[%s9 + $0x58] sm:$0xff]
    %v4004 = vld [vmem:[%s9 + $0x60] sm:$0xff]
    %v4005 = vld [vmem:[%s9 + $0x68] sm:$0xff]
    %v4006 = vld [vmem:[%s9 + $0x70] sm:$0xff]
    %v4007 = vld [vmem:[%s9 + $0x78] sm:$0xff]
    %v4008 = vld [vmem:[%s9 + $0x80] sm:$0xff]
    %v4009 = vld [vmem:[%s9 + $0x88] sm:$0xff]
    %v4010 = vld [vmem:[%s9 + $0x90] sm:$0xff]
    %v4011 = vld [vmem:[%s9 + $0x98] sm:$0xff]
    %v4012 = vld [vmem:[%s9 + $0xa0] sm:$0xff]
    %v4013 = vld [vmem:[%s9 + $0xa8] sm:$0xff]
    %v4014 = vld [vmem:[%s9 + $0xb0] sm:$0xff]
    %v4015 = vld [vmem:[%s9 + $0xb8] sm:$0xff]
    %v4016 = vld [vmem:[%s9 + $0xc0] sm:$0xff]
    %v4017 = vld [vmem:[%s9 + $0xc8] sm:$0xff]
    %v4018 = vld [vmem:[%s9 + $0xd0] sm:$0xff]
    %v4019 = vld [vmem:[%s9 + $0xd8] sm:$0xff]
    %v4020 = vld [vmem:[%s9 + $0xe0] sm:$0xff]
    %v4021 = vld [vmem:[%s9 + $0xe8] sm:$0xff]
    %v4022 = vld [vmem:[%s9 + $0xf0] sm:$0xff]
    %v4023 = vld [vmem:[%s9 + $0xf8] sm:$0xff]
    %v4024 = vld [vmem:[%s9 + $0x100] sm:$0xff]
    %v4025 = vld [vmem:[%s9 + $0x108] sm:$0xff]
    %v4026 = vld [vmem:[%s9 + $0x110] sm:$0xff]
    %v4027 = vld [vmem:[%s9 + $0x118] sm:$0xff]
    %v4028 = vld [vmem:[%s9 + $0x120] sm:$0xff]
    %v4029 = vld [vmem:[%s9 + $0x128] sm:$0xff]
    %v4030 = vld [vmem:[%s9 + $0x130] sm:$0xff]
    %v4031 = vld [vmem:[%s9 + $0x138] sm:$0xff]
    %v4032 = vld [vmem:[%s9 + $0x140] sm:$0xff]
    %v4033 = vld [vmem:[%s9 + $0x148] sm:$0xff]
    %v4034 = vld [vmem:[%s9 + $0x150] sm:$0xff]
    %v4035 = vld [vmem:[%s9 + $0x158] sm:$0xff]
    %v4036 = vld [vmem:[%s9 + $0x160] sm:$0xff]
    %v4037 = vld [vmem:[%s9 + $0x168] sm:$0xff]
    %v4038 = vld [vmem:[%s9 + $0x170] sm:$0xff]
    %v4039 = vld [vmem:[%s9 + $0x178] sm:$0xff]
    %v4040 = vld [vmem:[%s9 + $0x180] sm:$0xff]
    %v4041 = vld [vmem:[%s9 + $0x188] sm:$0xff]
    %v4042 = vld [vmem:[%s9 + $0x190] sm:$0xff]
    %v4043 = vld [vmem:[%s9 + $0x198] sm:$0xff]
    %v4044 = vld [vmem:[%s9 + $0x1a0] sm:$0xff]
    %v4045 = vld [vmem:[%s9 + $0x1a8] sm:$0xff]
    %v4046 = vld [vmem:[%s9 + $0x1b0] sm:$0xff]
    %v4047 = vld [vmem:[%s9 + $0x1b8] sm:$0xff]
    %v4048 = vld [vmem:[%s9 + $0x1c0] sm:$0xff]
    %v4049 = vld [vmem:[%s9 + $0x1c8] sm:$0xff]
    %v4050 = vld [vmem:[%s9 + $0x1d0] sm:$0xff]
    %v4051 = vld [vmem:[%s9 + $0x1d8] sm:$0xff]
    %v4052 = vld [vmem:[%s9 + $0x1e0] sm:$0xff]
    %v4053 = vld [vmem:[%s9 + $0x1e8] sm:$0xff]
    %v4054 = vld [vmem:[%s9 + $0x1f0] sm:$0xff]
    %v4055 = vld [vmem:[%s9 + $0x1f8] sm:$0xff]
    %v4056 = vld [vmem:[%s9 + $0x200] sm:$0xff]
    %v4057 = vld [vmem:[%s9 + $0x208] sm:$0xff]
    %v4058 = vld [vmem:[%s9 + $0x210] sm:$0xff]
    %v4059 = vld [vmem:[%s9 + $0x218] sm:$0xff]
    %v4060 = vld [vmem:[%s9 + $0x220] sm:$0xff]
    %v4061 = vld [vmem:[%s9 + $0x228] sm:$0xff]
    %v4062 = vld [vmem:[%s9 + $0x230] sm:$0xff]
    %v4063 = vld [vmem:[%s9 + $0x238] sm:$0xff]
    %v4064 = vld [vmem:[%s9 + $0x240] sm:$0xff]
    %v4065 = vld [vmem:[%s9 + $0x248] sm:$0xff]
    %v4066 = vld [vmem:[%s9 + $0x250] sm:$0xff]
    %v4067 = vld [vmem:[%s9 + $0x258] sm:$0xff]
    %v4068 = vld [vmem:[%s9 + $0x260] sm:$0xff]
    %v4069 = vld [vmem:[%s9 + $0x268] sm:$0xff]
    %v4070 = vld [vmem:[%s9 + $0x270] sm:$0xff]
    %v4071 = vld [vmem:[%s9 + $0x278] sm:$0xff]
    %v4072 = vld [vmem:[%s9 + $0x280] sm:$0xff]
    %v4073 = vld [vmem:[%s9 + $0x288] sm:$0xff]
    %v4074 = vld [vmem:[%s9 + $0x290] sm:$0xff]
    %v4075 = vld [vmem:[%s9 + $0x298] sm:$0xff]
    %v4076 = vld [vmem:[%s9 + $0x2a0] sm:$0xff]
    %v4077 = vld [vmem:[%s9 + $0x2a8] sm:$0xff]
    %v4078 = vld [vmem:[%s9 + $0x2b0] sm:$0xff]
    %v4079 = vld [vmem:[%s9 + $0x2b8] sm:$0xff]
    %v4080 = vld [vmem:[%s9 + $0x2c0] sm:$0xff]
    %v4081 = vld [vmem:[%s9 + $0x2c8] sm:$0xff]
    %v4082 = vld [vmem:[%s9 + $0x2d0] sm:$0xff]
    %v4083 = vld [vmem:[%s9 + $0x2d8] sm:$0xff]
    %v4084 = vld [vmem:[%s9 + $0x2e0] sm:$0xff]
    %v4085 = vld [vmem:[%s9 + $0x2e8] sm:$0xff]
    %v4086 = vld [vmem:[%s9 + $0x2f0] sm:$0xff]
    %v4087 = vld [vmem:[%s9 + $0x2f8] sm:$0xff]
    %v4088 = vld [vmem:[%s9 + $0x300] sm:$0xff]
    %v4089 = vld [vmem:[%s9 + $0x308] sm:$0xff]
    %v4090 = vld [vmem:[%s9 + $0x310] sm:$0xff]
    %v4091 = vld [vmem:[%s9 + $0x318] sm:$0xff]
    %v4093 = vsel %vm3404, %v3984, 0
    %v4096 = vsel %vm3404, %v3991, 0
    %4098 = vmatprep.subr.mxu0 0.0
    %4099 = vmatpush1.msra.mxu0 %v3992
    %4100 = vmatprep.subr.mxu0 0.0
    %4101 = vmatpush1.msra.mxu0 %v3993
    %4102 = vmatprep.subr.mxu0 0.0
    %4103 = vmatpush1.msra.mxu0 %v3994
    %4104 = vmatprep.subr.mxu0 0.0
    %4105 = vmatpush1.msra.mxu0 %v3995
    %4106 = vmatprep.subr.mxu0 0.0
    %4107 = vmatpush1.msra.mxu0 %v3996
    %4108 = vmatprep.subr.mxu0 0.0
    %4109 = vmatpush1.msra.mxu0 %v3997
    %4110 = vmatprep.subr.mxu0 0.0
    %4111 = vmatpush1.msra.mxu0 %v3998
    %4112 = vmatprep.subr.mxu0 0.0
    %4113 = vmatpush1.msra.mxu0 %v3999
    %4114 = vmatprep.subr.mxu0 0.0
    %4115 = vmatpush1.msra.mxu0 %v4000
    %4116 = vmatprep.subr.mxu0 0.0
    %4117 = vmatpush1.msra.mxu0 %v4001
    %4118 = vmatprep.subr.mxu0 0.0
    %4119 = vmatpush1.msra.mxu0 %v4002
    %4120 = vmatprep.subr.mxu0 0.0
    %4121 = vmatpush1.msra.mxu0 %v4003
    %4122 = vmatprep.subr.mxu0 0.0
    %4123 = vmatpush1.msra.mxu0 %v4004
    %4124 = vmatprep.subr.mxu0 0.0
    %4125 = vmatpush1.msra.mxu0 %v4005
    %4126 = vmatprep.subr.mxu0 0.0
    %4127 = vmatpush1.msra.mxu0 %v4006
    %4128 = vmatprep.subr.mxu0 0.0
    %4129 = vmatpush1.msra.mxu0 %v4007
    %4130 = vmatprep.subr.mxu0 0.0
    %4131 = vmatpush1.msra.mxu0 %v4008
    %4132 = vmatprep.subr.mxu0 0.0
    %4133 = vmatpush1.msra.mxu0 %v4009
    %4134 = vmatprep.subr.mxu0 0.0
    %4135 = vmatpush1.msra.mxu0 %v4010
    %4136 = vmatprep.subr.mxu0 0.0
    %4137 = vmatpush1.msra.mxu0 %v4011
    %4138 = vmatprep.subr.mxu0 0.0
    %4139 = vmatpush1.msra.mxu0 %v4012
    %4140 = vmatprep.subr.mxu0 0.0
    %4141 = vmatpush1.msra.mxu0 %v4013
    %4142 = vmatprep.subr.mxu0 0.0
    %4143 = vmatpush1.msra.mxu0 %v4014
    %4144 = vmatprep.subr.mxu0 0.0
    %4145 = vmatpush1.msra.mxu0 %v4015
    %4146 = vmatprep.subr.mxu0 0.0
    %4147 = vmatpush1.msra.mxu0 %v4016
    %4148 = vmatprep.subr.mxu0 0.0
    %4149 = vmatpush1.msra.mxu0 %v4017
    %4150 = vmatprep.subr.mxu0 0.0
    %4151 = vmatpush1.msra.mxu0 %v4018
    %4152 = vmatprep.subr.mxu0 0.0
    %4153 = vmatpush1.msra.mxu0 %v4019
    %4154 = vmatprep.subr.mxu0 0.0
    %4155 = vmatpush1.msra.mxu0 %v4020
    %4156 = vmatprep.subr.mxu0 0.0
    %4157 = vmatpush1.msra.mxu0 %v4021
    %4158 = vmatprep.subr.mxu0 0.0
    %4159 = vmatpush1.msra.mxu0 %v4022
    %4160 = vmatprep.subr.mxu0 0.0
    %4161 = vmatpush1.msra.mxu0 %v4023
    %4162 = vmatprep.mubr.f32.mxu0 %v3979
    %4163 = vmatmul.mubr.f32.gmra.mrb[0].mxu0 %v3978
    %v4164 = vpop.f32.mrb[0].mxu0
    %v4165 = vadd.f32 0.0, %v4164
    %v4166 = vpop.f32.mrb[0].mxu0
    %4167 = vmatprep.mubr.f32.mxu0 %v3986
    %4168 = vmatmul.mubr.f32.gmra.mrb[0].mxu0 %v3985
    %v4169 = vpop.f32.mrb[0].mxu0
    %v4170 = vadd.f32 0.0, %v4169
    %v4171 = vpop.f32.mrb[0].mxu0
    %4172 = vdwg.mxu0
    %4173 = vmatprep.subr.mxu0 0.0
    %4174 = vmatpush1.msra.mxu0 %v4024
    %4175 = vmatprep.subr.mxu0 0.0
    %4176 = vmatpush1.msra.mxu0 %v4025
    %4177 = vmatprep.subr.mxu0 0.0
    %4178 = vmatpush1.msra.mxu0 %v4026
    %4179 = vmatprep.subr.mxu0 0.0
    %4180 = vmatpush1.msra.mxu0 %v4027
    %4181 = vmatprep.subr.mxu0 0.0
    %4182 = vmatpush1.msra.mxu0 %v4028
    %4183 = vmatprep.subr.mxu0 0.0
    %4184 = vmatpush1.msra.mxu0 %v4029
    %4185 = vmatprep.subr.mxu0 0.0
    %4186 = vmatpush1.msra.mxu0 %v4030
    %4187 = vmatprep.subr.mxu0 0.0
    %4188 = vmatpush1.msra.mxu0 %v4031
    %4189 = vmatprep.subr.mxu0 0.0
    %4190 = vmatpush1.msra.mxu0 %v4032
    %4191 = vmatprep.subr.mxu0 0.0
    %4192 = vmatpush1.msra.mxu0 %v4033
    %4193 = vmatprep.subr.mxu0 0.0
    %4194 = vmatpush1.msra.mxu0 %v4034
    %4195 = vmatprep.subr.mxu0 0.0
    %4196 = vmatpush1.msra.mxu0 %v4035
    %4197 = vmatprep.subr.mxu0 0.0
    %4198 = vmatpush1.msra.mxu0 %v4036
    %4199 = vmatprep.subr.mxu0 0.0
    %4200 = vmatpush1.msra.mxu0 %v4037
    %4201 = vmatprep.subr.mxu0 0.0
    %4202 = vmatpush1.msra.mxu0 %v4038
    %4203 = vmatprep.subr.mxu0 0.0
    %4204 = vmatpush1.msra.mxu0 %v4039
    %4205 = vmatprep.subr.mxu0 0.0
    %4206 = vmatpush1.msra.mxu0 %v4040
    %4207 = vmatprep.subr.mxu0 0.0
    %4208 = vmatpush1.msra.mxu0 %v4041
    %4209 = vmatprep.subr.mxu0 0.0
    %4210 = vmatpush1.msra.mxu0 %v4042
    %4211 = vmatprep.subr.mxu0 0.0
    %4212 = vmatpush1.msra.mxu0 %v4043
    %4213 = vmatprep.subr.mxu0 0.0
    %4214 = vmatpush1.msra.mxu0 %v4044
    %4215 = vmatprep.subr.mxu0 0.0
    %4216 = vmatpush1.msra.mxu0 %v4045
    %4217 = vmatprep.subr.mxu0 0.0
    %4218 = vmatpush1.msra.mxu0 %v4046
    %4219 = vmatprep.subr.mxu0 0.0
    %4220 = vmatpush1.msra.mxu0 %v4047
    %4221 = vmatprep.subr.mxu0 0.0
    %4222 = vmatpush1.msra.mxu0 %v4048
    %4223 = vmatprep.subr.mxu0 0.0
    %4224 = vmatpush1.msra.mxu0 %v4049
    %4225 = vmatprep.subr.mxu0 0.0
    %4226 = vmatpush1.msra.mxu0 %v4050
    %4227 = vmatprep.subr.mxu0 0.0
    %4228 = vmatpush1.msra.mxu0 %v4051
    %4229 = vmatprep.subr.mxu0 0.0
    %4230 = vmatpush1.msra.mxu0 %v4052
    %4231 = vmatprep.subr.mxu0 0.0
    %4232 = vmatpush1.msra.mxu0 %v4053
    %4233 = vmatprep.subr.mxu0 0.0
    %4234 = vmatpush1.msra.mxu0 %v4054
    %4235 = vmatprep.subr.mxu0 0.0
    %4236 = vmatpush1.msra.mxu0 %v4055
    %4237 = vmatprep.mubr.f32.mxu0 %v3981
    %4238 = vmatmul.mubr.f32.gmra.mrb[0].mxu0 %v3980
    %v4239 = vpop.f32.mrb[0].mxu0
    %v4240 = vadd.f32 %v4165, %v4239
    %v4241 = vpop.f32.mrb[0].mxu0
    %4242 = vmatprep.mubr.f32.mxu0 %v3988
    %4243 = vmatmul.mubr.f32.gmra.mrb[0].mxu0 %v3987
    %v4244 = vpop.f32.mrb[0].mxu0
    %v4245 = vadd.f32 %v4170, %v4244
    %v4246 = vpop.f32.mrb[0].mxu0
    %4247 = vdwg.mxu0
    %4248 = vmatprep.subr.mxu0 0.0
    %4249 = vmatpush1.msra.mxu0 %v4056
    %4250 = vmatprep.subr.mxu0 0.0
    %4251 = vmatpush1.msra.mxu0 %v4057
    %4252 = vmatprep.subr.mxu0 0.0
    %4253 = vmatpush1.msra.mxu0 %v4058
    %4254 = vmatprep.subr.mxu0 0.0
    %4255 = vmatpush1.msra.mxu0 %v4059
    %4256 = vmatprep.subr.mxu0 0.0
    %4257 = vmatpush1.msra.mxu0 %v4060
    %4258 = vmatprep.subr.mxu0 0.0
    %4259 = vmatpush1.msra.mxu0 %v4061
    %4260 = vmatprep.subr.mxu0 0.0
    %4261 = vmatpush1.msra.mxu0 %v4062
    %4262 = vmatprep.subr.mxu0 0.0
    %4263 = vmatpush1.msra.mxu0 %v4063
    %4264 = vmatprep.subr.mxu0 0.0
    %4265 = vmatpush1.msra.mxu0 %v4064
    %4266 = vmatprep.subr.mxu0 0.0
    %4267 = vmatpush1.msra.mxu0 %v4065
    %4268 = vmatprep.subr.mxu0 0.0
    %4269 = vmatpush1.msra.mxu0 %v4066
    %4270 = vmatprep.subr.mxu0 0.0
    %4271 = vmatpush1.msra.mxu0 %v4067
    %4272 = vmatprep.subr.mxu0 0.0
    %4273 = vmatpush1.msra.mxu0 %v4068
    %4274 = vmatprep.subr.mxu0 0.0
    %4275 = vmatpush1.msra.mxu0 %v4069
    %4276 = vmatprep.subr.mxu0 0.0
    %4277 = vmatpush1.msra.mxu0 %v4070
    %4278 = vmatprep.subr.mxu0 0.0
    %4279 = vmatpush1.msra.mxu0 %v4071
    %4280 = vmatprep.subr.mxu0 0.0
    %4281 = vmatpush1.msra.mxu0 %v4072
    %4282 = vmatprep.subr.mxu0 0.0
    %4283 = vmatpush1.msra.mxu0 %v4073
    %4284 = vmatprep.subr.mxu0 0.0
    %4285 = vmatpush1.msra.mxu0 %v4074
    %4286 = vmatprep.subr.mxu0 0.0
    %4287 = vmatpush1.msra.mxu0 %v4075
    %4288 = vmatprep.subr.mxu0 0.0
    %4289 = vmatpush1.msra.mxu0 %v4076
    %4290 = vmatprep.subr.mxu0 0.0
    %4291 = vmatpush1.msra.mxu0 %v4077
    %4292 = vmatprep.subr.mxu0 0.0
    %4293 = vmatpush1.msra.mxu0 %v4078
    %4294 = vmatprep.subr.mxu0 0.0
    %4295 = vmatpush1.msra.mxu0 %v4079
    %4296 = vmatprep.subr.mxu0 0.0
    %4297 = vmatpush1.msra.mxu0 %v4080
    %4298 = vmatprep.subr.mxu0 0.0
    %4299 = vmatpush1.msra.mxu0 %v4081
    %4300 = vmatprep.subr.mxu0 0.0
    %4301 = vmatpush1.msra.mxu0 %v4082
    %4302 = vmatprep.subr.mxu0 0.0
    %4303 = vmatpush1.msra.mxu0 %v4083
    %4304 = vmatprep.subr.mxu0 0.0
    %4305 = vmatpush1.msra.mxu0 %v4084
    %4306 = vmatprep.subr.mxu0 0.0
    %4307 = vmatpush1.msra.mxu0 %v4085
    %4308 = vmatprep.subr.mxu0 0.0
    %4309 = vmatpush1.msra.mxu0 %v4086
    %4310 = vmatprep.subr.mxu0 0.0
    %4311 = vmatpush1.msra.mxu0 %v4087
    %4312 = vmatprep.mubr.f32.mxu0 %v3983
    %4313 = vmatmul.mubr.f32.gmra.mrb[0].mxu0 %v3982
    %v4314 = vpop.f32.mrb[0].mxu0
    %v4315 = vadd.f32 %v4240, %v4314
    %v4316 = vpop.f32.mrb[0].mxu0
    %4317 = vmatprep.mubr.f32.mxu0 %v3990
    %4318 = vmatmul.mubr.f32.gmra.mrb[0].mxu0 %v3989
    %v4319 = vpop.f32.mrb[0].mxu0
    %v4320 = vadd.f32 %v4245, %v4319
    %v4321 = vpop.f32.mrb[0].mxu0
    %4322 = vdwg.mxu0
    %4323 = vmatprep.subr.mxu0 0.0
    %4324 = vmatpush1.msra.mxu0 %v4088
    %4325 = vmatprep.subr.mxu0 0.0
    %4326 = vmatpush1.msra.mxu0 %v4089
    %4327 = vmatprep.subr.mxu0 0.0
    %4328 = vmatpush1.msra.mxu0 %v4090
    %4329 = vmatprep.subr.mxu0 0.0
    %4330 = vmatpush1.msra.mxu0 %v4091
    %4331 = vmatprep.subr.mxu0 0.0
    %4332 = vmatpush1.msra.mxu0 0.0
    %4333 = vmatprep.subr.mxu0 0.0
    %4334 = vmatpush1.msra.mxu0 0.0
    %4335 = vmatprep.subr.mxu0 0.0
    %4336 = vmatpush1.msra.mxu0 0.0
    %4337 = vmatprep.subr.mxu0 0.0
    %4338 = vmatpush1.msra.mxu0 0.0
    %4339 = vmatprep.subr.mxu0 0.0
    %4340 = vmatpush1.msra.mxu0 0.0
    %4341 = vmatprep.subr.mxu0 0.0
    %4342 = vmatpush1.msra.mxu0 0.0
    %4343 = vmatprep.subr.mxu0 0.0
    %4344 = vmatpush1.msra.mxu0 0.0
    %4345 = vmatprep.subr.mxu0 0.0
    %4346 = vmatpush1.msra.mxu0 0.0
    %4347 = vmatprep.subr.mxu0 0.0
    %4348 = vmatpush1.msra.mxu0 0.0
    %4349 = vmatprep.subr.mxu0 0.0
    %4350 = vmatpush1.msra.mxu0 0.0
    %4351 = vmatprep.subr.mxu0 0.0
    %4352 = vmatpush1.msra.mxu0 0.0
    %4353 = vmatprep.subr.mxu0 0.0
    %4354 = vmatpush1.msra.mxu0 0.0
    %4355 = vmatprep.subr.mxu0 0.0
    %4356 = vmatpush1.msra.mxu0 0.0
    %4357 = vmatprep.subr.mxu0 0.0
    %4358 = vmatpush1.msra.mxu0 0.0
    %4359 = vmatprep.subr.mxu0 0.0
    %4360 = vmatpush1.msra.mxu0 0.0
    %4361 = vmatprep.subr.mxu0 0.0
    %4362 = vmatpush1.msra.mxu0 0.0
    %4363 = vmatprep.subr.mxu0 0.0
    %4364 = vmatpush1.msra.mxu0 0.0
    %4365 = vmatprep.subr.mxu0 0.0
    %4366 = vmatpush1.msra.mxu0 0.0
    %4367 = vmatprep.subr.mxu0 0.0
    %4368 = vmatpush1.msra.mxu0 0.0
    %4369 = vmatprep.subr.mxu0 0.0
    %4370 = vmatpush1.msra.mxu0 0.0
    %4371 = vmatprep.subr.mxu0 0.0
    %4372 = vmatpush1.msra.mxu0 0.0
    %4373 = vmatprep.subr.mxu0 0.0
    %4374 = vmatpush1.msra.mxu0 0.0
    %4375 = vmatprep.subr.mxu0 0.0
    %4376 = vmatpush1.msra.mxu0 0.0
    %4377 = vmatprep.subr.mxu0 0.0
    %4378 = vmatpush1.msra.mxu0 0.0
    %4379 = vmatprep.subr.mxu0 0.0
    %4380 = vmatpush1.msra.mxu0 0.0
    %4381 = vmatprep.subr.mxu0 0.0
    %4382 = vmatpush1.msra.mxu0 0.0
    %4383 = vmatprep.subr.mxu0 0.0
    %4384 = vmatpush1.msra.mxu0 0.0
    %4385 = vmatprep.subr.mxu0 0.0
    %4386 = vmatpush1.msra.mxu0 0.0
    %4387 = vmatprep.mubr.f32.mxu0 0.0
    %4388 = vmatmul.mubr.f32.gmra.mrb[0].mxu0 %v4093
    %v4389 = vpop.f32.mrb[0].mxu0
    %v4390 = vadd.f32 %v4315, %v4389
    %v4391 = vpop.f32.mrb[0].mxu0
    %4392 = vmatprep.mubr.f32.mxu0 0.0
    %4393 = vmatmul.mubr.f32.gmra.mrb[0].mxu0 %v4096
    %v4394 = vpop.f32.mrb[0].mxu0
    %v4395 = vadd.f32 %v4320, %v4394
    %v4396 = vpop.f32.mrb[0].mxu0
    %4397 = vdwg.mxu0
    %v4398 = vld [vmem:[%s12] sm:$0xff]
    %v4399 = vld [vmem:[%s12 + $0x8] sm:$0xff]
    %v4400 = vld [vmem:[%s10] sm:$0x1]
    %v4401 = vld [vmem:[%s11] sm:$0x1]
    %vm4402 = vcmp.gt.f32.partialorder %v4398, 0.5
    %vm4403 = vcmp.gt.f32.partialorder %v4399, 0.5
    %v4404 = vsel %vm4402, 1, 0
    %v4405 = vsel %vm4403, 1, 0
    %4406 = vset.pattern.permute.xlu0 0
    %4407 = vperm.xlu0 %4406, %v4404
    %v4408 = vpop.permute.xlu0 %4407
    %4409 = vset.pattern.permute.xlu0 0
    %4410 = vperm.xlu0 %4409, %v4405
    %v4411 = vpop.permute.xlu0 %4410
    %vm4412 = vcmp.eq.s32.totalorder %v4408, 1
    %vm4413 = vcmp.eq.s32.totalorder %v4411, 1
    %v4414 = vsel %vm4412, %v4390, 0.0
    %v4415 = vsel %vm4413, %v4395, 0.0
    %v4416 = vsel %vm3404, %v4414, 0.0
    %v4417 = vsel %vm3404, %v4415, 0.0
    %v4418 = vadd.f32 %v4416, %v4417
    %v4419 = vrot.slane %v4418, 4
    %v4420 = vadd.f32 %v4418, %v4419
    %v4421 = vrot.slane %v4420, 2
    %v4422 = vadd.f32 %v4420, %v4421
    %v4423 = vrot.slane %v4422, 1
    %v4424 = vadd.f32 %v4422, %v4423
    %v4425 = vmul.f32 %v4424, 0.5
    %v4426 = vsub.f32 %v4390, %v4425
    %v4427 = vsub.f32 %v4395, %v4425
    %v4428 = vsel %vm4412, %v4426, 0.0
    %v4429 = vsel %vm4413, %v4427, 0.0
    %v4430 = vmul.f32 %v4428, %v4428
    %v4431 = vmul.f32 %v4429, %v4429
    %v4432 = vsel %vm3404, %v4430, 0.0
    %v4433 = vsel %vm3404, %v4431, 0.0
    %v4434 = vadd.f32 %v4432, %v4433
    %v4435 = vrot.slane %v4434, 4
    %v4436 = vadd.f32 %v4434, %v4435
    %v4437 = vrot.slane %v4436, 2
    %v4438 = vadd.f32 %v4436, %v4437
    %v4439 = vrot.slane %v4438, 1
    %v4440 = vadd.f32 %v4438, %v4439
    %v4441 = vmul.f32 %v4440, 0.5
    %v4442 = vadd.f32 %v4441, 1e-05
    %v4443 = vrsqrt.pop %v4442
    %v4444 = vmul.f32 %v4400, %v4443
    %v4445 = vmul.f32 %v4425, %v4444
    %v4446 = vsub.f32 %v4401, %v4445
    %v4448 = vlaneseq
    %v4449 = vshrl.u32 %v4448, 7
    %v4450 = vsub.s32 0, %v4449
    %v4451 = vrot.slane %v4444, %v4450
    %v4453 = vmul.f32 %v4390, %v4451
    %v4454 = vmul.f32 %v4395, %v4451
    %v4456 = vlaneseq
    %v4457 = vshrl.u32 %v4456, 7
    %v4458 = vsub.s32 0, %v4457
    %v4459 = vrot.slane %v4446, %v4458
    %v4461 = vadd.f32 %v4453, %v4459
    %v4462 = vadd.f32 %v4454, %v4459
    %v4463 = vmax.f32 %v4461, 0.0
    %v4464 = vmax.f32 %v4462, 0.0
    %4465 = vst.msk [vmem:[#allocation7] sm:$0xff] %vm3404, 0.0
    %vm4466 = vcmask 253952
    %4467 = vst.msk [vmem:[#allocation7] sm:$0x1] %vm4466, %v4463
    %4468 = vst.msk [vmem:[#allocation7 + $0x1] sm:$0x1] %vm4466, %v4464
    %v4469 = vld [vmem:[#allocation7] sm:$0xff]
    %v4470 = vld [vmem:[%s13] sm:$0xff]
    %v4471 = vld [vmem:[%s13 + $0x8] sm:$0xff]
    %v4472 = vld [vmem:[%s13 + $0x10] sm:$0xff]
    %v4473 = vld [vmem:[%s13 + $0x18] sm:$0xff]
    %v4474 = vld [vmem:[%s14] sm:$0x1]
    %v4476 = vlaneseq
    %v4477 = vshrl.u32 %v4476, 7
    %v4478 = vsub.s32 0, %v4477
    %v4479 = vrot.slane %v4474, %v4478
    %v4482 = vsel %vm3404, %v4469, 0
    %4484 = vmatprep.subr.mxu0 0.0
    %4485 = vmatpush1.msra.mxu0 %v4470
    %4486 = vmatprep.subr.mxu0 0.0
    %4487 = vmatpush1.msra.mxu0 %v4471
    %4488 = vmatprep.subr.mxu0 0.0
    %4489 = vmatpush1.msra.mxu0 %v4472
    %4490 = vmatprep.subr.mxu0 0.0
    %4491 = vmatpush1.msra.mxu0 %v4473
    %4492 = vmatprep.subr.mxu0 0.0
    %4493 = vmatpush1.msra.mxu0 0.0
    %4494 = vmatprep.subr.mxu0 0.0
    %4495 = vmatpush1.msra.mxu0 0.0
    %4496 = vmatprep.subr.mxu0 0.0
    %4497 = vmatpush1.msra.mxu0 0.0
    %4498 = vmatprep.subr.mxu0 0.0
    %4499 = vmatpush1.msra.mxu0 0.0
    %4500 = vmatprep.subr.mxu0 0.0
    %4501 = vmatpush1.msra.mxu0 0.0
    %4502 = vmatprep.subr.mxu0 0.0
    %4503 = vmatpush1.msra.mxu0 0.0
    %4504 = vmatprep.subr.mxu0 0.0
    %4505 = vmatpush1.msra.mxu0 0.0
    %4506 = vmatprep.subr.mxu0 0.0
    %4507 = vmatpush1.msra.mxu0 0.0
    %4508 = vmatprep.subr.mxu0 0.0
    %4509 = vmatpush1.msra.mxu0 0.0
    %4510 = vmatprep.subr.mxu0 0.0
    %4511 = vmatpush1.msra.mxu0 0.0
    %4512 = vmatprep.subr.mxu0 0.0
    %4513 = vmatpush1.msra.mxu0 0.0
    %4514 = vmatprep.subr.mxu0 0.0
    %4515 = vmatpush1.msra.mxu0 0.0
    %4516 = vmatprep.subr.mxu0 0.0
    %4517 = vmatpush1.msra.mxu0 0.0
    %4518 = vmatprep.subr.mxu0 0.0
    %4519 = vmatpush1.msra.mxu0 0.0
    %4520 = vmatprep.subr.mxu0 0.0
    %4521 = vmatpush1.msra.mxu0 0.0
    %4522 = vmatprep.subr.mxu0 0.0
    %4523 = vmatpush1.msra.mxu0 0.0
    %4524 = vmatprep.subr.mxu0 0.0
    %4525 = vmatpush1.msra.mxu0 0.0
    %4526 = vmatprep.subr.mxu0 0.0
    %4527 = vmatpush1.msra.mxu0 0.0
    %4528 = vmatprep.subr.mxu0 0.0
    %4529 = vmatpush1.msra.mxu0 0.0
    %4530 = vmatprep.subr.mxu0 0.0
    %4531 = vmatpush1.msra.mxu0 0.0
    %4532 = vmatprep.subr.mxu0 0.0
    %4533 = vmatpush1.msra.mxu0 0.0
    %4534 = vmatprep.subr.mxu0 0.0
    %4535 = vmatpush1.msra.mxu0 0.0
    %4536 = vmatprep.subr.mxu0 0.0
    %4537 = vmatpush1.msra.mxu0 0.0
    %4538 = vmatprep.subr.mxu0 0.0
    %4539 = vmatpush1.msra.mxu0 0.0
    %4540 = vmatprep.subr.mxu0 0.0
    %4541 = vmatpush1.msra.mxu0 0.0
    %4542 = vmatprep.subr.mxu0 0.0
    %4543 = vmatpush1.msra.mxu0 0.0
    %4544 = vmatprep.subr.mxu0 0.0
    %4545 = vmatpush1.msra.mxu0 0.0
    %4546 = vmatprep.subr.mxu0 0.0
    %4547 = vmatpush1.msra.mxu0 0.0
    %4548 = vmatprep.mubr.f32.mxu0 0.0
    %4549 = vmatmul.mubr.f32.gmra.mrb[0].mxu0 %v4482
    %v4550 = vpop.f32.mrb[0].mxu0
    %v4551 = vadd.f32 %v4479, %v4550
    %v4552 = vpop.f32.mrb[0].mxu0
    %4553 = vdwg.mxu0
    %vm4554 = vcmask 25600
    %4555 = vst.msk [vmem:[#allocation8] sm:$0x3] %vm4554, %v4551
    // Predicated region
    $region62: #{dqn_forward.1} parent=1 // pred_check
      _
    $region63: #{dqn_forward.1} parent=1 // pred_check_branch
      %4557 = sbr.rel (0) target = $region65
    $region64: #{dqn_forward.1} parent=1 // pred_region
      %s4559 = ssub.s32 32, 32
      %4560 = vsyncadd [#allocation9], %s4559
      %s4562 = sshll.u32 [#allocation8], 4
      %s4563 = int_to_ptr.vmem [resolvable:$true] %s4562
      %4565 = dma.vmem_to_hbm [thread:$0]  %s4563, 32, %s15, [#allocation9]
    $region65: #{dqn_forward.1} parent=1 // pred_fallthru
      _
    // Predicated region
    $region66: #{dqn_forward.1} parent=1 // pred_check
      _
    $region67: #{dqn_forward.1} parent=1 // pred_check_branch
      %4567 = sbr.rel (0) target = $region69
    $region68: #{dqn_forward.1} parent=1 // pred_region
      %4568 = dma.done [#allocation9], 32
    $region69: #{dqn_forward.1} parent=1 // pred_fallthru
      _
    %4569 = vsyncpa [#allocation9], 1

</llo_original>
